<compile_context>
chip_gen: v7x
topology: tpu7x:2x2x1
jax: 0.10.0
libtpu: 0.0.40
codegen_flags: <defaults>
</compile_context>

<pallas_src>
import functools

import numpy as np

import jax
import jax.numpy as jnp
from jax.experimental import pallas as pl
from jax.experimental.pallas import tpu as pltpu


# ---------------------------------------------------------------------------
# Host-side grid-invariant constants (pooling gather + conv shift one-hots)
# ---------------------------------------------------------------------------
def _pool_and_shift_constants(D, H, W, bp):
    """sel: (bp*M, bp*Mp) one-hot gather of stride-2 window starts.
    shifts: (27, bp*Mp, bp*Mp) one-hot shift matrices on the pooled grid
    (SAME zero padding via zero rows, block-diagonal across packed samples)."""
    Dp, Hp, Wp = (D - 3) // 2 + 1, (H - 3) // 2 + 1, (W - 3) // 2 + 1
    M, Mp = D * H * W, Dp * Hp * Wp

    sel = np.zeros((bp * M, bp * Mp), np.float32)
    for b in range(bp):
        for od in range(Dp):
            for oh in range(Hp):
                for ow in range(Wp):
                    q = (od * Hp + oh) * Wp + ow
                    start = (2 * od) * H * W + (2 * oh) * W + (2 * ow)
                    sel[b * M + start, b * Mp + q] = 1.0

    shifts = np.zeros((27, bp * Mp, bp * Mp), np.float32)
    t = 0
    for kd in range(3):
        for kh in range(3):
            for kw in range(3):
                od, oh, ow = kd - 1, kh - 1, kw - 1
                for b in range(bp):
                    for qd in range(Dp):
                        for qh in range(Hp):
                            for qw in range(Wp):
                                pd, ph, pw = qd + od, qh + oh, qw + ow
                                if 0 <= pd < Dp and 0 <= ph < Hp and 0 <= pw < Wp:
                                    p = (pd * Hp + ph) * Wp + pw
                                    q = (qd * Hp + qh) * Wp + qw
                                    shifts[t, b * Mp + p, b * Mp + q] = 1.0
                t += 1
    return sel, shifts


# ---------------------------------------------------------------------------
# Fused forward kernel (one grid step == one lane-packed group of bp samples)
# ---------------------------------------------------------------------------
def _vgg_fused_kernel(xcol_ref, w1_ref, bnb_ref, w2_ref, w3_ref, w4_ref,
                      sel_ref, sh_ref, wf_ref, bf_ref, o_ref, *, dims, bp, mp):
    _, H, W = dims
    f32 = jnp.float32
    bf16 = jnp.bfloat16

    # ---- conv1 (K-stacked im2col matmul) + per-channel BN + ReLU ------------
    a1 = jnp.dot(w1_ref[...], xcol_ref[0], preferred_element_type=f32)
    a1 = jnp.maximum(a1 + bnb_ref[...], 0.0)            # (8, bp*M)  f32

    # ---- 3x3x3 / stride-2 max pool: separable (6 rolls) + one-hot gather ----
    # Wrapped / cross-sample taps are never selected: `sel` only gathers
    # window starts whose full 3x3x3 window is in-bounds within its sample.
    L = a1.shape[1]
    r = a1
    for (o1, o2) in ((1, 2), (W, 2 * W), (H * W, 2 * H * W)):
        base = r
        r = jnp.maximum(base, pltpu.roll(base, L - o1, 1))
        r = jnp.maximum(r, pltpu.roll(base, L - o2, 1))
    pooled = jnp.dot(r.astype(bf16), sel_ref[...],
                     preferred_element_type=f32)        # (8, bp*Mp) f32

    # ---- conv2 / conv3 / conv4 (3x3x3, SAME) + ReLU, K-stacked --------------
    def conv_block(xin, w_ref):
        xb = xin.astype(bf16)
        parts = [jnp.dot(xb, sh_ref[t], preferred_element_type=f32)
                 for t in range(27)]                    # 27 shifted copies
        stacked = jnp.concatenate(parts, axis=0).astype(bf16)  # (27*cin, bp*Mp)
        out = jnp.dot(w_ref[...], stacked, preferred_element_type=f32)
        return jnp.maximum(out, 0.0)

    a2 = conv_block(pooled, w2_ref)                     # (8,  bp*Mp)
    a3 = conv_block(a2, w3_ref)                         # (16, bp*Mp)
    a4 = conv_block(a3, w4_ref)                         # (16, bp*Mp)

    # ---- per-sample global average pool + final linear (lane-padded 128) ----
    rows = []
    inv = 1.0 / mp
    for b in range(bp):
        feat = jnp.sum(a4[:, b * mp:(b + 1) * mp], axis=1, keepdims=True) * inv
        rows.append(jnp.sum(wf_ref[...] * feat, axis=0, keepdims=True)
                    + bf_ref[...])                      # (1, 128)
    o_ref[0] = jnp.concatenate(rows, axis=0)            # (bp, 128)


# ---------------------------------------------------------------------------
# Parameters + forward wrapper
# ---------------------------------------------------------------------------
def init_params(key, in_channels, out_channels):
    ks = jax.random.split(key, 6)

    def conv_w(k, cin, cout):
        # Minkowski kernel (27, cin, cout), kaiming_normal_(fan_out, relu);
        # stored as (27, cout, cin).
        fan_out = 27 * cout
        std = (2.0 / fan_out) ** 0.5
        return jax.random.normal(k, (27, cout, cin), jnp.float32) * std

    bound = 1.0 / (16.0 ** 0.5)
    return {
        "conv1_w": conv_w(ks[0], in_channels, 8),
        "conv2_w": conv_w(ks[1], 8, 8),
        "conv3_w": conv_w(ks[2], 8, 16),
        "conv4_w": conv_w(ks[3], 16, 16),
        # eval-mode BatchNorm after conv1 (module init: gamma=1, beta=0)
        "bn1_gamma": jnp.ones((8,), jnp.float32),
        "bn1_beta": jnp.zeros((8,), jnp.float32),
        "bn1_mean": jnp.zeros((8,), jnp.float32),
        "bn1_var": jnp.ones((8,), jnp.float32),
        "final_w": jax.random.uniform(ks[4], (16, out_channels), jnp.float32,
                                      -bound, bound),
        "final_b": jax.random.uniform(ks[5], (out_channels,), jnp.float32,
                                      -bound, bound),
    }


def vggnet_forward(params, x_ncdhw, samples_per_step=None):
    """x_ncdhw: (N, C, D, H, W) as in the PyTorch/Minkowski reference."""
    N, Cin, D, H, W = x_ncdhw.shape
    M = D * H * W
    Dp, Hp, Wp = (D - 3) // 2 + 1, (H - 3) // 2 + 1, (W - 3) // 2 + 1
    Mp = Dp * Hp * Wp

    num_classes = params["final_b"].shape[0]
    assert num_classes <= 128

    # Lane-pack bp samples per grid step (post-pool grid is only Mp=27 lanes
    # per sample). For v7x, choosing bp = ceil(N/2) keeps grid=2 (one step per
    # TensorCore); on single-TC v5e/v6e larger packing is strictly better.
    bp = samples_per_step if samples_per_step is not None else min(N, 4)
    G = -(-N // bp)
    Npad = G * bp
    L, PB = bp * M, bp * Mp
    K1 = 27 * Cin

    # ---- im2col for conv1 (SAME zero pad) done by XLA in the wrapper --------
    x = x_ncdhw.astype(jnp.float32)
    xp = jnp.pad(x, ((0, 0), (0, 0), (1, 1), (1, 1), (1, 1)))
    cols = [xp[:, :, kd:kd + D, kh:kh + H, kw:kw + W]
            for kd in range(3) for kh in range(3) for kw in range(3)]
    xcol = jnp.stack(cols, axis=1).reshape(N, K1, M)          # K idx = t*Cin+ci
    if Npad > N:
        xcol = jnp.pad(xcol, ((0, Npad - N), (0, 0), (0, 0)))
    xcol = (xcol.reshape(G, bp, K1, M).transpose(0, 2, 1, 3)
            .reshape(G, K1, L).astype(jnp.bfloat16))

    # ---- host-precomputed one-hot constants (bf16 is exact for 0/1) ---------
    sel_np, sh_np = _pool_and_shift_constants(D, H, W, bp)
    sel = jnp.asarray(sel_np, jnp.bfloat16)                   # (L, PB)
    shifts = jnp.asarray(sh_np, jnp.bfloat16)                 # (27, PB, PB)

    # ---- host-reshaped weights; BN folded as per-channel scale + bias -------
    bn_scale = params["bn1_gamma"] / jnp.sqrt(params["bn1_var"] + 1e-5)
    bn_bias = params["bn1_beta"] - params["bn1_mean"] * bn_scale
    w1flat = (params["conv1_w"].transpose(1, 0, 2).reshape(8, K1)
              * bn_scale[:, None]).astype(jnp.bfloat16)
    bnb = bn_bias.reshape(8, 1).astype(jnp.float32)

    def flat_w(w):  # (27, cout, cin) -> (cout, 27*cin), K index = tap*cin + ci
        cout, cin = w.shape[1], w.shape[2]
        return w.transpose(1, 0, 2).reshape(cout, 27 * cin).astype(jnp.bfloat16)

    w2f = flat_w(params["conv2_w"])
    w3f = flat_w(params["conv3_w"])
    w4f = flat_w(params["conv4_w"])

    wf = jnp.zeros((16, 128), jnp.float32)
    wf = wf.at[:, :num_classes].set(params["final_w"].astype(jnp.float32))
    bf = jnp.zeros((1, 128), jnp.float32)
    bf = bf.at[0, :num_classes].set(params["final_b"].astype(jnp.float32))

    kernel = functools.partial(_vgg_fused_kernel, dims=(D, H, W), bp=bp, mp=Mp)
    out = pl.pallas_call(
        kernel,
        out_shape=jax.ShapeDtypeStruct((G, bp, 128), jnp.float32),
        grid=(G,),
        in_specs=[
            pl.BlockSpec((1, K1, L), lambda g: (g, 0, 0)),
            pl.BlockSpec(w1flat.shape, lambda g: (0, 0)),
            pl.BlockSpec(bnb.shape, lambda g: (0, 0)),
            pl.BlockSpec(w2f.shape, lambda g: (0, 0)),
            pl.BlockSpec(w3f.shape, lambda g: (0, 0)),
            pl.BlockSpec(w4f.shape, lambda g: (0, 0)),
            pl.BlockSpec(sel.shape, lambda g: (0, 0)),
            pl.BlockSpec(shifts.shape, lambda g: (0, 0, 0)),
            pl.BlockSpec(wf.shape, lambda g: (0, 0)),
            pl.BlockSpec(bf.shape, lambda g: (0, 0)),
        ],
        out_specs=pl.BlockSpec((1, bp, 128), lambda g: (g, 0, 0)),
        compiler_params=pltpu.CompilerParams(
            dimension_semantics=("parallel",)),
        # TODO(synk): on v7x, explicit core sharding (pltpu.CORE_PARALLEL /
        # core_map) would guarantee the two TensorCores each take half the
        # groups; "parallel" is kept here for portability.
    )(xcol, w1flat, bnb, w2f, w3f, w4f, sel, shifts, wf, bf)

    return out.reshape(G * bp, 128)[:N, :num_classes]
    # TODO(synk): layer1..layer4 / conv5 / bn5 / glob_avg / final module
    # attributes are undefined in the reference (BLOCK=None, LAYERS=()); the
    # defined conv2->conv3->conv4 stack (each + ReLU) followed by global
    # average pooling and a linear head stands in for them, as before.


if __name__ == "__main__":
    key = jax.random.PRNGKey(0)
    kx, kp = jax.random.split(key)
    in_channels, out_channels = 4, 10
    # small NCDHW input: batch=2, channels=4, spatial=8^3
    x = jax.random.normal(kx, (2, in_channels, 8, 8, 8), jnp.float32)
    params = init_params(kp, in_channels, out_channels)

    out = jax.jit(vggnet_forward)(params, x)
    jax.block_until_ready(out)
    assert out.shape == (2, out_channels)
    assert jnp.all(jnp.isfinite(out))
    print("KERNEL_OK")
</pallas_src>

<mosaic_0001>
module attributes {stable_mosaic.version = 11 : i64} {
  func.func @_vgg_fused_kernel(%arg0: i32, %arg1: memref<1x108x1024xbf16, #tpu.memory_space<vmem>>, %arg2: memref<8x108xbf16, #tpu.memory_space<vmem>>, %arg3: memref<8x1xf32, #tpu.memory_space<vmem>>, %arg4: memref<8x216xbf16, #tpu.memory_space<vmem>>, %arg5: memref<16x216xbf16, #tpu.memory_space<vmem>>, %arg6: memref<16x432xbf16, #tpu.memory_space<vmem>>, %arg7: memref<1024x54xbf16, #tpu.memory_space<vmem>>, %arg8: memref<27x54x54xbf16, #tpu.memory_space<vmem>>, %arg9: memref<16x128xf32, #tpu.memory_space<vmem>>, %arg10: memref<1x128xf32, #tpu.memory_space<vmem>>, %arg11: memref<1x2x128xf32, #tpu.memory_space<vmem>>) attributes {dimension_semantics = [#tpu.dimension_semantics<parallel>], iteration_bounds = array<i64: 1>, scalar_prefetch = 0 : i64, scratch_operands = 0 : i64, tpu.core_type = #tpu.core_type<tc>, window_params = [{transform_indices = @transform_0, window_bounds = array<i64: 1, 108, 1024>}, {pipeline_mode = #tpu.pipeline_mode<synchronous>, transform_indices = @transform_1, window_bounds = array<i64: 8, 108>}, {pipeline_mode = #tpu.pipeline_mode<synchronous>, transform_indices = @transform_2, window_bounds = array<i64: 8, 1>}, {pipeline_mode = #tpu.pipeline_mode<synchronous>, transform_indices = @transform_3, window_bounds = array<i64: 8, 216>}, {pipeline_mode = #tpu.pipeline_mode<synchronous>, transform_indices = @transform_4, window_bounds = array<i64: 16, 216>}, {pipeline_mode = #tpu.pipeline_mode<synchronous>, transform_indices = @transform_5, window_bounds = array<i64: 16, 432>}, {pipeline_mode = #tpu.pipeline_mode<synchronous>, transform_indices = @transform_6, window_bounds = array<i64: 1024, 54>}, {pipeline_mode = #tpu.pipeline_mode<synchronous>, transform_indices = @transform_7, window_bounds = array<i64: 27, 54, 54>}, {pipeline_mode = #tpu.pipeline_mode<synchronous>, transform_indices = @transform_8, window_bounds = array<i64: 16, 128>}, {pipeline_mode = #tpu.pipeline_mode<synchronous>, transform_indices = @transform_9, window_bounds = array<i64: 1, 128>}, {transform_indices = @transform_10, window_bounds = array<i64: 1, 2, 128>}]} {
    %c0 = arith.constant 0 : index
    %c0_0 = arith.constant 0 : index
    %0 = vector.load %arg2[%c0, %c0_0] : memref<8x108xbf16, #tpu.memory_space<vmem>>, vector<8x108xbf16>
    %c0_1 = arith.constant 0 : index
    %c0_2 = arith.constant 0 : index
    %c0_3 = arith.constant 0 : index
    %1 = vector.load %arg1[%c0_1, %c0_2, %c0_3] : memref<1x108x1024xbf16, #tpu.memory_space<vmem>>, vector<1x108x1024xbf16>
    %2 = vector.shape_cast %1 : vector<1x108x1024xbf16> to vector<108x1024xbf16>
    %cst = arith.constant dense<0.000000e+00> : vector<8x1024xf32>
    %3 = tpu.matmul %0, %2, %cst {dimension_numbers = #tpu.dot_dimension_numbers<[1], [0], [0], [1], [0, 0, 1, 1], [], []>} : vector<8x108xbf16>, vector<108x1024xbf16>, vector<8x1024xf32> -> vector<8x1024xf32>
    %c0_4 = arith.constant 0 : index
    %c0_5 = arith.constant 0 : index
    %4 = vector.load %arg3[%c0_4, %c0_5] : memref<8x1xf32, #tpu.memory_space<vmem>>, vector<8x1xf32>
    %5 = vector.broadcast %4 : vector<8x1xf32> to vector<8x1024xf32>
    %6 = arith.addf %3, %5 : vector<8x1024xf32>
    %cst_6 = arith.constant 0.000000e+00 : f32
    %7 = vector.broadcast %cst_6 : f32 to vector<8x1024xf32>
    %8 = arith.maximumf %6, %7 : vector<8x1024xf32>
    %c1023_i32 = arith.constant 1023 : i32
    %9 = tpu.dynamic_rotate %8 by %c1023_i32 dim 1 : vector<8x1024xf32>, i32 -> vector<8x1024xf32>
    %10 = arith.maximumf %8, %9 : vector<8x1024xf32>
    %c1022_i32 = arith.constant 1022 : i32
    %11 = tpu.dynamic_rotate %8 by %c1022_i32 dim 1 : vector<8x1024xf32>, i32 -> vector<8x1024xf32>
    %12 = arith.maximumf %10, %11 : vector<8x1024xf32>
    %c1016_i32 = arith.constant 1016 : i32
    %13 = tpu.dynamic_rotate %12 by %c1016_i32 dim 1 : vector<8x1024xf32>, i32 -> vector<8x1024xf32>
    %14 = arith.maximumf %12, %13 : vector<8x1024xf32>
    %c1008_i32 = arith.constant 1008 : i32
    %15 = tpu.dynamic_rotate %12 by %c1008_i32 dim 1 : vector<8x1024xf32>, i32 -> vector<8x1024xf32>
    %16 = arith.maximumf %14, %15 : vector<8x1024xf32>
    %c960_i32 = arith.constant 960 : i32
    %17 = tpu.dynamic_rotate %16 by %c960_i32 dim 1 : vector<8x1024xf32>, i32 -> vector<8x1024xf32>
    %18 = arith.maximumf %16, %17 : vector<8x1024xf32>
    %c896_i32 = arith.constant 896 : i32
    %19 = tpu.dynamic_rotate %16 by %c896_i32 dim 1 : vector<8x1024xf32>, i32 -> vector<8x1024xf32>
    %20 = arith.maximumf %18, %19 : vector<8x1024xf32>
    %21 = arith.truncf %20 : vector<8x1024xf32> to vector<8x1024xbf16>
    %c0_7 = arith.constant 0 : index
    %c0_8 = arith.constant 0 : index
    %22 = vector.load %arg7[%c0_7, %c0_8] : memref<1024x54xbf16, #tpu.memory_space<vmem>>, vector<1024x54xbf16>
    %cst_9 = arith.constant dense<0.000000e+00> : vector<8x54xf32>
    %23 = tpu.matmul %21, %22, %cst_9 {dimension_numbers = #tpu.dot_dimension_numbers<[1], [0], [0], [1], [0, 0, 1, 1], [], []>} : vector<8x1024xbf16>, vector<1024x54xbf16>, vector<8x54xf32> -> vector<8x54xf32>
    %24 = arith.truncf %23 : vector<8x54xf32> to vector<8x54xbf16>
    %c0_10 = arith.constant 0 : index
    %c0_11 = arith.constant 0 : index
    %c0_12 = arith.constant 0 : index
    %25 = vector.load %arg8[%c0_10, %c0_11, %c0_12] : memref<27x54x54xbf16, #tpu.memory_space<vmem>>, vector<1x54x54xbf16>
    %26 = vector.shape_cast %25 : vector<1x54x54xbf16> to vector<54x54xbf16>
    %cst_13 = arith.constant dense<0.000000e+00> : vector<8x54xf32>
    %27 = tpu.matmul %24, %26, %cst_13 {dimension_numbers = #tpu.dot_dimension_numbers<[1], [0], [0], [1], [0, 0, 1, 1], [], []>} : vector<8x54xbf16>, vector<54x54xbf16>, vector<8x54xf32> -> vector<8x54xf32>
    %c1 = arith.constant 1 : index
    %c0_14 = arith.constant 0 : index
    %c0_15 = arith.constant 0 : index
    %28 = vector.load %arg8[%c1, %c0_14, %c0_15] : memref<27x54x54xbf16, #tpu.memory_space<vmem>>, vector<1x54x54xbf16>
    %29 = vector.shape_cast %28 : vector<1x54x54xbf16> to vector<54x54xbf16>
    %cst_16 = arith.constant dense<0.000000e+00> : vector<8x54xf32>
    %30 = tpu.matmul %24, %29, %cst_16 {dimension_numbers = #tpu.dot_dimension_numbers<[1], [0], [0], [1], [0, 0, 1, 1], [], []>} : vector<8x54xbf16>, vector<54x54xbf16>, vector<8x54xf32> -> vector<8x54xf32>
    %c2 = arith.constant 2 : index
    %c0_17 = arith.constant 0 : index
    %c0_18 = arith.constant 0 : index
    %31 = vector.load %arg8[%c2, %c0_17, %c0_18] : memref<27x54x54xbf16, #tpu.memory_space<vmem>>, vector<1x54x54xbf16>
    %32 = vector.shape_cast %31 : vector<1x54x54xbf16> to vector<54x54xbf16>
    %cst_19 = arith.constant dense<0.000000e+00> : vector<8x54xf32>
    %33 = tpu.matmul %24, %32, %cst_19 {dimension_numbers = #tpu.dot_dimension_numbers<[1], [0], [0], [1], [0, 0, 1, 1], [], []>} : vector<8x54xbf16>, vector<54x54xbf16>, vector<8x54xf32> -> vector<8x54xf32>
    %c3 = arith.constant 3 : index
    %c0_20 = arith.constant 0 : index
    %c0_21 = arith.constant 0 : index
    %34 = vector.load %arg8[%c3, %c0_20, %c0_21] : memref<27x54x54xbf16, #tpu.memory_space<vmem>>, vector<1x54x54xbf16>
    %35 = vector.shape_cast %34 : vector<1x54x54xbf16> to vector<54x54xbf16>
    %cst_22 = arith.constant dense<0.000000e+00> : vector<8x54xf32>
    %36 = tpu.matmul %24, %35, %cst_22 {dimension_numbers = #tpu.dot_dimension_numbers<[1], [0], [0], [1], [0, 0, 1, 1], [], []>} : vector<8x54xbf16>, vector<54x54xbf16>, vector<8x54xf32> -> vector<8x54xf32>
    %c4 = arith.constant 4 : index
    %c0_23 = arith.constant 0 : index
    %c0_24 = arith.constant 0 : index
    %37 = vector.load %arg8[%c4, %c0_23, %c0_24] : memref<27x54x54xbf16, #tpu.memory_space<vmem>>, vector<1x54x54xbf16>
    %38 = vector.shape_cast %37 : vector<1x54x54xbf16> to vector<54x54xbf16>
    %cst_25 = arith.constant dense<0.000000e+00> : vector<8x54xf32>
    %39 = tpu.matmul %24, %38, %cst_25 {dimension_numbers = #tpu.dot_dimension_numbers<[1], [0], [0], [1], [0, 0, 1, 1], [], []>} : vector<8x54xbf16>, vector<54x54xbf16>, vector<8x54xf32> -> vector<8x54xf32>
    %c5 = arith.constant 5 : index
    %c0_26 = arith.constant 0 : index
    %c0_27 = arith.constant 0 : index
    %40 = vector.load %arg8[%c5, %c0_26, %c0_27] : memref<27x54x54xbf16, #tpu.memory_space<vmem>>, vector<1x54x54xbf16>
    %41 = vector.shape_cast %40 : vector<1x54x54xbf16> to vector<54x54xbf16>
    %cst_28 = arith.constant dense<0.000000e+00> : vector<8x54xf32>
    %42 = tpu.matmul %24, %41, %cst_28 {dimension_numbers = #tpu.dot_dimension_numbers<[1], [0], [0], [1], [0, 0, 1, 1], [], []>} : vector<8x54xbf16>, vector<54x54xbf16>, vector<8x54xf32> -> vector<8x54xf32>
    %c6 = arith.constant 6 : index
    %c0_29 = arith.constant 0 : index
    %c0_30 = arith.constant 0 : index
    %43 = vector.load %arg8[%c6, %c0_29, %c0_30] : memref<27x54x54xbf16, #tpu.memory_space<vmem>>, vector<1x54x54xbf16>
    %44 = vector.shape_cast %43 : vector<1x54x54xbf16> to vector<54x54xbf16>
    %cst_31 = arith.constant dense<0.000000e+00> : vector<8x54xf32>
    %45 = tpu.matmul %24, %44, %cst_31 {dimension_numbers = #tpu.dot_dimension_numbers<[1], [0], [0], [1], [0, 0, 1, 1], [], []>} : vector<8x54xbf16>, vector<54x54xbf16>, vector<8x54xf32> -> vector<8x54xf32>
    %c7 = arith.constant 7 : index
    %c0_32 = arith.constant 0 : index
    %c0_33 = arith.constant 0 : index
    %46 = vector.load %arg8[%c7, %c0_32, %c0_33] : memref<27x54x54xbf16, #tpu.memory_space<vmem>>, vector<1x54x54xbf16>
    %47 = vector.shape_cast %46 : vector<1x54x54xbf16> to vector<54x54xbf16>
    %cst_34 = arith.constant dense<0.000000e+00> : vector<8x54xf32>
    %48 = tpu.matmul %24, %47, %cst_34 {dimension_numbers = #tpu.dot_dimension_numbers<[1], [0], [0], [1], [0, 0, 1, 1], [], []>} : vector<8x54xbf16>, vector<54x54xbf16>, vector<8x54xf32> -> vector<8x54xf32>
    %c8 = arith.constant 8 : index
    %c0_35 = arith.constant 0 : index
    %c0_36 = arith.constant 0 : index
    %49 = vector.load %arg8[%c8, %c0_35, %c0_36] : memref<27x54x54xbf16, #tpu.memory_space<vmem>>, vector<1x54x54xbf16>
    %50 = vector.shape_cast %49 : vector<1x54x54xbf16> to vector<54x54xbf16>
    %cst_37 = arith.constant dense<0.000000e+00> : vector<8x54xf32>
    %51 = tpu.matmul %24, %50, %cst_37 {dimension_numbers = #tpu.dot_dimension_numbers<[1], [0], [0], [1], [0, 0, 1, 1], [], []>} : vector<8x54xbf16>, vector<54x54xbf16>, vector<8x54xf32> -> vector<8x54xf32>
    %c9 = arith.constant 9 : index
    %c0_38 = arith.constant 0 : index
    %c0_39 = arith.constant 0 : index
    %52 = vector.load %arg8[%c9, %c0_38, %c0_39] : memref<27x54x54xbf16, #tpu.memory_space<vmem>>, vector<1x54x54xbf16>
    %53 = vector.shape_cast %52 : vector<1x54x54xbf16> to vector<54x54xbf16>
    %cst_40 = arith.constant dense<0.000000e+00> : vector<8x54xf32>
    %54 = tpu.matmul %24, %53, %cst_40 {dimension_numbers = #tpu.dot_dimension_numbers<[1], [0], [0], [1], [0, 0, 1, 1], [], []>} : vector<8x54xbf16>, vector<54x54xbf16>, vector<8x54xf32> -> vector<8x54xf32>
    %c10 = arith.constant 10 : index
    %c0_41 = arith.constant 0 : index
    %c0_42 = arith.constant 0 : index
    %55 = vector.load %arg8[%c10, %c0_41, %c0_42] : memref<27x54x54xbf16, #tpu.memory_space<vmem>>, vector<1x54x54xbf16>
    %56 = vector.shape_cast %55 : vector<1x54x54xbf16> to vector<54x54xbf16>
    %cst_43 = arith.constant dense<0.000000e+00> : vector<8x54xf32>
    %57 = tpu.matmul %24, %56, %cst_43 {dimension_numbers = #tpu.dot_dimension_numbers<[1], [0], [0], [1], [0, 0, 1, 1], [], []>} : vector<8x54xbf16>, vector<54x54xbf16>, vector<8x54xf32> -> vector<8x54xf32>
    %c11 = arith.constant 11 : index
    %c0_44 = arith.constant 0 : index
    %c0_45 = arith.constant 0 : index
    %58 = vector.load %arg8[%c11, %c0_44, %c0_45] : memref<27x54x54xbf16, #tpu.memory_space<vmem>>, vector<1x54x54xbf16>
    %59 = vector.shape_cast %58 : vector<1x54x54xbf16> to vector<54x54xbf16>
    %cst_46 = arith.constant dense<0.000000e+00> : vector<8x54xf32>
    %60 = tpu.matmul %24, %59, %cst_46 {dimension_numbers = #tpu.dot_dimension_numbers<[1], [0], [0], [1], [0, 0, 1, 1], [], []>} : vector<8x54xbf16>, vector<54x54xbf16>, vector<8x54xf32> -> vector<8x54xf32>
    %c12 = arith.constant 12 : index
    %c0_47 = arith.constant 0 : index
    %c0_48 = arith.constant 0 : index
    %61 = vector.load %arg8[%c12, %c0_47, %c0_48] : memref<27x54x54xbf16, #tpu.memory_space<vmem>>, vector<1x54x54xbf16>
    %62 = vector.shape_cast %61 : vector<1x54x54xbf16> to vector<54x54xbf16>
    %cst_49 = arith.constant dense<0.000000e+00> : vector<8x54xf32>
    %63 = tpu.matmul %24, %62, %cst_49 {dimension_numbers = #tpu.dot_dimension_numbers<[1], [0], [0], [1], [0, 0, 1, 1], [], []>} : vector<8x54xbf16>, vector<54x54xbf16>, vector<8x54xf32> -> vector<8x54xf32>
    %c13 = arith.constant 13 : index
    %c0_50 = arith.constant 0 : index
    %c0_51 = arith.constant 0 : index
    %64 = vector.load %arg8[%c13, %c0_50, %c0_51] : memref<27x54x54xbf16, #tpu.memory_space<vmem>>, vector<1x54x54xbf16>
    %65 = vector.shape_cast %64 : vector<1x54x54xbf16> to vector<54x54xbf16>
    %cst_52 = arith.constant dense<0.000000e+00> : vector<8x54xf32>
    %66 = tpu.matmul %24, %65, %cst_52 {dimension_numbers = #tpu.dot_dimension_numbers<[1], [0], [0], [1], [0, 0, 1, 1], [], []>} : vector<8x54xbf16>, vector<54x54xbf16>, vector<8x54xf32> -> vector<8x54xf32>
    %c14 = arith.constant 14 : index
    %c0_53 = arith.constant 0 : index
    %c0_54 = arith.constant 0 : index
    %67 = vector.load %arg8[%c14, %c0_53, %c0_54] : memref<27x54x54xbf16, #tpu.memory_space<vmem>>, vector<1x54x54xbf16>
    %68 = vector.shape_cast %67 : vector<1x54x54xbf16> to vector<54x54xbf16>
    %cst_55 = arith.constant dense<0.000000e+00> : vector<8x54xf32>
    %69 = tpu.matmul %24, %68, %cst_55 {dimension_numbers = #tpu.dot_dimension_numbers<[1], [0], [0], [1], [0, 0, 1, 1], [], []>} : vector<8x54xbf16>, vector<54x54xbf16>, vector<8x54xf32> -> vector<8x54xf32>
    %c15 = arith.constant 15 : index
    %c0_56 = arith.constant 0 : index
    %c0_57 = arith.constant 0 : index
    %70 = vector.load %arg8[%c15, %c0_56, %c0_57] : memref<27x54x54xbf16, #tpu.memory_space<vmem>>, vector<1x54x54xbf16>
    %71 = vector.shape_cast %70 : vector<1x54x54xbf16> to vector<54x54xbf16>
    %cst_58 = arith.constant dense<0.000000e+00> : vector<8x54xf32>
    %72 = tpu.matmul %24, %71, %cst_58 {dimension_numbers = #tpu.dot_dimension_numbers<[1], [0], [0], [1], [0, 0, 1, 1], [], []>} : vector<8x54xbf16>, vector<54x54xbf16>, vector<8x54xf32> -> vector<8x54xf32>
    %c16 = arith.constant 16 : index
    %c0_59 = arith.constant 0 : index
    %c0_60 = arith.constant 0 : index
    %73 = vector.load %arg8[%c16, %c0_59, %c0_60] : memref<27x54x54xbf16, #tpu.memory_space<vmem>>, vector<1x54x54xbf16>
    %74 = vector.shape_cast %73 : vector<1x54x54xbf16> to vector<54x54xbf16>
    %cst_61 = arith.constant dense<0.000000e+00> : vector<8x54xf32>
    %75 = tpu.matmul %24, %74, %cst_61 {dimension_numbers = #tpu.dot_dimension_numbers<[1], [0], [0], [1], [0, 0, 1, 1], [], []>} : vector<8x54xbf16>, vector<54x54xbf16>, vector<8x54xf32> -> vector<8x54xf32>
    %c17 = arith.constant 17 : index
    %c0_62 = arith.constant 0 : index
    %c0_63 = arith.constant 0 : index
    %76 = vector.load %arg8[%c17, %c0_62, %c0_63] : memref<27x54x54xbf16, #tpu.memory_space<vmem>>, vector<1x54x54xbf16>
    %77 = vector.shape_cast %76 : vector<1x54x54xbf16> to vector<54x54xbf16>
    %cst_64 = arith.constant dense<0.000000e+00> : vector<8x54xf32>
    %78 = tpu.matmul %24, %77, %cst_64 {dimension_numbers = #tpu.dot_dimension_numbers<[1], [0], [0], [1], [0, 0, 1, 1], [], []>} : vector<8x54xbf16>, vector<54x54xbf16>, vector<8x54xf32> -> vector<8x54xf32>
    %c18 = arith.constant 18 : index
    %c0_65 = arith.constant 0 : index
    %c0_66 = arith.constant 0 : index
    %79 = vector.load %arg8[%c18, %c0_65, %c0_66] : memref<27x54x54xbf16, #tpu.memory_space<vmem>>, vector<1x54x54xbf16>
    %80 = vector.shape_cast %79 : vector<1x54x54xbf16> to vector<54x54xbf16>
    %cst_67 = arith.constant dense<0.000000e+00> : vector<8x54xf32>
    %81 = tpu.matmul %24, %80, %cst_67 {dimension_numbers = #tpu.dot_dimension_numbers<[1], [0], [0], [1], [0, 0, 1, 1], [], []>} : vector<8x54xbf16>, vector<54x54xbf16>, vector<8x54xf32> -> vector<8x54xf32>
    %c19 = arith.constant 19 : index
    %c0_68 = arith.constant 0 : index
    %c0_69 = arith.constant 0 : index
    %82 = vector.load %arg8[%c19, %c0_68, %c0_69] : memref<27x54x54xbf16, #tpu.memory_space<vmem>>, vector<1x54x54xbf16>
    %83 = vector.shape_cast %82 : vector<1x54x54xbf16> to vector<54x54xbf16>
    %cst_70 = arith.constant dense<0.000000e+00> : vector<8x54xf32>
    %84 = tpu.matmul %24, %83, %cst_70 {dimension_numbers = #tpu.dot_dimension_numbers<[1], [0], [0], [1], [0, 0, 1, 1], [], []>} : vector<8x54xbf16>, vector<54x54xbf16>, vector<8x54xf32> -> vector<8x54xf32>
    %c20 = arith.constant 20 : index
    %c0_71 = arith.constant 0 : index
    %c0_72 = arith.constant 0 : index
    %85 = vector.load %arg8[%c20, %c0_71, %c0_72] : memref<27x54x54xbf16, #tpu.memory_space<vmem>>, vector<1x54x54xbf16>
    %86 = vector.shape_cast %85 : vector<1x54x54xbf16> to vector<54x54xbf16>
    %cst_73 = arith.constant dense<0.000000e+00> : vector<8x54xf32>
    %87 = tpu.matmul %24, %86, %cst_73 {dimension_numbers = #tpu.dot_dimension_numbers<[1], [0], [0], [1], [0, 0, 1, 1], [], []>} : vector<8x54xbf16>, vector<54x54xbf16>, vector<8x54xf32> -> vector<8x54xf32>
    %c21 = arith.constant 21 : index
    %c0_74 = arith.constant 0 : index
    %c0_75 = arith.constant 0 : index
    %88 = vector.load %arg8[%c21, %c0_74, %c0_75] : memref<27x54x54xbf16, #tpu.memory_space<vmem>>, vector<1x54x54xbf16>
    %89 = vector.shape_cast %88 : vector<1x54x54xbf16> to vector<54x54xbf16>
    %cst_76 = arith.constant dense<0.000000e+00> : vector<8x54xf32>
    %90 = tpu.matmul %24, %89, %cst_76 {dimension_numbers = #tpu.dot_dimension_numbers<[1], [0], [0], [1], [0, 0, 1, 1], [], []>} : vector<8x54xbf16>, vector<54x54xbf16>, vector<8x54xf32> -> vector<8x54xf32>
    %c22 = arith.constant 22 : index
    %c0_77 = arith.constant 0 : index
    %c0_78 = arith.constant 0 : index
    %91 = vector.load %arg8[%c22, %c0_77, %c0_78] : memref<27x54x54xbf16, #tpu.memory_space<vmem>>, vector<1x54x54xbf16>
    %92 = vector.shape_cast %91 : vector<1x54x54xbf16> to vector<54x54xbf16>
    %cst_79 = arith.constant dense<0.000000e+00> : vector<8x54xf32>
    %93 = tpu.matmul %24, %92, %cst_79 {dimension_numbers = #tpu.dot_dimension_numbers<[1], [0], [0], [1], [0, 0, 1, 1], [], []>} : vector<8x54xbf16>, vector<54x54xbf16>, vector<8x54xf32> -> vector<8x54xf32>
    %c23 = arith.constant 23 : index
    %c0_80 = arith.constant 0 : index
    %c0_81 = arith.constant 0 : index
    %94 = vector.load %arg8[%c23, %c0_80, %c0_81] : memref<27x54x54xbf16, #tpu.memory_space<vmem>>, vector<1x54x54xbf16>
    %95 = vector.shape_cast %94 : vector<1x54x54xbf16> to vector<54x54xbf16>
    %cst_82 = arith.constant dense<0.000000e+00> : vector<8x54xf32>
    %96 = tpu.matmul %24, %95, %cst_82 {dimension_numbers = #tpu.dot_dimension_numbers<[1], [0], [0], [1], [0, 0, 1, 1], [], []>} : vector<8x54xbf16>, vector<54x54xbf16>, vector<8x54xf32> -> vector<8x54xf32>
    %c24 = arith.constant 24 : index
    %c0_83 = arith.constant 0 : index
    %c0_84 = arith.constant 0 : index
    %97 = vector.load %arg8[%c24, %c0_83, %c0_84] : memref<27x54x54xbf16, #tpu.memory_space<vmem>>, vector<1x54x54xbf16>
    %98 = vector.shape_cast %97 : vector<1x54x54xbf16> to vector<54x54xbf16>
    %cst_85 = arith.constant dense<0.000000e+00> : vector<8x54xf32>
    %99 = tpu.matmul %24, %98, %cst_85 {dimension_numbers = #tpu.dot_dimension_numbers<[1], [0], [0], [1], [0, 0, 1, 1], [], []>} : vector<8x54xbf16>, vector<54x54xbf16>, vector<8x54xf32> -> vector<8x54xf32>
    %c25 = arith.constant 25 : index
    %c0_86 = arith.constant 0 : index
    %c0_87 = arith.constant 0 : index
    %100 = vector.load %arg8[%c25, %c0_86, %c0_87] : memref<27x54x54xbf16, #tpu.memory_space<vmem>>, vector<1x54x54xbf16>
    %101 = vector.shape_cast %100 : vector<1x54x54xbf16> to vector<54x54xbf16>
    %cst_88 = arith.constant dense<0.000000e+00> : vector<8x54xf32>
    %102 = tpu.matmul %24, %101, %cst_88 {dimension_numbers = #tpu.dot_dimension_numbers<[1], [0], [0], [1], [0, 0, 1, 1], [], []>} : vector<8x54xbf16>, vector<54x54xbf16>, vector<8x54xf32> -> vector<8x54xf32>
    %c26 = arith.constant 26 : index
    %c0_89 = arith.constant 0 : index
    %c0_90 = arith.constant 0 : index
    %103 = vector.load %arg8[%c26, %c0_89, %c0_90] : memref<27x54x54xbf16, #tpu.memory_space<vmem>>, vector<1x54x54xbf16>
    %104 = vector.shape_cast %103 : vector<1x54x54xbf16> to vector<54x54xbf16>
    %cst_91 = arith.constant dense<0.000000e+00> : vector<8x54xf32>
    %105 = tpu.matmul %24, %104, %cst_91 {dimension_numbers = #tpu.dot_dimension_numbers<[1], [0], [0], [1], [0, 0, 1, 1], [], []>} : vector<8x54xbf16>, vector<54x54xbf16>, vector<8x54xf32> -> vector<8x54xf32>
    %106 = tpu.concatenate %27, %30, %33, %36, %39, %42, %45, %48, %51, %54, %57, %60, %63, %66, %69, %72 in 0 : vector<8x54xf32>, vector<8x54xf32>, vector<8x54xf32>, vector<8x54xf32>, vector<8x54xf32>, vector<8x54xf32>, vector<8x54xf32>, vector<8x54xf32>, vector<8x54xf32>, vector<8x54xf32>, vector<8x54xf32>, vector<8x54xf32>, vector<8x54xf32>, vector<8x54xf32>, vector<8x54xf32>, vector<8x54xf32> -> vector<128x54xf32>
    %107 = tpu.concatenate %75, %78, %81, %84, %87, %90, %93, %96, %99, %102, %105 in 0 : vector<8x54xf32>, vector<8x54xf32>, vector<8x54xf32>, vector<8x54xf32>, vector<8x54xf32>, vector<8x54xf32>, vector<8x54xf32>, vector<8x54xf32>, vector<8x54xf32>, vector<8x54xf32>, vector<8x54xf32> -> vector<88x54xf32>
    %108 = tpu.concatenate %106, %107 in 0 : vector<128x54xf32>, vector<88x54xf32> -> vector<216x54xf32>
    %109 = arith.truncf %108 : vector<216x54xf32> to vector<216x54xbf16>
    %c0_92 = arith.constant 0 : index
    %c0_93 = arith.constant 0 : index
    %110 = vector.load %arg4[%c0_92, %c0_93] : memref<8x216xbf16, #tpu.memory_space<vmem>>, vector<8x216xbf16>
    %cst_94 = arith.constant dense<0.000000e+00> : vector<8x54xf32>
    %111 = tpu.matmul %110, %109, %cst_94 {dimension_numbers = #tpu.dot_dimension_numbers<[1], [0], [0], [1], [0, 0, 1, 1], [], []>} : vector<8x216xbf16>, vector<216x54xbf16>, vector<8x54xf32> -> vector<8x54xf32>
    %cst_95 = arith.constant 0.000000e+00 : f32
    %112 = vector.broadcast %cst_95 : f32 to vector<8x54xf32>
    %113 = arith.maximumf %111, %112 : vector<8x54xf32>
    %114 = arith.truncf %113 : vector<8x54xf32> to vector<8x54xbf16>
    %c0_96 = arith.constant 0 : index
    %c0_97 = arith.constant 0 : index
    %c0_98 = arith.constant 0 : index
    %115 = vector.load %arg8[%c0_96, %c0_97, %c0_98] : memref<27x54x54xbf16, #tpu.memory_space<vmem>>, vector<1x54x54xbf16>
    %116 = vector.shape_cast %115 : vector<1x54x54xbf16> to vector<54x54xbf16>
    %cst_99 = arith.constant dense<0.000000e+00> : vector<8x54xf32>
    %117 = tpu.matmul %114, %116, %cst_99 {dimension_numbers = #tpu.dot_dimension_numbers<[1], [0], [0], [1], [0, 0, 1, 1], [], []>} : vector<8x54xbf16>, vector<54x54xbf16>, vector<8x54xf32> -> vector<8x54xf32>
    %c1_100 = arith.constant 1 : index
    %c0_101 = arith.constant 0 : index
    %c0_102 = arith.constant 0 : index
    %118 = vector.load %arg8[%c1_100, %c0_101, %c0_102] : memref<27x54x54xbf16, #tpu.memory_space<vmem>>, vector<1x54x54xbf16>
    %119 = vector.shape_cast %118 : vector<1x54x54xbf16> to vector<54x54xbf16>
    %cst_103 = arith.constant dense<0.000000e+00> : vector<8x54xf32>
    %120 = tpu.matmul %114, %119, %cst_103 {dimension_numbers = #tpu.dot_dimension_numbers<[1], [0], [0], [1], [0, 0, 1, 1], [], []>} : vector<8x54xbf16>, vector<54x54xbf16>, vector<8x54xf32> -> vector<8x54xf32>
    %c2_104 = arith.constant 2 : index
    %c0_105 = arith.constant 0 : index
    %c0_106 = arith.constant 0 : index
    %121 = vector.load %arg8[%c2_104, %c0_105, %c0_106] : memref<27x54x54xbf16, #tpu.memory_space<vmem>>, vector<1x54x54xbf16>
    %122 = vector.shape_cast %121 : vector<1x54x54xbf16> to vector<54x54xbf16>
    %cst_107 = arith.constant dense<0.000000e+00> : vector<8x54xf32>
    %123 = tpu.matmul %114, %122, %cst_107 {dimension_numbers = #tpu.dot_dimension_numbers<[1], [0], [0], [1], [0, 0, 1, 1], [], []>} : vector<8x54xbf16>, vector<54x54xbf16>, vector<8x54xf32> -> vector<8x54xf32>
    %c3_108 = arith.constant 3 : index
    %c0_109 = arith.constant 0 : index
    %c0_110 = arith.constant 0 : index
    %124 = vector.load %arg8[%c3_108, %c0_109, %c0_110] : memref<27x54x54xbf16, #tpu.memory_space<vmem>>, vector<1x54x54xbf16>
    %125 = vector.shape_cast %124 : vector<1x54x54xbf16> to vector<54x54xbf16>
    %cst_111 = arith.constant dense<0.000000e+00> : vector<8x54xf32>
    %126 = tpu.matmul %114, %125, %cst_111 {dimension_numbers = #tpu.dot_dimension_numbers<[1], [0], [0], [1], [0, 0, 1, 1], [], []>} : vector<8x54xbf16>, vector<54x54xbf16>, vector<8x54xf32> -> vector<8x54xf32>
    %c4_112 = arith.constant 4 : index
    %c0_113 = arith.constant 0 : index
    %c0_114 = arith.constant 0 : index
    %127 = vector.load %arg8[%c4_112, %c0_113, %c0_114] : memref<27x54x54xbf16, #tpu.memory_space<vmem>>, vector<1x54x54xbf16>
    %128 = vector.shape_cast %127 : vector<1x54x54xbf16> to vector<54x54xbf16>
    %cst_115 = arith.constant dense<0.000000e+00> : vector<8x54xf32>
    %129 = tpu.matmul %114, %128, %cst_115 {dimension_numbers = #tpu.dot_dimension_numbers<[1], [0], [0], [1], [0, 0, 1, 1], [], []>} : vector<8x54xbf16>, vector<54x54xbf16>, vector<8x54xf32> -> vector<8x54xf32>
    %c5_116 = arith.constant 5 : index
    %c0_117 = arith.constant 0 : index
    %c0_118 = arith.constant 0 : index
    %130 = vector.load %arg8[%c5_116, %c0_117, %c0_118] : memref<27x54x54xbf16, #tpu.memory_space<vmem>>, vector<1x54x54xbf16>
    %131 = vector.shape_cast %130 : vector<1x54x54xbf16> to vector<54x54xbf16>
    %cst_119 = arith.constant dense<0.000000e+00> : vector<8x54xf32>
    %132 = tpu.matmul %114, %131, %cst_119 {dimension_numbers = #tpu.dot_dimension_numbers<[1], [0], [0], [1], [0, 0, 1, 1], [], []>} : vector<8x54xbf16>, vector<54x54xbf16>, vector<8x54xf32> -> vector<8x54xf32>
    %c6_120 = arith.constant 6 : index
    %c0_121 = arith.constant 0 : index
    %c0_122 = arith.constant 0 : index
    %133 = vector.load %arg8[%c6_120, %c0_121, %c0_122] : memref<27x54x54xbf16, #tpu.memory_space<vmem>>, vector<1x54x54xbf16>
    %134 = vector.shape_cast %133 : vector<1x54x54xbf16> to vector<54x54xbf16>
    %cst_123 = arith.constant dense<0.000000e+00> : vector<8x54xf32>
    %135 = tpu.matmul %114, %134, %cst_123 {dimension_numbers = #tpu.dot_dimension_numbers<[1], [0], [0], [1], [0, 0, 1, 1], [], []>} : vector<8x54xbf16>, vector<54x54xbf16>, vector<8x54xf32> -> vector<8x54xf32>
    %c7_124 = arith.constant 7 : index
    %c0_125 = arith.constant 0 : index
    %c0_126 = arith.constant 0 : index
    %136 = vector.load %arg8[%c7_124, %c0_125, %c0_126] : memref<27x54x54xbf16, #tpu.memory_space<vmem>>, vector<1x54x54xbf16>
    %137 = vector.shape_cast %136 : vector<1x54x54xbf16> to vector<54x54xbf16>
    %cst_127 = arith.constant dense<0.000000e+00> : vector<8x54xf32>
    %138 = tpu.matmul %114, %137, %cst_127 {dimension_numbers = #tpu.dot_dimension_numbers<[1], [0], [0], [1], [0, 0, 1, 1], [], []>} : vector<8x54xbf16>, vector<54x54xbf16>, vector<8x54xf32> -> vector<8x54xf32>
    %c8_128 = arith.constant 8 : index
    %c0_129 = arith.constant 0 : index
    %c0_130 = arith.constant 0 : index
    %139 = vector.load %arg8[%c8_128, %c0_129, %c0_130] : memref<27x54x54xbf16, #tpu.memory_space<vmem>>, vector<1x54x54xbf16>
    %140 = vector.shape_cast %139 : vector<1x54x54xbf16> to vector<54x54xbf16>
    %cst_131 = arith.constant dense<0.000000e+00> : vector<8x54xf32>
    %141 = tpu.matmul %114, %140, %cst_131 {dimension_numbers = #tpu.dot_dimension_numbers<[1], [0], [0], [1], [0, 0, 1, 1], [], []>} : vector<8x54xbf16>, vector<54x54xbf16>, vector<8x54xf32> -> vector<8x54xf32>
    %c9_132 = arith.constant 9 : index
    %c0_133 = arith.constant 0 : index
    %c0_134 = arith.constant 0 : index
    %142 = vector.load %arg8[%c9_132, %c0_133, %c0_134] : memref<27x54x54xbf16, #tpu.memory_space<vmem>>, vector<1x54x54xbf16>
    %143 = vector.shape_cast %142 : vector<1x54x54xbf16> to vector<54x54xbf16>
    %cst_135 = arith.constant dense<0.000000e+00> : vector<8x54xf32>
    %144 = tpu.matmul %114, %143, %cst_135 {dimension_numbers = #tpu.dot_dimension_numbers<[1], [0], [0], [1], [0, 0, 1, 1], [], []>} : vector<8x54xbf16>, vector<54x54xbf16>, vector<8x54xf32> -> vector<8x54xf32>
    %c10_136 = arith.constant 10 : index
    %c0_137 = arith.constant 0 : index
    %c0_138 = arith.constant 0 : index
    %145 = vector.load %arg8[%c10_136, %c0_137, %c0_138] : memref<27x54x54xbf16, #tpu.memory_space<vmem>>, vector<1x54x54xbf16>
    %146 = vector.shape_cast %145 : vector<1x54x54xbf16> to vector<54x54xbf16>
    %cst_139 = arith.constant dense<0.000000e+00> : vector<8x54xf32>
    %147 = tpu.matmul %114, %146, %cst_139 {dimension_numbers = #tpu.dot_dimension_numbers<[1], [0], [0], [1], [0, 0, 1, 1], [], []>} : vector<8x54xbf16>, vector<54x54xbf16>, vector<8x54xf32> -> vector<8x54xf32>
    %c11_140 = arith.constant 11 : index
    %c0_141 = arith.constant 0 : index
    %c0_142 = arith.constant 0 : index
    %148 = vector.load %arg8[%c11_140, %c0_141, %c0_142] : memref<27x54x54xbf16, #tpu.memory_space<vmem>>, vector<1x54x54xbf16>
    %149 = vector.shape_cast %148 : vector<1x54x54xbf16> to vector<54x54xbf16>
    %cst_143 = arith.constant dense<0.000000e+00> : vector<8x54xf32>
    %150 = tpu.matmul %114, %149, %cst_143 {dimension_numbers = #tpu.dot_dimension_numbers<[1], [0], [0], [1], [0, 0, 1, 1], [], []>} : vector<8x54xbf16>, vector<54x54xbf16>, vector<8x54xf32> -> vector<8x54xf32>
    %c12_144 = arith.constant 12 : index
    %c0_145 = arith.constant 0 : index
    %c0_146 = arith.constant 0 : index
    %151 = vector.load %arg8[%c12_144, %c0_145, %c0_146] : memref<27x54x54xbf16, #tpu.memory_space<vmem>>, vector<1x54x54xbf16>
    %152 = vector.shape_cast %151 : vector<1x54x54xbf16> to vector<54x54xbf16>
    %cst_147 = arith.constant dense<0.000000e+00> : vector<8x54xf32>
    %153 = tpu.matmul %114, %152, %cst_147 {dimension_numbers = #tpu.dot_dimension_numbers<[1], [0], [0], [1], [0, 0, 1, 1], [], []>} : vector<8x54xbf16>, vector<54x54xbf16>, vector<8x54xf32> -> vector<8x54xf32>
    %c13_148 = arith.constant 13 : index
    %c0_149 = arith.constant 0 : index
    %c0_150 = arith.constant 0 : index
    %154 = vector.load %arg8[%c13_148, %c0_149, %c0_150] : memref<27x54x54xbf16, #tpu.memory_space<vmem>>, vector<1x54x54xbf16>
    %155 = vector.shape_cast %154 : vector<1x54x54xbf16> to vector<54x54xbf16>
    %cst_151 = arith.constant dense<0.000000e+00> : vector<8x54xf32>
    %156 = tpu.matmul %114, %155, %cst_151 {dimension_numbers = #tpu.dot_dimension_numbers<[1], [0], [0], [1], [0, 0, 1, 1], [], []>} : vector<8x54xbf16>, vector<54x54xbf16>, vector<8x54xf32> -> vector<8x54xf32>
    %c14_152 = arith.constant 14 : index
    %c0_153 = arith.constant 0 : index
    %c0_154 = arith.constant 0 : index
    %157 = vector.load %arg8[%c14_152, %c0_153, %c0_154] : memref<27x54x54xbf16, #tpu.memory_space<vmem>>, vector<1x54x54xbf16>
    %158 = vector.shape_cast %157 : vector<1x54x54xbf16> to vector<54x54xbf16>
    %cst_155 = arith.constant dense<0.000000e+00> : vector<8x54xf32>
    %159 = tpu.matmul %114, %158, %cst_155 {dimension_numbers = #tpu.dot_dimension_numbers<[1], [0], [0], [1], [0, 0, 1, 1], [], []>} : vector<8x54xbf16>, vector<54x54xbf16>, vector<8x54xf32> -> vector<8x54xf32>
    %c15_156 = arith.constant 15 : index
    %c0_157 = arith.constant 0 : index
    %c0_158 = arith.constant 0 : index
    %160 = vector.load %arg8[%c15_156, %c0_157, %c0_158] : memref<27x54x54xbf16, #tpu.memory_space<vmem>>, vector<1x54x54xbf16>
    %161 = vector.shape_cast %160 : vector<1x54x54xbf16> to vector<54x54xbf16>
    %cst_159 = arith.constant dense<0.000000e+00> : vector<8x54xf32>
    %162 = tpu.matmul %114, %161, %cst_159 {dimension_numbers = #tpu.dot_dimension_numbers<[1], [0], [0], [1], [0, 0, 1, 1], [], []>} : vector<8x54xbf16>, vector<54x54xbf16>, vector<8x54xf32> -> vector<8x54xf32>
    %c16_160 = arith.constant 16 : index
    %c0_161 = arith.constant 0 : index
    %c0_162 = arith.constant 0 : index
    %163 = vector.load %arg8[%c16_160, %c0_161, %c0_162] : memref<27x54x54xbf16, #tpu.memory_space<vmem>>, vector<1x54x54xbf16>
    %164 = vector.shape_cast %163 : vector<1x54x54xbf16> to vector<54x54xbf16>
    %cst_163 = arith.constant dense<0.000000e+00> : vector<8x54xf32>
    %165 = tpu.matmul %114, %164, %cst_163 {dimension_numbers = #tpu.dot_dimension_numbers<[1], [0], [0], [1], [0, 0, 1, 1], [], []>} : vector<8x54xbf16>, vector<54x54xbf16>, vector<8x54xf32> -> vector<8x54xf32>
    %c17_164 = arith.constant 17 : index
    %c0_165 = arith.constant 0 : index
    %c0_166 = arith.constant 0 : index
    %166 = vector.load %arg8[%c17_164, %c0_165, %c0_166] : memref<27x54x54xbf16, #tpu.memory_space<vmem>>, vector<1x54x54xbf16>
    %167 = vector.shape_cast %166 : vector<1x54x54xbf16> to vector<54x54xbf16>
    %cst_167 = arith.constant dense<0.000000e+00> : vector<8x54xf32>
    %168 = tpu.matmul %114, %167, %cst_167 {dimension_numbers = #tpu.dot_dimension_numbers<[1], [0], [0], [1], [0, 0, 1, 1], [], []>} : vector<8x54xbf16>, vector<54x54xbf16>, vector<8x54xf32> -> vector<8x54xf32>
    %c18_168 = arith.constant 18 : index
    %c0_169 = arith.constant 0 : index
    %c0_170 = arith.constant 0 : index
    %169 = vector.load %arg8[%c18_168, %c0_169, %c0_170] : memref<27x54x54xbf16, #tpu.memory_space<vmem>>, vector<1x54x54xbf16>
    %170 = vector.shape_cast %169 : vector<1x54x54xbf16> to vector<54x54xbf16>
    %cst_171 = arith.constant dense<0.000000e+00> : vector<8x54xf32>
    %171 = tpu.matmul %114, %170, %cst_171 {dimension_numbers = #tpu.dot_dimension_numbers<[1], [0], [0], [1], [0, 0, 1, 1], [], []>} : vector<8x54xbf16>, vector<54x54xbf16>, vector<8x54xf32> -> vector<8x54xf32>
    %c19_172 = arith.constant 19 : index
    %c0_173 = arith.constant 0 : index
    %c0_174 = arith.constant 0 : index
    %172 = vector.load %arg8[%c19_172, %c0_173, %c0_174] : memref<27x54x54xbf16, #tpu.memory_space<vmem>>, vector<1x54x54xbf16>
    %173 = vector.shape_cast %172 : vector<1x54x54xbf16> to vector<54x54xbf16>
    %cst_175 = arith.constant dense<0.000000e+00> : vector<8x54xf32>
    %174 = tpu.matmul %114, %173, %cst_175 {dimension_numbers = #tpu.dot_dimension_numbers<[1], [0], [0], [1], [0, 0, 1, 1], [], []>} : vector<8x54xbf16>, vector<54x54xbf16>, vector<8x54xf32> -> vector<8x54xf32>
    %c20_176 = arith.constant 20 : index
    %c0_177 = arith.constant 0 : index
    %c0_178 = arith.constant 0 : index
    %175 = vector.load %arg8[%c20_176, %c0_177, %c0_178] : memref<27x54x54xbf16, #tpu.memory_space<vmem>>, vector<1x54x54xbf16>
    %176 = vector.shape_cast %175 : vector<1x54x54xbf16> to vector<54x54xbf16>
    %cst_179 = arith.constant dense<0.000000e+00> : vector<8x54xf32>
    %177 = tpu.matmul %114, %176, %cst_179 {dimension_numbers = #tpu.dot_dimension_numbers<[1], [0], [0], [1], [0, 0, 1, 1], [], []>} : vector<8x54xbf16>, vector<54x54xbf16>, vector<8x54xf32> -> vector<8x54xf32>
    %c21_180 = arith.constant 21 : index
    %c0_181 = arith.constant 0 : index
    %c0_182 = arith.constant 0 : index
    %178 = vector.load %arg8[%c21_180, %c0_181, %c0_182] : memref<27x54x54xbf16, #tpu.memory_space<vmem>>, vector<1x54x54xbf16>
    %179 = vector.shape_cast %178 : vector<1x54x54xbf16> to vector<54x54xbf16>
    %cst_183 = arith.constant dense<0.000000e+00> : vector<8x54xf32>
    %180 = tpu.matmul %114, %179, %cst_183 {dimension_numbers = #tpu.dot_dimension_numbers<[1], [0], [0], [1], [0, 0, 1, 1], [], []>} : vector<8x54xbf16>, vector<54x54xbf16>, vector<8x54xf32> -> vector<8x54xf32>
    %c22_184 = arith.constant 22 : index
    %c0_185 = arith.constant 0 : index
    %c0_186 = arith.constant 0 : index
    %181 = vector.load %arg8[%c22_184, %c0_185, %c0_186] : memref<27x54x54xbf16, #tpu.memory_space<vmem>>, vector<1x54x54xbf16>
    %182 = vector.shape_cast %181 : vector<1x54x54xbf16> to vector<54x54xbf16>
    %cst_187 = arith.constant dense<0.000000e+00> : vector<8x54xf32>
    %183 = tpu.matmul %114, %182, %cst_187 {dimension_numbers = #tpu.dot_dimension_numbers<[1], [0], [0], [1], [0, 0, 1, 1], [], []>} : vector<8x54xbf16>, vector<54x54xbf16>, vector<8x54xf32> -> vector<8x54xf32>
    %c23_188 = arith.constant 23 : index
    %c0_189 = arith.constant 0 : index
    %c0_190 = arith.constant 0 : index
    %184 = vector.load %arg8[%c23_188, %c0_189, %c0_190] : memref<27x54x54xbf16, #tpu.memory_space<vmem>>, vector<1x54x54xbf16>
    %185 = vector.shape_cast %184 : vector<1x54x54xbf16> to vector<54x54xbf16>
    %cst_191 = arith.constant dense<0.000000e+00> : vector<8x54xf32>
    %186 = tpu.matmul %114, %185, %cst_191 {dimension_numbers = #tpu.dot_dimension_numbers<[1], [0], [0], [1], [0, 0, 1, 1], [], []>} : vector<8x54xbf16>, vector<54x54xbf16>, vector<8x54xf32> -> vector<8x54xf32>
    %c24_192 = arith.constant 24 : index
    %c0_193 = arith.constant 0 : index
    %c0_194 = arith.constant 0 : index
    %187 = vector.load %arg8[%c24_192, %c0_193, %c0_194] : memref<27x54x54xbf16, #tpu.memory_space<vmem>>, vector<1x54x54xbf16>
    %188 = vector.shape_cast %187 : vector<1x54x54xbf16> to vector<54x54xbf16>
    %cst_195 = arith.constant dense<0.000000e+00> : vector<8x54xf32>
    %189 = tpu.matmul %114, %188, %cst_195 {dimension_numbers = #tpu.dot_dimension_numbers<[1], [0], [0], [1], [0, 0, 1, 1], [], []>} : vector<8x54xbf16>, vector<54x54xbf16>, vector<8x54xf32> -> vector<8x54xf32>
    %c25_196 = arith.constant 25 : index
    %c0_197 = arith.constant 0 : index
    %c0_198 = arith.constant 0 : index
    %190 = vector.load %arg8[%c25_196, %c0_197, %c0_198] : memref<27x54x54xbf16, #tpu.memory_space<vmem>>, vector<1x54x54xbf16>
    %191 = vector.shape_cast %190 : vector<1x54x54xbf16> to vector<54x54xbf16>
    %cst_199 = arith.constant dense<0.000000e+00> : vector<8x54xf32>
    %192 = tpu.matmul %114, %191, %cst_199 {dimension_numbers = #tpu.dot_dimension_numbers<[1], [0], [0], [1], [0, 0, 1, 1], [], []>} : vector<8x54xbf16>, vector<54x54xbf16>, vector<8x54xf32> -> vector<8x54xf32>
    %c26_200 = arith.constant 26 : index
    %c0_201 = arith.constant 0 : index
    %c0_202 = arith.constant 0 : index
    %193 = vector.load %arg8[%c26_200, %c0_201, %c0_202] : memref<27x54x54xbf16, #tpu.memory_space<vmem>>, vector<1x54x54xbf16>
    %194 = vector.shape_cast %193 : vector<1x54x54xbf16> to vector<54x54xbf16>
    %cst_203 = arith.constant dense<0.000000e+00> : vector<8x54xf32>
    %195 = tpu.matmul %114, %194, %cst_203 {dimension_numbers = #tpu.dot_dimension_numbers<[1], [0], [0], [1], [0, 0, 1, 1], [], []>} : vector<8x54xbf16>, vector<54x54xbf16>, vector<8x54xf32> -> vector<8x54xf32>
    %196 = tpu.concatenate %117, %120, %123, %126, %129, %132, %135, %138, %141, %144, %147, %150, %153, %156, %159, %162 in 0 : vector<8x54xf32>, vector<8x54xf32>, vector<8x54xf32>, vector<8x54xf32>, vector<8x54xf32>, vector<8x54xf32>, vector<8x54xf32>, vector<8x54xf32>, vector<8x54xf32>, vector<8x54xf32>, vector<8x54xf32>, vector<8x54xf32>, vector<8x54xf32>, vector<8x54xf32>, vector<8x54xf32>, vector<8x54xf32> -> vector<128x54xf32>
    %197 = tpu.concatenate %165, %168, %171, %174, %177, %180, %183, %186, %189, %192, %195 in 0 : vector<8x54xf32>, vector<8x54xf32>, vector<8x54xf32>, vector<8x54xf32>, vector<8x54xf32>, vector<8x54xf32>, vector<8x54xf32>, vector<8x54xf32>, vector<8x54xf32>, vector<8x54xf32>, vector<8x54xf32> -> vector<88x54xf32>
    %198 = tpu.concatenate %196, %197 in 0 : vector<128x54xf32>, vector<88x54xf32> -> vector<216x54xf32>
    %199 = arith.truncf %198 : vector<216x54xf32> to vector<216x54xbf16>
    %c0_204 = arith.constant 0 : index
    %c0_205 = arith.constant 0 : index
    %200 = vector.load %arg5[%c0_204, %c0_205] : memref<16x216xbf16, #tpu.memory_space<vmem>>, vector<16x216xbf16>
    %cst_206 = arith.constant dense<0.000000e+00> : vector<16x54xf32>
    %201 = tpu.matmul %200, %199, %cst_206 {dimension_numbers = #tpu.dot_dimension_numbers<[1], [0], [0], [1], [0, 0, 1, 1], [], []>} : vector<16x216xbf16>, vector<216x54xbf16>, vector<16x54xf32> -> vector<16x54xf32>
    %cst_207 = arith.constant 0.000000e+00 : f32
    %202 = vector.broadcast %cst_207 : f32 to vector<16x54xf32>
    %203 = arith.maximumf %201, %202 : vector<16x54xf32>
    %204 = arith.truncf %203 : vector<16x54xf32> to vector<16x54xbf16>
    %c0_208 = arith.constant 0 : index
    %c0_209 = arith.constant 0 : index
    %c0_210 = arith.constant 0 : index
    %205 = vector.load %arg8[%c0_208, %c0_209, %c0_210] : memref<27x54x54xbf16, #tpu.memory_space<vmem>>, vector<1x54x54xbf16>
    %206 = vector.shape_cast %205 : vector<1x54x54xbf16> to vector<54x54xbf16>
    %cst_211 = arith.constant dense<0.000000e+00> : vector<16x54xf32>
    %207 = tpu.matmul %204, %206, %cst_211 {dimension_numbers = #tpu.dot_dimension_numbers<[1], [0], [0], [1], [0, 0, 1, 1], [], []>} : vector<16x54xbf16>, vector<54x54xbf16>, vector<16x54xf32> -> vector<16x54xf32>
    %c1_212 = arith.constant 1 : index
    %c0_213 = arith.constant 0 : index
    %c0_214 = arith.constant 0 : index
    %208 = vector.load %arg8[%c1_212, %c0_213, %c0_214] : memref<27x54x54xbf16, #tpu.memory_space<vmem>>, vector<1x54x54xbf16>
    %209 = vector.shape_cast %208 : vector<1x54x54xbf16> to vector<54x54xbf16>
    %cst_215 = arith.constant dense<0.000000e+00> : vector<16x54xf32>
    %210 = tpu.matmul %204, %209, %cst_215 {dimension_numbers = #tpu.dot_dimension_numbers<[1], [0], [0], [1], [0, 0, 1, 1], [], []>} : vector<16x54xbf16>, vector<54x54xbf16>, vector<16x54xf32> -> vector<16x54xf32>
    %c2_216 = arith.constant 2 : index
    %c0_217 = arith.constant 0 : index
    %c0_218 = arith.constant 0 : index
    %211 = vector.load %arg8[%c2_216, %c0_217, %c0_218] : memref<27x54x54xbf16, #tpu.memory_space<vmem>>, vector<1x54x54xbf16>
    %212 = vector.shape_cast %211 : vector<1x54x54xbf16> to vector<54x54xbf16>
    %cst_219 = arith.constant dense<0.000000e+00> : vector<16x54xf32>
    %213 = tpu.matmul %204, %212, %cst_219 {dimension_numbers = #tpu.dot_dimension_numbers<[1], [0], [0], [1], [0, 0, 1, 1], [], []>} : vector<16x54xbf16>, vector<54x54xbf16>, vector<16x54xf32> -> vector<16x54xf32>
    %c3_220 = arith.constant 3 : index
    %c0_221 = arith.constant 0 : index
    %c0_222 = arith.constant 0 : index
    %214 = vector.load %arg8[%c3_220, %c0_221, %c0_222] : memref<27x54x54xbf16, #tpu.memory_space<vmem>>, vector<1x54x54xbf16>
    %215 = vector.shape_cast %214 : vector<1x54x54xbf16> to vector<54x54xbf16>
    %cst_223 = arith.constant dense<0.000000e+00> : vector<16x54xf32>
    %216 = tpu.matmul %204, %215, %cst_223 {dimension_numbers = #tpu.dot_dimension_numbers<[1], [0], [0], [1], [0, 0, 1, 1], [], []>} : vector<16x54xbf16>, vector<54x54xbf16>, vector<16x54xf32> -> vector<16x54xf32>
    %c4_224 = arith.constant 4 : index
    %c0_225 = arith.constant 0 : index
    %c0_226 = arith.constant 0 : index
    %217 = vector.load %arg8[%c4_224, %c0_225, %c0_226] : memref<27x54x54xbf16, #tpu.memory_space<vmem>>, vector<1x54x54xbf16>
    %218 = vector.shape_cast %217 : vector<1x54x54xbf16> to vector<54x54xbf16>
    %cst_227 = arith.constant dense<0.000000e+00> : vector<16x54xf32>
    %219 = tpu.matmul %204, %218, %cst_227 {dimension_numbers = #tpu.dot_dimension_numbers<[1], [0], [0], [1], [0, 0, 1, 1], [], []>} : vector<16x54xbf16>, vector<54x54xbf16>, vector<16x54xf32> -> vector<16x54xf32>
    %c5_228 = arith.constant 5 : index
    %c0_229 = arith.constant 0 : index
    %c0_230 = arith.constant 0 : index
    %220 = vector.load %arg8[%c5_228, %c0_229, %c0_230] : memref<27x54x54xbf16, #tpu.memory_space<vmem>>, vector<1x54x54xbf16>
    %221 = vector.shape_cast %220 : vector<1x54x54xbf16> to vector<54x54xbf16>
    %cst_231 = arith.constant dense<0.000000e+00> : vector<16x54xf32>
    %222 = tpu.matmul %204, %221, %cst_231 {dimension_numbers = #tpu.dot_dimension_numbers<[1], [0], [0], [1], [0, 0, 1, 1], [], []>} : vector<16x54xbf16>, vector<54x54xbf16>, vector<16x54xf32> -> vector<16x54xf32>
    %c6_232 = arith.constant 6 : index
    %c0_233 = arith.constant 0 : index
    %c0_234 = arith.constant 0 : index
    %223 = vector.load %arg8[%c6_232, %c0_233, %c0_234] : memref<27x54x54xbf16, #tpu.memory_space<vmem>>, vector<1x54x54xbf16>
    %224 = vector.shape_cast %223 : vector<1x54x54xbf16> to vector<54x54xbf16>
    %cst_235 = arith.constant dense<0.000000e+00> : vector<16x54xf32>
    %225 = tpu.matmul %204, %224, %cst_235 {dimension_numbers = #tpu.dot_dimension_numbers<[1], [0], [0], [1], [0, 0, 1, 1], [], []>} : vector<16x54xbf16>, vector<54x54xbf16>, vector<16x54xf32> -> vector<16x54xf32>
    %c7_236 = arith.constant 7 : index
    %c0_237 = arith.constant 0 : index
    %c0_238 = arith.constant 0 : index
    %226 = vector.load %arg8[%c7_236, %c0_237, %c0_238] : memref<27x54x54xbf16, #tpu.memory_space<vmem>>, vector<1x54x54xbf16>
    %227 = vector.shape_cast %226 : vector<1x54x54xbf16> to vector<54x54xbf16>
    %cst_239 = arith.constant dense<0.000000e+00> : vector<16x54xf32>
    %228 = tpu.matmul %204, %227, %cst_239 {dimension_numbers = #tpu.dot_dimension_numbers<[1], [0], [0], [1], [0, 0, 1, 1], [], []>} : vector<16x54xbf16>, vector<54x54xbf16>, vector<16x54xf32> -> vector<16x54xf32>
    %c8_240 = arith.constant 8 : index
    %c0_241 = arith.constant 0 : index
    %c0_242 = arith.constant 0 : index
    %229 = vector.load %arg8[%c8_240, %c0_241, %c0_242] : memref<27x54x54xbf16, #tpu.memory_space<vmem>>, vector<1x54x54xbf16>
    %230 = vector.shape_cast %229 : vector<1x54x54xbf16> to vector<54x54xbf16>
    %cst_243 = arith.constant dense<0.000000e+00> : vector<16x54xf32>
    %231 = tpu.matmul %204, %230, %cst_243 {dimension_numbers = #tpu.dot_dimension_numbers<[1], [0], [0], [1], [0, 0, 1, 1], [], []>} : vector<16x54xbf16>, vector<54x54xbf16>, vector<16x54xf32> -> vector<16x54xf32>
    %c9_244 = arith.constant 9 : index
    %c0_245 = arith.constant 0 : index
    %c0_246 = arith.constant 0 : index
    %232 = vector.load %arg8[%c9_244, %c0_245, %c0_246] : memref<27x54x54xbf16, #tpu.memory_space<vmem>>, vector<1x54x54xbf16>
    %233 = vector.shape_cast %232 : vector<1x54x54xbf16> to vector<54x54xbf16>
    %cst_247 = arith.constant dense<0.000000e+00> : vector<16x54xf32>
    %234 = tpu.matmul %204, %233, %cst_247 {dimension_numbers = #tpu.dot_dimension_numbers<[1], [0], [0], [1], [0, 0, 1, 1], [], []>} : vector<16x54xbf16>, vector<54x54xbf16>, vector<16x54xf32> -> vector<16x54xf32>
    %c10_248 = arith.constant 10 : index
    %c0_249 = arith.constant 0 : index
    %c0_250 = arith.constant 0 : index
    %235 = vector.load %arg8[%c10_248, %c0_249, %c0_250] : memref<27x54x54xbf16, #tpu.memory_space<vmem>>, vector<1x54x54xbf16>
    %236 = vector.shape_cast %235 : vector<1x54x54xbf16> to vector<54x54xbf16>
    %cst_251 = arith.constant dense<0.000000e+00> : vector<16x54xf32>
    %237 = tpu.matmul %204, %236, %cst_251 {dimension_numbers = #tpu.dot_dimension_numbers<[1], [0], [0], [1], [0, 0, 1, 1], [], []>} : vector<16x54xbf16>, vector<54x54xbf16>, vector<16x54xf32> -> vector<16x54xf32>
    %c11_252 = arith.constant 11 : index
    %c0_253 = arith.constant 0 : index
    %c0_254 = arith.constant 0 : index
    %238 = vector.load %arg8[%c11_252, %c0_253, %c0_254] : memref<27x54x54xbf16, #tpu.memory_space<vmem>>, vector<1x54x54xbf16>
    %239 = vector.shape_cast %238 : vector<1x54x54xbf16> to vector<54x54xbf16>
    %cst_255 = arith.constant dense<0.000000e+00> : vector<16x54xf32>
    %240 = tpu.matmul %204, %239, %cst_255 {dimension_numbers = #tpu.dot_dimension_numbers<[1], [0], [0], [1], [0, 0, 1, 1], [], []>} : vector<16x54xbf16>, vector<54x54xbf16>, vector<16x54xf32> -> vector<16x54xf32>
    %c12_256 = arith.constant 12 : index
    %c0_257 = arith.constant 0 : index
    %c0_258 = arith.constant 0 : index
    %241 = vector.load %arg8[%c12_256, %c0_257, %c0_258] : memref<27x54x54xbf16, #tpu.memory_space<vmem>>, vector<1x54x54xbf16>
    %242 = vector.shape_cast %241 : vector<1x54x54xbf16> to vector<54x54xbf16>
    %cst_259 = arith.constant dense<0.000000e+00> : vector<16x54xf32>
    %243 = tpu.matmul %204, %242, %cst_259 {dimension_numbers = #tpu.dot_dimension_numbers<[1], [0], [0], [1], [0, 0, 1, 1], [], []>} : vector<16x54xbf16>, vector<54x54xbf16>, vector<16x54xf32> -> vector<16x54xf32>
    %c13_260 = arith.constant 13 : index
    %c0_261 = arith.constant 0 : index
    %c0_262 = arith.constant 0 : index
    %244 = vector.load %arg8[%c13_260, %c0_261, %c0_262] : memref<27x54x54xbf16, #tpu.memory_space<vmem>>, vector<1x54x54xbf16>
    %245 = vector.shape_cast %244 : vector<1x54x54xbf16> to vector<54x54xbf16>
    %cst_263 = arith.constant dense<0.000000e+00> : vector<16x54xf32>
    %246 = tpu.matmul %204, %245, %cst_263 {dimension_numbers = #tpu.dot_dimension_numbers<[1], [0], [0], [1], [0, 0, 1, 1], [], []>} : vector<16x54xbf16>, vector<54x54xbf16>, vector<16x54xf32> -> vector<16x54xf32>
    %c14_264 = arith.constant 14 : index
    %c0_265 = arith.constant 0 : index
    %c0_266 = arith.constant 0 : index
    %247 = vector.load %arg8[%c14_264, %c0_265, %c0_266] : memref<27x54x54xbf16, #tpu.memory_space<vmem>>, vector<1x54x54xbf16>
    %248 = vector.shape_cast %247 : vector<1x54x54xbf16> to vector<54x54xbf16>
    %cst_267 = arith.constant dense<0.000000e+00> : vector<16x54xf32>
    %249 = tpu.matmul %204, %248, %cst_267 {dimension_numbers = #tpu.dot_dimension_numbers<[1], [0], [0], [1], [0, 0, 1, 1], [], []>} : vector<16x54xbf16>, vector<54x54xbf16>, vector<16x54xf32> -> vector<16x54xf32>
    %c15_268 = arith.constant 15 : index
    %c0_269 = arith.constant 0 : index
    %c0_270 = arith.constant 0 : index
    %250 = vector.load %arg8[%c15_268, %c0_269, %c0_270] : memref<27x54x54xbf16, #tpu.memory_space<vmem>>, vector<1x54x54xbf16>
    %251 = vector.shape_cast %250 : vector<1x54x54xbf16> to vector<54x54xbf16>
    %cst_271 = arith.constant dense<0.000000e+00> : vector<16x54xf32>
    %252 = tpu.matmul %204, %251, %cst_271 {dimension_numbers = #tpu.dot_dimension_numbers<[1], [0], [0], [1], [0, 0, 1, 1], [], []>} : vector<16x54xbf16>, vector<54x54xbf16>, vector<16x54xf32> -> vector<16x54xf32>
    %c16_272 = arith.constant 16 : index
    %c0_273 = arith.constant 0 : index
    %c0_274 = arith.constant 0 : index
    %253 = vector.load %arg8[%c16_272, %c0_273, %c0_274] : memref<27x54x54xbf16, #tpu.memory_space<vmem>>, vector<1x54x54xbf16>
    %254 = vector.shape_cast %253 : vector<1x54x54xbf16> to vector<54x54xbf16>
    %cst_275 = arith.constant dense<0.000000e+00> : vector<16x54xf32>
    %255 = tpu.matmul %204, %254, %cst_275 {dimension_numbers = #tpu.dot_dimension_numbers<[1], [0], [0], [1], [0, 0, 1, 1], [], []>} : vector<16x54xbf16>, vector<54x54xbf16>, vector<16x54xf32> -> vector<16x54xf32>
    %c17_276 = arith.constant 17 : index
    %c0_277 = arith.constant 0 : index
    %c0_278 = arith.constant 0 : index
    %256 = vector.load %arg8[%c17_276, %c0_277, %c0_278] : memref<27x54x54xbf16, #tpu.memory_space<vmem>>, vector<1x54x54xbf16>
    %257 = vector.shape_cast %256 : vector<1x54x54xbf16> to vector<54x54xbf16>
    %cst_279 = arith.constant dense<0.000000e+00> : vector<16x54xf32>
    %258 = tpu.matmul %204, %257, %cst_279 {dimension_numbers = #tpu.dot_dimension_numbers<[1], [0], [0], [1], [0, 0, 1, 1], [], []>} : vector<16x54xbf16>, vector<54x54xbf16>, vector<16x54xf32> -> vector<16x54xf32>
    %c18_280 = arith.constant 18 : index
    %c0_281 = arith.constant 0 : index
    %c0_282 = arith.constant 0 : index
    %259 = vector.load %arg8[%c18_280, %c0_281, %c0_282] : memref<27x54x54xbf16, #tpu.memory_space<vmem>>, vector<1x54x54xbf16>
    %260 = vector.shape_cast %259 : vector<1x54x54xbf16> to vector<54x54xbf16>
    %cst_283 = arith.constant dense<0.000000e+00> : vector<16x54xf32>
    %261 = tpu.matmul %204, %260, %cst_283 {dimension_numbers = #tpu.dot_dimension_numbers<[1], [0], [0], [1], [0, 0, 1, 1], [], []>} : vector<16x54xbf16>, vector<54x54xbf16>, vector<16x54xf32> -> vector<16x54xf32>
    %c19_284 = arith.constant 19 : index
    %c0_285 = arith.constant 0 : index
    %c0_286 = arith.constant 0 : index
    %262 = vector.load %arg8[%c19_284, %c0_285, %c0_286] : memref<27x54x54xbf16, #tpu.memory_space<vmem>>, vector<1x54x54xbf16>
    %263 = vector.shape_cast %262 : vector<1x54x54xbf16> to vector<54x54xbf16>
    %cst_287 = arith.constant dense<0.000000e+00> : vector<16x54xf32>
    %264 = tpu.matmul %204, %263, %cst_287 {dimension_numbers = #tpu.dot_dimension_numbers<[1], [0], [0], [1], [0, 0, 1, 1], [], []>} : vector<16x54xbf16>, vector<54x54xbf16>, vector<16x54xf32> -> vector<16x54xf32>
    %c20_288 = arith.constant 20 : index
    %c0_289 = arith.constant 0 : index
    %c0_290 = arith.constant 0 : index
    %265 = vector.load %arg8[%c20_288, %c0_289, %c0_290] : memref<27x54x54xbf16, #tpu.memory_space<vmem>>, vector<1x54x54xbf16>
    %266 = vector.shape_cast %265 : vector<1x54x54xbf16> to vector<54x54xbf16>
    %cst_291 = arith.constant dense<0.000000e+00> : vector<16x54xf32>
    %267 = tpu.matmul %204, %266, %cst_291 {dimension_numbers = #tpu.dot_dimension_numbers<[1], [0], [0], [1], [0, 0, 1, 1], [], []>} : vector<16x54xbf16>, vector<54x54xbf16>, vector<16x54xf32> -> vector<16x54xf32>
    %c21_292 = arith.constant 21 : index
    %c0_293 = arith.constant 0 : index
    %c0_294 = arith.constant 0 : index
    %268 = vector.load %arg8[%c21_292, %c0_293, %c0_294] : memref<27x54x54xbf16, #tpu.memory_space<vmem>>, vector<1x54x54xbf16>
    %269 = vector.shape_cast %268 : vector<1x54x54xbf16> to vector<54x54xbf16>
    %cst_295 = arith.constant dense<0.000000e+00> : vector<16x54xf32>
    %270 = tpu.matmul %204, %269, %cst_295 {dimension_numbers = #tpu.dot_dimension_numbers<[1], [0], [0], [1], [0, 0, 1, 1], [], []>} : vector<16x54xbf16>, vector<54x54xbf16>, vector<16x54xf32> -> vector<16x54xf32>
    %c22_296 = arith.constant 22 : index
    %c0_297 = arith.constant 0 : index
    %c0_298 = arith.constant 0 : index
    %271 = vector.load %arg8[%c22_296, %c0_297, %c0_298] : memref<27x54x54xbf16, #tpu.memory_space<vmem>>, vector<1x54x54xbf16>
    %272 = vector.shape_cast %271 : vector<1x54x54xbf16> to vector<54x54xbf16>
    %cst_299 = arith.constant dense<0.000000e+00> : vector<16x54xf32>
    %273 = tpu.matmul %204, %272, %cst_299 {dimension_numbers = #tpu.dot_dimension_numbers<[1], [0], [0], [1], [0, 0, 1, 1], [], []>} : vector<16x54xbf16>, vector<54x54xbf16>, vector<16x54xf32> -> vector<16x54xf32>
    %c23_300 = arith.constant 23 : index
    %c0_301 = arith.constant 0 : index
    %c0_302 = arith.constant 0 : index
    %274 = vector.load %arg8[%c23_300, %c0_301, %c0_302] : memref<27x54x54xbf16, #tpu.memory_space<vmem>>, vector<1x54x54xbf16>
    %275 = vector.shape_cast %274 : vector<1x54x54xbf16> to vector<54x54xbf16>
    %cst_303 = arith.constant dense<0.000000e+00> : vector<16x54xf32>
    %276 = tpu.matmul %204, %275, %cst_303 {dimension_numbers = #tpu.dot_dimension_numbers<[1], [0], [0], [1], [0, 0, 1, 1], [], []>} : vector<16x54xbf16>, vector<54x54xbf16>, vector<16x54xf32> -> vector<16x54xf32>
    %c24_304 = arith.constant 24 : index
    %c0_305 = arith.constant 0 : index
    %c0_306 = arith.constant 0 : index
    %277 = vector.load %arg8[%c24_304, %c0_305, %c0_306] : memref<27x54x54xbf16, #tpu.memory_space<vmem>>, vector<1x54x54xbf16>
    %278 = vector.shape_cast %277 : vector<1x54x54xbf16> to vector<54x54xbf16>
    %cst_307 = arith.constant dense<0.000000e+00> : vector<16x54xf32>
    %279 = tpu.matmul %204, %278, %cst_307 {dimension_numbers = #tpu.dot_dimension_numbers<[1], [0], [0], [1], [0, 0, 1, 1], [], []>} : vector<16x54xbf16>, vector<54x54xbf16>, vector<16x54xf32> -> vector<16x54xf32>
    %c25_308 = arith.constant 25 : index
    %c0_309 = arith.constant 0 : index
    %c0_310 = arith.constant 0 : index
    %280 = vector.load %arg8[%c25_308, %c0_309, %c0_310] : memref<27x54x54xbf16, #tpu.memory_space<vmem>>, vector<1x54x54xbf16>
    %281 = vector.shape_cast %280 : vector<1x54x54xbf16> to vector<54x54xbf16>
    %cst_311 = arith.constant dense<0.000000e+00> : vector<16x54xf32>
    %282 = tpu.matmul %204, %281, %cst_311 {dimension_numbers = #tpu.dot_dimension_numbers<[1], [0], [0], [1], [0, 0, 1, 1], [], []>} : vector<16x54xbf16>, vector<54x54xbf16>, vector<16x54xf32> -> vector<16x54xf32>
    %c26_312 = arith.constant 26 : index
    %c0_313 = arith.constant 0 : index
    %c0_314 = arith.constant 0 : index
    %283 = vector.load %arg8[%c26_312, %c0_313, %c0_314] : memref<27x54x54xbf16, #tpu.memory_space<vmem>>, vector<1x54x54xbf16>
    %284 = vector.shape_cast %283 : vector<1x54x54xbf16> to vector<54x54xbf16>
    %cst_315 = arith.constant dense<0.000000e+00> : vector<16x54xf32>
    %285 = tpu.matmul %204, %284, %cst_315 {dimension_numbers = #tpu.dot_dimension_numbers<[1], [0], [0], [1], [0, 0, 1, 1], [], []>} : vector<16x54xbf16>, vector<54x54xbf16>, vector<16x54xf32> -> vector<16x54xf32>
    %286 = tpu.concatenate %207, %210, %213, %216, %219, %222, %225, %228, %231, %234, %237, %240, %243, %246, %249, %252 in 0 : vector<16x54xf32>, vector<16x54xf32>, vector<16x54xf32>, vector<16x54xf32>, vector<16x54xf32>, vector<16x54xf32>, vector<16x54xf32>, vector<16x54xf32>, vector<16x54xf32>, vector<16x54xf32>, vector<16x54xf32>, vector<16x54xf32>, vector<16x54xf32>, vector<16x54xf32>, vector<16x54xf32>, vector<16x54xf32> -> vector<256x54xf32>
    %287 = tpu.concatenate %255, %258, %261, %264, %267, %270, %273, %276, %279, %282, %285 in 0 : vector<16x54xf32>, vector<16x54xf32>, vector<16x54xf32>, vector<16x54xf32>, vector<16x54xf32>, vector<16x54xf32>, vector<16x54xf32>, vector<16x54xf32>, vector<16x54xf32>, vector<16x54xf32>, vector<16x54xf32> -> vector<176x54xf32>
    %288 = tpu.concatenate %286, %287 in 0 : vector<256x54xf32>, vector<176x54xf32> -> vector<432x54xf32>
    %289 = arith.truncf %288 : vector<432x54xf32> to vector<432x54xbf16>
    %c0_316 = arith.constant 0 : index
    %c0_317 = arith.constant 0 : index
    %290 = vector.load %arg6[%c0_316, %c0_317] : memref<16x432xbf16, #tpu.memory_space<vmem>>, vector<16x432xbf16>
    %cst_318 = arith.constant dense<0.000000e+00> : vector<16x54xf32>
    %291 = tpu.matmul %290, %289, %cst_318 {dimension_numbers = #tpu.dot_dimension_numbers<[1], [0], [0], [1], [0, 0, 1, 1], [], []>} : vector<16x432xbf16>, vector<432x54xbf16>, vector<16x54xf32> -> vector<16x54xf32>
    %cst_319 = arith.constant 0.000000e+00 : f32
    %292 = vector.broadcast %cst_319 : f32 to vector<16x54xf32>
    %293 = arith.maximumf %291, %292 : vector<16x54xf32>
    %294 = vector.extract_strided_slice %293 {offsets = [0, 0], sizes = [16, 27], strides = [1, 1]} : vector<16x54xf32> to vector<16x27xf32>
    %cst_320 = arith.constant dense<0.000000e+00> : vector<16xf32>
    %295 = vector.multi_reduction <add>, %294, %cst_320 [1] : vector<16x27xf32> to vector<16xf32>
    %296 = vector.shape_cast %295 : vector<16xf32> to vector<16x1xf32>
    %cst_321 = arith.constant 0.0370370373 : f32
    %297 = vector.broadcast %cst_321 : f32 to vector<16x1xf32>
    %298 = arith.mulf %296, %297 : vector<16x1xf32>
    %c0_322 = arith.constant 0 : index
    %c0_323 = arith.constant 0 : index
    %299 = vector.load %arg9[%c0_322, %c0_323] : memref<16x128xf32, #tpu.memory_space<vmem>>, vector<16x128xf32>
    %300 = vector.broadcast %298 : vector<16x1xf32> to vector<16x128xf32>
    %301 = arith.mulf %299, %300 : vector<16x128xf32>
    %cst_324 = arith.constant dense<0.000000e+00> : vector<128xf32>
    %302 = vector.multi_reduction <add>, %301, %cst_324 [0] : vector<16x128xf32> to vector<128xf32>
    %303 = vector.shape_cast %302 : vector<128xf32> to vector<1x128xf32>
    %c0_325 = arith.constant 0 : index
    %c0_326 = arith.constant 0 : index
    %304 = vector.load %arg10[%c0_325, %c0_326] : memref<1x128xf32, #tpu.memory_space<vmem>>, vector<1x128xf32>
    %305 = arith.addf %303, %304 : vector<1x128xf32>
    %306 = vector.extract_strided_slice %293 {offsets = [0, 27], sizes = [16, 27], strides = [1, 1]} : vector<16x54xf32> to vector<16x27xf32>
    %cst_327 = arith.constant dense<0.000000e+00> : vector<16xf32>
    %307 = vector.multi_reduction <add>, %306, %cst_327 [1] : vector<16x27xf32> to vector<16xf32>
    %308 = vector.shape_cast %307 : vector<16xf32> to vector<16x1xf32>
    %cst_328 = arith.constant 0.0370370373 : f32
    %309 = vector.broadcast %cst_328 : f32 to vector<16x1xf32>
    %310 = arith.mulf %308, %309 : vector<16x1xf32>
    %c0_329 = arith.constant 0 : index
    %c0_330 = arith.constant 0 : index
    %311 = vector.load %arg9[%c0_329, %c0_330] : memref<16x128xf32, #tpu.memory_space<vmem>>, vector<16x128xf32>
    %312 = vector.broadcast %310 : vector<16x1xf32> to vector<16x128xf32>
    %313 = arith.mulf %311, %312 : vector<16x128xf32>
    %cst_331 = arith.constant dense<0.000000e+00> : vector<128xf32>
    %314 = vector.multi_reduction <add>, %313, %cst_331 [0] : vector<16x128xf32> to vector<128xf32>
    %315 = vector.shape_cast %314 : vector<128xf32> to vector<1x128xf32>
    %c0_332 = arith.constant 0 : index
    %c0_333 = arith.constant 0 : index
    %316 = vector.load %arg10[%c0_332, %c0_333] : memref<1x128xf32, #tpu.memory_space<vmem>>, vector<1x128xf32>
    %317 = arith.addf %315, %316 : vector<1x128xf32>
    %318 = tpu.concatenate %305, %317 in 0 : vector<1x128xf32>, vector<1x128xf32> -> vector<2x128xf32>
    %c0_334 = arith.constant 0 : index
    %c0_335 = arith.constant 0 : index
    %c0_336 = arith.constant 0 : index
    %319 = vector.load %arg11[%c0_334, %c0_335, %c0_336] : memref<1x2x128xf32, #tpu.memory_space<vmem>>, vector<1x2x128xf32>
    %320 = vector.shape_cast %319 : vector<1x2x128xf32> to vector<2x128xf32>
    %321 = vector.shape_cast %318 : vector<2x128xf32> to vector<1x2x128xf32>
    tpu.vector_store %arg11[%c0_334, %c0_335, %c0_336], %321 {strides = array<i32>} : memref<1x2x128xf32, #tpu.memory_space<vmem>>, vector<1x2x128xf32>,
    return
  }
  func.func @transform_0(%arg0: i32) -> (i32, i32, i32) {
    %c0_i32 = arith.constant 0 : i32
    %c0_i32_0 = arith.constant 0 : i32
    %c0_i32_1 = arith.constant 0 : i32
    return %arg0, %c0_i32, %c0_i32_0 : i32, i32, i32
  }
  func.func @transform_1(%arg0: i32) -> (i32, i32) {
    %c0_i32 = arith.constant 0 : i32
    %c0_i32_0 = arith.constant 0 : i32
    %c0_i32_1 = arith.constant 0 : i32
    return %c0_i32, %c0_i32_0 : i32, i32
  }
  func.func @transform_2(%arg0: i32) -> (i32, i32) {
    %c0_i32 = arith.constant 0 : i32
    %c0_i32_0 = arith.constant 0 : i32
    %c0_i32_1 = arith.constant 0 : i32
    return %c0_i32, %c0_i32_0 : i32, i32
  }
  func.func @transform_3(%arg0: i32) -> (i32, i32) {
    %c0_i32 = arith.constant 0 : i32
    %c0_i32_0 = arith.constant 0 : i32
    %c0_i32_1 = arith.constant 0 : i32
    return %c0_i32, %c0_i32_0 : i32, i32
  }
  func.func @transform_4(%arg0: i32) -> (i32, i32) {
    %c0_i32 = arith.constant 0 : i32
    %c0_i32_0 = arith.constant 0 : i32
    %c0_i32_1 = arith.constant 0 : i32
    return %c0_i32, %c0_i32_0 : i32, i32
  }
  func.func @transform_5(%arg0: i32) -> (i32, i32) {
    %c0_i32 = arith.constant 0 : i32
    %c0_i32_0 = arith.constant 0 : i32
    %c0_i32_1 = arith.constant 0 : i32
    return %c0_i32, %c0_i32_0 : i32, i32
  }
  func.func @transform_6(%arg0: i32) -> (i32, i32) {
    %c0_i32 = arith.constant 0 : i32
    %c0_i32_0 = arith.constant 0 : i32
    %c0_i32_1 = arith.constant 0 : i32
    return %c0_i32, %c0_i32_0 : i32, i32
  }
  func.func @transform_7(%arg0: i32) -> (i32, i32, i32) {
    %c0_i32 = arith.constant 0 : i32
    %c0_i32_0 = arith.constant 0 : i32
    %c0_i32_1 = arith.constant 0 : i32
    %c0_i32_2 = arith.constant 0 : i32
    return %c0_i32, %c0_i32_0, %c0_i32_1 : i32, i32, i32
  }
  func.func @transform_8(%arg0: i32) -> (i32, i32) {
    %c0_i32 = arith.constant 0 : i32
    %c0_i32_0 = arith.constant 0 : i32
    %c0_i32_1 = arith.constant 0 : i32
    return %c0_i32, %c0_i32_0 : i32, i32
  }
  func.func @transform_9(%arg0: i32) -> (i32, i32) {
    %c0_i32 = arith.constant 0 : i32
    %c0_i32_0 = arith.constant 0 : i32
    %c0_i32_1 = arith.constant 0 : i32
    return %c0_i32, %c0_i32_0 : i32, i32
  }
  func.func @transform_10(%arg0: i32) -> (i32, i32, i32) {
    %c0_i32 = arith.constant 0 : i32
    %c0_i32_0 = arith.constant 0 : i32
    %c0_i32_1 = arith.constant 0 : i32
    return %arg0, %c0_i32, %c0_i32_0 : i32, i32, i32
  }
}

</mosaic_0001>

<llo_original>
// kernel: vggnet_forward.1
$region0: #{vggnet_forward.1}
  #allocation0 [shape = 'u32[]', space=smem, size = 0x4, offset = 0x4, fixed_abs, tag = 'smem constant byte address 0x4 - core index']
  #allocation1 [shape = 'u32[144,128]{1,0:T(1,128)}', space=vmem, size = 0x12000, scoped, tag = 'internal scratch']
  %s0 = inlined_call_operand.vmem [shape: bf16[1,108,1024], index: 0, kind: input, shape index: {}]
  %s1 = inlined_call_operand.vmem [shape: bf16[8,108], index: 1, kind: input, shape index: {}]
  %s2 = inlined_call_operand.vmem [shape: f32[8,1], index: 2, kind: input, shape index: {}]
  %s3 = inlined_call_operand.vmem [shape: bf16[8,216], index: 3, kind: input, shape index: {}]
  %s4 = inlined_call_operand.vmem [shape: bf16[16,216], index: 4, kind: input, shape index: {}]
  %s5 = inlined_call_operand.vmem [shape: bf16[16,432], index: 5, kind: input, shape index: {}]
  %s6 = inlined_call_operand.vmem [shape: bf16[1024,54], index: 6, kind: input, shape index: {}]
  %s7 = inlined_call_operand.vmem [shape: bf16[27,54,54], index: 7, kind: input, shape index: {}]
  %s8 = inlined_call_operand.vmem [shape: f32[16,128], index: 8, kind: input, shape index: {}]
  %s9 = inlined_call_operand.vmem [shape: f32[1,128], index: 9, kind: input, shape index: {}]
  %s10 = inlined_call_operand.hbm [shape: f32[1,2,128], index: 10, kind: output, shape index: {}]
  %s11 = sld [smem:[#allocation0]]
  $region50: #{vggnet_forward.1} parent=0
    _
  %s13 = ssub.s32 1, %s11
  %s14 = scalar_select 0, %s13, %s11
  $region1: #{vggnet_forward.1} parent=0
    #allocation2 [shape = 'u8[1024]{0}', space=vmem, size = 0x400, scoped, tag = 'output window, operand 0, single buffered']
    #allocation3 [shape = 's32[1]{0}', space=sflag, size = 0x4, scoped, tag = 'scoped memory for vggnet_forward.1']
    %15 = vsyncpa [#allocation3], 0
    // Predicated region
    $region2: #{vggnet_forward.1} parent=1 // pred_check
      _
    $region3: #{vggnet_forward.1} parent=1 // pred_check_branch
      %17 = sbr.rel (0) target = $region5
    $region4: #{vggnet_forward.1} parent=1 // pred_region
      _
    $region5: #{vggnet_forward.1} parent=1 // pred_fallthru
      _
    // Predicated region
    $region6: #{vggnet_forward.1} parent=1 // pred_check
      _
    $region7: #{vggnet_forward.1} parent=1 // pred_check_branch
      %19 = sbr.rel (0) target = $region9
    $region8: #{vggnet_forward.1} parent=1 // pred_region
      _
    $region9: #{vggnet_forward.1} parent=1 // pred_fallthru
      _
    // Predicated region
    $region10: #{vggnet_forward.1} parent=1 // pred_check
      _
    $region11: #{vggnet_forward.1} parent=1 // pred_check_branch
      %21 = sbr.rel (0) target = $region13
    $region12: #{vggnet_forward.1} parent=1 // pred_region
      _
    $region13: #{vggnet_forward.1} parent=1 // pred_fallthru
      _
    // Predicated region
    $region14: #{vggnet_forward.1} parent=1 // pred_check
      _
    $region15: #{vggnet_forward.1} parent=1 // pred_check_branch
      %23 = sbr.rel (0) target = $region17
    $region16: #{vggnet_forward.1} parent=1 // pred_region
      _
    $region17: #{vggnet_forward.1} parent=1 // pred_fallthru
      _
    // Predicated region
    $region18: #{vggnet_forward.1} parent=1 // pred_check
      _
    $region19: #{vggnet_forward.1} parent=1 // pred_check_branch
      %25 = sbr.rel (0) target = $region21
    $region20: #{vggnet_forward.1} parent=1 // pred_region
      _
    $region21: #{vggnet_forward.1} parent=1 // pred_fallthru
      _
    // Predicated region
    $region22: #{vggnet_forward.1} parent=1 // pred_check
      _
    $region23: #{vggnet_forward.1} parent=1 // pred_check_branch
      %27 = sbr.rel (0) target = $region25
    $region24: #{vggnet_forward.1} parent=1 // pred_region
      _
    $region25: #{vggnet_forward.1} parent=1 // pred_fallthru
      _
    // Predicated region
    $region26: #{vggnet_forward.1} parent=1 // pred_check
      _
    $region27: #{vggnet_forward.1} parent=1 // pred_check_branch
      %29 = sbr.rel (0) target = $region29
    $region28: #{vggnet_forward.1} parent=1 // pred_region
      _
    $region29: #{vggnet_forward.1} parent=1 // pred_fallthru
      _
    // Predicated region
    $region30: #{vggnet_forward.1} parent=1 // pred_check
      _
    $region31: #{vggnet_forward.1} parent=1 // pred_check_branch
      %31 = sbr.rel (0) target = $region33
    $region32: #{vggnet_forward.1} parent=1 // pred_region
      _
    $region33: #{vggnet_forward.1} parent=1 // pred_fallthru
      _
    // Predicated region
    $region34: #{vggnet_forward.1} parent=1 // pred_check
      _
    $region35: #{vggnet_forward.1} parent=1 // pred_check_branch
      %33 = sbr.rel (0) target = $region37
    $region36: #{vggnet_forward.1} parent=1 // pred_region
      _
    $region37: #{vggnet_forward.1} parent=1 // pred_fallthru
      _
    // Predicated region
    $region38: #{vggnet_forward.1} parent=1 // pred_check
      _
    $region39: #{vggnet_forward.1} parent=1 // pred_check_branch
      %35 = sbr.rel (0) target = $region41
    $region40: #{vggnet_forward.1} parent=1 // pred_region
      _
    $region41: #{vggnet_forward.1} parent=1 // pred_fallthru
      _
    %v37 = vld [vmem:[%s1] sm:$0xf]
    %v38 = vld [vmem:[%s0] sm:$0xff]
    %v39 = vld [vmem:[%s0 + $0x8] sm:$0xff]
    %v40 = vld [vmem:[%s0 + $0x10] sm:$0xff]
    %v41 = vld [vmem:[%s0 + $0x18] sm:$0xff]
    %v42 = vld [vmem:[%s0 + $0x20] sm:$0xff]
    %v43 = vld [vmem:[%s0 + $0x28] sm:$0xff]
    %v44 = vld [vmem:[%s0 + $0x30] sm:$0xff]
    %v45 = vld [vmem:[%s0 + $0x38] sm:$0xff]
    %v46 = vld [vmem:[%s0 + $0x40] sm:$0xff]
    %v47 = vld [vmem:[%s0 + $0x48] sm:$0xff]
    %v48 = vld [vmem:[%s0 + $0x50] sm:$0xff]
    %v49 = vld [vmem:[%s0 + $0x58] sm:$0xff]
    %v50 = vld [vmem:[%s0 + $0x60] sm:$0xff]
    %v51 = vld [vmem:[%s0 + $0x68] sm:$0xff]
    %v52 = vld [vmem:[%s0 + $0x70] sm:$0xff]
    %v53 = vld [vmem:[%s0 + $0x78] sm:$0xff]
    %v54 = vld [vmem:[%s0 + $0x80] sm:$0xff]
    %v55 = vld [vmem:[%s0 + $0x88] sm:$0xff]
    %v56 = vld [vmem:[%s0 + $0x90] sm:$0xff]
    %v57 = vld [vmem:[%s0 + $0x98] sm:$0xff]
    %v58 = vld [vmem:[%s0 + $0xa0] sm:$0xff]
    %v59 = vld [vmem:[%s0 + $0xa8] sm:$0xff]
    %v60 = vld [vmem:[%s0 + $0xb0] sm:$0xff]
    %v61 = vld [vmem:[%s0 + $0xb8] sm:$0xff]
    %v62 = vld [vmem:[%s0 + $0xc0] sm:$0xff]
    %v63 = vld [vmem:[%s0 + $0xc8] sm:$0xff]
    %v64 = vld [vmem:[%s0 + $0xd0] sm:$0xff]
    %v65 = vld [vmem:[%s0 + $0xd8] sm:$0xff]
    %v66 = vld [vmem:[%s0 + $0xe0] sm:$0xff]
    %v67 = vld [vmem:[%s0 + $0xe8] sm:$0xff]
    %v68 = vld [vmem:[%s0 + $0xf0] sm:$0xff]
    %v69 = vld [vmem:[%s0 + $0xf8] sm:$0xff]
    %v70 = vld [vmem:[%s0 + $0x100] sm:$0xff]
    %v71 = vld [vmem:[%s0 + $0x108] sm:$0xff]
    %v72 = vld [vmem:[%s0 + $0x110] sm:$0xff]
    %v73 = vld [vmem:[%s0 + $0x118] sm:$0xff]
    %v74 = vld [vmem:[%s0 + $0x120] sm:$0xff]
    %v75 = vld [vmem:[%s0 + $0x128] sm:$0xff]
    %v76 = vld [vmem:[%s0 + $0x130] sm:$0xff]
    %v77 = vld [vmem:[%s0 + $0x138] sm:$0xff]
    %v78 = vld [vmem:[%s0 + $0x140] sm:$0xff]
    %v79 = vld [vmem:[%s0 + $0x148] sm:$0xff]
    %v80 = vld [vmem:[%s0 + $0x150] sm:$0xff]
    %v81 = vld [vmem:[%s0 + $0x158] sm:$0xff]
    %v82 = vld [vmem:[%s0 + $0x160] sm:$0xff]
    %v83 = vld [vmem:[%s0 + $0x168] sm:$0xff]
    %v84 = vld [vmem:[%s0 + $0x170] sm:$0xff]
    %v85 = vld [vmem:[%s0 + $0x178] sm:$0xff]
    %v86 = vld [vmem:[%s0 + $0x180] sm:$0xff]
    %v87 = vld [vmem:[%s0 + $0x188] sm:$0xff]
    %v88 = vld [vmem:[%s0 + $0x190] sm:$0xff]
    %v89 = vld [vmem:[%s0 + $0x198] sm:$0xff]
    %v90 = vld [vmem:[%s0 + $0x1a0] sm:$0x33]
    %v91 = vld [vmem:[%s0 + $0x1a8] sm:$0x33]
    %v92 = vld [vmem:[%s0 + $0x1b0] sm:$0x33]
    %v93 = vld [vmem:[%s0 + $0x1b8] sm:$0x33]
    %v94 = vld [vmem:[%s2] sm:$0xff]
    %96 = vset.pattern.permute.xlu0 0
    %97 = vperm.xlu0 %96, %v94
    %v98 = vpop.permute.xlu0 %97
    %v156 = vunpack.c.l.b16 %v38
    %v157 = vunpack.c.h.b16 %v38
    %v158 = vunpack.c.l.b16 %v39
    %v159 = vunpack.c.h.b16 %v39
    %v160 = vunpack.c.l.b16 %v40
    %v161 = vunpack.c.h.b16 %v40
    %v162 = vunpack.c.l.b16 %v41
    %v163 = vunpack.c.h.b16 %v41
    %v164 = vunpack.c.l.b16 %v42
    %v165 = vunpack.c.h.b16 %v42
    %v166 = vunpack.c.l.b16 %v43
    %v167 = vunpack.c.h.b16 %v43
    %v168 = vunpack.c.l.b16 %v44
    %v169 = vunpack.c.h.b16 %v44
    %v170 = vunpack.c.l.b16 %v45
    %v171 = vunpack.c.h.b16 %v45
    %v172 = vunpack.c.l.b16 %v46
    %v173 = vunpack.c.h.b16 %v46
    %v174 = vunpack.c.l.b16 %v47
    %v175 = vunpack.c.h.b16 %v47
    %v176 = vunpack.c.l.b16 %v48
    %v177 = vunpack.c.h.b16 %v48
    %v178 = vunpack.c.l.b16 %v49
    %v179 = vunpack.c.h.b16 %v49
    %v180 = vunpack.c.l.b16 %v50
    %v181 = vunpack.c.h.b16 %v50
    %v182 = vunpack.c.l.b16 %v51
    %v183 = vunpack.c.h.b16 %v51
    %v184 = vunpack.c.l.b16 %v52
    %v185 = vunpack.c.h.b16 %v52
    %v186 = vunpack.c.l.b16 %v53
    %v187 = vunpack.c.h.b16 %v53
    %v188 = vunpack.c.l.b16 %v54
    %v189 = vunpack.c.h.b16 %v54
    %v190 = vunpack.c.l.b16 %v55
    %v191 = vunpack.c.h.b16 %v55
    %v192 = vunpack.c.l.b16 %v56
    %v193 = vunpack.c.h.b16 %v56
    %v194 = vunpack.c.l.b16 %v57
    %v195 = vunpack.c.h.b16 %v57
    %v196 = vunpack.c.l.b16 %v58
    %v197 = vunpack.c.h.b16 %v58
    %v198 = vunpack.c.l.b16 %v59
    %v199 = vunpack.c.h.b16 %v59
    %v200 = vunpack.c.l.b16 %v60
    %v201 = vunpack.c.h.b16 %v60
    %v202 = vunpack.c.l.b16 %v61
    %v203 = vunpack.c.h.b16 %v61
    %v204 = vunpack.c.l.b16 %v62
    %v205 = vunpack.c.h.b16 %v62
    %v206 = vunpack.c.l.b16 %v63
    %v207 = vunpack.c.h.b16 %v63
    %v208 = vunpack.c.l.b16 %v64
    %v209 = vunpack.c.h.b16 %v64
    %v210 = vunpack.c.l.b16 %v65
    %v211 = vunpack.c.h.b16 %v65
    %v212 = vunpack.c.l.b16 %v66
    %v213 = vunpack.c.h.b16 %v66
    %v214 = vunpack.c.l.b16 %v67
    %v215 = vunpack.c.h.b16 %v67
    %v216 = vunpack.c.l.b16 %v68
    %v217 = vunpack.c.h.b16 %v68
    %v218 = vunpack.c.l.b16 %v69
    %v219 = vunpack.c.h.b16 %v69
    %v220 = vunpack.c.l.b16 %v70
    %v221 = vunpack.c.h.b16 %v70
    %v222 = vunpack.c.l.b16 %v71
    %v223 = vunpack.c.h.b16 %v71
    %v224 = vunpack.c.l.b16 %v72
    %v225 = vunpack.c.h.b16 %v72
    %v226 = vunpack.c.l.b16 %v73
    %v227 = vunpack.c.h.b16 %v73
    %v228 = vunpack.c.l.b16 %v74
    %v229 = vunpack.c.h.b16 %v74
    %v230 = vunpack.c.l.b16 %v75
    %v231 = vunpack.c.h.b16 %v75
    %v232 = vunpack.c.l.b16 %v76
    %v233 = vunpack.c.h.b16 %v76
    %v234 = vunpack.c.l.b16 %v77
    %v235 = vunpack.c.h.b16 %v77
    %v236 = vunpack.c.l.b16 %v78
    %v237 = vunpack.c.h.b16 %v78
    %v238 = vunpack.c.l.b16 %v79
    %v239 = vunpack.c.h.b16 %v79
    %v240 = vunpack.c.l.b16 %v80
    %v241 = vunpack.c.h.b16 %v80
    %v242 = vunpack.c.l.b16 %v81
    %v243 = vunpack.c.h.b16 %v81
    %v244 = vunpack.c.l.b16 %v82
    %v245 = vunpack.c.h.b16 %v82
    %v246 = vunpack.c.l.b16 %v83
    %v247 = vunpack.c.h.b16 %v83
    %v248 = vunpack.c.l.b16 %v84
    %v249 = vunpack.c.h.b16 %v84
    %v250 = vunpack.c.l.b16 %v85
    %v251 = vunpack.c.h.b16 %v85
    %v252 = vunpack.c.l.b16 %v86
    %v253 = vunpack.c.h.b16 %v86
    %v254 = vunpack.c.l.b16 %v87
    %v255 = vunpack.c.h.b16 %v87
    %v256 = vunpack.c.l.b16 %v88
    %v257 = vunpack.c.h.b16 %v88
    %v258 = vunpack.c.l.b16 %v89
    %v259 = vunpack.c.h.b16 %v89
    %v260 = vunpack.c.l.b16 %v90
    %v261 = vunpack.c.h.b16 %v90
    %v262 = vunpack.c.l.b16 %v91
    %v263 = vunpack.c.h.b16 %v91
    %v264 = vunpack.c.l.b16 %v92
    %v265 = vunpack.c.h.b16 %v92
    %v266 = vunpack.c.l.b16 %v93
    %v267 = vunpack.c.h.b16 %v93
    %v268 = vpack.c.b16 %v164, %v156
    %v269 = vpack.c.b16 %v165, %v157
    %v270 = vpack.c.b16 %v166, %v158
    %v271 = vpack.c.b16 %v167, %v159
    %v272 = vpack.c.b16 %v168, %v160
    %v273 = vpack.c.b16 %v169, %v161
    %v274 = vpack.c.b16 %v170, %v162
    %v275 = vpack.c.b16 %v171, %v163
    %v276 = vpack.c.b16 %v180, %v172
    %v277 = vpack.c.b16 %v181, %v173
    %v278 = vpack.c.b16 %v182, %v174
    %v279 = vpack.c.b16 %v183, %v175
    %v280 = vpack.c.b16 %v184, %v176
    %v281 = vpack.c.b16 %v185, %v177
    %v282 = vpack.c.b16 %v186, %v178
    %v283 = vpack.c.b16 %v187, %v179
    %v284 = vpack.c.b16 %v196, %v188
    %v285 = vpack.c.b16 %v197, %v189
    %v286 = vpack.c.b16 %v198, %v190
    %v287 = vpack.c.b16 %v199, %v191
    %v288 = vpack.c.b16 %v200, %v192
    %v289 = vpack.c.b16 %v201, %v193
    %v290 = vpack.c.b16 %v202, %v194
    %v291 = vpack.c.b16 %v203, %v195
    %v292 = vpack.c.b16 %v212, %v204
    %v293 = vpack.c.b16 %v213, %v205
    %v294 = vpack.c.b16 %v214, %v206
    %v295 = vpack.c.b16 %v215, %v207
    %v296 = vpack.c.b16 %v216, %v208
    %v297 = vpack.c.b16 %v217, %v209
    %v298 = vpack.c.b16 %v218, %v210
    %v299 = vpack.c.b16 %v219, %v211
    %v300 = vpack.c.b16 %v228, %v220
    %v301 = vpack.c.b16 %v229, %v221
    %v302 = vpack.c.b16 %v230, %v222
    %v303 = vpack.c.b16 %v231, %v223
    %v304 = vpack.c.b16 %v232, %v224
    %v305 = vpack.c.b16 %v233, %v225
    %v306 = vpack.c.b16 %v234, %v226
    %v307 = vpack.c.b16 %v235, %v227
    %v308 = vpack.c.b16 %v244, %v236
    %v309 = vpack.c.b16 %v245, %v237
    %v310 = vpack.c.b16 %v246, %v238
    %v311 = vpack.c.b16 %v247, %v239
    %v312 = vpack.c.b16 %v248, %v240
    %v313 = vpack.c.b16 %v249, %v241
    %v314 = vpack.c.b16 %v250, %v242
    %v315 = vpack.c.b16 %v251, %v243
    %v316 = vpack.c.b16 %v260, %v252
    %v317 = vpack.c.b16 %v261, %v253
    %v318 = vpack.c.b16 %v262, %v254
    %v319 = vpack.c.b16 %v263, %v255
    %v320 = vpack.c.b16 %v264, %v256
    %v321 = vpack.c.b16 %v265, %v257
    %v322 = vpack.c.b16 %v266, %v258
    %v323 = vpack.c.b16 %v267, %v259
    %vm372 = vcmask 883712
    %v374 = vsel %vm372, %v37, 0
    %vm376 = vcmask 1045504
    %v378 = vsel %vm376, %v316, 0
    %v381 = vsel %vm376, %v317, 0
    %v384 = vsel %vm376, %v318, 0
    %v387 = vsel %vm376, %v319, 0
    %v390 = vsel %vm376, %v320, 0
    %v393 = vsel %vm376, %v321, 0
    %v396 = vsel %vm376, %v322, 0
    %v399 = vsel %vm376, %v323, 0
    %401 = vmatprep.subr.bf16.mxu0 %v269
    %402 = vmatpush1.bf16.msra.mxu0 %v268
    %403 = vmatprep.subr.bf16.mxu0 %v277
    %404 = vmatpush1.bf16.msra.mxu0 %v276
    %405 = vmatprep.subr.bf16.mxu0 %v285
    %406 = vmatpush1.bf16.msra.mxu0 %v284
    %407 = vmatprep.subr.bf16.mxu0 %v293
    %408 = vmatpush1.bf16.msra.mxu0 %v292
    %409 = vmatprep.subr.bf16.mxu0 %v301
    %410 = vmatpush1.bf16.msra.mxu0 %v300
    %411 = vmatprep.subr.bf16.mxu0 %v309
    %412 = vmatpush1.bf16.msra.mxu0 %v308
    %413 = vmatprep.subr.bf16.mxu0 %v381
    %414 = vmatpush1.bf16.msra.mxu0 %v378
    %415 = vmatprep.subr.bf16.mxu0 0
    %416 = vmatpush1.bf16.msra.mxu0 0
    %417 = vmatprep.subr.bf16.mxu0 0
    %418 = vmatpush1.bf16.msra.mxu0 0
    %419 = vmatprep.subr.bf16.mxu0 0
    %420 = vmatpush1.bf16.msra.mxu0 0
    %421 = vmatprep.subr.bf16.mxu0 0
    %422 = vmatpush1.bf16.msra.mxu0 0
    %423 = vmatprep.subr.bf16.mxu0 0
    %424 = vmatpush1.bf16.msra.mxu0 0
    %425 = vmatprep.subr.bf16.mxu0 0
    %426 = vmatpush1.bf16.msra.mxu0 0
    %427 = vmatprep.subr.bf16.mxu0 0
    %428 = vmatpush1.bf16.msra.mxu0 0
    %429 = vmatprep.subr.bf16.mxu0 0
    %430 = vmatpush1.bf16.msra.mxu0 0
    %431 = vmatprep.subr.bf16.mxu0 0
    %432 = vmatpush1.bf16.msra.mxu0 0
    %433 = vmatprep.mubr.bf16.mxu0 0
    %434 = vmatmul.mubr.bf16.gmra.mrb[0].mxu0 %v374
    %v435 = vpop.f32.mrb[0].mxu0
    %v436 = vadd.f32 %v98, %v435
    %v437 = vpop.f32.mrb[0].mxu0
    %v438 = vadd.f32 %v98, %v437
    %v439 = vpop.f32.mrb[0].mxu0
    %v440 = vpop.f32.mrb[0].mxu0
    %441 = vdwg.mxu0
    %442 = vmatprep.subr.bf16.mxu0 %v271
    %443 = vmatpush1.bf16.msra.mxu0 %v270
    %444 = vmatprep.subr.bf16.mxu0 %v279
    %445 = vmatpush1.bf16.msra.mxu0 %v278
    %446 = vmatprep.subr.bf16.mxu0 %v287
    %447 = vmatpush1.bf16.msra.mxu0 %v286
    %448 = vmatprep.subr.bf16.mxu0 %v295
    %449 = vmatpush1.bf16.msra.mxu0 %v294
    %450 = vmatprep.subr.bf16.mxu0 %v303
    %451 = vmatpush1.bf16.msra.mxu0 %v302
    %452 = vmatprep.subr.bf16.mxu0 %v311
    %453 = vmatpush1.bf16.msra.mxu0 %v310
    %454 = vmatprep.subr.bf16.mxu0 %v387
    %455 = vmatpush1.bf16.msra.mxu0 %v384
    %456 = vmatprep.subr.bf16.mxu0 0
    %457 = vmatpush1.bf16.msra.mxu0 0
    %458 = vmatprep.subr.bf16.mxu0 0
    %459 = vmatpush1.bf16.msra.mxu0 0
    %460 = vmatprep.subr.bf16.mxu0 0
    %461 = vmatpush1.bf16.msra.mxu0 0
    %462 = vmatprep.subr.bf16.mxu0 0
    %463 = vmatpush1.bf16.msra.mxu0 0
    %464 = vmatprep.subr.bf16.mxu0 0
    %465 = vmatpush1.bf16.msra.mxu0 0
    %466 = vmatprep.subr.bf16.mxu0 0
    %467 = vmatpush1.bf16.msra.mxu0 0
    %468 = vmatprep.subr.bf16.mxu0 0
    %469 = vmatpush1.bf16.msra.mxu0 0
    %470 = vmatprep.subr.bf16.mxu0 0
    %471 = vmatpush1.bf16.msra.mxu0 0
    %472 = vmatprep.subr.bf16.mxu0 0
    %473 = vmatpush1.bf16.msra.mxu0 0
    %474 = vmatprep.mubr.bf16.mxu0 0
    %475 = vmatmul.mubr.bf16.gmra.mrb[0].mxu0 %v374
    %v476 = vpop.f32.mrb[0].mxu0
    %v477 = vadd.f32 %v98, %v476
    %v478 = vpop.f32.mrb[0].mxu0
    %v479 = vadd.f32 %v98, %v478
    %v480 = vpop.f32.mrb[0].mxu0
    %v481 = vpop.f32.mrb[0].mxu0
    %482 = vdwg.mxu0
    %483 = vmatprep.subr.bf16.mxu0 %v273
    %484 = vmatpush1.bf16.msra.mxu0 %v272
    %485 = vmatprep.subr.bf16.mxu0 %v281
    %486 = vmatpush1.bf16.msra.mxu0 %v280
    %487 = vmatprep.subr.bf16.mxu0 %v289
    %488 = vmatpush1.bf16.msra.mxu0 %v288
    %489 = vmatprep.subr.bf16.mxu0 %v297
    %490 = vmatpush1.bf16.msra.mxu0 %v296
    %491 = vmatprep.subr.bf16.mxu0 %v305
    %492 = vmatpush1.bf16.msra.mxu0 %v304
    %493 = vmatprep.subr.bf16.mxu0 %v313
    %494 = vmatpush1.bf16.msra.mxu0 %v312
    %495 = vmatprep.subr.bf16.mxu0 %v393
    %496 = vmatpush1.bf16.msra.mxu0 %v390
    %497 = vmatprep.subr.bf16.mxu0 0
    %498 = vmatpush1.bf16.msra.mxu0 0
    %499 = vmatprep.subr.bf16.mxu0 0
    %500 = vmatpush1.bf16.msra.mxu0 0
    %501 = vmatprep.subr.bf16.mxu0 0
    %502 = vmatpush1.bf16.msra.mxu0 0
    %503 = vmatprep.subr.bf16.mxu0 0
    %504 = vmatpush1.bf16.msra.mxu0 0
    %505 = vmatprep.subr.bf16.mxu0 0
    %506 = vmatpush1.bf16.msra.mxu0 0
    %507 = vmatprep.subr.bf16.mxu0 0
    %508 = vmatpush1.bf16.msra.mxu0 0
    %509 = vmatprep.subr.bf16.mxu0 0
    %510 = vmatpush1.bf16.msra.mxu0 0
    %511 = vmatprep.subr.bf16.mxu0 0
    %512 = vmatpush1.bf16.msra.mxu0 0
    %513 = vmatprep.subr.bf16.mxu0 0
    %514 = vmatpush1.bf16.msra.mxu0 0
    %515 = vmatprep.mubr.bf16.mxu0 0
    %516 = vmatmul.mubr.bf16.gmra.mrb[0].mxu0 %v374
    %v517 = vpop.f32.mrb[0].mxu0
    %v518 = vadd.f32 %v98, %v517
    %v519 = vpop.f32.mrb[0].mxu0
    %v520 = vadd.f32 %v98, %v519
    %v521 = vpop.f32.mrb[0].mxu0
    %v522 = vpop.f32.mrb[0].mxu0
    %523 = vdwg.mxu0
    %524 = vmatprep.subr.bf16.mxu0 %v275
    %525 = vmatpush1.bf16.msra.mxu0 %v274
    %526 = vmatprep.subr.bf16.mxu0 %v283
    %527 = vmatpush1.bf16.msra.mxu0 %v282
    %528 = vmatprep.subr.bf16.mxu0 %v291
    %529 = vmatpush1.bf16.msra.mxu0 %v290
    %530 = vmatprep.subr.bf16.mxu0 %v299
    %531 = vmatpush1.bf16.msra.mxu0 %v298
    %532 = vmatprep.subr.bf16.mxu0 %v307
    %533 = vmatpush1.bf16.msra.mxu0 %v306
    %534 = vmatprep.subr.bf16.mxu0 %v315
    %535 = vmatpush1.bf16.msra.mxu0 %v314
    %536 = vmatprep.subr.bf16.mxu0 %v399
    %537 = vmatpush1.bf16.msra.mxu0 %v396
    %538 = vmatprep.subr.bf16.mxu0 0
    %539 = vmatpush1.bf16.msra.mxu0 0
    %540 = vmatprep.subr.bf16.mxu0 0
    %541 = vmatpush1.bf16.msra.mxu0 0
    %542 = vmatprep.subr.bf16.mxu0 0
    %543 = vmatpush1.bf16.msra.mxu0 0
    %544 = vmatprep.subr.bf16.mxu0 0
    %545 = vmatpush1.bf16.msra.mxu0 0
    %546 = vmatprep.subr.bf16.mxu0 0
    %547 = vmatpush1.bf16.msra.mxu0 0
    %548 = vmatprep.subr.bf16.mxu0 0
    %549 = vmatpush1.bf16.msra.mxu0 0
    %550 = vmatprep.subr.bf16.mxu0 0
    %551 = vmatpush1.bf16.msra.mxu0 0
    %552 = vmatprep.subr.bf16.mxu0 0
    %553 = vmatpush1.bf16.msra.mxu0 0
    %554 = vmatprep.subr.bf16.mxu0 0
    %555 = vmatpush1.bf16.msra.mxu0 0
    %556 = vmatprep.mubr.bf16.mxu0 0
    %557 = vmatmul.mubr.bf16.gmra.mrb[0].mxu0 %v374
    %v558 = vpop.f32.mrb[0].mxu0
    %v559 = vadd.f32 %v98, %v558
    %v560 = vpop.f32.mrb[0].mxu0
    %v561 = vadd.f32 %v98, %v560
    %v562 = vpop.f32.mrb[0].mxu0
    %v563 = vpop.f32.mrb[0].mxu0
    %564 = vdwg.mxu0
    %v565 = vmax.f32 %v436, 0.0
    %v566 = vmax.f32 %v438, 0.0
    %v567 = vmax.f32 %v477, 0.0
    %v568 = vmax.f32 %v479, 0.0
    %v569 = vmax.f32 %v518, 0.0
    %v570 = vmax.f32 %v520, 0.0
    %v571 = vmax.f32 %v559, 0.0
    %v572 = vmax.f32 %v561, 0.0
    %573 = vrot.lane.b32.xlu0 %v565, 127
    %v574 = vpop.permute.xlu0 %573
    %575 = vrot.lane.b32.xlu0 %v566, 127
    %v576 = vpop.permute.xlu0 %575
    %577 = vrot.lane.b32.xlu0 %v567, 127
    %v578 = vpop.permute.xlu0 %577
    %579 = vrot.lane.b32.xlu0 %v568, 127
    %v580 = vpop.permute.xlu0 %579
    %581 = vrot.lane.b32.xlu0 %v569, 127
    %v582 = vpop.permute.xlu0 %581
    %583 = vrot.lane.b32.xlu0 %v570, 127
    %v584 = vpop.permute.xlu0 %583
    %585 = vrot.lane.b32.xlu0 %v571, 127
    %v586 = vpop.permute.xlu0 %585
    %587 = vrot.lane.b32.xlu0 %v572, 127
    %v588 = vpop.permute.xlu0 %587
    %v589 = vlaneseq
    %v590 = vand.u32 %v589, 127
    %vm591 = vcmp.lt.s32.totalorder %v590, 127
    %v592 = vsel %vm591, %v586, %v588
    %v593 = vsel %vm591, %v584, %v586
    %v594 = vsel %vm591, %v582, %v584
    %v595 = vsel %vm591, %v580, %v582
    %v596 = vsel %vm591, %v578, %v580
    %v597 = vsel %vm591, %v576, %v578
    %v598 = vsel %vm591, %v574, %v576
    %v599 = vsel %vm591, %v588, %v574
    %v600 = vmax.f32 %v565, %v598
    %v601 = vmax.f32 %v566, %v597
    %v602 = vmax.f32 %v567, %v596
    %v603 = vmax.f32 %v568, %v595
    %v604 = vmax.f32 %v569, %v594
    %v605 = vmax.f32 %v570, %v593
    %v606 = vmax.f32 %v571, %v592
    %v607 = vmax.f32 %v572, %v599
    %608 = vrot.lane.b32.xlu0 %v565, 126
    %v609 = vpop.permute.xlu0 %608
    %610 = vrot.lane.b32.xlu0 %v566, 126
    %v611 = vpop.permute.xlu0 %610
    %612 = vrot.lane.b32.xlu0 %v567, 126
    %v613 = vpop.permute.xlu0 %612
    %614 = vrot.lane.b32.xlu0 %v568, 126
    %v615 = vpop.permute.xlu0 %614
    %616 = vrot.lane.b32.xlu0 %v569, 126
    %v617 = vpop.permute.xlu0 %616
    %618 = vrot.lane.b32.xlu0 %v570, 126
    %v619 = vpop.permute.xlu0 %618
    %620 = vrot.lane.b32.xlu0 %v571, 126
    %v621 = vpop.permute.xlu0 %620
    %622 = vrot.lane.b32.xlu0 %v572, 126
    %v623 = vpop.permute.xlu0 %622
    %vm624 = vcmp.lt.s32.totalorder %v590, 126
    %v625 = vsel %vm624, %v621, %v623
    %v626 = vsel %vm624, %v619, %v621
    %v627 = vsel %vm624, %v617, %v619
    %v628 = vsel %vm624, %v615, %v617
    %v629 = vsel %vm624, %v613, %v615
    %v630 = vsel %vm624, %v611, %v613
    %v631 = vsel %vm624, %v609, %v611
    %v632 = vsel %vm624, %v623, %v609
    %v633 = vmax.f32 %v600, %v631
    %v634 = vmax.f32 %v601, %v630
    %v635 = vmax.f32 %v602, %v629
    %v636 = vmax.f32 %v603, %v628
    %v637 = vmax.f32 %v604, %v627
    %v638 = vmax.f32 %v605, %v626
    %v639 = vmax.f32 %v606, %v625
    %v640 = vmax.f32 %v607, %v632
    %641 = vrot.lane.b32.xlu0 %v633, 120
    %v642 = vpop.permute.xlu0 %641
    %643 = vrot.lane.b32.xlu0 %v634, 120
    %v644 = vpop.permute.xlu0 %643
    %645 = vrot.lane.b32.xlu0 %v635, 120
    %v646 = vpop.permute.xlu0 %645
    %647 = vrot.lane.b32.xlu0 %v636, 120
    %v648 = vpop.permute.xlu0 %647
    %649 = vrot.lane.b32.xlu0 %v637, 120
    %v650 = vpop.permute.xlu0 %649
    %651 = vrot.lane.b32.xlu0 %v638, 120
    %v652 = vpop.permute.xlu0 %651
    %653 = vrot.lane.b32.xlu0 %v639, 120
    %v654 = vpop.permute.xlu0 %653
    %655 = vrot.lane.b32.xlu0 %v640, 120
    %v656 = vpop.permute.xlu0 %655
    %vm657 = vcmp.lt.s32.totalorder %v590, 120
    %v658 = vsel %vm657, %v654, %v656
    %v659 = vsel %vm657, %v652, %v654
    %v660 = vsel %vm657, %v650, %v652
    %v661 = vsel %vm657, %v648, %v650
    %v662 = vsel %vm657, %v646, %v648
    %v663 = vsel %vm657, %v644, %v646
    %v664 = vsel %vm657, %v642, %v644
    %v665 = vsel %vm657, %v656, %v642
    %v666 = vmax.f32 %v633, %v664
    %v667 = vmax.f32 %v634, %v663
    %v668 = vmax.f32 %v635, %v662
    %v669 = vmax.f32 %v636, %v661
    %v670 = vmax.f32 %v637, %v660
    %v671 = vmax.f32 %v638, %v659
    %v672 = vmax.f32 %v639, %v658
    %v673 = vmax.f32 %v640, %v665
    %674 = vrot.lane.b32.xlu0 %v633, 112
    %v675 = vpop.permute.xlu0 %674
    %676 = vrot.lane.b32.xlu0 %v634, 112
    %v677 = vpop.permute.xlu0 %676
    %678 = vrot.lane.b32.xlu0 %v635, 112
    %v679 = vpop.permute.xlu0 %678
    %680 = vrot.lane.b32.xlu0 %v636, 112
    %v681 = vpop.permute.xlu0 %680
    %682 = vrot.lane.b32.xlu0 %v637, 112
    %v683 = vpop.permute.xlu0 %682
    %684 = vrot.lane.b32.xlu0 %v638, 112
    %v685 = vpop.permute.xlu0 %684
    %686 = vrot.lane.b32.xlu0 %v639, 112
    %v687 = vpop.permute.xlu0 %686
    %688 = vrot.lane.b32.xlu0 %v640, 112
    %v689 = vpop.permute.xlu0 %688
    %vm690 = vcmp.lt.s32.totalorder %v590, 112
    %v691 = vsel %vm690, %v687, %v689
    %v692 = vsel %vm690, %v685, %v687
    %v693 = vsel %vm690, %v683, %v685
    %v694 = vsel %vm690, %v681, %v683
    %v695 = vsel %vm690, %v679, %v681
    %v696 = vsel %vm690, %v677, %v679
    %v697 = vsel %vm690, %v675, %v677
    %v698 = vsel %vm690, %v689, %v675
    %v699 = vmax.f32 %v666, %v697
    %v700 = vmax.f32 %v667, %v696
    %v701 = vmax.f32 %v668, %v695
    %v702 = vmax.f32 %v669, %v694
    %v703 = vmax.f32 %v670, %v693
    %v704 = vmax.f32 %v671, %v692
    %v705 = vmax.f32 %v672, %v691
    %v706 = vmax.f32 %v673, %v698
    %707 = vrot.lane.b32.xlu0 %v699, 64
    %v708 = vpop.permute.xlu0 %707
    %709 = vrot.lane.b32.xlu0 %v700, 64
    %v710 = vpop.permute.xlu0 %709
    %711 = vrot.lane.b32.xlu0 %v701, 64
    %v712 = vpop.permute.xlu0 %711
    %713 = vrot.lane.b32.xlu0 %v702, 64
    %v714 = vpop.permute.xlu0 %713
    %715 = vrot.lane.b32.xlu0 %v703, 64
    %v716 = vpop.permute.xlu0 %715
    %717 = vrot.lane.b32.xlu0 %v704, 64
    %v718 = vpop.permute.xlu0 %717
    %719 = vrot.lane.b32.xlu0 %v705, 64
    %v720 = vpop.permute.xlu0 %719
    %721 = vrot.lane.b32.xlu0 %v706, 64
    %v722 = vpop.permute.xlu0 %721
    %vm723 = vcmp.lt.s32.totalorder %v590, 64
    %v724 = vsel %vm723, %v720, %v722
    %v725 = vsel %vm723, %v718, %v720
    %v726 = vsel %vm723, %v716, %v718
    %v727 = vsel %vm723, %v714, %v716
    %v728 = vsel %vm723, %v712, %v714
    %v729 = vsel %vm723, %v710, %v712
    %v730 = vsel %vm723, %v708, %v710
    %v731 = vsel %vm723, %v722, %v708
    %v732 = vmax.f32 %v699, %v730
    %v733 = vmax.f32 %v700, %v729
    %v734 = vmax.f32 %v701, %v728
    %v735 = vmax.f32 %v702, %v727
    %v736 = vmax.f32 %v703, %v726
    %v737 = vmax.f32 %v704, %v725
    %v738 = vmax.f32 %v705, %v724
    %v739 = vmax.f32 %v706, %v731
    %v740 = vmax.f32 %v732, %v700
    %v741 = vmax.f32 %v733, %v701
    %v742 = vmax.f32 %v734, %v702
    %v743 = vmax.f32 %v735, %v703
    %v744 = vmax.f32 %v736, %v704
    %v745 = vmax.f32 %v737, %v705
    %v746 = vmax.f32 %v738, %v706
    %v747 = vmax.f32 %v739, %v699
    %v748 = vpack.c.bf16 %v740, %v740
    %v749 = vpack.c.bf16 %v741, %v741
    %v750 = vpack.c.bf16 %v742, %v742
    %v751 = vpack.c.bf16 %v743, %v743
    %v752 = vpack.c.bf16 %v744, %v744
    %v753 = vpack.c.bf16 %v745, %v745
    %v754 = vpack.c.bf16 %v746, %v746
    %v755 = vpack.c.bf16 %v747, %v747
    %v756 = vld [vmem:[%s6] sm:$0xf]
    %v757 = vld [vmem:[%s6 + $0x4] sm:$0xf]
    %v758 = vld [vmem:[%s6 + $0x8] sm:$0xf]
    %v759 = vld [vmem:[%s6 + $0xc] sm:$0xf]
    %v760 = vld [vmem:[%s6 + $0x10] sm:$0xf]
    %v761 = vld [vmem:[%s6 + $0x14] sm:$0xf]
    %v762 = vld [vmem:[%s6 + $0x18] sm:$0xf]
    %v763 = vld [vmem:[%s6 + $0x1c] sm:$0xf]
    %v764 = vld [vmem:[%s6 + $0x20] sm:$0xf]
    %v765 = vld [vmem:[%s6 + $0x24] sm:$0xf]
    %v766 = vld [vmem:[%s6 + $0x28] sm:$0xf]
    %v767 = vld [vmem:[%s6 + $0x2c] sm:$0xf]
    %v768 = vld [vmem:[%s6 + $0x30] sm:$0xf]
    %v769 = vld [vmem:[%s6 + $0x34] sm:$0xf]
    %v770 = vld [vmem:[%s6 + $0x38] sm:$0xf]
    %v771 = vld [vmem:[%s6 + $0x3c] sm:$0xf]
    %v772 = vld [vmem:[%s6 + $0x40] sm:$0xf]
    %v773 = vld [vmem:[%s6 + $0x44] sm:$0xf]
    %v774 = vld [vmem:[%s6 + $0x48] sm:$0xf]
    %v775 = vld [vmem:[%s6 + $0x4c] sm:$0xf]
    %v776 = vld [vmem:[%s6 + $0x50] sm:$0xf]
    %v777 = vld [vmem:[%s6 + $0x54] sm:$0xf]
    %v778 = vld [vmem:[%s6 + $0x58] sm:$0xf]
    %v779 = vld [vmem:[%s6 + $0x5c] sm:$0xf]
    %v780 = vld [vmem:[%s6 + $0x60] sm:$0xf]
    %v781 = vld [vmem:[%s6 + $0x64] sm:$0xf]
    %v782 = vld [vmem:[%s6 + $0x68] sm:$0xf]
    %v783 = vld [vmem:[%s6 + $0x6c] sm:$0xf]
    %v784 = vld [vmem:[%s6 + $0x70] sm:$0xf]
    %v785 = vld [vmem:[%s6 + $0x74] sm:$0xf]
    %v786 = vld [vmem:[%s6 + $0x78] sm:$0xf]
    %v787 = vld [vmem:[%s6 + $0x7c] sm:$0xf]
    %v788 = vld [vmem:[%s6 + $0x80] sm:$0xf]
    %v789 = vld [vmem:[%s6 + $0x84] sm:$0xf]
    %v790 = vld [vmem:[%s6 + $0x88] sm:$0xf]
    %v791 = vld [vmem:[%s6 + $0x8c] sm:$0xf]
    %v792 = vld [vmem:[%s6 + $0x90] sm:$0xf]
    %v793 = vld [vmem:[%s6 + $0x94] sm:$0xf]
    %v794 = vld [vmem:[%s6 + $0x98] sm:$0xf]
    %v795 = vld [vmem:[%s6 + $0x9c] sm:$0xf]
    %v796 = vld [vmem:[%s6 + $0xa0] sm:$0xf]
    %v797 = vld [vmem:[%s6 + $0xa4] sm:$0xf]
    %v798 = vld [vmem:[%s6 + $0xa8] sm:$0xf]
    %v799 = vld [vmem:[%s6 + $0xac] sm:$0xf]
    %v800 = vld [vmem:[%s6 + $0xb0] sm:$0xf]
    %v801 = vld [vmem:[%s6 + $0xb4] sm:$0xf]
    %v802 = vld [vmem:[%s6 + $0xb8] sm:$0xf]
    %v803 = vld [vmem:[%s6 + $0xbc] sm:$0xf]
    %v804 = vld [vmem:[%s6 + $0xc0] sm:$0xf]
    %v805 = vld [vmem:[%s6 + $0xc4] sm:$0xf]
    %v806 = vld [vmem:[%s6 + $0xc8] sm:$0xf]
    %v807 = vld [vmem:[%s6 + $0xcc] sm:$0xf]
    %v808 = vld [vmem:[%s6 + $0xd0] sm:$0xf]
    %v809 = vld [vmem:[%s6 + $0xd4] sm:$0xf]
    %v810 = vld [vmem:[%s6 + $0xd8] sm:$0xf]
    %v811 = vld [vmem:[%s6 + $0xdc] sm:$0xf]
    %v812 = vld [vmem:[%s6 + $0xe0] sm:$0xf]
    %v813 = vld [vmem:[%s6 + $0xe4] sm:$0xf]
    %v814 = vld [vmem:[%s6 + $0xe8] sm:$0xf]
    %v815 = vld [vmem:[%s6 + $0xec] sm:$0xf]
    %v816 = vld [vmem:[%s6 + $0xf0] sm:$0xf]
    %v817 = vld [vmem:[%s6 + $0xf4] sm:$0xf]
    %v818 = vld [vmem:[%s6 + $0xf8] sm:$0xf]
    %v819 = vld [vmem:[%s6 + $0xfc] sm:$0xf]
    %v820 = vld [vmem:[%s6 + $0x100] sm:$0xf]
    %v821 = vld [vmem:[%s6 + $0x104] sm:$0xf]
    %v822 = vld [vmem:[%s6 + $0x108] sm:$0xf]
    %v823 = vld [vmem:[%s6 + $0x10c] sm:$0xf]
    %v824 = vld [vmem:[%s6 + $0x110] sm:$0xf]
    %v825 = vld [vmem:[%s6 + $0x114] sm:$0xf]
    %v826 = vld [vmem:[%s6 + $0x118] sm:$0xf]
    %v827 = vld [vmem:[%s6 + $0x11c] sm:$0xf]
    %v828 = vld [vmem:[%s6 + $0x120] sm:$0xf]
    %v829 = vld [vmem:[%s6 + $0x124] sm:$0xf]
    %v830 = vld [vmem:[%s6 + $0x128] sm:$0xf]
    %v831 = vld [vmem:[%s6 + $0x12c] sm:$0xf]
    %v832 = vld [vmem:[%s6 + $0x130] sm:$0xf]
    %v833 = vld [vmem:[%s6 + $0x134] sm:$0xf]
    %v834 = vld [vmem:[%s6 + $0x138] sm:$0xf]
    %v835 = vld [vmem:[%s6 + $0x13c] sm:$0xf]
    %v836 = vld [vmem:[%s6 + $0x140] sm:$0xf]
    %v837 = vld [vmem:[%s6 + $0x144] sm:$0xf]
    %v838 = vld [vmem:[%s6 + $0x148] sm:$0xf]
    %v839 = vld [vmem:[%s6 + $0x14c] sm:$0xf]
    %v840 = vld [vmem:[%s6 + $0x150] sm:$0xf]
    %v841 = vld [vmem:[%s6 + $0x154] sm:$0xf]
    %v842 = vld [vmem:[%s6 + $0x158] sm:$0xf]
    %v843 = vld [vmem:[%s6 + $0x15c] sm:$0xf]
    %v844 = vld [vmem:[%s6 + $0x160] sm:$0xf]
    %v845 = vld [vmem:[%s6 + $0x164] sm:$0xf]
    %v846 = vld [vmem:[%s6 + $0x168] sm:$0xf]
    %v847 = vld [vmem:[%s6 + $0x16c] sm:$0xf]
    %v848 = vld [vmem:[%s6 + $0x170] sm:$0xf]
    %v849 = vld [vmem:[%s6 + $0x174] sm:$0xf]
    %v850 = vld [vmem:[%s6 + $0x178] sm:$0xf]
    %v851 = vld [vmem:[%s6 + $0x17c] sm:$0xf]
    %v852 = vld [vmem:[%s6 + $0x180] sm:$0xf]
    %v853 = vld [vmem:[%s6 + $0x184] sm:$0xf]
    %v854 = vld [vmem:[%s6 + $0x188] sm:$0xf]
    %v855 = vld [vmem:[%s6 + $0x18c] sm:$0xf]
    %v856 = vld [vmem:[%s6 + $0x190] sm:$0xf]
    %v857 = vld [vmem:[%s6 + $0x194] sm:$0xf]
    %v858 = vld [vmem:[%s6 + $0x198] sm:$0xf]
    %v859 = vld [vmem:[%s6 + $0x19c] sm:$0xf]
    %v860 = vld [vmem:[%s6 + $0x1a0] sm:$0xf]
    %v861 = vld [vmem:[%s6 + $0x1a4] sm:$0xf]
    %v862 = vld [vmem:[%s6 + $0x1a8] sm:$0xf]
    %v863 = vld [vmem:[%s6 + $0x1ac] sm:$0xf]
    %v864 = vld [vmem:[%s6 + $0x1b0] sm:$0xf]
    %v865 = vld [vmem:[%s6 + $0x1b4] sm:$0xf]
    %v866 = vld [vmem:[%s6 + $0x1b8] sm:$0xf]
    %v867 = vld [vmem:[%s6 + $0x1bc] sm:$0xf]
    %v868 = vld [vmem:[%s6 + $0x1c0] sm:$0xf]
    %v869 = vld [vmem:[%s6 + $0x1c4] sm:$0xf]
    %v870 = vld [vmem:[%s6 + $0x1c8] sm:$0xf]
    %v871 = vld [vmem:[%s6 + $0x1cc] sm:$0xf]
    %v872 = vld [vmem:[%s6 + $0x1d0] sm:$0xf]
    %v873 = vld [vmem:[%s6 + $0x1d4] sm:$0xf]
    %v874 = vld [vmem:[%s6 + $0x1d8] sm:$0xf]
    %v875 = vld [vmem:[%s6 + $0x1dc] sm:$0xf]
    %v876 = vld [vmem:[%s6 + $0x1e0] sm:$0xf]
    %v877 = vld [vmem:[%s6 + $0x1e4] sm:$0xf]
    %v878 = vld [vmem:[%s6 + $0x1e8] sm:$0xf]
    %v879 = vld [vmem:[%s6 + $0x1ec] sm:$0xf]
    %v880 = vld [vmem:[%s6 + $0x1f0] sm:$0xf]
    %v881 = vld [vmem:[%s6 + $0x1f4] sm:$0xf]
    %v882 = vld [vmem:[%s6 + $0x1f8] sm:$0xf]
    %v883 = vld [vmem:[%s6 + $0x1fc] sm:$0xf]
    %v1012 = vunpack.c.l.b16 %v756
    %v1013 = vunpack.c.l.b16 %v757
    %v1014 = vunpack.c.l.b16 %v758
    %v1015 = vunpack.c.l.b16 %v759
    %v1016 = vunpack.c.l.b16 %v760
    %v1017 = vunpack.c.l.b16 %v761
    %v1018 = vunpack.c.l.b16 %v762
    %v1019 = vunpack.c.l.b16 %v763
    %v1020 = vunpack.c.l.b16 %v764
    %v1021 = vunpack.c.l.b16 %v765
    %v1022 = vunpack.c.l.b16 %v766
    %v1023 = vunpack.c.l.b16 %v767
    %v1024 = vunpack.c.l.b16 %v768
    %v1025 = vunpack.c.l.b16 %v769
    %v1026 = vunpack.c.l.b16 %v770
    %v1027 = vunpack.c.l.b16 %v771
    %v1028 = vunpack.c.l.b16 %v772
    %v1029 = vunpack.c.l.b16 %v773
    %v1030 = vunpack.c.l.b16 %v774
    %v1031 = vunpack.c.l.b16 %v775
    %v1032 = vunpack.c.l.b16 %v776
    %v1033 = vunpack.c.l.b16 %v777
    %v1034 = vunpack.c.l.b16 %v778
    %v1035 = vunpack.c.l.b16 %v779
    %v1036 = vunpack.c.l.b16 %v780
    %v1037 = vunpack.c.l.b16 %v781
    %v1038 = vunpack.c.l.b16 %v782
    %v1039 = vunpack.c.l.b16 %v783
    %v1040 = vunpack.c.l.b16 %v784
    %v1041 = vunpack.c.l.b16 %v785
    %v1042 = vunpack.c.l.b16 %v786
    %v1043 = vunpack.c.l.b16 %v787
    %v1044 = vunpack.c.l.b16 %v788
    %v1045 = vunpack.c.l.b16 %v789
    %v1046 = vunpack.c.l.b16 %v790
    %v1047 = vunpack.c.l.b16 %v791
    %v1048 = vunpack.c.l.b16 %v792
    %v1049 = vunpack.c.l.b16 %v793
    %v1050 = vunpack.c.l.b16 %v794
    %v1051 = vunpack.c.l.b16 %v795
    %v1052 = vunpack.c.l.b16 %v796
    %v1053 = vunpack.c.l.b16 %v797
    %v1054 = vunpack.c.l.b16 %v798
    %v1055 = vunpack.c.l.b16 %v799
    %v1056 = vunpack.c.l.b16 %v800
    %v1057 = vunpack.c.l.b16 %v801
    %v1058 = vunpack.c.l.b16 %v802
    %v1059 = vunpack.c.l.b16 %v803
    %v1060 = vunpack.c.l.b16 %v804
    %v1061 = vunpack.c.l.b16 %v805
    %v1062 = vunpack.c.l.b16 %v806
    %v1063 = vunpack.c.l.b16 %v807
    %v1064 = vunpack.c.l.b16 %v808
    %v1065 = vunpack.c.l.b16 %v809
    %v1066 = vunpack.c.l.b16 %v810
    %v1067 = vunpack.c.l.b16 %v811
    %v1068 = vunpack.c.l.b16 %v812
    %v1069 = vunpack.c.l.b16 %v813
    %v1070 = vunpack.c.l.b16 %v814
    %v1071 = vunpack.c.l.b16 %v815
    %v1072 = vunpack.c.l.b16 %v816
    %v1073 = vunpack.c.l.b16 %v817
    %v1074 = vunpack.c.l.b16 %v818
    %v1075 = vunpack.c.l.b16 %v819
    %v1076 = vunpack.c.l.b16 %v820
    %v1077 = vunpack.c.l.b16 %v821
    %v1078 = vunpack.c.l.b16 %v822
    %v1079 = vunpack.c.l.b16 %v823
    %v1080 = vunpack.c.l.b16 %v824
    %v1081 = vunpack.c.l.b16 %v825
    %v1082 = vunpack.c.l.b16 %v826
    %v1083 = vunpack.c.l.b16 %v827
    %v1084 = vunpack.c.l.b16 %v828
    %v1085 = vunpack.c.l.b16 %v829
    %v1086 = vunpack.c.l.b16 %v830
    %v1087 = vunpack.c.l.b16 %v831
    %v1088 = vunpack.c.l.b16 %v832
    %v1089 = vunpack.c.l.b16 %v833
    %v1090 = vunpack.c.l.b16 %v834
    %v1091 = vunpack.c.l.b16 %v835
    %v1092 = vunpack.c.l.b16 %v836
    %v1093 = vunpack.c.l.b16 %v837
    %v1094 = vunpack.c.l.b16 %v838
    %v1095 = vunpack.c.l.b16 %v839
    %v1096 = vunpack.c.l.b16 %v840
    %v1097 = vunpack.c.l.b16 %v841
    %v1098 = vunpack.c.l.b16 %v842
    %v1099 = vunpack.c.l.b16 %v843
    %v1100 = vunpack.c.l.b16 %v844
    %v1101 = vunpack.c.l.b16 %v845
    %v1102 = vunpack.c.l.b16 %v846
    %v1103 = vunpack.c.l.b16 %v847
    %v1104 = vunpack.c.l.b16 %v848
    %v1105 = vunpack.c.l.b16 %v849
    %v1106 = vunpack.c.l.b16 %v850
    %v1107 = vunpack.c.l.b16 %v851
    %v1108 = vunpack.c.l.b16 %v852
    %v1109 = vunpack.c.l.b16 %v853
    %v1110 = vunpack.c.l.b16 %v854
    %v1111 = vunpack.c.l.b16 %v855
    %v1112 = vunpack.c.l.b16 %v856
    %v1113 = vunpack.c.l.b16 %v857
    %v1114 = vunpack.c.l.b16 %v858
    %v1115 = vunpack.c.l.b16 %v859
    %v1116 = vunpack.c.l.b16 %v860
    %v1117 = vunpack.c.l.b16 %v861
    %v1118 = vunpack.c.l.b16 %v862
    %v1119 = vunpack.c.l.b16 %v863
    %v1120 = vunpack.c.l.b16 %v864
    %v1121 = vunpack.c.l.b16 %v865
    %v1122 = vunpack.c.l.b16 %v866
    %v1123 = vunpack.c.l.b16 %v867
    %v1124 = vunpack.c.l.b16 %v868
    %v1125 = vunpack.c.l.b16 %v869
    %v1126 = vunpack.c.l.b16 %v870
    %v1127 = vunpack.c.l.b16 %v871
    %v1128 = vunpack.c.l.b16 %v872
    %v1129 = vunpack.c.l.b16 %v873
    %v1130 = vunpack.c.l.b16 %v874
    %v1131 = vunpack.c.l.b16 %v875
    %v1132 = vunpack.c.l.b16 %v876
    %v1133 = vunpack.c.l.b16 %v877
    %v1134 = vunpack.c.l.b16 %v878
    %v1135 = vunpack.c.l.b16 %v879
    %v1136 = vunpack.c.l.b16 %v880
    %v1137 = vunpack.c.l.b16 %v881
    %v1138 = vunpack.c.l.b16 %v882
    %v1139 = vunpack.c.l.b16 %v883
    %v1140 = vpack.c.b16 %v1013, %v1012
    %v1141 = vpack.c.b16 %v1015, %v1014
    %v1142 = vpack.c.b16 %v1017, %v1016
    %v1143 = vpack.c.b16 %v1019, %v1018
    %v1144 = vpack.c.b16 %v1021, %v1020
    %v1145 = vpack.c.b16 %v1023, %v1022
    %v1146 = vpack.c.b16 %v1025, %v1024
    %v1147 = vpack.c.b16 %v1027, %v1026
    %v1148 = vpack.c.b16 %v1029, %v1028
    %v1149 = vpack.c.b16 %v1031, %v1030
    %v1150 = vpack.c.b16 %v1033, %v1032
    %v1151 = vpack.c.b16 %v1035, %v1034
    %v1152 = vpack.c.b16 %v1037, %v1036
    %v1153 = vpack.c.b16 %v1039, %v1038
    %v1154 = vpack.c.b16 %v1041, %v1040
    %v1155 = vpack.c.b16 %v1043, %v1042
    %v1156 = vpack.c.b16 %v1045, %v1044
    %v1157 = vpack.c.b16 %v1047, %v1046
    %v1158 = vpack.c.b16 %v1049, %v1048
    %v1159 = vpack.c.b16 %v1051, %v1050
    %v1160 = vpack.c.b16 %v1053, %v1052
    %v1161 = vpack.c.b16 %v1055, %v1054
    %v1162 = vpack.c.b16 %v1057, %v1056
    %v1163 = vpack.c.b16 %v1059, %v1058
    %v1164 = vpack.c.b16 %v1061, %v1060
    %v1165 = vpack.c.b16 %v1063, %v1062
    %v1166 = vpack.c.b16 %v1065, %v1064
    %v1167 = vpack.c.b16 %v1067, %v1066
    %v1168 = vpack.c.b16 %v1069, %v1068
    %v1169 = vpack.c.b16 %v1071, %v1070
    %v1170 = vpack.c.b16 %v1073, %v1072
    %v1171 = vpack.c.b16 %v1075, %v1074
    %v1172 = vpack.c.b16 %v1077, %v1076
    %v1173 = vpack.c.b16 %v1079, %v1078
    %v1174 = vpack.c.b16 %v1081, %v1080
    %v1175 = vpack.c.b16 %v1083, %v1082
    %v1176 = vpack.c.b16 %v1085, %v1084
    %v1177 = vpack.c.b16 %v1087, %v1086
    %v1178 = vpack.c.b16 %v1089, %v1088
    %v1179 = vpack.c.b16 %v1091, %v1090
    %v1180 = vpack.c.b16 %v1093, %v1092
    %v1181 = vpack.c.b16 %v1095, %v1094
    %v1182 = vpack.c.b16 %v1097, %v1096
    %v1183 = vpack.c.b16 %v1099, %v1098
    %v1184 = vpack.c.b16 %v1101, %v1100
    %v1185 = vpack.c.b16 %v1103, %v1102
    %v1186 = vpack.c.b16 %v1105, %v1104
    %v1187 = vpack.c.b16 %v1107, %v1106
    %v1188 = vpack.c.b16 %v1109, %v1108
    %v1189 = vpack.c.b16 %v1111, %v1110
    %v1190 = vpack.c.b16 %v1113, %v1112
    %v1191 = vpack.c.b16 %v1115, %v1114
    %v1192 = vpack.c.b16 %v1117, %v1116
    %v1193 = vpack.c.b16 %v1119, %v1118
    %v1194 = vpack.c.b16 %v1121, %v1120
    %v1195 = vpack.c.b16 %v1123, %v1122
    %v1196 = vpack.c.b16 %v1125, %v1124
    %v1197 = vpack.c.b16 %v1127, %v1126
    %v1198 = vpack.c.b16 %v1129, %v1128
    %v1199 = vpack.c.b16 %v1131, %v1130
    %v1200 = vpack.c.b16 %v1133, %v1132
    %v1201 = vpack.c.b16 %v1135, %v1134
    %v1202 = vpack.c.b16 %v1137, %v1136
    %v1203 = vpack.c.b16 %v1139, %v1138
    %1268 = vmatprep.subr.bf16.mxu0 0
    %1269 = vmatpush1.bf16.msra.mxu0 %v1140
    %1270 = vmatprep.subr.bf16.mxu0 0
    %1271 = vmatpush1.bf16.msra.mxu0 %v1141
    %1272 = vmatprep.subr.bf16.mxu0 0
    %1273 = vmatpush1.bf16.msra.mxu0 %v1142
    %1274 = vmatprep.subr.bf16.mxu0 0
    %1275 = vmatpush1.bf16.msra.mxu0 %v1143
    %1276 = vmatprep.subr.bf16.mxu0 0
    %1277 = vmatpush1.bf16.msra.mxu0 %v1144
    %1278 = vmatprep.subr.bf16.mxu0 0
    %1279 = vmatpush1.bf16.msra.mxu0 %v1145
    %1280 = vmatprep.subr.bf16.mxu0 0
    %1281 = vmatpush1.bf16.msra.mxu0 %v1146
    %1282 = vmatprep.subr.bf16.mxu0 0
    %1283 = vmatpush1.bf16.msra.mxu0 %v1147
    %1284 = vmatprep.subr.bf16.mxu0 0
    %1285 = vmatpush1.bf16.msra.mxu0 %v1148
    %1286 = vmatprep.subr.bf16.mxu0 0
    %1287 = vmatpush1.bf16.msra.mxu0 %v1149
    %1288 = vmatprep.subr.bf16.mxu0 0
    %1289 = vmatpush1.bf16.msra.mxu0 %v1150
    %1290 = vmatprep.subr.bf16.mxu0 0
    %1291 = vmatpush1.bf16.msra.mxu0 %v1151
    %1292 = vmatprep.subr.bf16.mxu0 0
    %1293 = vmatpush1.bf16.msra.mxu0 %v1152
    %1294 = vmatprep.subr.bf16.mxu0 0
    %1295 = vmatpush1.bf16.msra.mxu0 %v1153
    %1296 = vmatprep.subr.bf16.mxu0 0
    %1297 = vmatpush1.bf16.msra.mxu0 %v1154
    %1298 = vmatprep.subr.bf16.mxu0 0
    %1299 = vmatpush1.bf16.msra.mxu0 %v1155
    %1300 = vmatprep.mubr.bf16.mxu0 %v749
    %1301 = vmatmul.mubr.bf16.gmra.mrb[0].mxu0 %v748
    %v1302 = vpop.f32.mrb[0].mxu0
    %v1303 = vadd.f32 0.0, %v1302
    %v1304 = vpop.f32.mrb[0].mxu0
    %v1305 = vpop.f32.mrb[0].mxu0
    %v1306 = vpop.f32.mrb[0].mxu0
    %1307 = vdwg.mxu0
    %1308 = vmatprep.subr.bf16.mxu0 0
    %1309 = vmatpush1.bf16.msra.mxu0 %v1156
    %1310 = vmatprep.subr.bf16.mxu0 0
    %1311 = vmatpush1.bf16.msra.mxu0 %v1157
    %1312 = vmatprep.subr.bf16.mxu0 0
    %1313 = vmatpush1.bf16.msra.mxu0 %v1158
    %1314 = vmatprep.subr.bf16.mxu0 0
    %1315 = vmatpush1.bf16.msra.mxu0 %v1159
    %1316 = vmatprep.subr.bf16.mxu0 0
    %1317 = vmatpush1.bf16.msra.mxu0 %v1160
    %1318 = vmatprep.subr.bf16.mxu0 0
    %1319 = vmatpush1.bf16.msra.mxu0 %v1161
    %1320 = vmatprep.subr.bf16.mxu0 0
    %1321 = vmatpush1.bf16.msra.mxu0 %v1162
    %1322 = vmatprep.subr.bf16.mxu0 0
    %1323 = vmatpush1.bf16.msra.mxu0 %v1163
    %1324 = vmatprep.subr.bf16.mxu0 0
    %1325 = vmatpush1.bf16.msra.mxu0 %v1164
    %1326 = vmatprep.subr.bf16.mxu0 0
    %1327 = vmatpush1.bf16.msra.mxu0 %v1165
    %1328 = vmatprep.subr.bf16.mxu0 0
    %1329 = vmatpush1.bf16.msra.mxu0 %v1166
    %1330 = vmatprep.subr.bf16.mxu0 0
    %1331 = vmatpush1.bf16.msra.mxu0 %v1167
    %1332 = vmatprep.subr.bf16.mxu0 0
    %1333 = vmatpush1.bf16.msra.mxu0 %v1168
    %1334 = vmatprep.subr.bf16.mxu0 0
    %1335 = vmatpush1.bf16.msra.mxu0 %v1169
    %1336 = vmatprep.subr.bf16.mxu0 0
    %1337 = vmatpush1.bf16.msra.mxu0 %v1170
    %1338 = vmatprep.subr.bf16.mxu0 0
    %1339 = vmatpush1.bf16.msra.mxu0 %v1171
    %1340 = vmatprep.mubr.bf16.mxu0 %v751
    %1341 = vmatmul.mubr.bf16.gmra.mrb[0].mxu0 %v750
    %v1342 = vpop.f32.mrb[0].mxu0
    %v1343 = vadd.f32 %v1303, %v1342
    %v1344 = vpop.f32.mrb[0].mxu0
    %v1345 = vpop.f32.mrb[0].mxu0
    %v1346 = vpop.f32.mrb[0].mxu0
    %1347 = vdwg.mxu0
    %1348 = vmatprep.subr.bf16.mxu0 0
    %1349 = vmatpush1.bf16.msra.mxu0 %v1172
    %1350 = vmatprep.subr.bf16.mxu0 0
    %1351 = vmatpush1.bf16.msra.mxu0 %v1173
    %1352 = vmatprep.subr.bf16.mxu0 0
    %1353 = vmatpush1.bf16.msra.mxu0 %v1174
    %1354 = vmatprep.subr.bf16.mxu0 0
    %1355 = vmatpush1.bf16.msra.mxu0 %v1175
    %1356 = vmatprep.subr.bf16.mxu0 0
    %1357 = vmatpush1.bf16.msra.mxu0 %v1176
    %1358 = vmatprep.subr.bf16.mxu0 0
    %1359 = vmatpush1.bf16.msra.mxu0 %v1177
    %1360 = vmatprep.subr.bf16.mxu0 0
    %1361 = vmatpush1.bf16.msra.mxu0 %v1178
    %1362 = vmatprep.subr.bf16.mxu0 0
    %1363 = vmatpush1.bf16.msra.mxu0 %v1179
    %1364 = vmatprep.subr.bf16.mxu0 0
    %1365 = vmatpush1.bf16.msra.mxu0 %v1180
    %1366 = vmatprep.subr.bf16.mxu0 0
    %1367 = vmatpush1.bf16.msra.mxu0 %v1181
    %1368 = vmatprep.subr.bf16.mxu0 0
    %1369 = vmatpush1.bf16.msra.mxu0 %v1182
    %1370 = vmatprep.subr.bf16.mxu0 0
    %1371 = vmatpush1.bf16.msra.mxu0 %v1183
    %1372 = vmatprep.subr.bf16.mxu0 0
    %1373 = vmatpush1.bf16.msra.mxu0 %v1184
    %1374 = vmatprep.subr.bf16.mxu0 0
    %1375 = vmatpush1.bf16.msra.mxu0 %v1185
    %1376 = vmatprep.subr.bf16.mxu0 0
    %1377 = vmatpush1.bf16.msra.mxu0 %v1186
    %1378 = vmatprep.subr.bf16.mxu0 0
    %1379 = vmatpush1.bf16.msra.mxu0 %v1187
    %1380 = vmatprep.mubr.bf16.mxu0 %v753
    %1381 = vmatmul.mubr.bf16.gmra.mrb[0].mxu0 %v752
    %v1382 = vpop.f32.mrb[0].mxu0
    %v1383 = vadd.f32 %v1343, %v1382
    %v1384 = vpop.f32.mrb[0].mxu0
    %v1385 = vpop.f32.mrb[0].mxu0
    %v1386 = vpop.f32.mrb[0].mxu0
    %1387 = vdwg.mxu0
    %1388 = vmatprep.subr.bf16.mxu0 0
    %1389 = vmatpush1.bf16.msra.mxu0 %v1188
    %1390 = vmatprep.subr.bf16.mxu0 0
    %1391 = vmatpush1.bf16.msra.mxu0 %v1189
    %1392 = vmatprep.subr.bf16.mxu0 0
    %1393 = vmatpush1.bf16.msra.mxu0 %v1190
    %1394 = vmatprep.subr.bf16.mxu0 0
    %1395 = vmatpush1.bf16.msra.mxu0 %v1191
    %1396 = vmatprep.subr.bf16.mxu0 0
    %1397 = vmatpush1.bf16.msra.mxu0 %v1192
    %1398 = vmatprep.subr.bf16.mxu0 0
    %1399 = vmatpush1.bf16.msra.mxu0 %v1193
    %1400 = vmatprep.subr.bf16.mxu0 0
    %1401 = vmatpush1.bf16.msra.mxu0 %v1194
    %1402 = vmatprep.subr.bf16.mxu0 0
    %1403 = vmatpush1.bf16.msra.mxu0 %v1195
    %1404 = vmatprep.subr.bf16.mxu0 0
    %1405 = vmatpush1.bf16.msra.mxu0 %v1196
    %1406 = vmatprep.subr.bf16.mxu0 0
    %1407 = vmatpush1.bf16.msra.mxu0 %v1197
    %1408 = vmatprep.subr.bf16.mxu0 0
    %1409 = vmatpush1.bf16.msra.mxu0 %v1198
    %1410 = vmatprep.subr.bf16.mxu0 0
    %1411 = vmatpush1.bf16.msra.mxu0 %v1199
    %1412 = vmatprep.subr.bf16.mxu0 0
    %1413 = vmatpush1.bf16.msra.mxu0 %v1200
    %1414 = vmatprep.subr.bf16.mxu0 0
    %1415 = vmatpush1.bf16.msra.mxu0 %v1201
    %1416 = vmatprep.subr.bf16.mxu0 0
    %1417 = vmatpush1.bf16.msra.mxu0 %v1202
    %1418 = vmatprep.subr.bf16.mxu0 0
    %1419 = vmatpush1.bf16.msra.mxu0 %v1203
    %1420 = vmatprep.mubr.bf16.mxu0 %v755
    %1421 = vmatmul.mubr.bf16.gmra.mrb[0].mxu0 %v754
    %v1422 = vpop.f32.mrb[0].mxu0
    %v1423 = vadd.f32 %v1383, %v1422
    %v1424 = vpop.f32.mrb[0].mxu0
    %v1425 = vpop.f32.mrb[0].mxu0
    %v1426 = vpop.f32.mrb[0].mxu0
    %1427 = vdwg.mxu0
    %v1428 = vpack.c.bf16 %v1423, %v1423
    %v1429 = vld [vmem:[%s7] sm:$0xf]
    %v1430 = vld [vmem:[%s7 + $0x4] sm:$0xf]
    %v1431 = vld [vmem:[%s7 + $0x8] sm:$0xf]
    %v1432 = vld [vmem:[%s7 + $0xc] sm:$0xf]
    %v1433 = vld [vmem:[%s7 + $0x10] sm:$0xf]
    %v1434 = vld [vmem:[%s7 + $0x14] sm:$0xf]
    %v1435 = vld [vmem:[%s7 + $0x18] sm:$0x7]
    %v1443 = vunpack.c.l.b16 %v1429
    %v1444 = vunpack.c.l.b16 %v1430
    %v1445 = vunpack.c.l.b16 %v1431
    %v1446 = vunpack.c.l.b16 %v1432
    %v1447 = vunpack.c.l.b16 %v1433
    %v1448 = vunpack.c.l.b16 %v1434
    %v1449 = vunpack.c.l.b16 %v1435
    %v1450 = vpack.c.b16 %v1444, %v1443
    %v1451 = vpack.c.b16 %v1446, %v1445
    %v1452 = vpack.c.b16 %v1448, %v1447
    %v1453 = vpack.c.b16 %v1449, %v1449
    %vm1457 = vcmask 441344
    %v1459 = vsel %vm1457, %v1428, 0
    %vm1461 = vcmask 1042432
    %v1463 = vsel %vm1461, %v1453, 0
    %1465 = vmatprep.subr.bf16.mxu0 0
    %1466 = vmatpush1.bf16.msra.mxu0 %v1450
    %1467 = vmatprep.subr.bf16.mxu0 0
    %1468 = vmatpush1.bf16.msra.mxu0 %v1451
    %1469 = vmatprep.subr.bf16.mxu0 0
    %1470 = vmatpush1.bf16.msra.mxu0 %v1452
    %1471 = vmatprep.subr.bf16.mxu0 0
    %1472 = vmatpush1.bf16.msra.mxu0 %v1463
    %1473 = vmatprep.subr.bf16.mxu0 0
    %1474 = vmatpush1.bf16.msra.mxu0 0
    %1475 = vmatprep.subr.bf16.mxu0 0
    %1476 = vmatpush1.bf16.msra.mxu0 0
    %1477 = vmatprep.subr.bf16.mxu0 0
    %1478 = vmatpush1.bf16.msra.mxu0 0
    %1479 = vmatprep.subr.bf16.mxu0 0
    %1480 = vmatpush1.bf16.msra.mxu0 0
    %1481 = vmatprep.subr.bf16.mxu0 0
    %1482 = vmatpush1.bf16.msra.mxu0 0
    %1483 = vmatprep.subr.bf16.mxu0 0
    %1484 = vmatpush1.bf16.msra.mxu0 0
    %1485 = vmatprep.subr.bf16.mxu0 0
    %1486 = vmatpush1.bf16.msra.mxu0 0
    %1487 = vmatprep.subr.bf16.mxu0 0
    %1488 = vmatpush1.bf16.msra.mxu0 0
    %1489 = vmatprep.subr.bf16.mxu0 0
    %1490 = vmatpush1.bf16.msra.mxu0 0
    %1491 = vmatprep.subr.bf16.mxu0 0
    %1492 = vmatpush1.bf16.msra.mxu0 0
    %1493 = vmatprep.subr.bf16.mxu0 0
    %1494 = vmatpush1.bf16.msra.mxu0 0
    %1495 = vmatprep.subr.bf16.mxu0 0
    %1496 = vmatpush1.bf16.msra.mxu0 0
    %1497 = vmatprep.mubr.bf16.mxu0 0
    %1498 = vmatmul.mubr.bf16.gmra.mrb[0].mxu0 %v1459
    %v1499 = vpop.f32.mrb[0].mxu0
    %v1500 = vadd.f32 0.0, %v1499
    %v1501 = vpop.f32.mrb[0].mxu0
    %v1502 = vpop.f32.mrb[0].mxu0
    %v1503 = vpop.f32.mrb[0].mxu0
    %1504 = vdwg.mxu0
    %s1505 = scalar_lea.vmem %s7, 28
    %v1506 = vld [vmem:[%s1505] sm:$0xf]
    %v1507 = vld [vmem:[%s1505 + $0x4] sm:$0xf]
    %v1508 = vld [vmem:[%s1505 + $0x8] sm:$0xf]
    %v1509 = vld [vmem:[%s1505 + $0xc] sm:$0xf]
    %v1510 = vld [vmem:[%s1505 + $0x10] sm:$0xf]
    %v1511 = vld [vmem:[%s1505 + $0x14] sm:$0xf]
    %v1512 = vld [vmem:[%s1505 + $0x18] sm:$0x7]
    %v1520 = vunpack.c.l.b16 %v1506
    %v1521 = vunpack.c.l.b16 %v1507
    %v1522 = vunpack.c.l.b16 %v1508
    %v1523 = vunpack.c.l.b16 %v1509
    %v1524 = vunpack.c.l.b16 %v1510
    %v1525 = vunpack.c.l.b16 %v1511
    %v1526 = vunpack.c.l.b16 %v1512
    %v1527 = vpack.c.b16 %v1521, %v1520
    %v1528 = vpack.c.b16 %v1523, %v1522
    %v1529 = vpack.c.b16 %v1525, %v1524
    %v1530 = vpack.c.b16 %v1526, %v1526
    %v1535 = vsel %vm1461, %v1530, 0
    %1537 = vmatprep.subr.bf16.mxu0 0
    %1538 = vmatpush1.bf16.msra.mxu0 %v1527
    %1539 = vmatprep.subr.bf16.mxu0 0
    %1540 = vmatpush1.bf16.msra.mxu0 %v1528
    %1541 = vmatprep.subr.bf16.mxu0 0
    %1542 = vmatpush1.bf16.msra.mxu0 %v1529
    %1543 = vmatprep.subr.bf16.mxu0 0
    %1544 = vmatpush1.bf16.msra.mxu0 %v1535
    %1545 = vmatprep.subr.bf16.mxu0 0
    %1546 = vmatpush1.bf16.msra.mxu0 0
    %1547 = vmatprep.subr.bf16.mxu0 0
    %1548 = vmatpush1.bf16.msra.mxu0 0
    %1549 = vmatprep.subr.bf16.mxu0 0
    %1550 = vmatpush1.bf16.msra.mxu0 0
    %1551 = vmatprep.subr.bf16.mxu0 0
    %1552 = vmatpush1.bf16.msra.mxu0 0
    %1553 = vmatprep.subr.bf16.mxu0 0
    %1554 = vmatpush1.bf16.msra.mxu0 0
    %1555 = vmatprep.subr.bf16.mxu0 0
    %1556 = vmatpush1.bf16.msra.mxu0 0
    %1557 = vmatprep.subr.bf16.mxu0 0
    %1558 = vmatpush1.bf16.msra.mxu0 0
    %1559 = vmatprep.subr.bf16.mxu0 0
    %1560 = vmatpush1.bf16.msra.mxu0 0
    %1561 = vmatprep.subr.bf16.mxu0 0
    %1562 = vmatpush1.bf16.msra.mxu0 0
    %1563 = vmatprep.subr.bf16.mxu0 0
    %1564 = vmatpush1.bf16.msra.mxu0 0
    %1565 = vmatprep.subr.bf16.mxu0 0
    %1566 = vmatpush1.bf16.msra.mxu0 0
    %1567 = vmatprep.subr.bf16.mxu0 0
    %1568 = vmatpush1.bf16.msra.mxu0 0
    %1569 = vmatprep.mubr.bf16.mxu0 0
    %1570 = vmatmul.mubr.bf16.gmra.mrb[0].mxu0 %v1459
    %v1571 = vpop.f32.mrb[0].mxu0
    %v1572 = vadd.f32 0.0, %v1571
    %v1573 = vpop.f32.mrb[0].mxu0
    %v1574 = vpop.f32.mrb[0].mxu0
    %v1575 = vpop.f32.mrb[0].mxu0
    %1576 = vdwg.mxu0
    %s1577 = scalar_lea.vmem %s7, 56
    %v1578 = vld [vmem:[%s1577] sm:$0xf]
    %v1579 = vld [vmem:[%s1577 + $0x4] sm:$0xf]
    %v1580 = vld [vmem:[%s1577 + $0x8] sm:$0xf]
    %v1581 = vld [vmem:[%s1577 + $0xc] sm:$0xf]
    %v1582 = vld [vmem:[%s1577 + $0x10] sm:$0xf]
    %v1583 = vld [vmem:[%s1577 + $0x14] sm:$0xf]
    %v1584 = vld [vmem:[%s1577 + $0x18] sm:$0x7]
    %v1592 = vunpack.c.l.b16 %v1578
    %v1593 = vunpack.c.l.b16 %v1579
    %v1594 = vunpack.c.l.b16 %v1580
    %v1595 = vunpack.c.l.b16 %v1581
    %v1596 = vunpack.c.l.b16 %v1582
    %v1597 = vunpack.c.l.b16 %v1583
    %v1598 = vunpack.c.l.b16 %v1584
    %v1599 = vpack.c.b16 %v1593, %v1592
    %v1600 = vpack.c.b16 %v1595, %v1594
    %v1601 = vpack.c.b16 %v1597, %v1596
    %v1602 = vpack.c.b16 %v1598, %v1598
    %v1607 = vsel %vm1461, %v1602, 0
    %1609 = vmatprep.subr.bf16.mxu0 0
    %1610 = vmatpush1.bf16.msra.mxu0 %v1599
    %1611 = vmatprep.subr.bf16.mxu0 0
    %1612 = vmatpush1.bf16.msra.mxu0 %v1600
    %1613 = vmatprep.subr.bf16.mxu0 0
    %1614 = vmatpush1.bf16.msra.mxu0 %v1601
    %1615 = vmatprep.subr.bf16.mxu0 0
    %1616 = vmatpush1.bf16.msra.mxu0 %v1607
    %1617 = vmatprep.subr.bf16.mxu0 0
    %1618 = vmatpush1.bf16.msra.mxu0 0
    %1619 = vmatprep.subr.bf16.mxu0 0
    %1620 = vmatpush1.bf16.msra.mxu0 0
    %1621 = vmatprep.subr.bf16.mxu0 0
    %1622 = vmatpush1.bf16.msra.mxu0 0
    %1623 = vmatprep.subr.bf16.mxu0 0
    %1624 = vmatpush1.bf16.msra.mxu0 0
    %1625 = vmatprep.subr.bf16.mxu0 0
    %1626 = vmatpush1.bf16.msra.mxu0 0
    %1627 = vmatprep.subr.bf16.mxu0 0
    %1628 = vmatpush1.bf16.msra.mxu0 0
    %1629 = vmatprep.subr.bf16.mxu0 0
    %1630 = vmatpush1.bf16.msra.mxu0 0
    %1631 = vmatprep.subr.bf16.mxu0 0
    %1632 = vmatpush1.bf16.msra.mxu0 0
    %1633 = vmatprep.subr.bf16.mxu0 0
    %1634 = vmatpush1.bf16.msra.mxu0 0
    %1635 = vmatprep.subr.bf16.mxu0 0
    %1636 = vmatpush1.bf16.msra.mxu0 0
    %1637 = vmatprep.subr.bf16.mxu0 0
    %1638 = vmatpush1.bf16.msra.mxu0 0
    %1639 = vmatprep.subr.bf16.mxu0 0
    %1640 = vmatpush1.bf16.msra.mxu0 0
    %1641 = vmatprep.mubr.bf16.mxu0 0
    %1642 = vmatmul.mubr.bf16.gmra.mrb[0].mxu0 %v1459
    %v1643 = vpop.f32.mrb[0].mxu0
    %v1644 = vadd.f32 0.0, %v1643
    %v1645 = vpop.f32.mrb[0].mxu0
    %v1646 = vpop.f32.mrb[0].mxu0
    %v1647 = vpop.f32.mrb[0].mxu0
    %1648 = vdwg.mxu0
    %s1649 = scalar_lea.vmem %s7, 84
    %v1650 = vld [vmem:[%s1649] sm:$0xf]
    %v1651 = vld [vmem:[%s1649 + $0x4] sm:$0xf]
    %v1652 = vld [vmem:[%s1649 + $0x8] sm:$0xf]
    %v1653 = vld [vmem:[%s1649 + $0xc] sm:$0xf]
    %v1654 = vld [vmem:[%s1649 + $0x10] sm:$0xf]
    %v1655 = vld [vmem:[%s1649 + $0x14] sm:$0xf]
    %v1656 = vld [vmem:[%s1649 + $0x18] sm:$0x7]
    %v1664 = vunpack.c.l.b16 %v1650
    %v1665 = vunpack.c.l.b16 %v1651
    %v1666 = vunpack.c.l.b16 %v1652
    %v1667 = vunpack.c.l.b16 %v1653
    %v1668 = vunpack.c.l.b16 %v1654
    %v1669 = vunpack.c.l.b16 %v1655
    %v1670 = vunpack.c.l.b16 %v1656
    %v1671 = vpack.c.b16 %v1665, %v1664
    %v1672 = vpack.c.b16 %v1667, %v1666
    %v1673 = vpack.c.b16 %v1669, %v1668
    %v1674 = vpack.c.b16 %v1670, %v1670
    %v1679 = vsel %vm1461, %v1674, 0
    %1681 = vmatprep.subr.bf16.mxu0 0
    %1682 = vmatpush1.bf16.msra.mxu0 %v1671
    %1683 = vmatprep.subr.bf16.mxu0 0
    %1684 = vmatpush1.bf16.msra.mxu0 %v1672
    %1685 = vmatprep.subr.bf16.mxu0 0
    %1686 = vmatpush1.bf16.msra.mxu0 %v1673
    %1687 = vmatprep.subr.bf16.mxu0 0
    %1688 = vmatpush1.bf16.msra.mxu0 %v1679
    %1689 = vmatprep.subr.bf16.mxu0 0
    %1690 = vmatpush1.bf16.msra.mxu0 0
    %1691 = vmatprep.subr.bf16.mxu0 0
    %1692 = vmatpush1.bf16.msra.mxu0 0
    %1693 = vmatprep.subr.bf16.mxu0 0
    %1694 = vmatpush1.bf16.msra.mxu0 0
    %1695 = vmatprep.subr.bf16.mxu0 0
    %1696 = vmatpush1.bf16.msra.mxu0 0
    %1697 = vmatprep.subr.bf16.mxu0 0
    %1698 = vmatpush1.bf16.msra.mxu0 0
    %1699 = vmatprep.subr.bf16.mxu0 0
    %1700 = vmatpush1.bf16.msra.mxu0 0
    %1701 = vmatprep.subr.bf16.mxu0 0
    %1702 = vmatpush1.bf16.msra.mxu0 0
    %1703 = vmatprep.subr.bf16.mxu0 0
    %1704 = vmatpush1.bf16.msra.mxu0 0
    %1705 = vmatprep.subr.bf16.mxu0 0
    %1706 = vmatpush1.bf16.msra.mxu0 0
    %1707 = vmatprep.subr.bf16.mxu0 0
    %1708 = vmatpush1.bf16.msra.mxu0 0
    %1709 = vmatprep.subr.bf16.mxu0 0
    %1710 = vmatpush1.bf16.msra.mxu0 0
    %1711 = vmatprep.subr.bf16.mxu0 0
    %1712 = vmatpush1.bf16.msra.mxu0 0
    %1713 = vmatprep.mubr.bf16.mxu0 0
    %1714 = vmatmul.mubr.bf16.gmra.mrb[0].mxu0 %v1459
    %v1715 = vpop.f32.mrb[0].mxu0
    %v1716 = vadd.f32 0.0, %v1715
    %v1717 = vpop.f32.mrb[0].mxu0
    %v1718 = vpop.f32.mrb[0].mxu0
    %v1719 = vpop.f32.mrb[0].mxu0
    %1720 = vdwg.mxu0
    %s1721 = scalar_lea.vmem %s7, 112
    %v1722 = vld [vmem:[%s1721] sm:$0xf]
    %v1723 = vld [vmem:[%s1721 + $0x4] sm:$0xf]
    %v1724 = vld [vmem:[%s1721 + $0x8] sm:$0xf]
    %v1725 = vld [vmem:[%s1721 + $0xc] sm:$0xf]
    %v1726 = vld [vmem:[%s1721 + $0x10] sm:$0xf]
    %v1727 = vld [vmem:[%s1721 + $0x14] sm:$0xf]
    %v1728 = vld [vmem:[%s1721 + $0x18] sm:$0x7]
    %v1736 = vunpack.c.l.b16 %v1722
    %v1737 = vunpack.c.l.b16 %v1723
    %v1738 = vunpack.c.l.b16 %v1724
    %v1739 = vunpack.c.l.b16 %v1725
    %v1740 = vunpack.c.l.b16 %v1726
    %v1741 = vunpack.c.l.b16 %v1727
    %v1742 = vunpack.c.l.b16 %v1728
    %v1743 = vpack.c.b16 %v1737, %v1736
    %v1744 = vpack.c.b16 %v1739, %v1738
    %v1745 = vpack.c.b16 %v1741, %v1740
    %v1746 = vpack.c.b16 %v1742, %v1742
    %v1751 = vsel %vm1461, %v1746, 0
    %1753 = vmatprep.subr.bf16.mxu0 0
    %1754 = vmatpush1.bf16.msra.mxu0 %v1743
    %1755 = vmatprep.subr.bf16.mxu0 0
    %1756 = vmatpush1.bf16.msra.mxu0 %v1744
    %1757 = vmatprep.subr.bf16.mxu0 0
    %1758 = vmatpush1.bf16.msra.mxu0 %v1745
    %1759 = vmatprep.subr.bf16.mxu0 0
    %1760 = vmatpush1.bf16.msra.mxu0 %v1751
    %1761 = vmatprep.subr.bf16.mxu0 0
    %1762 = vmatpush1.bf16.msra.mxu0 0
    %1763 = vmatprep.subr.bf16.mxu0 0
    %1764 = vmatpush1.bf16.msra.mxu0 0
    %1765 = vmatprep.subr.bf16.mxu0 0
    %1766 = vmatpush1.bf16.msra.mxu0 0
    %1767 = vmatprep.subr.bf16.mxu0 0
    %1768 = vmatpush1.bf16.msra.mxu0 0
    %1769 = vmatprep.subr.bf16.mxu0 0
    %1770 = vmatpush1.bf16.msra.mxu0 0
    %1771 = vmatprep.subr.bf16.mxu0 0
    %1772 = vmatpush1.bf16.msra.mxu0 0
    %1773 = vmatprep.subr.bf16.mxu0 0
    %1774 = vmatpush1.bf16.msra.mxu0 0
    %1775 = vmatprep.subr.bf16.mxu0 0
    %1776 = vmatpush1.bf16.msra.mxu0 0
    %1777 = vmatprep.subr.bf16.mxu0 0
    %1778 = vmatpush1.bf16.msra.mxu0 0
    %1779 = vmatprep.subr.bf16.mxu0 0
    %1780 = vmatpush1.bf16.msra.mxu0 0
    %1781 = vmatprep.subr.bf16.mxu0 0
    %1782 = vmatpush1.bf16.msra.mxu0 0
    %1783 = vmatprep.subr.bf16.mxu0 0
    %1784 = vmatpush1.bf16.msra.mxu0 0
    %1785 = vmatprep.mubr.bf16.mxu0 0
    %1786 = vmatmul.mubr.bf16.gmra.mrb[0].mxu0 %v1459
    %v1787 = vpop.f32.mrb[0].mxu0
    %v1788 = vadd.f32 0.0, %v1787
    %v1789 = vpop.f32.mrb[0].mxu0
    %v1790 = vpop.f32.mrb[0].mxu0
    %v1791 = vpop.f32.mrb[0].mxu0
    %1792 = vdwg.mxu0
    %s1793 = scalar_lea.vmem %s7, 140
    %v1794 = vld [vmem:[%s1793] sm:$0xf]
    %v1795 = vld [vmem:[%s1793 + $0x4] sm:$0xf]
    %v1796 = vld [vmem:[%s1793 + $0x8] sm:$0xf]
    %v1797 = vld [vmem:[%s1793 + $0xc] sm:$0xf]
    %v1798 = vld [vmem:[%s1793 + $0x10] sm:$0xf]
    %v1799 = vld [vmem:[%s1793 + $0x14] sm:$0xf]
    %v1800 = vld [vmem:[%s1793 + $0x18] sm:$0x7]
    %v1808 = vunpack.c.l.b16 %v1794
    %v1809 = vunpack.c.l.b16 %v1795
    %v1810 = vunpack.c.l.b16 %v1796
    %v1811 = vunpack.c.l.b16 %v1797
    %v1812 = vunpack.c.l.b16 %v1798
    %v1813 = vunpack.c.l.b16 %v1799
    %v1814 = vunpack.c.l.b16 %v1800
    %v1815 = vpack.c.b16 %v1809, %v1808
    %v1816 = vpack.c.b16 %v1811, %v1810
    %v1817 = vpack.c.b16 %v1813, %v1812
    %v1818 = vpack.c.b16 %v1814, %v1814
    %v1823 = vsel %vm1461, %v1818, 0
    %1825 = vmatprep.subr.bf16.mxu0 0
    %1826 = vmatpush1.bf16.msra.mxu0 %v1815
    %1827 = vmatprep.subr.bf16.mxu0 0
    %1828 = vmatpush1.bf16.msra.mxu0 %v1816
    %1829 = vmatprep.subr.bf16.mxu0 0
    %1830 = vmatpush1.bf16.msra.mxu0 %v1817
    %1831 = vmatprep.subr.bf16.mxu0 0
    %1832 = vmatpush1.bf16.msra.mxu0 %v1823
    %1833 = vmatprep.subr.bf16.mxu0 0
    %1834 = vmatpush1.bf16.msra.mxu0 0
    %1835 = vmatprep.subr.bf16.mxu0 0
    %1836 = vmatpush1.bf16.msra.mxu0 0
    %1837 = vmatprep.subr.bf16.mxu0 0
    %1838 = vmatpush1.bf16.msra.mxu0 0
    %1839 = vmatprep.subr.bf16.mxu0 0
    %1840 = vmatpush1.bf16.msra.mxu0 0
    %1841 = vmatprep.subr.bf16.mxu0 0
    %1842 = vmatpush1.bf16.msra.mxu0 0
    %1843 = vmatprep.subr.bf16.mxu0 0
    %1844 = vmatpush1.bf16.msra.mxu0 0
    %1845 = vmatprep.subr.bf16.mxu0 0
    %1846 = vmatpush1.bf16.msra.mxu0 0
    %1847 = vmatprep.subr.bf16.mxu0 0
    %1848 = vmatpush1.bf16.msra.mxu0 0
    %1849 = vmatprep.subr.bf16.mxu0 0
    %1850 = vmatpush1.bf16.msra.mxu0 0
    %1851 = vmatprep.subr.bf16.mxu0 0
    %1852 = vmatpush1.bf16.msra.mxu0 0
    %1853 = vmatprep.subr.bf16.mxu0 0
    %1854 = vmatpush1.bf16.msra.mxu0 0
    %1855 = vmatprep.subr.bf16.mxu0 0
    %1856 = vmatpush1.bf16.msra.mxu0 0
    %1857 = vmatprep.mubr.bf16.mxu0 0
    %1858 = vmatmul.mubr.bf16.gmra.mrb[0].mxu0 %v1459
    %v1859 = vpop.f32.mrb[0].mxu0
    %v1860 = vadd.f32 0.0, %v1859
    %v1861 = vpop.f32.mrb[0].mxu0
    %v1862 = vpop.f32.mrb[0].mxu0
    %v1863 = vpop.f32.mrb[0].mxu0
    %1864 = vdwg.mxu0
    %s1865 = scalar_lea.vmem %s7, 168
    %v1866 = vld [vmem:[%s1865] sm:$0xf]
    %v1867 = vld [vmem:[%s1865 + $0x4] sm:$0xf]
    %v1868 = vld [vmem:[%s1865 + $0x8] sm:$0xf]
    %v1869 = vld [vmem:[%s1865 + $0xc] sm:$0xf]
    %v1870 = vld [vmem:[%s1865 + $0x10] sm:$0xf]
    %v1871 = vld [vmem:[%s1865 + $0x14] sm:$0xf]
    %v1872 = vld [vmem:[%s1865 + $0x18] sm:$0x7]
    %v1880 = vunpack.c.l.b16 %v1866
    %v1881 = vunpack.c.l.b16 %v1867
    %v1882 = vunpack.c.l.b16 %v1868
    %v1883 = vunpack.c.l.b16 %v1869
    %v1884 = vunpack.c.l.b16 %v1870
    %v1885 = vunpack.c.l.b16 %v1871
    %v1886 = vunpack.c.l.b16 %v1872
    %v1887 = vpack.c.b16 %v1881, %v1880
    %v1888 = vpack.c.b16 %v1883, %v1882
    %v1889 = vpack.c.b16 %v1885, %v1884
    %v1890 = vpack.c.b16 %v1886, %v1886
    %v1895 = vsel %vm1461, %v1890, 0
    %1897 = vmatprep.subr.bf16.mxu0 0
    %1898 = vmatpush1.bf16.msra.mxu0 %v1887
    %1899 = vmatprep.subr.bf16.mxu0 0
    %1900 = vmatpush1.bf16.msra.mxu0 %v1888
    %1901 = vmatprep.subr.bf16.mxu0 0
    %1902 = vmatpush1.bf16.msra.mxu0 %v1889
    %1903 = vmatprep.subr.bf16.mxu0 0
    %1904 = vmatpush1.bf16.msra.mxu0 %v1895
    %1905 = vmatprep.subr.bf16.mxu0 0
    %1906 = vmatpush1.bf16.msra.mxu0 0
    %1907 = vmatprep.subr.bf16.mxu0 0
    %1908 = vmatpush1.bf16.msra.mxu0 0
    %1909 = vmatprep.subr.bf16.mxu0 0
    %1910 = vmatpush1.bf16.msra.mxu0 0
    %1911 = vmatprep.subr.bf16.mxu0 0
    %1912 = vmatpush1.bf16.msra.mxu0 0
    %1913 = vmatprep.subr.bf16.mxu0 0
    %1914 = vmatpush1.bf16.msra.mxu0 0
    %1915 = vmatprep.subr.bf16.mxu0 0
    %1916 = vmatpush1.bf16.msra.mxu0 0
    %1917 = vmatprep.subr.bf16.mxu0 0
    %1918 = vmatpush1.bf16.msra.mxu0 0
    %1919 = vmatprep.subr.bf16.mxu0 0
    %1920 = vmatpush1.bf16.msra.mxu0 0
    %1921 = vmatprep.subr.bf16.mxu0 0
    %1922 = vmatpush1.bf16.msra.mxu0 0
    %1923 = vmatprep.subr.bf16.mxu0 0
    %1924 = vmatpush1.bf16.msra.mxu0 0
    %1925 = vmatprep.subr.bf16.mxu0 0
    %1926 = vmatpush1.bf16.msra.mxu0 0
    %1927 = vmatprep.subr.bf16.mxu0 0
    %1928 = vmatpush1.bf16.msra.mxu0 0
    %1929 = vmatprep.mubr.bf16.mxu0 0
    %1930 = vmatmul.mubr.bf16.gmra.mrb[0].mxu0 %v1459
    %v1931 = vpop.f32.mrb[0].mxu0
    %v1932 = vadd.f32 0.0, %v1931
    %v1933 = vpop.f32.mrb[0].mxu0
    %v1934 = vpop.f32.mrb[0].mxu0
    %v1935 = vpop.f32.mrb[0].mxu0
    %1936 = vdwg.mxu0
    %s1937 = scalar_lea.vmem %s7, 196
    %v1938 = vld [vmem:[%s1937] sm:$0xf]
    %v1939 = vld [vmem:[%s1937 + $0x4] sm:$0xf]
    %v1940 = vld [vmem:[%s1937 + $0x8] sm:$0xf]
    %v1941 = vld [vmem:[%s1937 + $0xc] sm:$0xf]
    %v1942 = vld [vmem:[%s1937 + $0x10] sm:$0xf]
    %v1943 = vld [vmem:[%s1937 + $0x14] sm:$0xf]
    %v1944 = vld [vmem:[%s1937 + $0x18] sm:$0x7]
    %v1952 = vunpack.c.l.b16 %v1938
    %v1953 = vunpack.c.l.b16 %v1939
    %v1954 = vunpack.c.l.b16 %v1940
    %v1955 = vunpack.c.l.b16 %v1941
    %v1956 = vunpack.c.l.b16 %v1942
    %v1957 = vunpack.c.l.b16 %v1943
    %v1958 = vunpack.c.l.b16 %v1944
    %v1959 = vpack.c.b16 %v1953, %v1952
    %v1960 = vpack.c.b16 %v1955, %v1954
    %v1961 = vpack.c.b16 %v1957, %v1956
    %v1962 = vpack.c.b16 %v1958, %v1958
    %v1967 = vsel %vm1461, %v1962, 0
    %1969 = vmatprep.subr.bf16.mxu0 0
    %1970 = vmatpush1.bf16.msra.mxu0 %v1959
    %1971 = vmatprep.subr.bf16.mxu0 0
    %1972 = vmatpush1.bf16.msra.mxu0 %v1960
    %1973 = vmatprep.subr.bf16.mxu0 0
    %1974 = vmatpush1.bf16.msra.mxu0 %v1961
    %1975 = vmatprep.subr.bf16.mxu0 0
    %1976 = vmatpush1.bf16.msra.mxu0 %v1967
    %1977 = vmatprep.subr.bf16.mxu0 0
    %1978 = vmatpush1.bf16.msra.mxu0 0
    %1979 = vmatprep.subr.bf16.mxu0 0
    %1980 = vmatpush1.bf16.msra.mxu0 0
    %1981 = vmatprep.subr.bf16.mxu0 0
    %1982 = vmatpush1.bf16.msra.mxu0 0
    %1983 = vmatprep.subr.bf16.mxu0 0
    %1984 = vmatpush1.bf16.msra.mxu0 0
    %1985 = vmatprep.subr.bf16.mxu0 0
    %1986 = vmatpush1.bf16.msra.mxu0 0
    %1987 = vmatprep.subr.bf16.mxu0 0
    %1988 = vmatpush1.bf16.msra.mxu0 0
    %1989 = vmatprep.subr.bf16.mxu0 0
    %1990 = vmatpush1.bf16.msra.mxu0 0
    %1991 = vmatprep.subr.bf16.mxu0 0
    %1992 = vmatpush1.bf16.msra.mxu0 0
    %1993 = vmatprep.subr.bf16.mxu0 0
    %1994 = vmatpush1.bf16.msra.mxu0 0
    %1995 = vmatprep.subr.bf16.mxu0 0
    %1996 = vmatpush1.bf16.msra.mxu0 0
    %1997 = vmatprep.subr.bf16.mxu0 0
    %1998 = vmatpush1.bf16.msra.mxu0 0
    %1999 = vmatprep.subr.bf16.mxu0 0
    %2000 = vmatpush1.bf16.msra.mxu0 0
    %2001 = vmatprep.mubr.bf16.mxu0 0
    %2002 = vmatmul.mubr.bf16.gmra.mrb[0].mxu0 %v1459
    %v2003 = vpop.f32.mrb[0].mxu0
    %v2004 = vadd.f32 0.0, %v2003
    %v2005 = vpop.f32.mrb[0].mxu0
    %v2006 = vpop.f32.mrb[0].mxu0
    %v2007 = vpop.f32.mrb[0].mxu0
    %2008 = vdwg.mxu0
    %s2009 = scalar_lea.vmem %s7, 224
    %v2010 = vld [vmem:[%s2009] sm:$0xf]
    %v2011 = vld [vmem:[%s2009 + $0x4] sm:$0xf]
    %v2012 = vld [vmem:[%s2009 + $0x8] sm:$0xf]
    %v2013 = vld [vmem:[%s2009 + $0xc] sm:$0xf]
    %v2014 = vld [vmem:[%s2009 + $0x10] sm:$0xf]
    %v2015 = vld [vmem:[%s2009 + $0x14] sm:$0xf]
    %v2016 = vld [vmem:[%s2009 + $0x18] sm:$0x7]
    %v2024 = vunpack.c.l.b16 %v2010
    %v2025 = vunpack.c.l.b16 %v2011
    %v2026 = vunpack.c.l.b16 %v2012
    %v2027 = vunpack.c.l.b16 %v2013
    %v2028 = vunpack.c.l.b16 %v2014
    %v2029 = vunpack.c.l.b16 %v2015
    %v2030 = vunpack.c.l.b16 %v2016
    %v2031 = vpack.c.b16 %v2025, %v2024
    %v2032 = vpack.c.b16 %v2027, %v2026
    %v2033 = vpack.c.b16 %v2029, %v2028
    %v2034 = vpack.c.b16 %v2030, %v2030
    %v2039 = vsel %vm1461, %v2034, 0
    %2041 = vmatprep.subr.bf16.mxu0 0
    %2042 = vmatpush1.bf16.msra.mxu0 %v2031
    %2043 = vmatprep.subr.bf16.mxu0 0
    %2044 = vmatpush1.bf16.msra.mxu0 %v2032
    %2045 = vmatprep.subr.bf16.mxu0 0
    %2046 = vmatpush1.bf16.msra.mxu0 %v2033
    %2047 = vmatprep.subr.bf16.mxu0 0
    %2048 = vmatpush1.bf16.msra.mxu0 %v2039
    %2049 = vmatprep.subr.bf16.mxu0 0
    %2050 = vmatpush1.bf16.msra.mxu0 0
    %2051 = vmatprep.subr.bf16.mxu0 0
    %2052 = vmatpush1.bf16.msra.mxu0 0
    %2053 = vmatprep.subr.bf16.mxu0 0
    %2054 = vmatpush1.bf16.msra.mxu0 0
    %2055 = vmatprep.subr.bf16.mxu0 0
    %2056 = vmatpush1.bf16.msra.mxu0 0
    %2057 = vmatprep.subr.bf16.mxu0 0
    %2058 = vmatpush1.bf16.msra.mxu0 0
    %2059 = vmatprep.subr.bf16.mxu0 0
    %2060 = vmatpush1.bf16.msra.mxu0 0
    %2061 = vmatprep.subr.bf16.mxu0 0
    %2062 = vmatpush1.bf16.msra.mxu0 0
    %2063 = vmatprep.subr.bf16.mxu0 0
    %2064 = vmatpush1.bf16.msra.mxu0 0
    %2065 = vmatprep.subr.bf16.mxu0 0
    %2066 = vmatpush1.bf16.msra.mxu0 0
    %2067 = vmatprep.subr.bf16.mxu0 0
    %2068 = vmatpush1.bf16.msra.mxu0 0
    %2069 = vmatprep.subr.bf16.mxu0 0
    %2070 = vmatpush1.bf16.msra.mxu0 0
    %2071 = vmatprep.subr.bf16.mxu0 0
    %2072 = vmatpush1.bf16.msra.mxu0 0
    %2073 = vmatprep.mubr.bf16.mxu0 0
    %2074 = vmatmul.mubr.bf16.gmra.mrb[0].mxu0 %v1459
    %v2075 = vpop.f32.mrb[0].mxu0
    %v2076 = vadd.f32 0.0, %v2075
    %v2077 = vpop.f32.mrb[0].mxu0
    %v2078 = vpop.f32.mrb[0].mxu0
    %v2079 = vpop.f32.mrb[0].mxu0
    %2080 = vdwg.mxu0
    %s2081 = scalar_lea.vmem %s7, 252
    %v2082 = vld [vmem:[%s2081] sm:$0xf]
    %v2083 = vld [vmem:[%s2081 + $0x4] sm:$0xf]
    %v2084 = vld [vmem:[%s2081 + $0x8] sm:$0xf]
    %v2085 = vld [vmem:[%s2081 + $0xc] sm:$0xf]
    %v2086 = vld [vmem:[%s2081 + $0x10] sm:$0xf]
    %v2087 = vld [vmem:[%s2081 + $0x14] sm:$0xf]
    %v2088 = vld [vmem:[%s2081 + $0x18] sm:$0x7]
    %v2096 = vunpack.c.l.b16 %v2082
    %v2097 = vunpack.c.l.b16 %v2083
    %v2098 = vunpack.c.l.b16 %v2084
    %v2099 = vunpack.c.l.b16 %v2085
    %v2100 = vunpack.c.l.b16 %v2086
    %v2101 = vunpack.c.l.b16 %v2087
    %v2102 = vunpack.c.l.b16 %v2088
    %v2103 = vpack.c.b16 %v2097, %v2096
    %v2104 = vpack.c.b16 %v2099, %v2098
    %v2105 = vpack.c.b16 %v2101, %v2100
    %v2106 = vpack.c.b16 %v2102, %v2102
    %v2111 = vsel %vm1461, %v2106, 0
    %2113 = vmatprep.subr.bf16.mxu0 0
    %2114 = vmatpush1.bf16.msra.mxu0 %v2103
    %2115 = vmatprep.subr.bf16.mxu0 0
    %2116 = vmatpush1.bf16.msra.mxu0 %v2104
    %2117 = vmatprep.subr.bf16.mxu0 0
    %2118 = vmatpush1.bf16.msra.mxu0 %v2105
    %2119 = vmatprep.subr.bf16.mxu0 0
    %2120 = vmatpush1.bf16.msra.mxu0 %v2111
    %2121 = vmatprep.subr.bf16.mxu0 0
    %2122 = vmatpush1.bf16.msra.mxu0 0
    %2123 = vmatprep.subr.bf16.mxu0 0
    %2124 = vmatpush1.bf16.msra.mxu0 0
    %2125 = vmatprep.subr.bf16.mxu0 0
    %2126 = vmatpush1.bf16.msra.mxu0 0
    %2127 = vmatprep.subr.bf16.mxu0 0
    %2128 = vmatpush1.bf16.msra.mxu0 0
    %2129 = vmatprep.subr.bf16.mxu0 0
    %2130 = vmatpush1.bf16.msra.mxu0 0
    %2131 = vmatprep.subr.bf16.mxu0 0
    %2132 = vmatpush1.bf16.msra.mxu0 0
    %2133 = vmatprep.subr.bf16.mxu0 0
    %2134 = vmatpush1.bf16.msra.mxu0 0
    %2135 = vmatprep.subr.bf16.mxu0 0
    %2136 = vmatpush1.bf16.msra.mxu0 0
    %2137 = vmatprep.subr.bf16.mxu0 0
    %2138 = vmatpush1.bf16.msra.mxu0 0
    %2139 = vmatprep.subr.bf16.mxu0 0
    %2140 = vmatpush1.bf16.msra.mxu0 0
    %2141 = vmatprep.subr.bf16.mxu0 0
    %2142 = vmatpush1.bf16.msra.mxu0 0
    %2143 = vmatprep.subr.bf16.mxu0 0
    %2144 = vmatpush1.bf16.msra.mxu0 0
    %2145 = vmatprep.mubr.bf16.mxu0 0
    %2146 = vmatmul.mubr.bf16.gmra.mrb[0].mxu0 %v1459
    %v2147 = vpop.f32.mrb[0].mxu0
    %v2148 = vadd.f32 0.0, %v2147
    %v2149 = vpop.f32.mrb[0].mxu0
    %v2150 = vpop.f32.mrb[0].mxu0
    %v2151 = vpop.f32.mrb[0].mxu0
    %2152 = vdwg.mxu0
    %s2153 = scalar_lea.vmem %s7, 280
    %v2154 = vld [vmem:[%s2153] sm:$0xf]
    %v2155 = vld [vmem:[%s2153 + $0x4] sm:$0xf]
    %v2156 = vld [vmem:[%s2153 + $0x8] sm:$0xf]
    %v2157 = vld [vmem:[%s2153 + $0xc] sm:$0xf]
    %v2158 = vld [vmem:[%s2153 + $0x10] sm:$0xf]
    %v2159 = vld [vmem:[%s2153 + $0x14] sm:$0xf]
    %v2160 = vld [vmem:[%s2153 + $0x18] sm:$0x7]
    %v2168 = vunpack.c.l.b16 %v2154
    %v2169 = vunpack.c.l.b16 %v2155
    %v2170 = vunpack.c.l.b16 %v2156
    %v2171 = vunpack.c.l.b16 %v2157
    %v2172 = vunpack.c.l.b16 %v2158
    %v2173 = vunpack.c.l.b16 %v2159
    %v2174 = vunpack.c.l.b16 %v2160
    %v2175 = vpack.c.b16 %v2169, %v2168
    %v2176 = vpack.c.b16 %v2171, %v2170
    %v2177 = vpack.c.b16 %v2173, %v2172
    %v2178 = vpack.c.b16 %v2174, %v2174
    %v2183 = vsel %vm1461, %v2178, 0
    %2185 = vmatprep.subr.bf16.mxu0 0
    %2186 = vmatpush1.bf16.msra.mxu0 %v2175
    %2187 = vmatprep.subr.bf16.mxu0 0
    %2188 = vmatpush1.bf16.msra.mxu0 %v2176
    %2189 = vmatprep.subr.bf16.mxu0 0
    %2190 = vmatpush1.bf16.msra.mxu0 %v2177
    %2191 = vmatprep.subr.bf16.mxu0 0
    %2192 = vmatpush1.bf16.msra.mxu0 %v2183
    %2193 = vmatprep.subr.bf16.mxu0 0
    %2194 = vmatpush1.bf16.msra.mxu0 0
    %2195 = vmatprep.subr.bf16.mxu0 0
    %2196 = vmatpush1.bf16.msra.mxu0 0
    %2197 = vmatprep.subr.bf16.mxu0 0
    %2198 = vmatpush1.bf16.msra.mxu0 0
    %2199 = vmatprep.subr.bf16.mxu0 0
    %2200 = vmatpush1.bf16.msra.mxu0 0
    %2201 = vmatprep.subr.bf16.mxu0 0
    %2202 = vmatpush1.bf16.msra.mxu0 0
    %2203 = vmatprep.subr.bf16.mxu0 0
    %2204 = vmatpush1.bf16.msra.mxu0 0
    %2205 = vmatprep.subr.bf16.mxu0 0
    %2206 = vmatpush1.bf16.msra.mxu0 0
    %2207 = vmatprep.subr.bf16.mxu0 0
    %2208 = vmatpush1.bf16.msra.mxu0 0
    %2209 = vmatprep.subr.bf16.mxu0 0
    %2210 = vmatpush1.bf16.msra.mxu0 0
    %2211 = vmatprep.subr.bf16.mxu0 0
    %2212 = vmatpush1.bf16.msra.mxu0 0
    %2213 = vmatprep.subr.bf16.mxu0 0
    %2214 = vmatpush1.bf16.msra.mxu0 0
    %2215 = vmatprep.subr.bf16.mxu0 0
    %2216 = vmatpush1.bf16.msra.mxu0 0
    %2217 = vmatprep.mubr.bf16.mxu0 0
    %2218 = vmatmul.mubr.bf16.gmra.mrb[0].mxu0 %v1459
    %v2219 = vpop.f32.mrb[0].mxu0
    %v2220 = vadd.f32 0.0, %v2219
    %v2221 = vpop.f32.mrb[0].mxu0
    %v2222 = vpop.f32.mrb[0].mxu0
    %v2223 = vpop.f32.mrb[0].mxu0
    %2224 = vdwg.mxu0
    %s2225 = scalar_lea.vmem %s7, 308
    %v2226 = vld [vmem:[%s2225] sm:$0xf]
    %v2227 = vld [vmem:[%s2225 + $0x4] sm:$0xf]
    %v2228 = vld [vmem:[%s2225 + $0x8] sm:$0xf]
    %v2229 = vld [vmem:[%s2225 + $0xc] sm:$0xf]
    %v2230 = vld [vmem:[%s2225 + $0x10] sm:$0xf]
    %v2231 = vld [vmem:[%s2225 + $0x14] sm:$0xf]
    %v2232 = vld [vmem:[%s2225 + $0x18] sm:$0x7]
    %v2240 = vunpack.c.l.b16 %v2226
    %v2241 = vunpack.c.l.b16 %v2227
    %v2242 = vunpack.c.l.b16 %v2228
    %v2243 = vunpack.c.l.b16 %v2229
    %v2244 = vunpack.c.l.b16 %v2230
    %v2245 = vunpack.c.l.b16 %v2231
    %v2246 = vunpack.c.l.b16 %v2232
    %v2247 = vpack.c.b16 %v2241, %v2240
    %v2248 = vpack.c.b16 %v2243, %v2242
    %v2249 = vpack.c.b16 %v2245, %v2244
    %v2250 = vpack.c.b16 %v2246, %v2246
    %v2255 = vsel %vm1461, %v2250, 0
    %2257 = vmatprep.subr.bf16.mxu0 0
    %2258 = vmatpush1.bf16.msra.mxu0 %v2247
    %2259 = vmatprep.subr.bf16.mxu0 0
    %2260 = vmatpush1.bf16.msra.mxu0 %v2248
    %2261 = vmatprep.subr.bf16.mxu0 0
    %2262 = vmatpush1.bf16.msra.mxu0 %v2249
    %2263 = vmatprep.subr.bf16.mxu0 0
    %2264 = vmatpush1.bf16.msra.mxu0 %v2255
    %2265 = vmatprep.subr.bf16.mxu0 0
    %2266 = vmatpush1.bf16.msra.mxu0 0
    %2267 = vmatprep.subr.bf16.mxu0 0
    %2268 = vmatpush1.bf16.msra.mxu0 0
    %2269 = vmatprep.subr.bf16.mxu0 0
    %2270 = vmatpush1.bf16.msra.mxu0 0
    %2271 = vmatprep.subr.bf16.mxu0 0
    %2272 = vmatpush1.bf16.msra.mxu0 0
    %2273 = vmatprep.subr.bf16.mxu0 0
    %2274 = vmatpush1.bf16.msra.mxu0 0
    %2275 = vmatprep.subr.bf16.mxu0 0
    %2276 = vmatpush1.bf16.msra.mxu0 0
    %2277 = vmatprep.subr.bf16.mxu0 0
    %2278 = vmatpush1.bf16.msra.mxu0 0
    %2279 = vmatprep.subr.bf16.mxu0 0
    %2280 = vmatpush1.bf16.msra.mxu0 0
    %2281 = vmatprep.subr.bf16.mxu0 0
    %2282 = vmatpush1.bf16.msra.mxu0 0
    %2283 = vmatprep.subr.bf16.mxu0 0
    %2284 = vmatpush1.bf16.msra.mxu0 0
    %2285 = vmatprep.subr.bf16.mxu0 0
    %2286 = vmatpush1.bf16.msra.mxu0 0
    %2287 = vmatprep.subr.bf16.mxu0 0
    %2288 = vmatpush1.bf16.msra.mxu0 0
    %2289 = vmatprep.mubr.bf16.mxu0 0
    %2290 = vmatmul.mubr.bf16.gmra.mrb[0].mxu0 %v1459
    %v2291 = vpop.f32.mrb[0].mxu0
    %v2292 = vadd.f32 0.0, %v2291
    %v2293 = vpop.f32.mrb[0].mxu0
    %v2294 = vpop.f32.mrb[0].mxu0
    %v2295 = vpop.f32.mrb[0].mxu0
    %2296 = vdwg.mxu0
    %s2297 = scalar_lea.vmem %s7, 336
    %v2298 = vld [vmem:[%s2297] sm:$0xf]
    %v2299 = vld [vmem:[%s2297 + $0x4] sm:$0xf]
    %v2300 = vld [vmem:[%s2297 + $0x8] sm:$0xf]
    %v2301 = vld [vmem:[%s2297 + $0xc] sm:$0xf]
    %v2302 = vld [vmem:[%s2297 + $0x10] sm:$0xf]
    %v2303 = vld [vmem:[%s2297 + $0x14] sm:$0xf]
    %v2304 = vld [vmem:[%s2297 + $0x18] sm:$0x7]
    %v2312 = vunpack.c.l.b16 %v2298
    %v2313 = vunpack.c.l.b16 %v2299
    %v2314 = vunpack.c.l.b16 %v2300
    %v2315 = vunpack.c.l.b16 %v2301
    %v2316 = vunpack.c.l.b16 %v2302
    %v2317 = vunpack.c.l.b16 %v2303
    %v2318 = vunpack.c.l.b16 %v2304
    %v2319 = vpack.c.b16 %v2313, %v2312
    %v2320 = vpack.c.b16 %v2315, %v2314
    %v2321 = vpack.c.b16 %v2317, %v2316
    %v2322 = vpack.c.b16 %v2318, %v2318
    %v2327 = vsel %vm1461, %v2322, 0
    %2329 = vmatprep.subr.bf16.mxu0 0
    %2330 = vmatpush1.bf16.msra.mxu0 %v2319
    %2331 = vmatprep.subr.bf16.mxu0 0
    %2332 = vmatpush1.bf16.msra.mxu0 %v2320
    %2333 = vmatprep.subr.bf16.mxu0 0
    %2334 = vmatpush1.bf16.msra.mxu0 %v2321
    %2335 = vmatprep.subr.bf16.mxu0 0
    %2336 = vmatpush1.bf16.msra.mxu0 %v2327
    %2337 = vmatprep.subr.bf16.mxu0 0
    %2338 = vmatpush1.bf16.msra.mxu0 0
    %2339 = vmatprep.subr.bf16.mxu0 0
    %2340 = vmatpush1.bf16.msra.mxu0 0
    %2341 = vmatprep.subr.bf16.mxu0 0
    %2342 = vmatpush1.bf16.msra.mxu0 0
    %2343 = vmatprep.subr.bf16.mxu0 0
    %2344 = vmatpush1.bf16.msra.mxu0 0
    %2345 = vmatprep.subr.bf16.mxu0 0
    %2346 = vmatpush1.bf16.msra.mxu0 0
    %2347 = vmatprep.subr.bf16.mxu0 0
    %2348 = vmatpush1.bf16.msra.mxu0 0
    %2349 = vmatprep.subr.bf16.mxu0 0
    %2350 = vmatpush1.bf16.msra.mxu0 0
    %2351 = vmatprep.subr.bf16.mxu0 0
    %2352 = vmatpush1.bf16.msra.mxu0 0
    %2353 = vmatprep.subr.bf16.mxu0 0
    %2354 = vmatpush1.bf16.msra.mxu0 0
    %2355 = vmatprep.subr.bf16.mxu0 0
    %2356 = vmatpush1.bf16.msra.mxu0 0
    %2357 = vmatprep.subr.bf16.mxu0 0
    %2358 = vmatpush1.bf16.msra.mxu0 0
    %2359 = vmatprep.subr.bf16.mxu0 0
    %2360 = vmatpush1.bf16.msra.mxu0 0
    %2361 = vmatprep.mubr.bf16.mxu0 0
    %2362 = vmatmul.mubr.bf16.gmra.mrb[0].mxu0 %v1459
    %v2363 = vpop.f32.mrb[0].mxu0
    %v2364 = vadd.f32 0.0, %v2363
    %v2365 = vpop.f32.mrb[0].mxu0
    %v2366 = vpop.f32.mrb[0].mxu0
    %v2367 = vpop.f32.mrb[0].mxu0
    %2368 = vdwg.mxu0
    %s2369 = scalar_lea.vmem %s7, 364
    %v2370 = vld [vmem:[%s2369] sm:$0xf]
    %v2371 = vld [vmem:[%s2369 + $0x4] sm:$0xf]
    %v2372 = vld [vmem:[%s2369 + $0x8] sm:$0xf]
    %v2373 = vld [vmem:[%s2369 + $0xc] sm:$0xf]
    %v2374 = vld [vmem:[%s2369 + $0x10] sm:$0xf]
    %v2375 = vld [vmem:[%s2369 + $0x14] sm:$0xf]
    %v2376 = vld [vmem:[%s2369 + $0x18] sm:$0x7]
    %v2384 = vunpack.c.l.b16 %v2370
    %v2385 = vunpack.c.l.b16 %v2371
    %v2386 = vunpack.c.l.b16 %v2372
    %v2387 = vunpack.c.l.b16 %v2373
    %v2388 = vunpack.c.l.b16 %v2374
    %v2389 = vunpack.c.l.b16 %v2375
    %v2390 = vunpack.c.l.b16 %v2376
    %v2391 = vpack.c.b16 %v2385, %v2384
    %v2392 = vpack.c.b16 %v2387, %v2386
    %v2393 = vpack.c.b16 %v2389, %v2388
    %v2394 = vpack.c.b16 %v2390, %v2390
    %v2399 = vsel %vm1461, %v2394, 0
    %2401 = vmatprep.subr.bf16.mxu0 0
    %2402 = vmatpush1.bf16.msra.mxu0 %v2391
    %2403 = vmatprep.subr.bf16.mxu0 0
    %2404 = vmatpush1.bf16.msra.mxu0 %v2392
    %2405 = vmatprep.subr.bf16.mxu0 0
    %2406 = vmatpush1.bf16.msra.mxu0 %v2393
    %2407 = vmatprep.subr.bf16.mxu0 0
    %2408 = vmatpush1.bf16.msra.mxu0 %v2399
    %2409 = vmatprep.subr.bf16.mxu0 0
    %2410 = vmatpush1.bf16.msra.mxu0 0
    %2411 = vmatprep.subr.bf16.mxu0 0
    %2412 = vmatpush1.bf16.msra.mxu0 0
    %2413 = vmatprep.subr.bf16.mxu0 0
    %2414 = vmatpush1.bf16.msra.mxu0 0
    %2415 = vmatprep.subr.bf16.mxu0 0
    %2416 = vmatpush1.bf16.msra.mxu0 0
    %2417 = vmatprep.subr.bf16.mxu0 0
    %2418 = vmatpush1.bf16.msra.mxu0 0
    %2419 = vmatprep.subr.bf16.mxu0 0
    %2420 = vmatpush1.bf16.msra.mxu0 0
    %2421 = vmatprep.subr.bf16.mxu0 0
    %2422 = vmatpush1.bf16.msra.mxu0 0
    %2423 = vmatprep.subr.bf16.mxu0 0
    %2424 = vmatpush1.bf16.msra.mxu0 0
    %2425 = vmatprep.subr.bf16.mxu0 0
    %2426 = vmatpush1.bf16.msra.mxu0 0
    %2427 = vmatprep.subr.bf16.mxu0 0
    %2428 = vmatpush1.bf16.msra.mxu0 0
    %2429 = vmatprep.subr.bf16.mxu0 0
    %2430 = vmatpush1.bf16.msra.mxu0 0
    %2431 = vmatprep.subr.bf16.mxu0 0
    %2432 = vmatpush1.bf16.msra.mxu0 0
    %2433 = vmatprep.mubr.bf16.mxu0 0
    %2434 = vmatmul.mubr.bf16.gmra.mrb[0].mxu0 %v1459
    %v2435 = vpop.f32.mrb[0].mxu0
    %v2436 = vadd.f32 0.0, %v2435
    %v2437 = vpop.f32.mrb[0].mxu0
    %v2438 = vpop.f32.mrb[0].mxu0
    %v2439 = vpop.f32.mrb[0].mxu0
    %2440 = vdwg.mxu0
    %s2441 = scalar_lea.vmem %s7, 392
    %v2442 = vld [vmem:[%s2441] sm:$0xf]
    %v2443 = vld [vmem:[%s2441 + $0x4] sm:$0xf]
    %v2444 = vld [vmem:[%s2441 + $0x8] sm:$0xf]
    %v2445 = vld [vmem:[%s2441 + $0xc] sm:$0xf]
    %v2446 = vld [vmem:[%s2441 + $0x10] sm:$0xf]
    %v2447 = vld [vmem:[%s2441 + $0x14] sm:$0xf]
    %v2448 = vld [vmem:[%s2441 + $0x18] sm:$0x7]
    %v2456 = vunpack.c.l.b16 %v2442
    %v2457 = vunpack.c.l.b16 %v2443
    %v2458 = vunpack.c.l.b16 %v2444
    %v2459 = vunpack.c.l.b16 %v2445
    %v2460 = vunpack.c.l.b16 %v2446
    %v2461 = vunpack.c.l.b16 %v2447
    %v2462 = vunpack.c.l.b16 %v2448
    %v2463 = vpack.c.b16 %v2457, %v2456
    %v2464 = vpack.c.b16 %v2459, %v2458
    %v2465 = vpack.c.b16 %v2461, %v2460
    %v2466 = vpack.c.b16 %v2462, %v2462
    %v2471 = vsel %vm1461, %v2466, 0
    %2473 = vmatprep.subr.bf16.mxu0 0
    %2474 = vmatpush1.bf16.msra.mxu0 %v2463
    %2475 = vmatprep.subr.bf16.mxu0 0
    %2476 = vmatpush1.bf16.msra.mxu0 %v2464
    %2477 = vmatprep.subr.bf16.mxu0 0
    %2478 = vmatpush1.bf16.msra.mxu0 %v2465
    %2479 = vmatprep.subr.bf16.mxu0 0
    %2480 = vmatpush1.bf16.msra.mxu0 %v2471
    %2481 = vmatprep.subr.bf16.mxu0 0
    %2482 = vmatpush1.bf16.msra.mxu0 0
    %2483 = vmatprep.subr.bf16.mxu0 0
    %2484 = vmatpush1.bf16.msra.mxu0 0
    %2485 = vmatprep.subr.bf16.mxu0 0
    %2486 = vmatpush1.bf16.msra.mxu0 0
    %2487 = vmatprep.subr.bf16.mxu0 0
    %2488 = vmatpush1.bf16.msra.mxu0 0
    %2489 = vmatprep.subr.bf16.mxu0 0
    %2490 = vmatpush1.bf16.msra.mxu0 0
    %2491 = vmatprep.subr.bf16.mxu0 0
    %2492 = vmatpush1.bf16.msra.mxu0 0
    %2493 = vmatprep.subr.bf16.mxu0 0
    %2494 = vmatpush1.bf16.msra.mxu0 0
    %2495 = vmatprep.subr.bf16.mxu0 0
    %2496 = vmatpush1.bf16.msra.mxu0 0
    %2497 = vmatprep.subr.bf16.mxu0 0
    %2498 = vmatpush1.bf16.msra.mxu0 0
    %2499 = vmatprep.subr.bf16.mxu0 0
    %2500 = vmatpush1.bf16.msra.mxu0 0
    %2501 = vmatprep.subr.bf16.mxu0 0
    %2502 = vmatpush1.bf16.msra.mxu0 0
    %2503 = vmatprep.subr.bf16.mxu0 0
    %2504 = vmatpush1.bf16.msra.mxu0 0
    %2505 = vmatprep.mubr.bf16.mxu0 0
    %2506 = vmatmul.mubr.bf16.gmra.mrb[0].mxu0 %v1459
    %v2507 = vpop.f32.mrb[0].mxu0
    %v2508 = vadd.f32 0.0, %v2507
    %v2509 = vpop.f32.mrb[0].mxu0
    %v2510 = vpop.f32.mrb[0].mxu0
    %v2511 = vpop.f32.mrb[0].mxu0
    %2512 = vdwg.mxu0
    %s2513 = scalar_lea.vmem %s7, 420
    %v2514 = vld [vmem:[%s2513] sm:$0xf]
    %v2515 = vld [vmem:[%s2513 + $0x4] sm:$0xf]
    %v2516 = vld [vmem:[%s2513 + $0x8] sm:$0xf]
    %v2517 = vld [vmem:[%s2513 + $0xc] sm:$0xf]
    %v2518 = vld [vmem:[%s2513 + $0x10] sm:$0xf]
    %v2519 = vld [vmem:[%s2513 + $0x14] sm:$0xf]
    %v2520 = vld [vmem:[%s2513 + $0x18] sm:$0x7]
    %v2528 = vunpack.c.l.b16 %v2514
    %v2529 = vunpack.c.l.b16 %v2515
    %v2530 = vunpack.c.l.b16 %v2516
    %v2531 = vunpack.c.l.b16 %v2517
    %v2532 = vunpack.c.l.b16 %v2518
    %v2533 = vunpack.c.l.b16 %v2519
    %v2534 = vunpack.c.l.b16 %v2520
    %v2535 = vpack.c.b16 %v2529, %v2528
    %v2536 = vpack.c.b16 %v2531, %v2530
    %v2537 = vpack.c.b16 %v2533, %v2532
    %v2538 = vpack.c.b16 %v2534, %v2534
    %v2543 = vsel %vm1461, %v2538, 0
    %2545 = vmatprep.subr.bf16.mxu0 0
    %2546 = vmatpush1.bf16.msra.mxu0 %v2535
    %2547 = vmatprep.subr.bf16.mxu0 0
    %2548 = vmatpush1.bf16.msra.mxu0 %v2536
    %2549 = vmatprep.subr.bf16.mxu0 0
    %2550 = vmatpush1.bf16.msra.mxu0 %v2537
    %2551 = vmatprep.subr.bf16.mxu0 0
    %2552 = vmatpush1.bf16.msra.mxu0 %v2543
    %2553 = vmatprep.subr.bf16.mxu0 0
    %2554 = vmatpush1.bf16.msra.mxu0 0
    %2555 = vmatprep.subr.bf16.mxu0 0
    %2556 = vmatpush1.bf16.msra.mxu0 0
    %2557 = vmatprep.subr.bf16.mxu0 0
    %2558 = vmatpush1.bf16.msra.mxu0 0
    %2559 = vmatprep.subr.bf16.mxu0 0
    %2560 = vmatpush1.bf16.msra.mxu0 0
    %2561 = vmatprep.subr.bf16.mxu0 0
    %2562 = vmatpush1.bf16.msra.mxu0 0
    %2563 = vmatprep.subr.bf16.mxu0 0
    %2564 = vmatpush1.bf16.msra.mxu0 0
    %2565 = vmatprep.subr.bf16.mxu0 0
    %2566 = vmatpush1.bf16.msra.mxu0 0
    %2567 = vmatprep.subr.bf16.mxu0 0
    %2568 = vmatpush1.bf16.msra.mxu0 0
    %2569 = vmatprep.subr.bf16.mxu0 0
    %2570 = vmatpush1.bf16.msra.mxu0 0
    %2571 = vmatprep.subr.bf16.mxu0 0
    %2572 = vmatpush1.bf16.msra.mxu0 0
    %2573 = vmatprep.subr.bf16.mxu0 0
    %2574 = vmatpush1.bf16.msra.mxu0 0
    %2575 = vmatprep.subr.bf16.mxu0 0
    %2576 = vmatpush1.bf16.msra.mxu0 0
    %2577 = vmatprep.mubr.bf16.mxu0 0
    %2578 = vmatmul.mubr.bf16.gmra.mrb[0].mxu0 %v1459
    %v2579 = vpop.f32.mrb[0].mxu0
    %v2580 = vadd.f32 0.0, %v2579
    %v2581 = vpop.f32.mrb[0].mxu0
    %v2582 = vpop.f32.mrb[0].mxu0
    %v2583 = vpop.f32.mrb[0].mxu0
    %2584 = vdwg.mxu0
    %s2585 = scalar_lea.vmem %s7, 448
    %v2586 = vld [vmem:[%s2585] sm:$0xf]
    %v2587 = vld [vmem:[%s2585 + $0x4] sm:$0xf]
    %v2588 = vld [vmem:[%s2585 + $0x8] sm:$0xf]
    %v2589 = vld [vmem:[%s2585 + $0xc] sm:$0xf]
    %v2590 = vld [vmem:[%s2585 + $0x10] sm:$0xf]
    %v2591 = vld [vmem:[%s2585 + $0x14] sm:$0xf]
    %v2592 = vld [vmem:[%s2585 + $0x18] sm:$0x7]
    %v2600 = vunpack.c.l.b16 %v2586
    %v2601 = vunpack.c.l.b16 %v2587
    %v2602 = vunpack.c.l.b16 %v2588
    %v2603 = vunpack.c.l.b16 %v2589
    %v2604 = vunpack.c.l.b16 %v2590
    %v2605 = vunpack.c.l.b16 %v2591
    %v2606 = vunpack.c.l.b16 %v2592
    %v2607 = vpack.c.b16 %v2601, %v2600
    %v2608 = vpack.c.b16 %v2603, %v2602
    %v2609 = vpack.c.b16 %v2605, %v2604
    %v2610 = vpack.c.b16 %v2606, %v2606
    %v2615 = vsel %vm1461, %v2610, 0
    %2617 = vmatprep.subr.bf16.mxu0 0
    %2618 = vmatpush1.bf16.msra.mxu0 %v2607
    %2619 = vmatprep.subr.bf16.mxu0 0
    %2620 = vmatpush1.bf16.msra.mxu0 %v2608
    %2621 = vmatprep.subr.bf16.mxu0 0
    %2622 = vmatpush1.bf16.msra.mxu0 %v2609
    %2623 = vmatprep.subr.bf16.mxu0 0
    %2624 = vmatpush1.bf16.msra.mxu0 %v2615
    %2625 = vmatprep.subr.bf16.mxu0 0
    %2626 = vmatpush1.bf16.msra.mxu0 0
    %2627 = vmatprep.subr.bf16.mxu0 0
    %2628 = vmatpush1.bf16.msra.mxu0 0
    %2629 = vmatprep.subr.bf16.mxu0 0
    %2630 = vmatpush1.bf16.msra.mxu0 0
    %2631 = vmatprep.subr.bf16.mxu0 0
    %2632 = vmatpush1.bf16.msra.mxu0 0
    %2633 = vmatprep.subr.bf16.mxu0 0
    %2634 = vmatpush1.bf16.msra.mxu0 0
    %2635 = vmatprep.subr.bf16.mxu0 0
    %2636 = vmatpush1.bf16.msra.mxu0 0
    %2637 = vmatprep.subr.bf16.mxu0 0
    %2638 = vmatpush1.bf16.msra.mxu0 0
    %2639 = vmatprep.subr.bf16.mxu0 0
    %2640 = vmatpush1.bf16.msra.mxu0 0
    %2641 = vmatprep.subr.bf16.mxu0 0
    %2642 = vmatpush1.bf16.msra.mxu0 0
    %2643 = vmatprep.subr.bf16.mxu0 0
    %2644 = vmatpush1.bf16.msra.mxu0 0
    %2645 = vmatprep.subr.bf16.mxu0 0
    %2646 = vmatpush1.bf16.msra.mxu0 0
    %2647 = vmatprep.subr.bf16.mxu0 0
    %2648 = vmatpush1.bf16.msra.mxu0 0
    %2649 = vmatprep.mubr.bf16.mxu0 0
    %2650 = vmatmul.mubr.bf16.gmra.mrb[0].mxu0 %v1459
    %v2651 = vpop.f32.mrb[0].mxu0
    %v2652 = vadd.f32 0.0, %v2651
    %v2653 = vpop.f32.mrb[0].mxu0
    %v2654 = vpop.f32.mrb[0].mxu0
    %v2655 = vpop.f32.mrb[0].mxu0
    %2656 = vdwg.mxu0
    %s2657 = scalar_lea.vmem %s7, 476
    %v2658 = vld [vmem:[%s2657] sm:$0xf]
    %v2659 = vld [vmem:[%s2657 + $0x4] sm:$0xf]
    %v2660 = vld [vmem:[%s2657 + $0x8] sm:$0xf]
    %v2661 = vld [vmem:[%s2657 + $0xc] sm:$0xf]
    %v2662 = vld [vmem:[%s2657 + $0x10] sm:$0xf]
    %v2663 = vld [vmem:[%s2657 + $0x14] sm:$0xf]
    %v2664 = vld [vmem:[%s2657 + $0x18] sm:$0x7]
    %v2672 = vunpack.c.l.b16 %v2658
    %v2673 = vunpack.c.l.b16 %v2659
    %v2674 = vunpack.c.l.b16 %v2660
    %v2675 = vunpack.c.l.b16 %v2661
    %v2676 = vunpack.c.l.b16 %v2662
    %v2677 = vunpack.c.l.b16 %v2663
    %v2678 = vunpack.c.l.b16 %v2664
    %v2679 = vpack.c.b16 %v2673, %v2672
    %v2680 = vpack.c.b16 %v2675, %v2674
    %v2681 = vpack.c.b16 %v2677, %v2676
    %v2682 = vpack.c.b16 %v2678, %v2678
    %v2687 = vsel %vm1461, %v2682, 0
    %2689 = vmatprep.subr.bf16.mxu0 0
    %2690 = vmatpush1.bf16.msra.mxu0 %v2679
    %2691 = vmatprep.subr.bf16.mxu0 0
    %2692 = vmatpush1.bf16.msra.mxu0 %v2680
    %2693 = vmatprep.subr.bf16.mxu0 0
    %2694 = vmatpush1.bf16.msra.mxu0 %v2681
    %2695 = vmatprep.subr.bf16.mxu0 0
    %2696 = vmatpush1.bf16.msra.mxu0 %v2687
    %2697 = vmatprep.subr.bf16.mxu0 0
    %2698 = vmatpush1.bf16.msra.mxu0 0
    %2699 = vmatprep.subr.bf16.mxu0 0
    %2700 = vmatpush1.bf16.msra.mxu0 0
    %2701 = vmatprep.subr.bf16.mxu0 0
    %2702 = vmatpush1.bf16.msra.mxu0 0
    %2703 = vmatprep.subr.bf16.mxu0 0
    %2704 = vmatpush1.bf16.msra.mxu0 0
    %2705 = vmatprep.subr.bf16.mxu0 0
    %2706 = vmatpush1.bf16.msra.mxu0 0
    %2707 = vmatprep.subr.bf16.mxu0 0
    %2708 = vmatpush1.bf16.msra.mxu0 0
    %2709 = vmatprep.subr.bf16.mxu0 0
    %2710 = vmatpush1.bf16.msra.mxu0 0
    %2711 = vmatprep.subr.bf16.mxu0 0
    %2712 = vmatpush1.bf16.msra.mxu0 0
    %2713 = vmatprep.subr.bf16.mxu0 0
    %2714 = vmatpush1.bf16.msra.mxu0 0
    %2715 = vmatprep.subr.bf16.mxu0 0
    %2716 = vmatpush1.bf16.msra.mxu0 0
    %2717 = vmatprep.subr.bf16.mxu0 0
    %2718 = vmatpush1.bf16.msra.mxu0 0
    %2719 = vmatprep.subr.bf16.mxu0 0
    %2720 = vmatpush1.bf16.msra.mxu0 0
    %2721 = vmatprep.mubr.bf16.mxu0 0
    %2722 = vmatmul.mubr.bf16.gmra.mrb[0].mxu0 %v1459
    %v2723 = vpop.f32.mrb[0].mxu0
    %v2724 = vadd.f32 0.0, %v2723
    %v2725 = vpop.f32.mrb[0].mxu0
    %v2726 = vpop.f32.mrb[0].mxu0
    %v2727 = vpop.f32.mrb[0].mxu0
    %2728 = vdwg.mxu0
    %s2729 = scalar_lea.vmem %s7, 504
    %v2730 = vld [vmem:[%s2729] sm:$0xf]
    %v2731 = vld [vmem:[%s2729 + $0x4] sm:$0xf]
    %v2732 = vld [vmem:[%s2729 + $0x8] sm:$0xf]
    %v2733 = vld [vmem:[%s2729 + $0xc] sm:$0xf]
    %v2734 = vld [vmem:[%s2729 + $0x10] sm:$0xf]
    %v2735 = vld [vmem:[%s2729 + $0x14] sm:$0xf]
    %v2736 = vld [vmem:[%s2729 + $0x18] sm:$0x7]
    %v2744 = vunpack.c.l.b16 %v2730
    %v2745 = vunpack.c.l.b16 %v2731
    %v2746 = vunpack.c.l.b16 %v2732
    %v2747 = vunpack.c.l.b16 %v2733
    %v2748 = vunpack.c.l.b16 %v2734
    %v2749 = vunpack.c.l.b16 %v2735
    %v2750 = vunpack.c.l.b16 %v2736
    %v2751 = vpack.c.b16 %v2745, %v2744
    %v2752 = vpack.c.b16 %v2747, %v2746
    %v2753 = vpack.c.b16 %v2749, %v2748
    %v2754 = vpack.c.b16 %v2750, %v2750
    %v2759 = vsel %vm1461, %v2754, 0
    %2761 = vmatprep.subr.bf16.mxu0 0
    %2762 = vmatpush1.bf16.msra.mxu0 %v2751
    %2763 = vmatprep.subr.bf16.mxu0 0
    %2764 = vmatpush1.bf16.msra.mxu0 %v2752
    %2765 = vmatprep.subr.bf16.mxu0 0
    %2766 = vmatpush1.bf16.msra.mxu0 %v2753
    %2767 = vmatprep.subr.bf16.mxu0 0
    %2768 = vmatpush1.bf16.msra.mxu0 %v2759
    %2769 = vmatprep.subr.bf16.mxu0 0
    %2770 = vmatpush1.bf16.msra.mxu0 0
    %2771 = vmatprep.subr.bf16.mxu0 0
    %2772 = vmatpush1.bf16.msra.mxu0 0
    %2773 = vmatprep.subr.bf16.mxu0 0
    %2774 = vmatpush1.bf16.msra.mxu0 0
    %2775 = vmatprep.subr.bf16.mxu0 0
    %2776 = vmatpush1.bf16.msra.mxu0 0
    %2777 = vmatprep.subr.bf16.mxu0 0
    %2778 = vmatpush1.bf16.msra.mxu0 0
    %2779 = vmatprep.subr.bf16.mxu0 0
    %2780 = vmatpush1.bf16.msra.mxu0 0
    %2781 = vmatprep.subr.bf16.mxu0 0
    %2782 = vmatpush1.bf16.msra.mxu0 0
    %2783 = vmatprep.subr.bf16.mxu0 0
    %2784 = vmatpush1.bf16.msra.mxu0 0
    %2785 = vmatprep.subr.bf16.mxu0 0
    %2786 = vmatpush1.bf16.msra.mxu0 0
    %2787 = vmatprep.subr.bf16.mxu0 0
    %2788 = vmatpush1.bf16.msra.mxu0 0
    %2789 = vmatprep.subr.bf16.mxu0 0
    %2790 = vmatpush1.bf16.msra.mxu0 0
    %2791 = vmatprep.subr.bf16.mxu0 0
    %2792 = vmatpush1.bf16.msra.mxu0 0
    %2793 = vmatprep.mubr.bf16.mxu0 0
    %2794 = vmatmul.mubr.bf16.gmra.mrb[0].mxu0 %v1459
    %v2795 = vpop.f32.mrb[0].mxu0
    %v2796 = vadd.f32 0.0, %v2795
    %v2797 = vpop.f32.mrb[0].mxu0
    %v2798 = vpop.f32.mrb[0].mxu0
    %v2799 = vpop.f32.mrb[0].mxu0
    %2800 = vdwg.mxu0
    %s2801 = scalar_lea.vmem %s7, 532
    %v2802 = vld [vmem:[%s2801] sm:$0xf]
    %v2803 = vld [vmem:[%s2801 + $0x4] sm:$0xf]
    %v2804 = vld [vmem:[%s2801 + $0x8] sm:$0xf]
    %v2805 = vld [vmem:[%s2801 + $0xc] sm:$0xf]
    %v2806 = vld [vmem:[%s2801 + $0x10] sm:$0xf]
    %v2807 = vld [vmem:[%s2801 + $0x14] sm:$0xf]
    %v2808 = vld [vmem:[%s2801 + $0x18] sm:$0x7]
    %v2816 = vunpack.c.l.b16 %v2802
    %v2817 = vunpack.c.l.b16 %v2803
    %v2818 = vunpack.c.l.b16 %v2804
    %v2819 = vunpack.c.l.b16 %v2805
    %v2820 = vunpack.c.l.b16 %v2806
    %v2821 = vunpack.c.l.b16 %v2807
    %v2822 = vunpack.c.l.b16 %v2808
    %v2823 = vpack.c.b16 %v2817, %v2816
    %v2824 = vpack.c.b16 %v2819, %v2818
    %v2825 = vpack.c.b16 %v2821, %v2820
    %v2826 = vpack.c.b16 %v2822, %v2822
    %v2831 = vsel %vm1461, %v2826, 0
    %2833 = vmatprep.subr.bf16.mxu0 0
    %2834 = vmatpush1.bf16.msra.mxu0 %v2823
    %2835 = vmatprep.subr.bf16.mxu0 0
    %2836 = vmatpush1.bf16.msra.mxu0 %v2824
    %2837 = vmatprep.subr.bf16.mxu0 0
    %2838 = vmatpush1.bf16.msra.mxu0 %v2825
    %2839 = vmatprep.subr.bf16.mxu0 0
    %2840 = vmatpush1.bf16.msra.mxu0 %v2831
    %2841 = vmatprep.subr.bf16.mxu0 0
    %2842 = vmatpush1.bf16.msra.mxu0 0
    %2843 = vmatprep.subr.bf16.mxu0 0
    %2844 = vmatpush1.bf16.msra.mxu0 0
    %2845 = vmatprep.subr.bf16.mxu0 0
    %2846 = vmatpush1.bf16.msra.mxu0 0
    %2847 = vmatprep.subr.bf16.mxu0 0
    %2848 = vmatpush1.bf16.msra.mxu0 0
    %2849 = vmatprep.subr.bf16.mxu0 0
    %2850 = vmatpush1.bf16.msra.mxu0 0
    %2851 = vmatprep.subr.bf16.mxu0 0
    %2852 = vmatpush1.bf16.msra.mxu0 0
    %2853 = vmatprep.subr.bf16.mxu0 0
    %2854 = vmatpush1.bf16.msra.mxu0 0
    %2855 = vmatprep.subr.bf16.mxu0 0
    %2856 = vmatpush1.bf16.msra.mxu0 0
    %2857 = vmatprep.subr.bf16.mxu0 0
    %2858 = vmatpush1.bf16.msra.mxu0 0
    %2859 = vmatprep.subr.bf16.mxu0 0
    %2860 = vmatpush1.bf16.msra.mxu0 0
    %2861 = vmatprep.subr.bf16.mxu0 0
    %2862 = vmatpush1.bf16.msra.mxu0 0
    %2863 = vmatprep.subr.bf16.mxu0 0
    %2864 = vmatpush1.bf16.msra.mxu0 0
    %2865 = vmatprep.mubr.bf16.mxu0 0
    %2866 = vmatmul.mubr.bf16.gmra.mrb[0].mxu0 %v1459
    %v2867 = vpop.f32.mrb[0].mxu0
    %v2868 = vadd.f32 0.0, %v2867
    %v2869 = vpop.f32.mrb[0].mxu0
    %v2870 = vpop.f32.mrb[0].mxu0
    %v2871 = vpop.f32.mrb[0].mxu0
    %2872 = vdwg.mxu0
    %s2873 = scalar_lea.vmem %s7, 560
    %v2874 = vld [vmem:[%s2873] sm:$0xf]
    %v2875 = vld [vmem:[%s2873 + $0x4] sm:$0xf]
    %v2876 = vld [vmem:[%s2873 + $0x8] sm:$0xf]
    %v2877 = vld [vmem:[%s2873 + $0xc] sm:$0xf]
    %v2878 = vld [vmem:[%s2873 + $0x10] sm:$0xf]
    %v2879 = vld [vmem:[%s2873 + $0x14] sm:$0xf]
    %v2880 = vld [vmem:[%s2873 + $0x18] sm:$0x7]
    %v2888 = vunpack.c.l.b16 %v2874
    %v2889 = vunpack.c.l.b16 %v2875
    %v2890 = vunpack.c.l.b16 %v2876
    %v2891 = vunpack.c.l.b16 %v2877
    %v2892 = vunpack.c.l.b16 %v2878
    %v2893 = vunpack.c.l.b16 %v2879
    %v2894 = vunpack.c.l.b16 %v2880
    %v2895 = vpack.c.b16 %v2889, %v2888
    %v2896 = vpack.c.b16 %v2891, %v2890
    %v2897 = vpack.c.b16 %v2893, %v2892
    %v2898 = vpack.c.b16 %v2894, %v2894
    %v2903 = vsel %vm1461, %v2898, 0
    %2905 = vmatprep.subr.bf16.mxu0 0
    %2906 = vmatpush1.bf16.msra.mxu0 %v2895
    %2907 = vmatprep.subr.bf16.mxu0 0
    %2908 = vmatpush1.bf16.msra.mxu0 %v2896
    %2909 = vmatprep.subr.bf16.mxu0 0
    %2910 = vmatpush1.bf16.msra.mxu0 %v2897
    %2911 = vmatprep.subr.bf16.mxu0 0
    %2912 = vmatpush1.bf16.msra.mxu0 %v2903
    %2913 = vmatprep.subr.bf16.mxu0 0
    %2914 = vmatpush1.bf16.msra.mxu0 0
    %2915 = vmatprep.subr.bf16.mxu0 0
    %2916 = vmatpush1.bf16.msra.mxu0 0
    %2917 = vmatprep.subr.bf16.mxu0 0
    %2918 = vmatpush1.bf16.msra.mxu0 0
    %2919 = vmatprep.subr.bf16.mxu0 0
    %2920 = vmatpush1.bf16.msra.mxu0 0
    %2921 = vmatprep.subr.bf16.mxu0 0
    %2922 = vmatpush1.bf16.msra.mxu0 0
    %2923 = vmatprep.subr.bf16.mxu0 0
    %2924 = vmatpush1.bf16.msra.mxu0 0
    %2925 = vmatprep.subr.bf16.mxu0 0
    %2926 = vmatpush1.bf16.msra.mxu0 0
    %2927 = vmatprep.subr.bf16.mxu0 0
    %2928 = vmatpush1.bf16.msra.mxu0 0
    %2929 = vmatprep.subr.bf16.mxu0 0
    %2930 = vmatpush1.bf16.msra.mxu0 0
    %2931 = vmatprep.subr.bf16.mxu0 0
    %2932 = vmatpush1.bf16.msra.mxu0 0
    %2933 = vmatprep.subr.bf16.mxu0 0
    %2934 = vmatpush1.bf16.msra.mxu0 0
    %2935 = vmatprep.subr.bf16.mxu0 0
    %2936 = vmatpush1.bf16.msra.mxu0 0
    %2937 = vmatprep.mubr.bf16.mxu0 0
    %2938 = vmatmul.mubr.bf16.gmra.mrb[0].mxu0 %v1459
    %v2939 = vpop.f32.mrb[0].mxu0
    %v2940 = vadd.f32 0.0, %v2939
    %v2941 = vpop.f32.mrb[0].mxu0
    %v2942 = vpop.f32.mrb[0].mxu0
    %v2943 = vpop.f32.mrb[0].mxu0
    %2944 = vdwg.mxu0
    %s2945 = scalar_lea.vmem %s7, 588
    %v2946 = vld [vmem:[%s2945] sm:$0xf]
    %v2947 = vld [vmem:[%s2945 + $0x4] sm:$0xf]
    %v2948 = vld [vmem:[%s2945 + $0x8] sm:$0xf]
    %v2949 = vld [vmem:[%s2945 + $0xc] sm:$0xf]
    %v2950 = vld [vmem:[%s2945 + $0x10] sm:$0xf]
    %v2951 = vld [vmem:[%s2945 + $0x14] sm:$0xf]
    %v2952 = vld [vmem:[%s2945 + $0x18] sm:$0x7]
    %v2960 = vunpack.c.l.b16 %v2946
    %v2961 = vunpack.c.l.b16 %v2947
    %v2962 = vunpack.c.l.b16 %v2948
    %v2963 = vunpack.c.l.b16 %v2949
    %v2964 = vunpack.c.l.b16 %v2950
    %v2965 = vunpack.c.l.b16 %v2951
    %v2966 = vunpack.c.l.b16 %v2952
    %v2967 = vpack.c.b16 %v2961, %v2960
    %v2968 = vpack.c.b16 %v2963, %v2962
    %v2969 = vpack.c.b16 %v2965, %v2964
    %v2970 = vpack.c.b16 %v2966, %v2966
    %v2975 = vsel %vm1461, %v2970, 0
    %2977 = vmatprep.subr.bf16.mxu0 0
    %2978 = vmatpush1.bf16.msra.mxu0 %v2967
    %2979 = vmatprep.subr.bf16.mxu0 0
    %2980 = vmatpush1.bf16.msra.mxu0 %v2968
    %2981 = vmatprep.subr.bf16.mxu0 0
    %2982 = vmatpush1.bf16.msra.mxu0 %v2969
    %2983 = vmatprep.subr.bf16.mxu0 0
    %2984 = vmatpush1.bf16.msra.mxu0 %v2975
    %2985 = vmatprep.subr.bf16.mxu0 0
    %2986 = vmatpush1.bf16.msra.mxu0 0
    %2987 = vmatprep.subr.bf16.mxu0 0
    %2988 = vmatpush1.bf16.msra.mxu0 0
    %2989 = vmatprep.subr.bf16.mxu0 0
    %2990 = vmatpush1.bf16.msra.mxu0 0
    %2991 = vmatprep.subr.bf16.mxu0 0
    %2992 = vmatpush1.bf16.msra.mxu0 0
    %2993 = vmatprep.subr.bf16.mxu0 0
    %2994 = vmatpush1.bf16.msra.mxu0 0
    %2995 = vmatprep.subr.bf16.mxu0 0
    %2996 = vmatpush1.bf16.msra.mxu0 0
    %2997 = vmatprep.subr.bf16.mxu0 0
    %2998 = vmatpush1.bf16.msra.mxu0 0
    %2999 = vmatprep.subr.bf16.mxu0 0
    %3000 = vmatpush1.bf16.msra.mxu0 0
    %3001 = vmatprep.subr.bf16.mxu0 0
    %3002 = vmatpush1.bf16.msra.mxu0 0
    %3003 = vmatprep.subr.bf16.mxu0 0
    %3004 = vmatpush1.bf16.msra.mxu0 0
    %3005 = vmatprep.subr.bf16.mxu0 0
    %3006 = vmatpush1.bf16.msra.mxu0 0
    %3007 = vmatprep.subr.bf16.mxu0 0
    %3008 = vmatpush1.bf16.msra.mxu0 0
    %3009 = vmatprep.mubr.bf16.mxu0 0
    %3010 = vmatmul.mubr.bf16.gmra.mrb[0].mxu0 %v1459
    %v3011 = vpop.f32.mrb[0].mxu0
    %v3012 = vadd.f32 0.0, %v3011
    %v3013 = vpop.f32.mrb[0].mxu0
    %v3014 = vpop.f32.mrb[0].mxu0
    %v3015 = vpop.f32.mrb[0].mxu0
    %3016 = vdwg.mxu0
    %s3017 = scalar_lea.vmem %s7, 616
    %v3018 = vld [vmem:[%s3017] sm:$0xf]
    %v3019 = vld [vmem:[%s3017 + $0x4] sm:$0xf]
    %v3020 = vld [vmem:[%s3017 + $0x8] sm:$0xf]
    %v3021 = vld [vmem:[%s3017 + $0xc] sm:$0xf]
    %v3022 = vld [vmem:[%s3017 + $0x10] sm:$0xf]
    %v3023 = vld [vmem:[%s3017 + $0x14] sm:$0xf]
    %v3024 = vld [vmem:[%s3017 + $0x18] sm:$0x7]
    %v3032 = vunpack.c.l.b16 %v3018
    %v3033 = vunpack.c.l.b16 %v3019
    %v3034 = vunpack.c.l.b16 %v3020
    %v3035 = vunpack.c.l.b16 %v3021
    %v3036 = vunpack.c.l.b16 %v3022
    %v3037 = vunpack.c.l.b16 %v3023
    %v3038 = vunpack.c.l.b16 %v3024
    %v3039 = vpack.c.b16 %v3033, %v3032
    %v3040 = vpack.c.b16 %v3035, %v3034
    %v3041 = vpack.c.b16 %v3037, %v3036
    %v3042 = vpack.c.b16 %v3038, %v3038
    %v3047 = vsel %vm1461, %v3042, 0
    %3049 = vmatprep.subr.bf16.mxu0 0
    %3050 = vmatpush1.bf16.msra.mxu0 %v3039
    %3051 = vmatprep.subr.bf16.mxu0 0
    %3052 = vmatpush1.bf16.msra.mxu0 %v3040
    %3053 = vmatprep.subr.bf16.mxu0 0
    %3054 = vmatpush1.bf16.msra.mxu0 %v3041
    %3055 = vmatprep.subr.bf16.mxu0 0
    %3056 = vmatpush1.bf16.msra.mxu0 %v3047
    %3057 = vmatprep.subr.bf16.mxu0 0
    %3058 = vmatpush1.bf16.msra.mxu0 0
    %3059 = vmatprep.subr.bf16.mxu0 0
    %3060 = vmatpush1.bf16.msra.mxu0 0
    %3061 = vmatprep.subr.bf16.mxu0 0
    %3062 = vmatpush1.bf16.msra.mxu0 0
    %3063 = vmatprep.subr.bf16.mxu0 0
    %3064 = vmatpush1.bf16.msra.mxu0 0
    %3065 = vmatprep.subr.bf16.mxu0 0
    %3066 = vmatpush1.bf16.msra.mxu0 0
    %3067 = vmatprep.subr.bf16.mxu0 0
    %3068 = vmatpush1.bf16.msra.mxu0 0
    %3069 = vmatprep.subr.bf16.mxu0 0
    %3070 = vmatpush1.bf16.msra.mxu0 0
    %3071 = vmatprep.subr.bf16.mxu0 0
    %3072 = vmatpush1.bf16.msra.mxu0 0
    %3073 = vmatprep.subr.bf16.mxu0 0
    %3074 = vmatpush1.bf16.msra.mxu0 0
    %3075 = vmatprep.subr.bf16.mxu0 0
    %3076 = vmatpush1.bf16.msra.mxu0 0
    %3077 = vmatprep.subr.bf16.mxu0 0
    %3078 = vmatpush1.bf16.msra.mxu0 0
    %3079 = vmatprep.subr.bf16.mxu0 0
    %3080 = vmatpush1.bf16.msra.mxu0 0
    %3081 = vmatprep.mubr.bf16.mxu0 0
    %3082 = vmatmul.mubr.bf16.gmra.mrb[0].mxu0 %v1459
    %v3083 = vpop.f32.mrb[0].mxu0
    %v3084 = vadd.f32 0.0, %v3083
    %v3085 = vpop.f32.mrb[0].mxu0
    %v3086 = vpop.f32.mrb[0].mxu0
    %v3087 = vpop.f32.mrb[0].mxu0
    %3088 = vdwg.mxu0
    %s3089 = scalar_lea.vmem %s7, 644
    %v3090 = vld [vmem:[%s3089] sm:$0xf]
    %v3091 = vld [vmem:[%s3089 + $0x4] sm:$0xf]
    %v3092 = vld [vmem:[%s3089 + $0x8] sm:$0xf]
    %v3093 = vld [vmem:[%s3089 + $0xc] sm:$0xf]
    %v3094 = vld [vmem:[%s3089 + $0x10] sm:$0xf]
    %v3095 = vld [vmem:[%s3089 + $0x14] sm:$0xf]
    %v3096 = vld [vmem:[%s3089 + $0x18] sm:$0x7]
    %v3104 = vunpack.c.l.b16 %v3090
    %v3105 = vunpack.c.l.b16 %v3091
    %v3106 = vunpack.c.l.b16 %v3092
    %v3107 = vunpack.c.l.b16 %v3093
    %v3108 = vunpack.c.l.b16 %v3094
    %v3109 = vunpack.c.l.b16 %v3095
    %v3110 = vunpack.c.l.b16 %v3096
    %v3111 = vpack.c.b16 %v3105, %v3104
    %v3112 = vpack.c.b16 %v3107, %v3106
    %v3113 = vpack.c.b16 %v3109, %v3108
    %v3114 = vpack.c.b16 %v3110, %v3110
    %v3119 = vsel %vm1461, %v3114, 0
    %3121 = vmatprep.subr.bf16.mxu0 0
    %3122 = vmatpush1.bf16.msra.mxu0 %v3111
    %3123 = vmatprep.subr.bf16.mxu0 0
    %3124 = vmatpush1.bf16.msra.mxu0 %v3112
    %3125 = vmatprep.subr.bf16.mxu0 0
    %3126 = vmatpush1.bf16.msra.mxu0 %v3113
    %3127 = vmatprep.subr.bf16.mxu0 0
    %3128 = vmatpush1.bf16.msra.mxu0 %v3119
    %3129 = vmatprep.subr.bf16.mxu0 0
    %3130 = vmatpush1.bf16.msra.mxu0 0
    %3131 = vmatprep.subr.bf16.mxu0 0
    %3132 = vmatpush1.bf16.msra.mxu0 0
    %3133 = vmatprep.subr.bf16.mxu0 0
    %3134 = vmatpush1.bf16.msra.mxu0 0
    %3135 = vmatprep.subr.bf16.mxu0 0
    %3136 = vmatpush1.bf16.msra.mxu0 0
    %3137 = vmatprep.subr.bf16.mxu0 0
    %3138 = vmatpush1.bf16.msra.mxu0 0
    %3139 = vmatprep.subr.bf16.mxu0 0
    %3140 = vmatpush1.bf16.msra.mxu0 0
    %3141 = vmatprep.subr.bf16.mxu0 0
    %3142 = vmatpush1.bf16.msra.mxu0 0
    %3143 = vmatprep.subr.bf16.mxu0 0
    %3144 = vmatpush1.bf16.msra.mxu0 0
    %3145 = vmatprep.subr.bf16.mxu0 0
    %3146 = vmatpush1.bf16.msra.mxu0 0
    %3147 = vmatprep.subr.bf16.mxu0 0
    %3148 = vmatpush1.bf16.msra.mxu0 0
    %3149 = vmatprep.subr.bf16.mxu0 0
    %3150 = vmatpush1.bf16.msra.mxu0 0
    %3151 = vmatprep.subr.bf16.mxu0 0
    %3152 = vmatpush1.bf16.msra.mxu0 0
    %3153 = vmatprep.mubr.bf16.mxu0 0
    %3154 = vmatmul.mubr.bf16.gmra.mrb[0].mxu0 %v1459
    %v3155 = vpop.f32.mrb[0].mxu0
    %v3156 = vadd.f32 0.0, %v3155
    %v3157 = vpop.f32.mrb[0].mxu0
    %v3158 = vpop.f32.mrb[0].mxu0
    %v3159 = vpop.f32.mrb[0].mxu0
    %3160 = vdwg.mxu0
    %s3161 = scalar_lea.vmem %s7, 672
    %v3162 = vld [vmem:[%s3161] sm:$0xf]
    %v3163 = vld [vmem:[%s3161 + $0x4] sm:$0xf]
    %v3164 = vld [vmem:[%s3161 + $0x8] sm:$0xf]
    %v3165 = vld [vmem:[%s3161 + $0xc] sm:$0xf]
    %v3166 = vld [vmem:[%s3161 + $0x10] sm:$0xf]
    %v3167 = vld [vmem:[%s3161 + $0x14] sm:$0xf]
    %v3168 = vld [vmem:[%s3161 + $0x18] sm:$0x7]
    %v3176 = vunpack.c.l.b16 %v3162
    %v3177 = vunpack.c.l.b16 %v3163
    %v3178 = vunpack.c.l.b16 %v3164
    %v3179 = vunpack.c.l.b16 %v3165
    %v3180 = vunpack.c.l.b16 %v3166
    %v3181 = vunpack.c.l.b16 %v3167
    %v3182 = vunpack.c.l.b16 %v3168
    %v3183 = vpack.c.b16 %v3177, %v3176
    %v3184 = vpack.c.b16 %v3179, %v3178
    %v3185 = vpack.c.b16 %v3181, %v3180
    %v3186 = vpack.c.b16 %v3182, %v3182
    %v3191 = vsel %vm1461, %v3186, 0
    %3193 = vmatprep.subr.bf16.mxu0 0
    %3194 = vmatpush1.bf16.msra.mxu0 %v3183
    %3195 = vmatprep.subr.bf16.mxu0 0
    %3196 = vmatpush1.bf16.msra.mxu0 %v3184
    %3197 = vmatprep.subr.bf16.mxu0 0
    %3198 = vmatpush1.bf16.msra.mxu0 %v3185
    %3199 = vmatprep.subr.bf16.mxu0 0
    %3200 = vmatpush1.bf16.msra.mxu0 %v3191
    %3201 = vmatprep.subr.bf16.mxu0 0
    %3202 = vmatpush1.bf16.msra.mxu0 0
    %3203 = vmatprep.subr.bf16.mxu0 0
    %3204 = vmatpush1.bf16.msra.mxu0 0
    %3205 = vmatprep.subr.bf16.mxu0 0
    %3206 = vmatpush1.bf16.msra.mxu0 0
    %3207 = vmatprep.subr.bf16.mxu0 0
    %3208 = vmatpush1.bf16.msra.mxu0 0
    %3209 = vmatprep.subr.bf16.mxu0 0
    %3210 = vmatpush1.bf16.msra.mxu0 0
    %3211 = vmatprep.subr.bf16.mxu0 0
    %3212 = vmatpush1.bf16.msra.mxu0 0
    %3213 = vmatprep.subr.bf16.mxu0 0
    %3214 = vmatpush1.bf16.msra.mxu0 0
    %3215 = vmatprep.subr.bf16.mxu0 0
    %3216 = vmatpush1.bf16.msra.mxu0 0
    %3217 = vmatprep.subr.bf16.mxu0 0
    %3218 = vmatpush1.bf16.msra.mxu0 0
    %3219 = vmatprep.subr.bf16.mxu0 0
    %3220 = vmatpush1.bf16.msra.mxu0 0
    %3221 = vmatprep.subr.bf16.mxu0 0
    %3222 = vmatpush1.bf16.msra.mxu0 0
    %3223 = vmatprep.subr.bf16.mxu0 0
    %3224 = vmatpush1.bf16.msra.mxu0 0
    %3225 = vmatprep.mubr.bf16.mxu0 0
    %3226 = vmatmul.mubr.bf16.gmra.mrb[0].mxu0 %v1459
    %v3227 = vpop.f32.mrb[0].mxu0
    %v3228 = vadd.f32 0.0, %v3227
    %v3229 = vpop.f32.mrb[0].mxu0
    %v3230 = vpop.f32.mrb[0].mxu0
    %v3231 = vpop.f32.mrb[0].mxu0
    %3232 = vdwg.mxu0
    %s3233 = scalar_lea.vmem %s7, 700
    %v3234 = vld [vmem:[%s3233] sm:$0xf]
    %v3235 = vld [vmem:[%s3233 + $0x4] sm:$0xf]
    %v3236 = vld [vmem:[%s3233 + $0x8] sm:$0xf]
    %v3237 = vld [vmem:[%s3233 + $0xc] sm:$0xf]
    %v3238 = vld [vmem:[%s3233 + $0x10] sm:$0xf]
    %v3239 = vld [vmem:[%s3233 + $0x14] sm:$0xf]
    %v3240 = vld [vmem:[%s3233 + $0x18] sm:$0x7]
    %v3248 = vunpack.c.l.b16 %v3234
    %v3249 = vunpack.c.l.b16 %v3235
    %v3250 = vunpack.c.l.b16 %v3236
    %v3251 = vunpack.c.l.b16 %v3237
    %v3252 = vunpack.c.l.b16 %v3238
    %v3253 = vunpack.c.l.b16 %v3239
    %v3254 = vunpack.c.l.b16 %v3240
    %v3255 = vpack.c.b16 %v3249, %v3248
    %v3256 = vpack.c.b16 %v3251, %v3250
    %v3257 = vpack.c.b16 %v3253, %v3252
    %v3258 = vpack.c.b16 %v3254, %v3254
    %v3263 = vsel %vm1461, %v3258, 0
    %3265 = vmatprep.subr.bf16.mxu0 0
    %3266 = vmatpush1.bf16.msra.mxu0 %v3255
    %3267 = vmatprep.subr.bf16.mxu0 0
    %3268 = vmatpush1.bf16.msra.mxu0 %v3256
    %3269 = vmatprep.subr.bf16.mxu0 0
    %3270 = vmatpush1.bf16.msra.mxu0 %v3257
    %3271 = vmatprep.subr.bf16.mxu0 0
    %3272 = vmatpush1.bf16.msra.mxu0 %v3263
    %3273 = vmatprep.subr.bf16.mxu0 0
    %3274 = vmatpush1.bf16.msra.mxu0 0
    %3275 = vmatprep.subr.bf16.mxu0 0
    %3276 = vmatpush1.bf16.msra.mxu0 0
    %3277 = vmatprep.subr.bf16.mxu0 0
    %3278 = vmatpush1.bf16.msra.mxu0 0
    %3279 = vmatprep.subr.bf16.mxu0 0
    %3280 = vmatpush1.bf16.msra.mxu0 0
    %3281 = vmatprep.subr.bf16.mxu0 0
    %3282 = vmatpush1.bf16.msra.mxu0 0
    %3283 = vmatprep.subr.bf16.mxu0 0
    %3284 = vmatpush1.bf16.msra.mxu0 0
    %3285 = vmatprep.subr.bf16.mxu0 0
    %3286 = vmatpush1.bf16.msra.mxu0 0
    %3287 = vmatprep.subr.bf16.mxu0 0
    %3288 = vmatpush1.bf16.msra.mxu0 0
    %3289 = vmatprep.subr.bf16.mxu0 0
    %3290 = vmatpush1.bf16.msra.mxu0 0
    %3291 = vmatprep.subr.bf16.mxu0 0
    %3292 = vmatpush1.bf16.msra.mxu0 0
    %3293 = vmatprep.subr.bf16.mxu0 0
    %3294 = vmatpush1.bf16.msra.mxu0 0
    %3295 = vmatprep.subr.bf16.mxu0 0
    %3296 = vmatpush1.bf16.msra.mxu0 0
    %3297 = vmatprep.mubr.bf16.mxu0 0
    %3298 = vmatmul.mubr.bf16.gmra.mrb[0].mxu0 %v1459
    %v3299 = vpop.f32.mrb[0].mxu0
    %v3300 = vadd.f32 0.0, %v3299
    %v3301 = vpop.f32.mrb[0].mxu0
    %v3302 = vpop.f32.mrb[0].mxu0
    %v3303 = vpop.f32.mrb[0].mxu0
    %3304 = vdwg.mxu0
    %s3305 = scalar_lea.vmem %s7, 728
    %v3306 = vld [vmem:[%s3305] sm:$0xf]
    %v3307 = vld [vmem:[%s3305 + $0x4] sm:$0xf]
    %v3308 = vld [vmem:[%s3305 + $0x8] sm:$0xf]
    %v3309 = vld [vmem:[%s3305 + $0xc] sm:$0xf]
    %v3310 = vld [vmem:[%s3305 + $0x10] sm:$0xf]
    %v3311 = vld [vmem:[%s3305 + $0x14] sm:$0xf]
    %v3312 = vld [vmem:[%s3305 + $0x18] sm:$0x7]
    %v3320 = vunpack.c.l.b16 %v3306
    %v3321 = vunpack.c.l.b16 %v3307
    %v3322 = vunpack.c.l.b16 %v3308
    %v3323 = vunpack.c.l.b16 %v3309
    %v3324 = vunpack.c.l.b16 %v3310
    %v3325 = vunpack.c.l.b16 %v3311
    %v3326 = vunpack.c.l.b16 %v3312
    %v3327 = vpack.c.b16 %v3321, %v3320
    %v3328 = vpack.c.b16 %v3323, %v3322
    %v3329 = vpack.c.b16 %v3325, %v3324
    %v3330 = vpack.c.b16 %v3326, %v3326
    %v3335 = vsel %vm1461, %v3330, 0
    %3337 = vmatprep.subr.bf16.mxu0 0
    %3338 = vmatpush1.bf16.msra.mxu0 %v3327
    %3339 = vmatprep.subr.bf16.mxu0 0
    %3340 = vmatpush1.bf16.msra.mxu0 %v3328
    %3341 = vmatprep.subr.bf16.mxu0 0
    %3342 = vmatpush1.bf16.msra.mxu0 %v3329
    %3343 = vmatprep.subr.bf16.mxu0 0
    %3344 = vmatpush1.bf16.msra.mxu0 %v3335
    %3345 = vmatprep.subr.bf16.mxu0 0
    %3346 = vmatpush1.bf16.msra.mxu0 0
    %3347 = vmatprep.subr.bf16.mxu0 0
    %3348 = vmatpush1.bf16.msra.mxu0 0
    %3349 = vmatprep.subr.bf16.mxu0 0
    %3350 = vmatpush1.bf16.msra.mxu0 0
    %3351 = vmatprep.subr.bf16.mxu0 0
    %3352 = vmatpush1.bf16.msra.mxu0 0
    %3353 = vmatprep.subr.bf16.mxu0 0
    %3354 = vmatpush1.bf16.msra.mxu0 0
    %3355 = vmatprep.subr.bf16.mxu0 0
    %3356 = vmatpush1.bf16.msra.mxu0 0
    %3357 = vmatprep.subr.bf16.mxu0 0
    %3358 = vmatpush1.bf16.msra.mxu0 0
    %3359 = vmatprep.subr.bf16.mxu0 0
    %3360 = vmatpush1.bf16.msra.mxu0 0
    %3361 = vmatprep.subr.bf16.mxu0 0
    %3362 = vmatpush1.bf16.msra.mxu0 0
    %3363 = vmatprep.subr.bf16.mxu0 0
    %3364 = vmatpush1.bf16.msra.mxu0 0
    %3365 = vmatprep.subr.bf16.mxu0 0
    %3366 = vmatpush1.bf16.msra.mxu0 0
    %3367 = vmatprep.subr.bf16.mxu0 0
    %3368 = vmatpush1.bf16.msra.mxu0 0
    %3369 = vmatprep.mubr.bf16.mxu0 0
    %3370 = vmatmul.mubr.bf16.gmra.mrb[0].mxu0 %v1459
    %v3371 = vpop.f32.mrb[0].mxu0
    %v3372 = vadd.f32 0.0, %v3371
    %v3373 = vpop.f32.mrb[0].mxu0
    %v3374 = vpop.f32.mrb[0].mxu0
    %v3375 = vpop.f32.mrb[0].mxu0
    %3376 = vdwg.mxu0
    %v3377 = vpack.c.bf16 %v1572, %v1500
    %v3378 = vpack.c.bf16 %v1716, %v1644
    %v3379 = vpack.c.bf16 %v1860, %v1788
    %v3380 = vpack.c.bf16 %v2004, %v1932
    %v3381 = vpack.c.bf16 %v2148, %v2076
    %v3382 = vpack.c.bf16 %v2292, %v2220
    %v3383 = vpack.c.bf16 %v2436, %v2364
    %v3384 = vpack.c.bf16 %v2580, %v2508
    %v3385 = vpack.c.bf16 %v2724, %v2652
    %v3386 = vpack.c.bf16 %v2868, %v2796
    %v3387 = vpack.c.bf16 %v3012, %v2940
    %v3388 = vpack.c.bf16 %v3156, %v3084
    %v3389 = vpack.c.bf16 %v3300, %v3228
    %v3390 = vpack.c.bf16 %v3372, %v3372
    %v3391 = vld [vmem:[%s3] sm:$0xff]
    %v3393 = vunpack.c.l.b16 %v3391
    %v3394 = vunpack.c.h.b16 %v3391
    %v3395 = vpack.c.b16 %v3393, %v3393
    %v3396 = vpack.c.b16 %v3394, %v3394
    %vm3398 = vcmask 719872
    %v3400 = vsel %vm3398, %v3396, 0
    %vm3402 = vcmask 1043456
    %v3404 = vsel %vm3402, %v3390, 0
    %3406 = vmatprep.subr.bf16.mxu0 0
    %3407 = vmatpush1.bf16.msra.mxu0 %v3377
    %3408 = vmatprep.subr.bf16.mxu0 0
    %3409 = vmatpush1.bf16.msra.mxu0 %v3378
    %3410 = vmatprep.subr.bf16.mxu0 0
    %3411 = vmatpush1.bf16.msra.mxu0 %v3379
    %3412 = vmatprep.subr.bf16.mxu0 0
    %3413 = vmatpush1.bf16.msra.mxu0 %v3380
    %3414 = vmatprep.subr.bf16.mxu0 0
    %3415 = vmatpush1.bf16.msra.mxu0 %v3381
    %3416 = vmatprep.subr.bf16.mxu0 0
    %3417 = vmatpush1.bf16.msra.mxu0 %v3382
    %3418 = vmatprep.subr.bf16.mxu0 0
    %3419 = vmatpush1.bf16.msra.mxu0 %v3383
    %3420 = vmatprep.subr.bf16.mxu0 0
    %3421 = vmatpush1.bf16.msra.mxu0 %v3384
    %3422 = vmatprep.subr.bf16.mxu0 0
    %3423 = vmatpush1.bf16.msra.mxu0 %v3385
    %3424 = vmatprep.subr.bf16.mxu0 0
    %3425 = vmatpush1.bf16.msra.mxu0 %v3386
    %3426 = vmatprep.subr.bf16.mxu0 0
    %3427 = vmatpush1.bf16.msra.mxu0 %v3387
    %3428 = vmatprep.subr.bf16.mxu0 0
    %3429 = vmatpush1.bf16.msra.mxu0 %v3388
    %3430 = vmatprep.subr.bf16.mxu0 0
    %3431 = vmatpush1.bf16.msra.mxu0 %v3389
    %3432 = vmatprep.subr.bf16.mxu0 0
    %3433 = vmatpush1.bf16.msra.mxu0 %v3404
    %3434 = vmatprep.subr.bf16.mxu0 0
    %3435 = vmatpush1.bf16.msra.mxu0 0
    %3436 = vmatprep.subr.bf16.mxu0 0
    %3437 = vmatpush1.bf16.msra.mxu0 0
    %3438 = vmatprep.mubr.bf16.mxu0 %v3400
    %3439 = vmatmul.mubr.bf16.gmra.mrb[0].mxu0 %v3395
    %v3440 = vpop.f32.mrb[0].mxu0
    %v3441 = vadd.f32 0.0, %v3440
    %v3442 = vpop.f32.mrb[0].mxu0
    %v3443 = vpop.f32.mrb[0].mxu0
    %v3444 = vpop.f32.mrb[0].mxu0
    %3445 = vdwg.mxu0
    %v3446 = vmax.f32 %v3441, 0.0
    %v3447 = vpack.c.bf16 %v3446, %v3446
    %v3449 = vsel %vm1457, %v3447, 0
    %3451 = vmatprep.subr.bf16.mxu0 0
    %3452 = vmatpush1.bf16.msra.mxu0 %v1450
    %3453 = vmatprep.subr.bf16.mxu0 0
    %3454 = vmatpush1.bf16.msra.mxu0 %v1451
    %3455 = vmatprep.subr.bf16.mxu0 0
    %3456 = vmatpush1.bf16.msra.mxu0 %v1452
    %3457 = vmatprep.subr.bf16.mxu0 0
    %3458 = vmatpush1.bf16.msra.mxu0 %v1463
    %3459 = vmatprep.subr.bf16.mxu0 0
    %3460 = vmatpush1.bf16.msra.mxu0 0
    %3461 = vmatprep.subr.bf16.mxu0 0
    %3462 = vmatpush1.bf16.msra.mxu0 0
    %3463 = vmatprep.subr.bf16.mxu0 0
    %3464 = vmatpush1.bf16.msra.mxu0 0
    %3465 = vmatprep.subr.bf16.mxu0 0
    %3466 = vmatpush1.bf16.msra.mxu0 0
    %3467 = vmatprep.subr.bf16.mxu0 0
    %3468 = vmatpush1.bf16.msra.mxu0 0
    %3469 = vmatprep.subr.bf16.mxu0 0
    %3470 = vmatpush1.bf16.msra.mxu0 0
    %3471 = vmatprep.subr.bf16.mxu0 0
    %3472 = vmatpush1.bf16.msra.mxu0 0
    %3473 = vmatprep.subr.bf16.mxu0 0
    %3474 = vmatpush1.bf16.msra.mxu0 0
    %3475 = vmatprep.subr.bf16.mxu0 0
    %3476 = vmatpush1.bf16.msra.mxu0 0
    %3477 = vmatprep.subr.bf16.mxu0 0
    %3478 = vmatpush1.bf16.msra.mxu0 0
    %3479 = vmatprep.subr.bf16.mxu0 0
    %3480 = vmatpush1.bf16.msra.mxu0 0
    %3481 = vmatprep.subr.bf16.mxu0 0
    %3482 = vmatpush1.bf16.msra.mxu0 0
    %3483 = vmatprep.mubr.bf16.mxu0 0
    %3484 = vmatmul.mubr.bf16.gmra.mrb[0].mxu0 %v3449
    %v3485 = vpop.f32.mrb[0].mxu0
    %v3486 = vadd.f32 0.0, %v3485
    %v3487 = vpop.f32.mrb[0].mxu0
    %v3488 = vpop.f32.mrb[0].mxu0
    %v3489 = vpop.f32.mrb[0].mxu0
    %3490 = vdwg.mxu0
    %3491 = vmatprep.subr.bf16.mxu0 0
    %3492 = vmatpush1.bf16.msra.mxu0 %v1527
    %3493 = vmatprep.subr.bf16.mxu0 0
    %3494 = vmatpush1.bf16.msra.mxu0 %v1528
    %3495 = vmatprep.subr.bf16.mxu0 0
    %3496 = vmatpush1.bf16.msra.mxu0 %v1529
    %3497 = vmatprep.subr.bf16.mxu0 0
    %3498 = vmatpush1.bf16.msra.mxu0 %v1535
    %3499 = vmatprep.subr.bf16.mxu0 0
    %3500 = vmatpush1.bf16.msra.mxu0 0
    %3501 = vmatprep.subr.bf16.mxu0 0
    %3502 = vmatpush1.bf16.msra.mxu0 0
    %3503 = vmatprep.subr.bf16.mxu0 0
    %3504 = vmatpush1.bf16.msra.mxu0 0
    %3505 = vmatprep.subr.bf16.mxu0 0
    %3506 = vmatpush1.bf16.msra.mxu0 0
    %3507 = vmatprep.subr.bf16.mxu0 0
    %3508 = vmatpush1.bf16.msra.mxu0 0
    %3509 = vmatprep.subr.bf16.mxu0 0
    %3510 = vmatpush1.bf16.msra.mxu0 0
    %3511 = vmatprep.subr.bf16.mxu0 0
    %3512 = vmatpush1.bf16.msra.mxu0 0
    %3513 = vmatprep.subr.bf16.mxu0 0
    %3514 = vmatpush1.bf16.msra.mxu0 0
    %3515 = vmatprep.subr.bf16.mxu0 0
    %3516 = vmatpush1.bf16.msra.mxu0 0
    %3517 = vmatprep.subr.bf16.mxu0 0
    %3518 = vmatpush1.bf16.msra.mxu0 0
    %3519 = vmatprep.subr.bf16.mxu0 0
    %3520 = vmatpush1.bf16.msra.mxu0 0
    %3521 = vmatprep.subr.bf16.mxu0 0
    %3522 = vmatpush1.bf16.msra.mxu0 0
    %3523 = vmatprep.mubr.bf16.mxu0 0
    %3524 = vmatmul.mubr.bf16.gmra.mrb[0].mxu0 %v3449
    %v3525 = vpop.f32.mrb[0].mxu0
    %v3526 = vadd.f32 0.0, %v3525
    %v3527 = vpop.f32.mrb[0].mxu0
    %v3528 = vpop.f32.mrb[0].mxu0
    %v3529 = vpop.f32.mrb[0].mxu0
    %3530 = vdwg.mxu0
    %3531 = vmatprep.subr.bf16.mxu0 0
    %3532 = vmatpush1.bf16.msra.mxu0 %v1599
    %3533 = vmatprep.subr.bf16.mxu0 0
    %3534 = vmatpush1.bf16.msra.mxu0 %v1600
    %3535 = vmatprep.subr.bf16.mxu0 0
    %3536 = vmatpush1.bf16.msra.mxu0 %v1601
    %3537 = vmatprep.subr.bf16.mxu0 0
    %3538 = vmatpush1.bf16.msra.mxu0 %v1607
    %3539 = vmatprep.subr.bf16.mxu0 0
    %3540 = vmatpush1.bf16.msra.mxu0 0
    %3541 = vmatprep.subr.bf16.mxu0 0
    %3542 = vmatpush1.bf16.msra.mxu0 0
    %3543 = vmatprep.subr.bf16.mxu0 0
    %3544 = vmatpush1.bf16.msra.mxu0 0
    %3545 = vmatprep.subr.bf16.mxu0 0
    %3546 = vmatpush1.bf16.msra.mxu0 0
    %3547 = vmatprep.subr.bf16.mxu0 0
    %3548 = vmatpush1.bf16.msra.mxu0 0
    %3549 = vmatprep.subr.bf16.mxu0 0
    %3550 = vmatpush1.bf16.msra.mxu0 0
    %3551 = vmatprep.subr.bf16.mxu0 0
    %3552 = vmatpush1.bf16.msra.mxu0 0
    %3553 = vmatprep.subr.bf16.mxu0 0
    %3554 = vmatpush1.bf16.msra.mxu0 0
    %3555 = vmatprep.subr.bf16.mxu0 0
    %3556 = vmatpush1.bf16.msra.mxu0 0
    %3557 = vmatprep.subr.bf16.mxu0 0
    %3558 = vmatpush1.bf16.msra.mxu0 0
    %3559 = vmatprep.subr.bf16.mxu0 0
    %3560 = vmatpush1.bf16.msra.mxu0 0
    %3561 = vmatprep.subr.bf16.mxu0 0
    %3562 = vmatpush1.bf16.msra.mxu0 0
    %3563 = vmatprep.mubr.bf16.mxu0 0
    %3564 = vmatmul.mubr.bf16.gmra.mrb[0].mxu0 %v3449
    %v3565 = vpop.f32.mrb[0].mxu0
    %v3566 = vadd.f32 0.0, %v3565
    %v3567 = vpop.f32.mrb[0].mxu0
    %v3568 = vpop.f32.mrb[0].mxu0
    %v3569 = vpop.f32.mrb[0].mxu0
    %3570 = vdwg.mxu0
    %3571 = vmatprep.subr.bf16.mxu0 0
    %3572 = vmatpush1.bf16.msra.mxu0 %v1671
    %3573 = vmatprep.subr.bf16.mxu0 0
    %3574 = vmatpush1.bf16.msra.mxu0 %v1672
    %3575 = vmatprep.subr.bf16.mxu0 0
    %3576 = vmatpush1.bf16.msra.mxu0 %v1673
    %3577 = vmatprep.subr.bf16.mxu0 0
    %3578 = vmatpush1.bf16.msra.mxu0 %v1679
    %3579 = vmatprep.subr.bf16.mxu0 0
    %3580 = vmatpush1.bf16.msra.mxu0 0
    %3581 = vmatprep.subr.bf16.mxu0 0
    %3582 = vmatpush1.bf16.msra.mxu0 0
    %3583 = vmatprep.subr.bf16.mxu0 0
    %3584 = vmatpush1.bf16.msra.mxu0 0
    %3585 = vmatprep.subr.bf16.mxu0 0
    %3586 = vmatpush1.bf16.msra.mxu0 0
    %3587 = vmatprep.subr.bf16.mxu0 0
    %3588 = vmatpush1.bf16.msra.mxu0 0
    %3589 = vmatprep.subr.bf16.mxu0 0
    %3590 = vmatpush1.bf16.msra.mxu0 0
    %3591 = vmatprep.subr.bf16.mxu0 0
    %3592 = vmatpush1.bf16.msra.mxu0 0
    %3593 = vmatprep.subr.bf16.mxu0 0
    %3594 = vmatpush1.bf16.msra.mxu0 0
    %3595 = vmatprep.subr.bf16.mxu0 0
    %3596 = vmatpush1.bf16.msra.mxu0 0
    %3597 = vmatprep.subr.bf16.mxu0 0
    %3598 = vmatpush1.bf16.msra.mxu0 0
    %3599 = vmatprep.subr.bf16.mxu0 0
    %3600 = vmatpush1.bf16.msra.mxu0 0
    %3601 = vmatprep.subr.bf16.mxu0 0
    %3602 = vmatpush1.bf16.msra.mxu0 0
    %3603 = vmatprep.mubr.bf16.mxu0 0
    %3604 = vmatmul.mubr.bf16.gmra.mrb[0].mxu0 %v3449
    %v3605 = vpop.f32.mrb[0].mxu0
    %v3606 = vadd.f32 0.0, %v3605
    %v3607 = vpop.f32.mrb[0].mxu0
    %v3608 = vpop.f32.mrb[0].mxu0
    %v3609 = vpop.f32.mrb[0].mxu0
    %3610 = vdwg.mxu0
    %3611 = vmatprep.subr.bf16.mxu0 0
    %3612 = vmatpush1.bf16.msra.mxu0 %v1743
    %3613 = vmatprep.subr.bf16.mxu0 0
    %3614 = vmatpush1.bf16.msra.mxu0 %v1744
    %3615 = vmatprep.subr.bf16.mxu0 0
    %3616 = vmatpush1.bf16.msra.mxu0 %v1745
    %3617 = vmatprep.subr.bf16.mxu0 0
    %3618 = vmatpush1.bf16.msra.mxu0 %v1751
    %3619 = vmatprep.subr.bf16.mxu0 0
    %3620 = vmatpush1.bf16.msra.mxu0 0
    %3621 = vmatprep.subr.bf16.mxu0 0
    %3622 = vmatpush1.bf16.msra.mxu0 0
    %3623 = vmatprep.subr.bf16.mxu0 0
    %3624 = vmatpush1.bf16.msra.mxu0 0
    %3625 = vmatprep.subr.bf16.mxu0 0
    %3626 = vmatpush1.bf16.msra.mxu0 0
    %3627 = vmatprep.subr.bf16.mxu0 0
    %3628 = vmatpush1.bf16.msra.mxu0 0
    %3629 = vmatprep.subr.bf16.mxu0 0
    %3630 = vmatpush1.bf16.msra.mxu0 0
    %3631 = vmatprep.subr.bf16.mxu0 0
    %3632 = vmatpush1.bf16.msra.mxu0 0
    %3633 = vmatprep.subr.bf16.mxu0 0
    %3634 = vmatpush1.bf16.msra.mxu0 0
    %3635 = vmatprep.subr.bf16.mxu0 0
    %3636 = vmatpush1.bf16.msra.mxu0 0
    %3637 = vmatprep.subr.bf16.mxu0 0
    %3638 = vmatpush1.bf16.msra.mxu0 0
    %3639 = vmatprep.subr.bf16.mxu0 0
    %3640 = vmatpush1.bf16.msra.mxu0 0
    %3641 = vmatprep.subr.bf16.mxu0 0
    %3642 = vmatpush1.bf16.msra.mxu0 0
    %3643 = vmatprep.mubr.bf16.mxu0 0
    %3644 = vmatmul.mubr.bf16.gmra.mrb[0].mxu0 %v3449
    %v3645 = vpop.f32.mrb[0].mxu0
    %v3646 = vadd.f32 0.0, %v3645
    %v3647 = vpop.f32.mrb[0].mxu0
    %v3648 = vpop.f32.mrb[0].mxu0
    %v3649 = vpop.f32.mrb[0].mxu0
    %3650 = vdwg.mxu0
    %3651 = vmatprep.subr.bf16.mxu0 0
    %3652 = vmatpush1.bf16.msra.mxu0 %v1815
    %3653 = vmatprep.subr.bf16.mxu0 0
    %3654 = vmatpush1.bf16.msra.mxu0 %v1816
    %3655 = vmatprep.subr.bf16.mxu0 0
    %3656 = vmatpush1.bf16.msra.mxu0 %v1817
    %3657 = vmatprep.subr.bf16.mxu0 0
    %3658 = vmatpush1.bf16.msra.mxu0 %v1823
    %3659 = vmatprep.subr.bf16.mxu0 0
    %3660 = vmatpush1.bf16.msra.mxu0 0
    %3661 = vmatprep.subr.bf16.mxu0 0
    %3662 = vmatpush1.bf16.msra.mxu0 0
    %3663 = vmatprep.subr.bf16.mxu0 0
    %3664 = vmatpush1.bf16.msra.mxu0 0
    %3665 = vmatprep.subr.bf16.mxu0 0
    %3666 = vmatpush1.bf16.msra.mxu0 0
    %3667 = vmatprep.subr.bf16.mxu0 0
    %3668 = vmatpush1.bf16.msra.mxu0 0
    %3669 = vmatprep.subr.bf16.mxu0 0
    %3670 = vmatpush1.bf16.msra.mxu0 0
    %3671 = vmatprep.subr.bf16.mxu0 0
    %3672 = vmatpush1.bf16.msra.mxu0 0
    %3673 = vmatprep.subr.bf16.mxu0 0
    %3674 = vmatpush1.bf16.msra.mxu0 0
    %3675 = vmatprep.subr.bf16.mxu0 0
    %3676 = vmatpush1.bf16.msra.mxu0 0
    %3677 = vmatprep.subr.bf16.mxu0 0
    %3678 = vmatpush1.bf16.msra.mxu0 0
    %3679 = vmatprep.subr.bf16.mxu0 0
    %3680 = vmatpush1.bf16.msra.mxu0 0
    %3681 = vmatprep.subr.bf16.mxu0 0
    %3682 = vmatpush1.bf16.msra.mxu0 0
    %3683 = vmatprep.mubr.bf16.mxu0 0
    %3684 = vmatmul.mubr.bf16.gmra.mrb[0].mxu0 %v3449
    %v3685 = vpop.f32.mrb[0].mxu0
    %v3686 = vadd.f32 0.0, %v3685
    %v3687 = vpop.f32.mrb[0].mxu0
    %v3688 = vpop.f32.mrb[0].mxu0
    %v3689 = vpop.f32.mrb[0].mxu0
    %3690 = vdwg.mxu0
    %3691 = vmatprep.subr.bf16.mxu0 0
    %3692 = vmatpush1.bf16.msra.mxu0 %v1887
    %3693 = vmatprep.subr.bf16.mxu0 0
    %3694 = vmatpush1.bf16.msra.mxu0 %v1888
    %3695 = vmatprep.subr.bf16.mxu0 0
    %3696 = vmatpush1.bf16.msra.mxu0 %v1889
    %3697 = vmatprep.subr.bf16.mxu0 0
    %3698 = vmatpush1.bf16.msra.mxu0 %v1895
    %3699 = vmatprep.subr.bf16.mxu0 0
    %3700 = vmatpush1.bf16.msra.mxu0 0
    %3701 = vmatprep.subr.bf16.mxu0 0
    %3702 = vmatpush1.bf16.msra.mxu0 0
    %3703 = vmatprep.subr.bf16.mxu0 0
    %3704 = vmatpush1.bf16.msra.mxu0 0
    %3705 = vmatprep.subr.bf16.mxu0 0
    %3706 = vmatpush1.bf16.msra.mxu0 0
    %3707 = vmatprep.subr.bf16.mxu0 0
    %3708 = vmatpush1.bf16.msra.mxu0 0
    %3709 = vmatprep.subr.bf16.mxu0 0
    %3710 = vmatpush1.bf16.msra.mxu0 0
    %3711 = vmatprep.subr.bf16.mxu0 0
    %3712 = vmatpush1.bf16.msra.mxu0 0
    %3713 = vmatprep.subr.bf16.mxu0 0
    %3714 = vmatpush1.bf16.msra.mxu0 0
    %3715 = vmatprep.subr.bf16.mxu0 0
    %3716 = vmatpush1.bf16.msra.mxu0 0
    %3717 = vmatprep.subr.bf16.mxu0 0
    %3718 = vmatpush1.bf16.msra.mxu0 0
    %3719 = vmatprep.subr.bf16.mxu0 0
    %3720 = vmatpush1.bf16.msra.mxu0 0
    %3721 = vmatprep.subr.bf16.mxu0 0
    %3722 = vmatpush1.bf16.msra.mxu0 0
    %3723 = vmatprep.mubr.bf16.mxu0 0
    %3724 = vmatmul.mubr.bf16.gmra.mrb[0].mxu0 %v3449
    %v3725 = vpop.f32.mrb[0].mxu0
    %v3726 = vadd.f32 0.0, %v3725
    %v3727 = vpop.f32.mrb[0].mxu0
    %v3728 = vpop.f32.mrb[0].mxu0
    %v3729 = vpop.f32.mrb[0].mxu0
    %3730 = vdwg.mxu0
    %3731 = vmatprep.subr.bf16.mxu0 0
    %3732 = vmatpush1.bf16.msra.mxu0 %v1959
    %3733 = vmatprep.subr.bf16.mxu0 0
    %3734 = vmatpush1.bf16.msra.mxu0 %v1960
    %3735 = vmatprep.subr.bf16.mxu0 0
    %3736 = vmatpush1.bf16.msra.mxu0 %v1961
    %3737 = vmatprep.subr.bf16.mxu0 0
    %3738 = vmatpush1.bf16.msra.mxu0 %v1967
    %3739 = vmatprep.subr.bf16.mxu0 0
    %3740 = vmatpush1.bf16.msra.mxu0 0
    %3741 = vmatprep.subr.bf16.mxu0 0
    %3742 = vmatpush1.bf16.msra.mxu0 0
    %3743 = vmatprep.subr.bf16.mxu0 0
    %3744 = vmatpush1.bf16.msra.mxu0 0
    %3745 = vmatprep.subr.bf16.mxu0 0
    %3746 = vmatpush1.bf16.msra.mxu0 0
    %3747 = vmatprep.subr.bf16.mxu0 0
    %3748 = vmatpush1.bf16.msra.mxu0 0
    %3749 = vmatprep.subr.bf16.mxu0 0
    %3750 = vmatpush1.bf16.msra.mxu0 0
    %3751 = vmatprep.subr.bf16.mxu0 0
    %3752 = vmatpush1.bf16.msra.mxu0 0
    %3753 = vmatprep.subr.bf16.mxu0 0
    %3754 = vmatpush1.bf16.msra.mxu0 0
    %3755 = vmatprep.subr.bf16.mxu0 0
    %3756 = vmatpush1.bf16.msra.mxu0 0
    %3757 = vmatprep.subr.bf16.mxu0 0
    %3758 = vmatpush1.bf16.msra.mxu0 0
    %3759 = vmatprep.subr.bf16.mxu0 0
    %3760 = vmatpush1.bf16.msra.mxu0 0
    %3761 = vmatprep.subr.bf16.mxu0 0
    %3762 = vmatpush1.bf16.msra.mxu0 0
    %3763 = vmatprep.mubr.bf16.mxu0 0
    %3764 = vmatmul.mubr.bf16.gmra.mrb[0].mxu0 %v3449
    %v3765 = vpop.f32.mrb[0].mxu0
    %v3766 = vadd.f32 0.0, %v3765
    %v3767 = vpop.f32.mrb[0].mxu0
    %v3768 = vpop.f32.mrb[0].mxu0
    %v3769 = vpop.f32.mrb[0].mxu0
    %3770 = vdwg.mxu0
    %3771 = vmatprep.subr.bf16.mxu0 0
    %3772 = vmatpush1.bf16.msra.mxu0 %v2031
    %3773 = vmatprep.subr.bf16.mxu0 0
    %3774 = vmatpush1.bf16.msra.mxu0 %v2032
    %3775 = vmatprep.subr.bf16.mxu0 0
    %3776 = vmatpush1.bf16.msra.mxu0 %v2033
    %3777 = vmatprep.subr.bf16.mxu0 0
    %3778 = vmatpush1.bf16.msra.mxu0 %v2039
    %3779 = vmatprep.subr.bf16.mxu0 0
    %3780 = vmatpush1.bf16.msra.mxu0 0
    %3781 = vmatprep.subr.bf16.mxu0 0
    %3782 = vmatpush1.bf16.msra.mxu0 0
    %3783 = vmatprep.subr.bf16.mxu0 0
    %3784 = vmatpush1.bf16.msra.mxu0 0
    %3785 = vmatprep.subr.bf16.mxu0 0
    %3786 = vmatpush1.bf16.msra.mxu0 0
    %3787 = vmatprep.subr.bf16.mxu0 0
    %3788 = vmatpush1.bf16.msra.mxu0 0
    %3789 = vmatprep.subr.bf16.mxu0 0
    %3790 = vmatpush1.bf16.msra.mxu0 0
    %3791 = vmatprep.subr.bf16.mxu0 0
    %3792 = vmatpush1.bf16.msra.mxu0 0
    %3793 = vmatprep.subr.bf16.mxu0 0
    %3794 = vmatpush1.bf16.msra.mxu0 0
    %3795 = vmatprep.subr.bf16.mxu0 0
    %3796 = vmatpush1.bf16.msra.mxu0 0
    %3797 = vmatprep.subr.bf16.mxu0 0
    %3798 = vmatpush1.bf16.msra.mxu0 0
    %3799 = vmatprep.subr.bf16.mxu0 0
    %3800 = vmatpush1.bf16.msra.mxu0 0
    %3801 = vmatprep.subr.bf16.mxu0 0
    %3802 = vmatpush1.bf16.msra.mxu0 0
    %3803 = vmatprep.mubr.bf16.mxu0 0
    %3804 = vmatmul.mubr.bf16.gmra.mrb[0].mxu0 %v3449
    %v3805 = vpop.f32.mrb[0].mxu0
    %v3806 = vadd.f32 0.0, %v3805
    %v3807 = vpop.f32.mrb[0].mxu0
    %v3808 = vpop.f32.mrb[0].mxu0
    %v3809 = vpop.f32.mrb[0].mxu0
    %3810 = vdwg.mxu0
    %3811 = vmatprep.subr.bf16.mxu0 0
    %3812 = vmatpush1.bf16.msra.mxu0 %v2103
    %3813 = vmatprep.subr.bf16.mxu0 0
    %3814 = vmatpush1.bf16.msra.mxu0 %v2104
    %3815 = vmatprep.subr.bf16.mxu0 0
    %3816 = vmatpush1.bf16.msra.mxu0 %v2105
    %3817 = vmatprep.subr.bf16.mxu0 0
    %3818 = vmatpush1.bf16.msra.mxu0 %v2111
    %3819 = vmatprep.subr.bf16.mxu0 0
    %3820 = vmatpush1.bf16.msra.mxu0 0
    %3821 = vmatprep.subr.bf16.mxu0 0
    %3822 = vmatpush1.bf16.msra.mxu0 0
    %3823 = vmatprep.subr.bf16.mxu0 0
    %3824 = vmatpush1.bf16.msra.mxu0 0
    %3825 = vmatprep.subr.bf16.mxu0 0
    %3826 = vmatpush1.bf16.msra.mxu0 0
    %3827 = vmatprep.subr.bf16.mxu0 0
    %3828 = vmatpush1.bf16.msra.mxu0 0
    %3829 = vmatprep.subr.bf16.mxu0 0
    %3830 = vmatpush1.bf16.msra.mxu0 0
    %3831 = vmatprep.subr.bf16.mxu0 0
    %3832 = vmatpush1.bf16.msra.mxu0 0
    %3833 = vmatprep.subr.bf16.mxu0 0
    %3834 = vmatpush1.bf16.msra.mxu0 0
    %3835 = vmatprep.subr.bf16.mxu0 0
    %3836 = vmatpush1.bf16.msra.mxu0 0
    %3837 = vmatprep.subr.bf16.mxu0 0
    %3838 = vmatpush1.bf16.msra.mxu0 0
    %3839 = vmatprep.subr.bf16.mxu0 0
    %3840 = vmatpush1.bf16.msra.mxu0 0
    %3841 = vmatprep.subr.bf16.mxu0 0
    %3842 = vmatpush1.bf16.msra.mxu0 0
    %3843 = vmatprep.mubr.bf16.mxu0 0
    %3844 = vmatmul.mubr.bf16.gmra.mrb[0].mxu0 %v3449
    %v3845 = vpop.f32.mrb[0].mxu0
    %v3846 = vadd.f32 0.0, %v3845
    %v3847 = vpop.f32.mrb[0].mxu0
    %v3848 = vpop.f32.mrb[0].mxu0
    %v3849 = vpop.f32.mrb[0].mxu0
    %3850 = vdwg.mxu0
    %3851 = vmatprep.subr.bf16.mxu0 0
    %3852 = vmatpush1.bf16.msra.mxu0 %v2175
    %3853 = vmatprep.subr.bf16.mxu0 0
    %3854 = vmatpush1.bf16.msra.mxu0 %v2176
    %3855 = vmatprep.subr.bf16.mxu0 0
    %3856 = vmatpush1.bf16.msra.mxu0 %v2177
    %3857 = vmatprep.subr.bf16.mxu0 0
    %3858 = vmatpush1.bf16.msra.mxu0 %v2183
    %3859 = vmatprep.subr.bf16.mxu0 0
    %3860 = vmatpush1.bf16.msra.mxu0 0
    %3861 = vmatprep.subr.bf16.mxu0 0
    %3862 = vmatpush1.bf16.msra.mxu0 0
    %3863 = vmatprep.subr.bf16.mxu0 0
    %3864 = vmatpush1.bf16.msra.mxu0 0
    %3865 = vmatprep.subr.bf16.mxu0 0
    %3866 = vmatpush1.bf16.msra.mxu0 0
    %3867 = vmatprep.subr.bf16.mxu0 0
    %3868 = vmatpush1.bf16.msra.mxu0 0
    %3869 = vmatprep.subr.bf16.mxu0 0
    %3870 = vmatpush1.bf16.msra.mxu0 0
    %3871 = vmatprep.subr.bf16.mxu0 0
    %3872 = vmatpush1.bf16.msra.mxu0 0
    %3873 = vmatprep.subr.bf16.mxu0 0
    %3874 = vmatpush1.bf16.msra.mxu0 0
    %3875 = vmatprep.subr.bf16.mxu0 0
    %3876 = vmatpush1.bf16.msra.mxu0 0
    %3877 = vmatprep.subr.bf16.mxu0 0
    %3878 = vmatpush1.bf16.msra.mxu0 0
    %3879 = vmatprep.subr.bf16.mxu0 0
    %3880 = vmatpush1.bf16.msra.mxu0 0
    %3881 = vmatprep.subr.bf16.mxu0 0
    %3882 = vmatpush1.bf16.msra.mxu0 0
    %3883 = vmatprep.mubr.bf16.mxu0 0
    %3884 = vmatmul.mubr.bf16.gmra.mrb[0].mxu0 %v3449
    %v3885 = vpop.f32.mrb[0].mxu0
    %v3886 = vadd.f32 0.0, %v3885
    %v3887 = vpop.f32.mrb[0].mxu0
    %v3888 = vpop.f32.mrb[0].mxu0
    %v3889 = vpop.f32.mrb[0].mxu0
    %3890 = vdwg.mxu0
    %3891 = vmatprep.subr.bf16.mxu0 0
    %3892 = vmatpush1.bf16.msra.mxu0 %v2247
    %3893 = vmatprep.subr.bf16.mxu0 0
    %3894 = vmatpush1.bf16.msra.mxu0 %v2248
    %3895 = vmatprep.subr.bf16.mxu0 0
    %3896 = vmatpush1.bf16.msra.mxu0 %v2249
    %3897 = vmatprep.subr.bf16.mxu0 0
    %3898 = vmatpush1.bf16.msra.mxu0 %v2255
    %3899 = vmatprep.subr.bf16.mxu0 0
    %3900 = vmatpush1.bf16.msra.mxu0 0
    %3901 = vmatprep.subr.bf16.mxu0 0
    %3902 = vmatpush1.bf16.msra.mxu0 0
    %3903 = vmatprep.subr.bf16.mxu0 0
    %3904 = vmatpush1.bf16.msra.mxu0 0
    %3905 = vmatprep.subr.bf16.mxu0 0
    %3906 = vmatpush1.bf16.msra.mxu0 0
    %3907 = vmatprep.subr.bf16.mxu0 0
    %3908 = vmatpush1.bf16.msra.mxu0 0
    %3909 = vmatprep.subr.bf16.mxu0 0
    %3910 = vmatpush1.bf16.msra.mxu0 0
    %3911 = vmatprep.subr.bf16.mxu0 0
    %3912 = vmatpush1.bf16.msra.mxu0 0
    %3913 = vmatprep.subr.bf16.mxu0 0
    %3914 = vmatpush1.bf16.msra.mxu0 0
    %3915 = vmatprep.subr.bf16.mxu0 0
    %3916 = vmatpush1.bf16.msra.mxu0 0
    %3917 = vmatprep.subr.bf16.mxu0 0
    %3918 = vmatpush1.bf16.msra.mxu0 0
    %3919 = vmatprep.subr.bf16.mxu0 0
    %3920 = vmatpush1.bf16.msra.mxu0 0
    %3921 = vmatprep.subr.bf16.mxu0 0
    %3922 = vmatpush1.bf16.msra.mxu0 0
    %3923 = vmatprep.mubr.bf16.mxu0 0
    %3924 = vmatmul.mubr.bf16.gmra.mrb[0].mxu0 %v3449
    %v3925 = vpop.f32.mrb[0].mxu0
    %v3926 = vadd.f32 0.0, %v3925
    %v3927 = vpop.f32.mrb[0].mxu0
    %v3928 = vpop.f32.mrb[0].mxu0
    %v3929 = vpop.f32.mrb[0].mxu0
    %3930 = vdwg.mxu0
    %3931 = vmatprep.subr.bf16.mxu0 0
    %3932 = vmatpush1.bf16.msra.mxu0 %v2319
    %3933 = vmatprep.subr.bf16.mxu0 0
    %3934 = vmatpush1.bf16.msra.mxu0 %v2320
    %3935 = vmatprep.subr.bf16.mxu0 0
    %3936 = vmatpush1.bf16.msra.mxu0 %v2321
    %3937 = vmatprep.subr.bf16.mxu0 0
    %3938 = vmatpush1.bf16.msra.mxu0 %v2327
    %3939 = vmatprep.subr.bf16.mxu0 0
    %3940 = vmatpush1.bf16.msra.mxu0 0
    %3941 = vmatprep.subr.bf16.mxu0 0
    %3942 = vmatpush1.bf16.msra.mxu0 0
    %3943 = vmatprep.subr.bf16.mxu0 0
    %3944 = vmatpush1.bf16.msra.mxu0 0
    %3945 = vmatprep.subr.bf16.mxu0 0
    %3946 = vmatpush1.bf16.msra.mxu0 0
    %3947 = vmatprep.subr.bf16.mxu0 0
    %3948 = vmatpush1.bf16.msra.mxu0 0
    %3949 = vmatprep.subr.bf16.mxu0 0
    %3950 = vmatpush1.bf16.msra.mxu0 0
    %3951 = vmatprep.subr.bf16.mxu0 0
    %3952 = vmatpush1.bf16.msra.mxu0 0
    %3953 = vmatprep.subr.bf16.mxu0 0
    %3954 = vmatpush1.bf16.msra.mxu0 0
    %3955 = vmatprep.subr.bf16.mxu0 0
    %3956 = vmatpush1.bf16.msra.mxu0 0
    %3957 = vmatprep.subr.bf16.mxu0 0
    %3958 = vmatpush1.bf16.msra.mxu0 0
    %3959 = vmatprep.subr.bf16.mxu0 0
    %3960 = vmatpush1.bf16.msra.mxu0 0
    %3961 = vmatprep.subr.bf16.mxu0 0
    %3962 = vmatpush1.bf16.msra.mxu0 0
    %3963 = vmatprep.mubr.bf16.mxu0 0
    %3964 = vmatmul.mubr.bf16.gmra.mrb[0].mxu0 %v3449
    %v3965 = vpop.f32.mrb[0].mxu0
    %v3966 = vadd.f32 0.0, %v3965
    %v3967 = vpop.f32.mrb[0].mxu0
    %v3968 = vpop.f32.mrb[0].mxu0
    %v3969 = vpop.f32.mrb[0].mxu0
    %3970 = vdwg.mxu0
    %3971 = vmatprep.subr.bf16.mxu0 0
    %3972 = vmatpush1.bf16.msra.mxu0 %v2391
    %3973 = vmatprep.subr.bf16.mxu0 0
    %3974 = vmatpush1.bf16.msra.mxu0 %v2392
    %3975 = vmatprep.subr.bf16.mxu0 0
    %3976 = vmatpush1.bf16.msra.mxu0 %v2393
    %3977 = vmatprep.subr.bf16.mxu0 0
    %3978 = vmatpush1.bf16.msra.mxu0 %v2399
    %3979 = vmatprep.subr.bf16.mxu0 0
    %3980 = vmatpush1.bf16.msra.mxu0 0
    %3981 = vmatprep.subr.bf16.mxu0 0
    %3982 = vmatpush1.bf16.msra.mxu0 0
    %3983 = vmatprep.subr.bf16.mxu0 0
    %3984 = vmatpush1.bf16.msra.mxu0 0
    %3985 = vmatprep.subr.bf16.mxu0 0
    %3986 = vmatpush1.bf16.msra.mxu0 0
    %3987 = vmatprep.subr.bf16.mxu0 0
    %3988 = vmatpush1.bf16.msra.mxu0 0
    %3989 = vmatprep.subr.bf16.mxu0 0
    %3990 = vmatpush1.bf16.msra.mxu0 0
    %3991 = vmatprep.subr.bf16.mxu0 0
    %3992 = vmatpush1.bf16.msra.mxu0 0
    %3993 = vmatprep.subr.bf16.mxu0 0
    %3994 = vmatpush1.bf16.msra.mxu0 0
    %3995 = vmatprep.subr.bf16.mxu0 0
    %3996 = vmatpush1.bf16.msra.mxu0 0
    %3997 = vmatprep.subr.bf16.mxu0 0
    %3998 = vmatpush1.bf16.msra.mxu0 0
    %3999 = vmatprep.subr.bf16.mxu0 0
    %4000 = vmatpush1.bf16.msra.mxu0 0
    %4001 = vmatprep.subr.bf16.mxu0 0
    %4002 = vmatpush1.bf16.msra.mxu0 0
    %4003 = vmatprep.mubr.bf16.mxu0 0
    %4004 = vmatmul.mubr.bf16.gmra.mrb[0].mxu0 %v3449
    %v4005 = vpop.f32.mrb[0].mxu0
    %v4006 = vadd.f32 0.0, %v4005
    %v4007 = vpop.f32.mrb[0].mxu0
    %v4008 = vpop.f32.mrb[0].mxu0
    %v4009 = vpop.f32.mrb[0].mxu0
    %4010 = vdwg.mxu0
    %4011 = vmatprep.subr.bf16.mxu0 0
    %4012 = vmatpush1.bf16.msra.mxu0 %v2463
    %4013 = vmatprep.subr.bf16.mxu0 0
    %4014 = vmatpush1.bf16.msra.mxu0 %v2464
    %4015 = vmatprep.subr.bf16.mxu0 0
    %4016 = vmatpush1.bf16.msra.mxu0 %v2465
    %4017 = vmatprep.subr.bf16.mxu0 0
    %4018 = vmatpush1.bf16.msra.mxu0 %v2471
    %4019 = vmatprep.subr.bf16.mxu0 0
    %4020 = vmatpush1.bf16.msra.mxu0 0
    %4021 = vmatprep.subr.bf16.mxu0 0
    %4022 = vmatpush1.bf16.msra.mxu0 0
    %4023 = vmatprep.subr.bf16.mxu0 0
    %4024 = vmatpush1.bf16.msra.mxu0 0
    %4025 = vmatprep.subr.bf16.mxu0 0
    %4026 = vmatpush1.bf16.msra.mxu0 0
    %4027 = vmatprep.subr.bf16.mxu0 0
    %4028 = vmatpush1.bf16.msra.mxu0 0
    %4029 = vmatprep.subr.bf16.mxu0 0
    %4030 = vmatpush1.bf16.msra.mxu0 0
    %4031 = vmatprep.subr.bf16.mxu0 0
    %4032 = vmatpush1.bf16.msra.mxu0 0
    %4033 = vmatprep.subr.bf16.mxu0 0
    %4034 = vmatpush1.bf16.msra.mxu0 0
    %4035 = vmatprep.subr.bf16.mxu0 0
    %4036 = vmatpush1.bf16.msra.mxu0 0
    %4037 = vmatprep.subr.bf16.mxu0 0
    %4038 = vmatpush1.bf16.msra.mxu0 0
    %4039 = vmatprep.subr.bf16.mxu0 0
    %4040 = vmatpush1.bf16.msra.mxu0 0
    %4041 = vmatprep.subr.bf16.mxu0 0
    %4042 = vmatpush1.bf16.msra.mxu0 0
    %4043 = vmatprep.mubr.bf16.mxu0 0
    %4044 = vmatmul.mubr.bf16.gmra.mrb[0].mxu0 %v3449
    %v4045 = vpop.f32.mrb[0].mxu0
    %v4046 = vadd.f32 0.0, %v4045
    %v4047 = vpop.f32.mrb[0].mxu0
    %v4048 = vpop.f32.mrb[0].mxu0
    %v4049 = vpop.f32.mrb[0].mxu0
    %4050 = vdwg.mxu0
    %4051 = vmatprep.subr.bf16.mxu0 0
    %4052 = vmatpush1.bf16.msra.mxu0 %v2535
    %4053 = vmatprep.subr.bf16.mxu0 0
    %4054 = vmatpush1.bf16.msra.mxu0 %v2536
    %4055 = vmatprep.subr.bf16.mxu0 0
    %4056 = vmatpush1.bf16.msra.mxu0 %v2537
    %4057 = vmatprep.subr.bf16.mxu0 0
    %4058 = vmatpush1.bf16.msra.mxu0 %v2543
    %4059 = vmatprep.subr.bf16.mxu0 0
    %4060 = vmatpush1.bf16.msra.mxu0 0
    %4061 = vmatprep.subr.bf16.mxu0 0
    %4062 = vmatpush1.bf16.msra.mxu0 0
    %4063 = vmatprep.subr.bf16.mxu0 0
    %4064 = vmatpush1.bf16.msra.mxu0 0
    %4065 = vmatprep.subr.bf16.mxu0 0
    %4066 = vmatpush1.bf16.msra.mxu0 0
    %4067 = vmatprep.subr.bf16.mxu0 0
    %4068 = vmatpush1.bf16.msra.mxu0 0
    %4069 = vmatprep.subr.bf16.mxu0 0
    %4070 = vmatpush1.bf16.msra.mxu0 0
    %4071 = vmatprep.subr.bf16.mxu0 0
    %4072 = vmatpush1.bf16.msra.mxu0 0
    %4073 = vmatprep.subr.bf16.mxu0 0
    %4074 = vmatpush1.bf16.msra.mxu0 0
    %4075 = vmatprep.subr.bf16.mxu0 0
    %4076 = vmatpush1.bf16.msra.mxu0 0
    %4077 = vmatprep.subr.bf16.mxu0 0
    %4078 = vmatpush1.bf16.msra.mxu0 0
    %4079 = vmatprep.subr.bf16.mxu0 0
    %4080 = vmatpush1.bf16.msra.mxu0 0
    %4081 = vmatprep.subr.bf16.mxu0 0
    %4082 = vmatpush1.bf16.msra.mxu0 0
    %4083 = vmatprep.mubr.bf16.mxu0 0
    %4084 = vmatmul.mubr.bf16.gmra.mrb[0].mxu0 %v3449
    %v4085 = vpop.f32.mrb[0].mxu0
    %v4086 = vadd.f32 0.0, %v4085
    %v4087 = vpop.f32.mrb[0].mxu0
    %v4088 = vpop.f32.mrb[0].mxu0
    %v4089 = vpop.f32.mrb[0].mxu0
    %4090 = vdwg.mxu0
    %4091 = vmatprep.subr.bf16.mxu0 0
    %4092 = vmatpush1.bf16.msra.mxu0 %v2607
    %4093 = vmatprep.subr.bf16.mxu0 0
    %4094 = vmatpush1.bf16.msra.mxu0 %v2608
    %4095 = vmatprep.subr.bf16.mxu0 0
    %4096 = vmatpush1.bf16.msra.mxu0 %v2609
    %4097 = vmatprep.subr.bf16.mxu0 0
    %4098 = vmatpush1.bf16.msra.mxu0 %v2615
    %4099 = vmatprep.subr.bf16.mxu0 0
    %4100 = vmatpush1.bf16.msra.mxu0 0
    %4101 = vmatprep.subr.bf16.mxu0 0
    %4102 = vmatpush1.bf16.msra.mxu0 0
    %4103 = vmatprep.subr.bf16.mxu0 0
    %4104 = vmatpush1.bf16.msra.mxu0 0
    %4105 = vmatprep.subr.bf16.mxu0 0
    %4106 = vmatpush1.bf16.msra.mxu0 0
    %4107 = vmatprep.subr.bf16.mxu0 0
    %4108 = vmatpush1.bf16.msra.mxu0 0
    %4109 = vmatprep.subr.bf16.mxu0 0
    %4110 = vmatpush1.bf16.msra.mxu0 0
    %4111 = vmatprep.subr.bf16.mxu0 0
    %4112 = vmatpush1.bf16.msra.mxu0 0
    %4113 = vmatprep.subr.bf16.mxu0 0
    %4114 = vmatpush1.bf16.msra.mxu0 0
    %4115 = vmatprep.subr.bf16.mxu0 0
    %4116 = vmatpush1.bf16.msra.mxu0 0
    %4117 = vmatprep.subr.bf16.mxu0 0
    %4118 = vmatpush1.bf16.msra.mxu0 0
    %4119 = vmatprep.subr.bf16.mxu0 0
    %4120 = vmatpush1.bf16.msra.mxu0 0
    %4121 = vmatprep.subr.bf16.mxu0 0
    %4122 = vmatpush1.bf16.msra.mxu0 0
    %4123 = vmatprep.mubr.bf16.mxu0 0
    %4124 = vmatmul.mubr.bf16.gmra.mrb[0].mxu0 %v3449
    %v4125 = vpop.f32.mrb[0].mxu0
    %v4126 = vadd.f32 0.0, %v4125
    %v4127 = vpop.f32.mrb[0].mxu0
    %v4128 = vpop.f32.mrb[0].mxu0
    %v4129 = vpop.f32.mrb[0].mxu0
    %4130 = vdwg.mxu0
    %4131 = vmatprep.subr.bf16.mxu0 0
    %4132 = vmatpush1.bf16.msra.mxu0 %v2679
    %4133 = vmatprep.subr.bf16.mxu0 0
    %4134 = vmatpush1.bf16.msra.mxu0 %v2680
    %4135 = vmatprep.subr.bf16.mxu0 0
    %4136 = vmatpush1.bf16.msra.mxu0 %v2681
    %4137 = vmatprep.subr.bf16.mxu0 0
    %4138 = vmatpush1.bf16.msra.mxu0 %v2687
    %4139 = vmatprep.subr.bf16.mxu0 0
    %4140 = vmatpush1.bf16.msra.mxu0 0
    %4141 = vmatprep.subr.bf16.mxu0 0
    %4142 = vmatpush1.bf16.msra.mxu0 0
    %4143 = vmatprep.subr.bf16.mxu0 0
    %4144 = vmatpush1.bf16.msra.mxu0 0
    %4145 = vmatprep.subr.bf16.mxu0 0
    %4146 = vmatpush1.bf16.msra.mxu0 0
    %4147 = vmatprep.subr.bf16.mxu0 0
    %4148 = vmatpush1.bf16.msra.mxu0 0
    %4149 = vmatprep.subr.bf16.mxu0 0
    %4150 = vmatpush1.bf16.msra.mxu0 0
    %4151 = vmatprep.subr.bf16.mxu0 0
    %4152 = vmatpush1.bf16.msra.mxu0 0
    %4153 = vmatprep.subr.bf16.mxu0 0
    %4154 = vmatpush1.bf16.msra.mxu0 0
    %4155 = vmatprep.subr.bf16.mxu0 0
    %4156 = vmatpush1.bf16.msra.mxu0 0
    %4157 = vmatprep.subr.bf16.mxu0 0
    %4158 = vmatpush1.bf16.msra.mxu0 0
    %4159 = vmatprep.subr.bf16.mxu0 0
    %4160 = vmatpush1.bf16.msra.mxu0 0
    %4161 = vmatprep.subr.bf16.mxu0 0
    %4162 = vmatpush1.bf16.msra.mxu0 0
    %4163 = vmatprep.mubr.bf16.mxu0 0
    %4164 = vmatmul.mubr.bf16.gmra.mrb[0].mxu0 %v3449
    %v4165 = vpop.f32.mrb[0].mxu0
    %v4166 = vadd.f32 0.0, %v4165
    %v4167 = vpop.f32.mrb[0].mxu0
    %v4168 = vpop.f32.mrb[0].mxu0
    %v4169 = vpop.f32.mrb[0].mxu0
    %4170 = vdwg.mxu0
    %4171 = vmatprep.subr.bf16.mxu0 0
    %4172 = vmatpush1.bf16.msra.mxu0 %v2751
    %4173 = vmatprep.subr.bf16.mxu0 0
    %4174 = vmatpush1.bf16.msra.mxu0 %v2752
    %4175 = vmatprep.subr.bf16.mxu0 0
    %4176 = vmatpush1.bf16.msra.mxu0 %v2753
    %4177 = vmatprep.subr.bf16.mxu0 0
    %4178 = vmatpush1.bf16.msra.mxu0 %v2759
    %4179 = vmatprep.subr.bf16.mxu0 0
    %4180 = vmatpush1.bf16.msra.mxu0 0
    %4181 = vmatprep.subr.bf16.mxu0 0
    %4182 = vmatpush1.bf16.msra.mxu0 0
    %4183 = vmatprep.subr.bf16.mxu0 0
    %4184 = vmatpush1.bf16.msra.mxu0 0
    %4185 = vmatprep.subr.bf16.mxu0 0
    %4186 = vmatpush1.bf16.msra.mxu0 0
    %4187 = vmatprep.subr.bf16.mxu0 0
    %4188 = vmatpush1.bf16.msra.mxu0 0
    %4189 = vmatprep.subr.bf16.mxu0 0
    %4190 = vmatpush1.bf16.msra.mxu0 0
    %4191 = vmatprep.subr.bf16.mxu0 0
    %4192 = vmatpush1.bf16.msra.mxu0 0
    %4193 = vmatprep.subr.bf16.mxu0 0
    %4194 = vmatpush1.bf16.msra.mxu0 0
    %4195 = vmatprep.subr.bf16.mxu0 0
    %4196 = vmatpush1.bf16.msra.mxu0 0
    %4197 = vmatprep.subr.bf16.mxu0 0
    %4198 = vmatpush1.bf16.msra.mxu0 0
    %4199 = vmatprep.subr.bf16.mxu0 0
    %4200 = vmatpush1.bf16.msra.mxu0 0
    %4201 = vmatprep.subr.bf16.mxu0 0
    %4202 = vmatpush1.bf16.msra.mxu0 0
    %4203 = vmatprep.mubr.bf16.mxu0 0
    %4204 = vmatmul.mubr.bf16.gmra.mrb[0].mxu0 %v3449
    %v4205 = vpop.f32.mrb[0].mxu0
    %v4206 = vadd.f32 0.0, %v4205
    %v4207 = vpop.f32.mrb[0].mxu0
    %v4208 = vpop.f32.mrb[0].mxu0
    %v4209 = vpop.f32.mrb[0].mxu0
    %4210 = vdwg.mxu0
    %4211 = vmatprep.subr.bf16.mxu0 0
    %4212 = vmatpush1.bf16.msra.mxu0 %v2823
    %4213 = vmatprep.subr.bf16.mxu0 0
    %4214 = vmatpush1.bf16.msra.mxu0 %v2824
    %4215 = vmatprep.subr.bf16.mxu0 0
    %4216 = vmatpush1.bf16.msra.mxu0 %v2825
    %4217 = vmatprep.subr.bf16.mxu0 0
    %4218 = vmatpush1.bf16.msra.mxu0 %v2831
    %4219 = vmatprep.subr.bf16.mxu0 0
    %4220 = vmatpush1.bf16.msra.mxu0 0
    %4221 = vmatprep.subr.bf16.mxu0 0
    %4222 = vmatpush1.bf16.msra.mxu0 0
    %4223 = vmatprep.subr.bf16.mxu0 0
    %4224 = vmatpush1.bf16.msra.mxu0 0
    %4225 = vmatprep.subr.bf16.mxu0 0
    %4226 = vmatpush1.bf16.msra.mxu0 0
    %4227 = vmatprep.subr.bf16.mxu0 0
    %4228 = vmatpush1.bf16.msra.mxu0 0
    %4229 = vmatprep.subr.bf16.mxu0 0
    %4230 = vmatpush1.bf16.msra.mxu0 0
    %4231 = vmatprep.subr.bf16.mxu0 0
    %4232 = vmatpush1.bf16.msra.mxu0 0
    %4233 = vmatprep.subr.bf16.mxu0 0
    %4234 = vmatpush1.bf16.msra.mxu0 0
    %4235 = vmatprep.subr.bf16.mxu0 0
    %4236 = vmatpush1.bf16.msra.mxu0 0
    %4237 = vmatprep.subr.bf16.mxu0 0
    %4238 = vmatpush1.bf16.msra.mxu0 0
    %4239 = vmatprep.subr.bf16.mxu0 0
    %4240 = vmatpush1.bf16.msra.mxu0 0
    %4241 = vmatprep.subr.bf16.mxu0 0
    %4242 = vmatpush1.bf16.msra.mxu0 0
    %4243 = vmatprep.mubr.bf16.mxu0 0
    %4244 = vmatmul.mubr.bf16.gmra.mrb[0].mxu0 %v3449
    %v4245 = vpop.f32.mrb[0].mxu0
    %v4246 = vadd.f32 0.0, %v4245
    %v4247 = vpop.f32.mrb[0].mxu0
    %v4248 = vpop.f32.mrb[0].mxu0
    %v4249 = vpop.f32.mrb[0].mxu0
    %4250 = vdwg.mxu0
    %4251 = vmatprep.subr.bf16.mxu0 0
    %4252 = vmatpush1.bf16.msra.mxu0 %v2895
    %4253 = vmatprep.subr.bf16.mxu0 0
    %4254 = vmatpush1.bf16.msra.mxu0 %v2896
    %4255 = vmatprep.subr.bf16.mxu0 0
    %4256 = vmatpush1.bf16.msra.mxu0 %v2897
    %4257 = vmatprep.subr.bf16.mxu0 0
    %4258 = vmatpush1.bf16.msra.mxu0 %v2903
    %4259 = vmatprep.subr.bf16.mxu0 0
    %4260 = vmatpush1.bf16.msra.mxu0 0
    %4261 = vmatprep.subr.bf16.mxu0 0
    %4262 = vmatpush1.bf16.msra.mxu0 0
    %4263 = vmatprep.subr.bf16.mxu0 0
    %4264 = vmatpush1.bf16.msra.mxu0 0
    %4265 = vmatprep.subr.bf16.mxu0 0
    %4266 = vmatpush1.bf16.msra.mxu0 0
    %4267 = vmatprep.subr.bf16.mxu0 0
    %4268 = vmatpush1.bf16.msra.mxu0 0
    %4269 = vmatprep.subr.bf16.mxu0 0
    %4270 = vmatpush1.bf16.msra.mxu0 0
    %4271 = vmatprep.subr.bf16.mxu0 0
    %4272 = vmatpush1.bf16.msra.mxu0 0
    %4273 = vmatprep.subr.bf16.mxu0 0
    %4274 = vmatpush1.bf16.msra.mxu0 0
    %4275 = vmatprep.subr.bf16.mxu0 0
    %4276 = vmatpush1.bf16.msra.mxu0 0
    %4277 = vmatprep.subr.bf16.mxu0 0
    %4278 = vmatpush1.bf16.msra.mxu0 0
    %4279 = vmatprep.subr.bf16.mxu0 0
    %4280 = vmatpush1.bf16.msra.mxu0 0
    %4281 = vmatprep.subr.bf16.mxu0 0
    %4282 = vmatpush1.bf16.msra.mxu0 0
    %4283 = vmatprep.mubr.bf16.mxu0 0
    %4284 = vmatmul.mubr.bf16.gmra.mrb[0].mxu0 %v3449
    %v4285 = vpop.f32.mrb[0].mxu0
    %v4286 = vadd.f32 0.0, %v4285
    %v4287 = vpop.f32.mrb[0].mxu0
    %v4288 = vpop.f32.mrb[0].mxu0
    %v4289 = vpop.f32.mrb[0].mxu0
    %4290 = vdwg.mxu0
    %4291 = vmatprep.subr.bf16.mxu0 0
    %4292 = vmatpush1.bf16.msra.mxu0 %v2967
    %4293 = vmatprep.subr.bf16.mxu0 0
    %4294 = vmatpush1.bf16.msra.mxu0 %v2968
    %4295 = vmatprep.subr.bf16.mxu0 0
    %4296 = vmatpush1.bf16.msra.mxu0 %v2969
    %4297 = vmatprep.subr.bf16.mxu0 0
    %4298 = vmatpush1.bf16.msra.mxu0 %v2975
    %4299 = vmatprep.subr.bf16.mxu0 0
    %4300 = vmatpush1.bf16.msra.mxu0 0
    %4301 = vmatprep.subr.bf16.mxu0 0
    %4302 = vmatpush1.bf16.msra.mxu0 0
    %4303 = vmatprep.subr.bf16.mxu0 0
    %4304 = vmatpush1.bf16.msra.mxu0 0
    %4305 = vmatprep.subr.bf16.mxu0 0
    %4306 = vmatpush1.bf16.msra.mxu0 0
    %4307 = vmatprep.subr.bf16.mxu0 0
    %4308 = vmatpush1.bf16.msra.mxu0 0
    %4309 = vmatprep.subr.bf16.mxu0 0
    %4310 = vmatpush1.bf16.msra.mxu0 0
    %4311 = vmatprep.subr.bf16.mxu0 0
    %4312 = vmatpush1.bf16.msra.mxu0 0
    %4313 = vmatprep.subr.bf16.mxu0 0
    %4314 = vmatpush1.bf16.msra.mxu0 0
    %4315 = vmatprep.subr.bf16.mxu0 0
    %4316 = vmatpush1.bf16.msra.mxu0 0
    %4317 = vmatprep.subr.bf16.mxu0 0
    %4318 = vmatpush1.bf16.msra.mxu0 0
    %4319 = vmatprep.subr.bf16.mxu0 0
    %4320 = vmatpush1.bf16.msra.mxu0 0
    %4321 = vmatprep.subr.bf16.mxu0 0
    %4322 = vmatpush1.bf16.msra.mxu0 0
    %4323 = vmatprep.mubr.bf16.mxu0 0
    %4324 = vmatmul.mubr.bf16.gmra.mrb[0].mxu0 %v3449
    %v4325 = vpop.f32.mrb[0].mxu0
    %v4326 = vadd.f32 0.0, %v4325
    %v4327 = vpop.f32.mrb[0].mxu0
    %v4328 = vpop.f32.mrb[0].mxu0
    %v4329 = vpop.f32.mrb[0].mxu0
    %4330 = vdwg.mxu0
    %4331 = vmatprep.subr.bf16.mxu0 0
    %4332 = vmatpush1.bf16.msra.mxu0 %v3039
    %4333 = vmatprep.subr.bf16.mxu0 0
    %4334 = vmatpush1.bf16.msra.mxu0 %v3040
    %4335 = vmatprep.subr.bf16.mxu0 0
    %4336 = vmatpush1.bf16.msra.mxu0 %v3041
    %4337 = vmatprep.subr.bf16.mxu0 0
    %4338 = vmatpush1.bf16.msra.mxu0 %v3047
    %4339 = vmatprep.subr.bf16.mxu0 0
    %4340 = vmatpush1.bf16.msra.mxu0 0
    %4341 = vmatprep.subr.bf16.mxu0 0
    %4342 = vmatpush1.bf16.msra.mxu0 0
    %4343 = vmatprep.subr.bf16.mxu0 0
    %4344 = vmatpush1.bf16.msra.mxu0 0
    %4345 = vmatprep.subr.bf16.mxu0 0
    %4346 = vmatpush1.bf16.msra.mxu0 0
    %4347 = vmatprep.subr.bf16.mxu0 0
    %4348 = vmatpush1.bf16.msra.mxu0 0
    %4349 = vmatprep.subr.bf16.mxu0 0
    %4350 = vmatpush1.bf16.msra.mxu0 0
    %4351 = vmatprep.subr.bf16.mxu0 0
    %4352 = vmatpush1.bf16.msra.mxu0 0
    %4353 = vmatprep.subr.bf16.mxu0 0
    %4354 = vmatpush1.bf16.msra.mxu0 0
    %4355 = vmatprep.subr.bf16.mxu0 0
    %4356 = vmatpush1.bf16.msra.mxu0 0
    %4357 = vmatprep.subr.bf16.mxu0 0
    %4358 = vmatpush1.bf16.msra.mxu0 0
    %4359 = vmatprep.subr.bf16.mxu0 0
    %4360 = vmatpush1.bf16.msra.mxu0 0
    %4361 = vmatprep.subr.bf16.mxu0 0
    %4362 = vmatpush1.bf16.msra.mxu0 0
    %4363 = vmatprep.mubr.bf16.mxu0 0
    %4364 = vmatmul.mubr.bf16.gmra.mrb[0].mxu0 %v3449
    %v4365 = vpop.f32.mrb[0].mxu0
    %v4366 = vadd.f32 0.0, %v4365
    %v4367 = vpop.f32.mrb[0].mxu0
    %v4368 = vpop.f32.mrb[0].mxu0
    %v4369 = vpop.f32.mrb[0].mxu0
    %4370 = vdwg.mxu0
    %4371 = vmatprep.subr.bf16.mxu0 0
    %4372 = vmatpush1.bf16.msra.mxu0 %v3111
    %4373 = vmatprep.subr.bf16.mxu0 0
    %4374 = vmatpush1.bf16.msra.mxu0 %v3112
    %4375 = vmatprep.subr.bf16.mxu0 0
    %4376 = vmatpush1.bf16.msra.mxu0 %v3113
    %4377 = vmatprep.subr.bf16.mxu0 0
    %4378 = vmatpush1.bf16.msra.mxu0 %v3119
    %4379 = vmatprep.subr.bf16.mxu0 0
    %4380 = vmatpush1.bf16.msra.mxu0 0
    %4381 = vmatprep.subr.bf16.mxu0 0
    %4382 = vmatpush1.bf16.msra.mxu0 0
    %4383 = vmatprep.subr.bf16.mxu0 0
    %4384 = vmatpush1.bf16.msra.mxu0 0
    %4385 = vmatprep.subr.bf16.mxu0 0
    %4386 = vmatpush1.bf16.msra.mxu0 0
    %4387 = vmatprep.subr.bf16.mxu0 0
    %4388 = vmatpush1.bf16.msra.mxu0 0
    %4389 = vmatprep.subr.bf16.mxu0 0
    %4390 = vmatpush1.bf16.msra.mxu0 0
    %4391 = vmatprep.subr.bf16.mxu0 0
    %4392 = vmatpush1.bf16.msra.mxu0 0
    %4393 = vmatprep.subr.bf16.mxu0 0
    %4394 = vmatpush1.bf16.msra.mxu0 0
    %4395 = vmatprep.subr.bf16.mxu0 0
    %4396 = vmatpush1.bf16.msra.mxu0 0
    %4397 = vmatprep.subr.bf16.mxu0 0
    %4398 = vmatpush1.bf16.msra.mxu0 0
    %4399 = vmatprep.subr.bf16.mxu0 0
    %4400 = vmatpush1.bf16.msra.mxu0 0
    %4401 = vmatprep.subr.bf16.mxu0 0
    %4402 = vmatpush1.bf16.msra.mxu0 0
    %4403 = vmatprep.mubr.bf16.mxu0 0
    %4404 = vmatmul.mubr.bf16.gmra.mrb[0].mxu0 %v3449
    %v4405 = vpop.f32.mrb[0].mxu0
    %v4406 = vadd.f32 0.0, %v4405
    %v4407 = vpop.f32.mrb[0].mxu0
    %v4408 = vpop.f32.mrb[0].mxu0
    %v4409 = vpop.f32.mrb[0].mxu0
    %4410 = vdwg.mxu0
    %4411 = vmatprep.subr.bf16.mxu0 0
    %4412 = vmatpush1.bf16.msra.mxu0 %v3183
    %4413 = vmatprep.subr.bf16.mxu0 0
    %4414 = vmatpush1.bf16.msra.mxu0 %v3184
    %4415 = vmatprep.subr.bf16.mxu0 0
    %4416 = vmatpush1.bf16.msra.mxu0 %v3185
    %4417 = vmatprep.subr.bf16.mxu0 0
    %4418 = vmatpush1.bf16.msra.mxu0 %v3191
    %4419 = vmatprep.subr.bf16.mxu0 0
    %4420 = vmatpush1.bf16.msra.mxu0 0
    %4421 = vmatprep.subr.bf16.mxu0 0
    %4422 = vmatpush1.bf16.msra.mxu0 0
    %4423 = vmatprep.subr.bf16.mxu0 0
    %4424 = vmatpush1.bf16.msra.mxu0 0
    %4425 = vmatprep.subr.bf16.mxu0 0
    %4426 = vmatpush1.bf16.msra.mxu0 0
    %4427 = vmatprep.subr.bf16.mxu0 0
    %4428 = vmatpush1.bf16.msra.mxu0 0
    %4429 = vmatprep.subr.bf16.mxu0 0
    %4430 = vmatpush1.bf16.msra.mxu0 0
    %4431 = vmatprep.subr.bf16.mxu0 0
    %4432 = vmatpush1.bf16.msra.mxu0 0
    %4433 = vmatprep.subr.bf16.mxu0 0
    %4434 = vmatpush1.bf16.msra.mxu0 0
    %4435 = vmatprep.subr.bf16.mxu0 0
    %4436 = vmatpush1.bf16.msra.mxu0 0
    %4437 = vmatprep.subr.bf16.mxu0 0
    %4438 = vmatpush1.bf16.msra.mxu0 0
    %4439 = vmatprep.subr.bf16.mxu0 0
    %4440 = vmatpush1.bf16.msra.mxu0 0
    %4441 = vmatprep.subr.bf16.mxu0 0
    %4442 = vmatpush1.bf16.msra.mxu0 0
    %4443 = vmatprep.mubr.bf16.mxu0 0
    %4444 = vmatmul.mubr.bf16.gmra.mrb[0].mxu0 %v3449
    %v4445 = vpop.f32.mrb[0].mxu0
    %v4446 = vadd.f32 0.0, %v4445
    %v4447 = vpop.f32.mrb[0].mxu0
    %v4448 = vpop.f32.mrb[0].mxu0
    %v4449 = vpop.f32.mrb[0].mxu0
    %4450 = vdwg.mxu0
    %4451 = vmatprep.subr.bf16.mxu0 0
    %4452 = vmatpush1.bf16.msra.mxu0 %v3255
    %4453 = vmatprep.subr.bf16.mxu0 0
    %4454 = vmatpush1.bf16.msra.mxu0 %v3256
    %4455 = vmatprep.subr.bf16.mxu0 0
    %4456 = vmatpush1.bf16.msra.mxu0 %v3257
    %4457 = vmatprep.subr.bf16.mxu0 0
    %4458 = vmatpush1.bf16.msra.mxu0 %v3263
    %4459 = vmatprep.subr.bf16.mxu0 0
    %4460 = vmatpush1.bf16.msra.mxu0 0
    %4461 = vmatprep.subr.bf16.mxu0 0
    %4462 = vmatpush1.bf16.msra.mxu0 0
    %4463 = vmatprep.subr.bf16.mxu0 0
    %4464 = vmatpush1.bf16.msra.mxu0 0
    %4465 = vmatprep.subr.bf16.mxu0 0
    %4466 = vmatpush1.bf16.msra.mxu0 0
    %4467 = vmatprep.subr.bf16.mxu0 0
    %4468 = vmatpush1.bf16.msra.mxu0 0
    %4469 = vmatprep.subr.bf16.mxu0 0
    %4470 = vmatpush1.bf16.msra.mxu0 0
    %4471 = vmatprep.subr.bf16.mxu0 0
    %4472 = vmatpush1.bf16.msra.mxu0 0
    %4473 = vmatprep.subr.bf16.mxu0 0
    %4474 = vmatpush1.bf16.msra.mxu0 0
    %4475 = vmatprep.subr.bf16.mxu0 0
    %4476 = vmatpush1.bf16.msra.mxu0 0
    %4477 = vmatprep.subr.bf16.mxu0 0
    %4478 = vmatpush1.bf16.msra.mxu0 0
    %4479 = vmatprep.subr.bf16.mxu0 0
    %4480 = vmatpush1.bf16.msra.mxu0 0
    %4481 = vmatprep.subr.bf16.mxu0 0
    %4482 = vmatpush1.bf16.msra.mxu0 0
    %4483 = vmatprep.mubr.bf16.mxu0 0
    %4484 = vmatmul.mubr.bf16.gmra.mrb[0].mxu0 %v3449
    %v4485 = vpop.f32.mrb[0].mxu0
    %v4486 = vadd.f32 0.0, %v4485
    %v4487 = vpop.f32.mrb[0].mxu0
    %v4488 = vpop.f32.mrb[0].mxu0
    %v4489 = vpop.f32.mrb[0].mxu0
    %4490 = vdwg.mxu0
    %4491 = vmatprep.subr.bf16.mxu0 0
    %4492 = vmatpush1.bf16.msra.mxu0 %v3327
    %4493 = vmatprep.subr.bf16.mxu0 0
    %4494 = vmatpush1.bf16.msra.mxu0 %v3328
    %4495 = vmatprep.subr.bf16.mxu0 0
    %4496 = vmatpush1.bf16.msra.mxu0 %v3329
    %4497 = vmatprep.subr.bf16.mxu0 0
    %4498 = vmatpush1.bf16.msra.mxu0 %v3335
    %4499 = vmatprep.subr.bf16.mxu0 0
    %4500 = vmatpush1.bf16.msra.mxu0 0
    %4501 = vmatprep.subr.bf16.mxu0 0
    %4502 = vmatpush1.bf16.msra.mxu0 0
    %4503 = vmatprep.subr.bf16.mxu0 0
    %4504 = vmatpush1.bf16.msra.mxu0 0
    %4505 = vmatprep.subr.bf16.mxu0 0
    %4506 = vmatpush1.bf16.msra.mxu0 0
    %4507 = vmatprep.subr.bf16.mxu0 0
    %4508 = vmatpush1.bf16.msra.mxu0 0
    %4509 = vmatprep.subr.bf16.mxu0 0
    %4510 = vmatpush1.bf16.msra.mxu0 0
    %4511 = vmatprep.subr.bf16.mxu0 0
    %4512 = vmatpush1.bf16.msra.mxu0 0
    %4513 = vmatprep.subr.bf16.mxu0 0
    %4514 = vmatpush1.bf16.msra.mxu0 0
    %4515 = vmatprep.subr.bf16.mxu0 0
    %4516 = vmatpush1.bf16.msra.mxu0 0
    %4517 = vmatprep.subr.bf16.mxu0 0
    %4518 = vmatpush1.bf16.msra.mxu0 0
    %4519 = vmatprep.subr.bf16.mxu0 0
    %4520 = vmatpush1.bf16.msra.mxu0 0
    %4521 = vmatprep.subr.bf16.mxu0 0
    %4522 = vmatpush1.bf16.msra.mxu0 0
    %4523 = vmatprep.mubr.bf16.mxu0 0
    %4524 = vmatmul.mubr.bf16.gmra.mrb[0].mxu0 %v3449
    %v4525 = vpop.f32.mrb[0].mxu0
    %v4526 = vadd.f32 0.0, %v4525
    %v4527 = vpop.f32.mrb[0].mxu0
    %v4528 = vpop.f32.mrb[0].mxu0
    %v4529 = vpop.f32.mrb[0].mxu0
    %4530 = vdwg.mxu0
    %v4531 = vpack.c.bf16 %v3526, %v3486
    %v4532 = vpack.c.bf16 %v3606, %v3566
    %v4533 = vpack.c.bf16 %v3686, %v3646
    %v4534 = vpack.c.bf16 %v3766, %v3726
    %v4535 = vpack.c.bf16 %v3846, %v3806
    %v4536 = vpack.c.bf16 %v3926, %v3886
    %v4537 = vpack.c.bf16 %v4006, %v3966
    %v4538 = vpack.c.bf16 %v4086, %v4046
    %v4539 = vpack.c.bf16 %v4166, %v4126
    %v4540 = vpack.c.bf16 %v4246, %v4206
    %v4541 = vpack.c.bf16 %v4326, %v4286
    %v4542 = vpack.c.bf16 %v4406, %v4366
    %v4543 = vpack.c.bf16 %v4486, %v4446
    %v4544 = vpack.c.bf16 %v4526, %v4526
    %v4545 = vld [vmem:[%s4] sm:$0xff]
    %v4546 = vld [vmem:[%s4 + $0x8] sm:$0xff]
    %v4549 = vunpack.c.l.b16 %v4545
    %v4550 = vunpack.c.h.b16 %v4545
    %v4551 = vunpack.c.l.b16 %v4546
    %v4552 = vunpack.c.h.b16 %v4546
    %v4553 = vpack.c.b16 %v4551, %v4549
    %v4554 = vpack.c.b16 %v4552, %v4550
    %v4557 = vsel %vm3398, %v4554, 0
    %v4560 = vsel %vm3402, %v4544, 0
    %4562 = vmatprep.subr.bf16.mxu0 0
    %4563 = vmatpush1.bf16.msra.mxu0 %v4531
    %4564 = vmatprep.subr.bf16.mxu0 0
    %4565 = vmatpush1.bf16.msra.mxu0 %v4532
    %4566 = vmatprep.subr.bf16.mxu0 0
    %4567 = vmatpush1.bf16.msra.mxu0 %v4533
    %4568 = vmatprep.subr.bf16.mxu0 0
    %4569 = vmatpush1.bf16.msra.mxu0 %v4534
    %4570 = vmatprep.subr.bf16.mxu0 0
    %4571 = vmatpush1.bf16.msra.mxu0 %v4535
    %4572 = vmatprep.subr.bf16.mxu0 0
    %4573 = vmatpush1.bf16.msra.mxu0 %v4536
    %4574 = vmatprep.subr.bf16.mxu0 0
    %4575 = vmatpush1.bf16.msra.mxu0 %v4537
    %4576 = vmatprep.subr.bf16.mxu0 0
    %4577 = vmatpush1.bf16.msra.mxu0 %v4538
    %4578 = vmatprep.subr.bf16.mxu0 0
    %4579 = vmatpush1.bf16.msra.mxu0 %v4539
    %4580 = vmatprep.subr.bf16.mxu0 0
    %4581 = vmatpush1.bf16.msra.mxu0 %v4540
    %4582 = vmatprep.subr.bf16.mxu0 0
    %4583 = vmatpush1.bf16.msra.mxu0 %v4541
    %4584 = vmatprep.subr.bf16.mxu0 0
    %4585 = vmatpush1.bf16.msra.mxu0 %v4542
    %4586 = vmatprep.subr.bf16.mxu0 0
    %4587 = vmatpush1.bf16.msra.mxu0 %v4543
    %4588 = vmatprep.subr.bf16.mxu0 0
    %4589 = vmatpush1.bf16.msra.mxu0 %v4560
    %4590 = vmatprep.subr.bf16.mxu0 0
    %4591 = vmatpush1.bf16.msra.mxu0 0
    %4592 = vmatprep.subr.bf16.mxu0 0
    %4593 = vmatpush1.bf16.msra.mxu0 0
    %4594 = vmatprep.mubr.bf16.mxu0 %v4557
    %4595 = vmatmul.mubr.bf16.gmra.mrb[0].mxu0 %v4553
    %v4596 = vpop.f32.mrb[0].mxu0
    %v4597 = vadd.f32 0.0, %v4596
    %v4598 = vpop.f32.mrb[0].mxu0
    %v4599 = vpop.f32.mrb[0].mxu0
    %v4600 = vadd.f32 0.0, %v4599
    %v4601 = vpop.f32.mrb[0].mxu0
    %4602 = vdwg.mxu0
    %v4603 = vmax.f32 %v4597, 0.0
    %v4604 = vmax.f32 %v4600, 0.0
    %v4605 = vpack.c.bf16 %v4604, %v4603
    %v4607 = vsel %vm1457, %v4605, 0
    %4609 = vmatprep.subr.bf16.mxu0 0
    %4610 = vmatpush1.bf16.msra.mxu0 %v1450
    %4611 = vmatprep.subr.bf16.mxu0 0
    %4612 = vmatpush1.bf16.msra.mxu0 %v1451
    %4613 = vmatprep.subr.bf16.mxu0 0
    %4614 = vmatpush1.bf16.msra.mxu0 %v1452
    %4615 = vmatprep.subr.bf16.mxu0 0
    %4616 = vmatpush1.bf16.msra.mxu0 %v1463
    %4617 = vmatprep.subr.bf16.mxu0 0
    %4618 = vmatpush1.bf16.msra.mxu0 0
    %4619 = vmatprep.subr.bf16.mxu0 0
    %4620 = vmatpush1.bf16.msra.mxu0 0
    %4621 = vmatprep.subr.bf16.mxu0 0
    %4622 = vmatpush1.bf16.msra.mxu0 0
    %4623 = vmatprep.subr.bf16.mxu0 0
    %4624 = vmatpush1.bf16.msra.mxu0 0
    %4625 = vmatprep.subr.bf16.mxu0 0
    %4626 = vmatpush1.bf16.msra.mxu0 0
    %4627 = vmatprep.subr.bf16.mxu0 0
    %4628 = vmatpush1.bf16.msra.mxu0 0
    %4629 = vmatprep.subr.bf16.mxu0 0
    %4630 = vmatpush1.bf16.msra.mxu0 0
    %4631 = vmatprep.subr.bf16.mxu0 0
    %4632 = vmatpush1.bf16.msra.mxu0 0
    %4633 = vmatprep.subr.bf16.mxu0 0
    %4634 = vmatpush1.bf16.msra.mxu0 0
    %4635 = vmatprep.subr.bf16.mxu0 0
    %4636 = vmatpush1.bf16.msra.mxu0 0
    %4637 = vmatprep.subr.bf16.mxu0 0
    %4638 = vmatpush1.bf16.msra.mxu0 0
    %4639 = vmatprep.subr.bf16.mxu0 0
    %4640 = vmatpush1.bf16.msra.mxu0 0
    %4641 = vmatprep.mubr.bf16.mxu0 0
    %4642 = vmatmul.mubr.bf16.gmra.mrb[0].mxu0 %v4607
    %v4643 = vpop.f32.mrb[0].mxu0
    %v4644 = vadd.f32 0.0, %v4643
    %v4645 = vpop.f32.mrb[0].mxu0
    %v4646 = vpop.f32.mrb[0].mxu0
    %v4647 = vadd.f32 0.0, %v4646
    %v4648 = vpop.f32.mrb[0].mxu0
    %4649 = vdwg.mxu0
    %4650 = vmatprep.subr.bf16.mxu0 0
    %4651 = vmatpush1.bf16.msra.mxu0 %v1527
    %4652 = vmatprep.subr.bf16.mxu0 0
    %4653 = vmatpush1.bf16.msra.mxu0 %v1528
    %4654 = vmatprep.subr.bf16.mxu0 0
    %4655 = vmatpush1.bf16.msra.mxu0 %v1529
    %4656 = vmatprep.subr.bf16.mxu0 0
    %4657 = vmatpush1.bf16.msra.mxu0 %v1535
    %4658 = vmatprep.subr.bf16.mxu0 0
    %4659 = vmatpush1.bf16.msra.mxu0 0
    %4660 = vmatprep.subr.bf16.mxu0 0
    %4661 = vmatpush1.bf16.msra.mxu0 0
    %4662 = vmatprep.subr.bf16.mxu0 0
    %4663 = vmatpush1.bf16.msra.mxu0 0
    %4664 = vmatprep.subr.bf16.mxu0 0
    %4665 = vmatpush1.bf16.msra.mxu0 0
    %4666 = vmatprep.subr.bf16.mxu0 0
    %4667 = vmatpush1.bf16.msra.mxu0 0
    %4668 = vmatprep.subr.bf16.mxu0 0
    %4669 = vmatpush1.bf16.msra.mxu0 0
    %4670 = vmatprep.subr.bf16.mxu0 0
    %4671 = vmatpush1.bf16.msra.mxu0 0
    %4672 = vmatprep.subr.bf16.mxu0 0
    %4673 = vmatpush1.bf16.msra.mxu0 0
    %4674 = vmatprep.subr.bf16.mxu0 0
    %4675 = vmatpush1.bf16.msra.mxu0 0
    %4676 = vmatprep.subr.bf16.mxu0 0
    %4677 = vmatpush1.bf16.msra.mxu0 0
    %4678 = vmatprep.subr.bf16.mxu0 0
    %4679 = vmatpush1.bf16.msra.mxu0 0
    %4680 = vmatprep.subr.bf16.mxu0 0
    %4681 = vmatpush1.bf16.msra.mxu0 0
    %4682 = vmatprep.mubr.bf16.mxu0 0
    %4683 = vmatmul.mubr.bf16.gmra.mrb[0].mxu0 %v4607
    %v4684 = vpop.f32.mrb[0].mxu0
    %v4685 = vadd.f32 0.0, %v4684
    %v4686 = vpop.f32.mrb[0].mxu0
    %v4687 = vpop.f32.mrb[0].mxu0
    %v4688 = vadd.f32 0.0, %v4687
    %v4689 = vpop.f32.mrb[0].mxu0
    %4690 = vdwg.mxu0
    %4691 = vmatprep.subr.bf16.mxu0 0
    %4692 = vmatpush1.bf16.msra.mxu0 %v1599
    %4693 = vmatprep.subr.bf16.mxu0 0
    %4694 = vmatpush1.bf16.msra.mxu0 %v1600
    %4695 = vmatprep.subr.bf16.mxu0 0
    %4696 = vmatpush1.bf16.msra.mxu0 %v1601
    %4697 = vmatprep.subr.bf16.mxu0 0
    %4698 = vmatpush1.bf16.msra.mxu0 %v1607
    %4699 = vmatprep.subr.bf16.mxu0 0
    %4700 = vmatpush1.bf16.msra.mxu0 0
    %4701 = vmatprep.subr.bf16.mxu0 0
    %4702 = vmatpush1.bf16.msra.mxu0 0
    %4703 = vmatprep.subr.bf16.mxu0 0
    %4704 = vmatpush1.bf16.msra.mxu0 0
    %4705 = vmatprep.subr.bf16.mxu0 0
    %4706 = vmatpush1.bf16.msra.mxu0 0
    %4707 = vmatprep.subr.bf16.mxu0 0
    %4708 = vmatpush1.bf16.msra.mxu0 0
    %4709 = vmatprep.subr.bf16.mxu0 0
    %4710 = vmatpush1.bf16.msra.mxu0 0
    %4711 = vmatprep.subr.bf16.mxu0 0
    %4712 = vmatpush1.bf16.msra.mxu0 0
    %4713 = vmatprep.subr.bf16.mxu0 0
    %4714 = vmatpush1.bf16.msra.mxu0 0
    %4715 = vmatprep.subr.bf16.mxu0 0
    %4716 = vmatpush1.bf16.msra.mxu0 0
    %4717 = vmatprep.subr.bf16.mxu0 0
    %4718 = vmatpush1.bf16.msra.mxu0 0
    %4719 = vmatprep.subr.bf16.mxu0 0
    %4720 = vmatpush1.bf16.msra.mxu0 0
    %4721 = vmatprep.subr.bf16.mxu0 0
    %4722 = vmatpush1.bf16.msra.mxu0 0
    %4723 = vmatprep.mubr.bf16.mxu0 0
    %4724 = vmatmul.mubr.bf16.gmra.mrb[0].mxu0 %v4607
    %v4725 = vpop.f32.mrb[0].mxu0
    %v4726 = vadd.f32 0.0, %v4725
    %v4727 = vpop.f32.mrb[0].mxu0
    %v4728 = vpop.f32.mrb[0].mxu0
    %v4729 = vadd.f32 0.0, %v4728
    %v4730 = vpop.f32.mrb[0].mxu0
    %4731 = vdwg.mxu0
    %4732 = vmatprep.subr.bf16.mxu0 0
    %4733 = vmatpush1.bf16.msra.mxu0 %v1671
    %4734 = vmatprep.subr.bf16.mxu0 0
    %4735 = vmatpush1.bf16.msra.mxu0 %v1672
    %4736 = vmatprep.subr.bf16.mxu0 0
    %4737 = vmatpush1.bf16.msra.mxu0 %v1673
    %4738 = vmatprep.subr.bf16.mxu0 0
    %4739 = vmatpush1.bf16.msra.mxu0 %v1679
    %4740 = vmatprep.subr.bf16.mxu0 0
    %4741 = vmatpush1.bf16.msra.mxu0 0
    %4742 = vmatprep.subr.bf16.mxu0 0
    %4743 = vmatpush1.bf16.msra.mxu0 0
    %4744 = vmatprep.subr.bf16.mxu0 0
    %4745 = vmatpush1.bf16.msra.mxu0 0
    %4746 = vmatprep.subr.bf16.mxu0 0
    %4747 = vmatpush1.bf16.msra.mxu0 0
    %4748 = vmatprep.subr.bf16.mxu0 0
    %4749 = vmatpush1.bf16.msra.mxu0 0
    %4750 = vmatprep.subr.bf16.mxu0 0
    %4751 = vmatpush1.bf16.msra.mxu0 0
    %4752 = vmatprep.subr.bf16.mxu0 0
    %4753 = vmatpush1.bf16.msra.mxu0 0
    %4754 = vmatprep.subr.bf16.mxu0 0
    %4755 = vmatpush1.bf16.msra.mxu0 0
    %4756 = vmatprep.subr.bf16.mxu0 0
    %4757 = vmatpush1.bf16.msra.mxu0 0
    %4758 = vmatprep.subr.bf16.mxu0 0
    %4759 = vmatpush1.bf16.msra.mxu0 0
    %4760 = vmatprep.subr.bf16.mxu0 0
    %4761 = vmatpush1.bf16.msra.mxu0 0
    %4762 = vmatprep.subr.bf16.mxu0 0
    %4763 = vmatpush1.bf16.msra.mxu0 0
    %4764 = vmatprep.mubr.bf16.mxu0 0
    %4765 = vmatmul.mubr.bf16.gmra.mrb[0].mxu0 %v4607
    %v4766 = vpop.f32.mrb[0].mxu0
    %v4767 = vadd.f32 0.0, %v4766
    %v4768 = vpop.f32.mrb[0].mxu0
    %v4769 = vpop.f32.mrb[0].mxu0
    %v4770 = vadd.f32 0.0, %v4769
    %v4771 = vpop.f32.mrb[0].mxu0
    %4772 = vdwg.mxu0
    %4773 = vmatprep.subr.bf16.mxu0 0
    %4774 = vmatpush1.bf16.msra.mxu0 %v1743
    %4775 = vmatprep.subr.bf16.mxu0 0
    %4776 = vmatpush1.bf16.msra.mxu0 %v1744
    %4777 = vmatprep.subr.bf16.mxu0 0
    %4778 = vmatpush1.bf16.msra.mxu0 %v1745
    %4779 = vmatprep.subr.bf16.mxu0 0
    %4780 = vmatpush1.bf16.msra.mxu0 %v1751
    %4781 = vmatprep.subr.bf16.mxu0 0
    %4782 = vmatpush1.bf16.msra.mxu0 0
    %4783 = vmatprep.subr.bf16.mxu0 0
    %4784 = vmatpush1.bf16.msra.mxu0 0
    %4785 = vmatprep.subr.bf16.mxu0 0
    %4786 = vmatpush1.bf16.msra.mxu0 0
    %4787 = vmatprep.subr.bf16.mxu0 0
    %4788 = vmatpush1.bf16.msra.mxu0 0
    %4789 = vmatprep.subr.bf16.mxu0 0
    %4790 = vmatpush1.bf16.msra.mxu0 0
    %4791 = vmatprep.subr.bf16.mxu0 0
    %4792 = vmatpush1.bf16.msra.mxu0 0
    %4793 = vmatprep.subr.bf16.mxu0 0
    %4794 = vmatpush1.bf16.msra.mxu0 0
    %4795 = vmatprep.subr.bf16.mxu0 0
    %4796 = vmatpush1.bf16.msra.mxu0 0
    %4797 = vmatprep.subr.bf16.mxu0 0
    %4798 = vmatpush1.bf16.msra.mxu0 0
    %4799 = vmatprep.subr.bf16.mxu0 0
    %4800 = vmatpush1.bf16.msra.mxu0 0
    %4801 = vmatprep.subr.bf16.mxu0 0
    %4802 = vmatpush1.bf16.msra.mxu0 0
    %4803 = vmatprep.subr.bf16.mxu0 0
    %4804 = vmatpush1.bf16.msra.mxu0 0
    %4805 = vmatprep.mubr.bf16.mxu0 0
    %4806 = vmatmul.mubr.bf16.gmra.mrb[0].mxu0 %v4607
    %v4807 = vpop.f32.mrb[0].mxu0
    %v4808 = vadd.f32 0.0, %v4807
    %v4809 = vpop.f32.mrb[0].mxu0
    %v4810 = vpop.f32.mrb[0].mxu0
    %v4811 = vadd.f32 0.0, %v4810
    %v4812 = vpop.f32.mrb[0].mxu0
    %4813 = vdwg.mxu0
    %4814 = vmatprep.subr.bf16.mxu0 0
    %4815 = vmatpush1.bf16.msra.mxu0 %v1815
    %4816 = vmatprep.subr.bf16.mxu0 0
    %4817 = vmatpush1.bf16.msra.mxu0 %v1816
    %4818 = vmatprep.subr.bf16.mxu0 0
    %4819 = vmatpush1.bf16.msra.mxu0 %v1817
    %4820 = vmatprep.subr.bf16.mxu0 0
    %4821 = vmatpush1.bf16.msra.mxu0 %v1823
    %4822 = vmatprep.subr.bf16.mxu0 0
    %4823 = vmatpush1.bf16.msra.mxu0 0
    %4824 = vmatprep.subr.bf16.mxu0 0
    %4825 = vmatpush1.bf16.msra.mxu0 0
    %4826 = vmatprep.subr.bf16.mxu0 0
    %4827 = vmatpush1.bf16.msra.mxu0 0
    %4828 = vmatprep.subr.bf16.mxu0 0
    %4829 = vmatpush1.bf16.msra.mxu0 0
    %4830 = vmatprep.subr.bf16.mxu0 0
    %4831 = vmatpush1.bf16.msra.mxu0 0
    %4832 = vmatprep.subr.bf16.mxu0 0
    %4833 = vmatpush1.bf16.msra.mxu0 0
    %4834 = vmatprep.subr.bf16.mxu0 0
    %4835 = vmatpush1.bf16.msra.mxu0 0
    %4836 = vmatprep.subr.bf16.mxu0 0
    %4837 = vmatpush1.bf16.msra.mxu0 0
    %4838 = vmatprep.subr.bf16.mxu0 0
    %4839 = vmatpush1.bf16.msra.mxu0 0
    %4840 = vmatprep.subr.bf16.mxu0 0
    %4841 = vmatpush1.bf16.msra.mxu0 0
    %4842 = vmatprep.subr.bf16.mxu0 0
    %4843 = vmatpush1.bf16.msra.mxu0 0
    %4844 = vmatprep.subr.bf16.mxu0 0
    %4845 = vmatpush1.bf16.msra.mxu0 0
    %4846 = vmatprep.mubr.bf16.mxu0 0
    %4847 = vmatmul.mubr.bf16.gmra.mrb[0].mxu0 %v4607
    %v4848 = vpop.f32.mrb[0].mxu0
    %v4849 = vadd.f32 0.0, %v4848
    %v4850 = vpop.f32.mrb[0].mxu0
    %v4851 = vpop.f32.mrb[0].mxu0
    %v4852 = vadd.f32 0.0, %v4851
    %v4853 = vpop.f32.mrb[0].mxu0
    %4854 = vdwg.mxu0
    %4855 = vmatprep.subr.bf16.mxu0 0
    %4856 = vmatpush1.bf16.msra.mxu0 %v1887
    %4857 = vmatprep.subr.bf16.mxu0 0
    %4858 = vmatpush1.bf16.msra.mxu0 %v1888
    %4859 = vmatprep.subr.bf16.mxu0 0
    %4860 = vmatpush1.bf16.msra.mxu0 %v1889
    %4861 = vmatprep.subr.bf16.mxu0 0
    %4862 = vmatpush1.bf16.msra.mxu0 %v1895
    %4863 = vmatprep.subr.bf16.mxu0 0
    %4864 = vmatpush1.bf16.msra.mxu0 0
    %4865 = vmatprep.subr.bf16.mxu0 0
    %4866 = vmatpush1.bf16.msra.mxu0 0
    %4867 = vmatprep.subr.bf16.mxu0 0
    %4868 = vmatpush1.bf16.msra.mxu0 0
    %4869 = vmatprep.subr.bf16.mxu0 0
    %4870 = vmatpush1.bf16.msra.mxu0 0
    %4871 = vmatprep.subr.bf16.mxu0 0
    %4872 = vmatpush1.bf16.msra.mxu0 0
    %4873 = vmatprep.subr.bf16.mxu0 0
    %4874 = vmatpush1.bf16.msra.mxu0 0
    %4875 = vmatprep.subr.bf16.mxu0 0
    %4876 = vmatpush1.bf16.msra.mxu0 0
    %4877 = vmatprep.subr.bf16.mxu0 0
    %4878 = vmatpush1.bf16.msra.mxu0 0
    %4879 = vmatprep.subr.bf16.mxu0 0
    %4880 = vmatpush1.bf16.msra.mxu0 0
    %4881 = vmatprep.subr.bf16.mxu0 0
    %4882 = vmatpush1.bf16.msra.mxu0 0
    %4883 = vmatprep.subr.bf16.mxu0 0
    %4884 = vmatpush1.bf16.msra.mxu0 0
    %4885 = vmatprep.subr.bf16.mxu0 0
    %4886 = vmatpush1.bf16.msra.mxu0 0
    %4887 = vmatprep.mubr.bf16.mxu0 0
    %4888 = vmatmul.mubr.bf16.gmra.mrb[0].mxu0 %v4607
    %v4889 = vpop.f32.mrb[0].mxu0
    %v4890 = vadd.f32 0.0, %v4889
    %v4891 = vpop.f32.mrb[0].mxu0
    %v4892 = vpop.f32.mrb[0].mxu0
    %v4893 = vadd.f32 0.0, %v4892
    %v4894 = vpop.f32.mrb[0].mxu0
    %4895 = vdwg.mxu0
    %4896 = vmatprep.subr.bf16.mxu0 0
    %4897 = vmatpush1.bf16.msra.mxu0 %v1959
    %4898 = vmatprep.subr.bf16.mxu0 0
    %4899 = vmatpush1.bf16.msra.mxu0 %v1960
    %4900 = vmatprep.subr.bf16.mxu0 0
    %4901 = vmatpush1.bf16.msra.mxu0 %v1961
    %4902 = vmatprep.subr.bf16.mxu0 0
    %4903 = vmatpush1.bf16.msra.mxu0 %v1967
    %4904 = vmatprep.subr.bf16.mxu0 0
    %4905 = vmatpush1.bf16.msra.mxu0 0
    %4906 = vmatprep.subr.bf16.mxu0 0
    %4907 = vmatpush1.bf16.msra.mxu0 0
    %4908 = vmatprep.subr.bf16.mxu0 0
    %4909 = vmatpush1.bf16.msra.mxu0 0
    %4910 = vmatprep.subr.bf16.mxu0 0
    %4911 = vmatpush1.bf16.msra.mxu0 0
    %4912 = vmatprep.subr.bf16.mxu0 0
    %4913 = vmatpush1.bf16.msra.mxu0 0
    %4914 = vmatprep.subr.bf16.mxu0 0
    %4915 = vmatpush1.bf16.msra.mxu0 0
    %4916 = vmatprep.subr.bf16.mxu0 0
    %4917 = vmatpush1.bf16.msra.mxu0 0
    %4918 = vmatprep.subr.bf16.mxu0 0
    %4919 = vmatpush1.bf16.msra.mxu0 0
    %4920 = vmatprep.subr.bf16.mxu0 0
    %4921 = vmatpush1.bf16.msra.mxu0 0
    %4922 = vmatprep.subr.bf16.mxu0 0
    %4923 = vmatpush1.bf16.msra.mxu0 0
    %4924 = vmatprep.subr.bf16.mxu0 0
    %4925 = vmatpush1.bf16.msra.mxu0 0
    %4926 = vmatprep.subr.bf16.mxu0 0
    %4927 = vmatpush1.bf16.msra.mxu0 0
    %4928 = vmatprep.mubr.bf16.mxu0 0
    %4929 = vmatmul.mubr.bf16.gmra.mrb[0].mxu0 %v4607
    %v4930 = vpop.f32.mrb[0].mxu0
    %v4931 = vadd.f32 0.0, %v4930
    %v4932 = vpop.f32.mrb[0].mxu0
    %v4933 = vpop.f32.mrb[0].mxu0
    %v4934 = vadd.f32 0.0, %v4933
    %v4935 = vpop.f32.mrb[0].mxu0
    %4936 = vdwg.mxu0
    %4937 = vmatprep.subr.bf16.mxu0 0
    %4938 = vmatpush1.bf16.msra.mxu0 %v2031
    %4939 = vmatprep.subr.bf16.mxu0 0
    %4940 = vmatpush1.bf16.msra.mxu0 %v2032
    %4941 = vmatprep.subr.bf16.mxu0 0
    %4942 = vmatpush1.bf16.msra.mxu0 %v2033
    %4943 = vmatprep.subr.bf16.mxu0 0
    %4944 = vmatpush1.bf16.msra.mxu0 %v2039
    %4945 = vmatprep.subr.bf16.mxu0 0
    %4946 = vmatpush1.bf16.msra.mxu0 0
    %4947 = vmatprep.subr.bf16.mxu0 0
    %4948 = vmatpush1.bf16.msra.mxu0 0
    %4949 = vmatprep.subr.bf16.mxu0 0
    %4950 = vmatpush1.bf16.msra.mxu0 0
    %4951 = vmatprep.subr.bf16.mxu0 0
    %4952 = vmatpush1.bf16.msra.mxu0 0
    %4953 = vmatprep.subr.bf16.mxu0 0
    %4954 = vmatpush1.bf16.msra.mxu0 0
    %4955 = vmatprep.subr.bf16.mxu0 0
    %4956 = vmatpush1.bf16.msra.mxu0 0
    %4957 = vmatprep.subr.bf16.mxu0 0
    %4958 = vmatpush1.bf16.msra.mxu0 0
    %4959 = vmatprep.subr.bf16.mxu0 0
    %4960 = vmatpush1.bf16.msra.mxu0 0
    %4961 = vmatprep.subr.bf16.mxu0 0
    %4962 = vmatpush1.bf16.msra.mxu0 0
    %4963 = vmatprep.subr.bf16.mxu0 0
    %4964 = vmatpush1.bf16.msra.mxu0 0
    %4965 = vmatprep.subr.bf16.mxu0 0
    %4966 = vmatpush1.bf16.msra.mxu0 0
    %4967 = vmatprep.subr.bf16.mxu0 0
    %4968 = vmatpush1.bf16.msra.mxu0 0
    %4969 = vmatprep.mubr.bf16.mxu0 0
    %4970 = vmatmul.mubr.bf16.gmra.mrb[0].mxu0 %v4607
    %v4971 = vpop.f32.mrb[0].mxu0
    %v4972 = vadd.f32 0.0, %v4971
    %v4973 = vpop.f32.mrb[0].mxu0
    %v4974 = vpop.f32.mrb[0].mxu0
    %v4975 = vadd.f32 0.0, %v4974
    %v4976 = vpop.f32.mrb[0].mxu0
    %4977 = vdwg.mxu0
    %4978 = vmatprep.subr.bf16.mxu0 0
    %4979 = vmatpush1.bf16.msra.mxu0 %v2103
    %4980 = vmatprep.subr.bf16.mxu0 0
    %4981 = vmatpush1.bf16.msra.mxu0 %v2104
    %4982 = vmatprep.subr.bf16.mxu0 0
    %4983 = vmatpush1.bf16.msra.mxu0 %v2105
    %4984 = vmatprep.subr.bf16.mxu0 0
    %4985 = vmatpush1.bf16.msra.mxu0 %v2111
    %4986 = vmatprep.subr.bf16.mxu0 0
    %4987 = vmatpush1.bf16.msra.mxu0 0
    %4988 = vmatprep.subr.bf16.mxu0 0
    %4989 = vmatpush1.bf16.msra.mxu0 0
    %4990 = vmatprep.subr.bf16.mxu0 0
    %4991 = vmatpush1.bf16.msra.mxu0 0
    %4992 = vmatprep.subr.bf16.mxu0 0
    %4993 = vmatpush1.bf16.msra.mxu0 0
    %4994 = vmatprep.subr.bf16.mxu0 0
    %4995 = vmatpush1.bf16.msra.mxu0 0
    %4996 = vmatprep.subr.bf16.mxu0 0
    %4997 = vmatpush1.bf16.msra.mxu0 0
    %4998 = vmatprep.subr.bf16.mxu0 0
    %4999 = vmatpush1.bf16.msra.mxu0 0
    %5000 = vmatprep.subr.bf16.mxu0 0
    %5001 = vmatpush1.bf16.msra.mxu0 0
    %5002 = vmatprep.subr.bf16.mxu0 0
    %5003 = vmatpush1.bf16.msra.mxu0 0
    %5004 = vmatprep.subr.bf16.mxu0 0
    %5005 = vmatpush1.bf16.msra.mxu0 0
    %5006 = vmatprep.subr.bf16.mxu0 0
    %5007 = vmatpush1.bf16.msra.mxu0 0
    %5008 = vmatprep.subr.bf16.mxu0 0
    %5009 = vmatpush1.bf16.msra.mxu0 0
    %5010 = vmatprep.mubr.bf16.mxu0 0
    %5011 = vmatmul.mubr.bf16.gmra.mrb[0].mxu0 %v4607
    %v5012 = vpop.f32.mrb[0].mxu0
    %v5013 = vadd.f32 0.0, %v5012
    %v5014 = vpop.f32.mrb[0].mxu0
    %v5015 = vpop.f32.mrb[0].mxu0
    %v5016 = vadd.f32 0.0, %v5015
    %v5017 = vpop.f32.mrb[0].mxu0
    %5018 = vdwg.mxu0
    %5019 = vmatprep.subr.bf16.mxu0 0
    %5020 = vmatpush1.bf16.msra.mxu0 %v2175
    %5021 = vmatprep.subr.bf16.mxu0 0
    %5022 = vmatpush1.bf16.msra.mxu0 %v2176
    %5023 = vmatprep.subr.bf16.mxu0 0
    %5024 = vmatpush1.bf16.msra.mxu0 %v2177
    %5025 = vmatprep.subr.bf16.mxu0 0
    %5026 = vmatpush1.bf16.msra.mxu0 %v2183
    %5027 = vmatprep.subr.bf16.mxu0 0
    %5028 = vmatpush1.bf16.msra.mxu0 0
    %5029 = vmatprep.subr.bf16.mxu0 0
    %5030 = vmatpush1.bf16.msra.mxu0 0
    %5031 = vmatprep.subr.bf16.mxu0 0
    %5032 = vmatpush1.bf16.msra.mxu0 0
    %5033 = vmatprep.subr.bf16.mxu0 0
    %5034 = vmatpush1.bf16.msra.mxu0 0
    %5035 = vmatprep.subr.bf16.mxu0 0
    %5036 = vmatpush1.bf16.msra.mxu0 0
    %5037 = vmatprep.subr.bf16.mxu0 0
    %5038 = vmatpush1.bf16.msra.mxu0 0
    %5039 = vmatprep.subr.bf16.mxu0 0
    %5040 = vmatpush1.bf16.msra.mxu0 0
    %5041 = vmatprep.subr.bf16.mxu0 0
    %5042 = vmatpush1.bf16.msra.mxu0 0
    %5043 = vmatprep.subr.bf16.mxu0 0
    %5044 = vmatpush1.bf16.msra.mxu0 0
    %5045 = vmatprep.subr.bf16.mxu0 0
    %5046 = vmatpush1.bf16.msra.mxu0 0
    %5047 = vmatprep.subr.bf16.mxu0 0
    %5048 = vmatpush1.bf16.msra.mxu0 0
    %5049 = vmatprep.subr.bf16.mxu0 0
    %5050 = vmatpush1.bf16.msra.mxu0 0
    %5051 = vmatprep.mubr.bf16.mxu0 0
    %5052 = vmatmul.mubr.bf16.gmra.mrb[0].mxu0 %v4607
    %v5053 = vpop.f32.mrb[0].mxu0
    %v5054 = vadd.f32 0.0, %v5053
    %v5055 = vpop.f32.mrb[0].mxu0
    %v5056 = vpop.f32.mrb[0].mxu0
    %v5057 = vadd.f32 0.0, %v5056
    %v5058 = vpop.f32.mrb[0].mxu0
    %5059 = vdwg.mxu0
    %5060 = vmatprep.subr.bf16.mxu0 0
    %5061 = vmatpush1.bf16.msra.mxu0 %v2247
    %5062 = vmatprep.subr.bf16.mxu0 0
    %5063 = vmatpush1.bf16.msra.mxu0 %v2248
    %5064 = vmatprep.subr.bf16.mxu0 0
    %5065 = vmatpush1.bf16.msra.mxu0 %v2249
    %5066 = vmatprep.subr.bf16.mxu0 0
    %5067 = vmatpush1.bf16.msra.mxu0 %v2255
    %5068 = vmatprep.subr.bf16.mxu0 0
    %5069 = vmatpush1.bf16.msra.mxu0 0
    %5070 = vmatprep.subr.bf16.mxu0 0
    %5071 = vmatpush1.bf16.msra.mxu0 0
    %5072 = vmatprep.subr.bf16.mxu0 0
    %5073 = vmatpush1.bf16.msra.mxu0 0
    %5074 = vmatprep.subr.bf16.mxu0 0
    %5075 = vmatpush1.bf16.msra.mxu0 0
    %5076 = vmatprep.subr.bf16.mxu0 0
    %5077 = vmatpush1.bf16.msra.mxu0 0
    %5078 = vmatprep.subr.bf16.mxu0 0
    %5079 = vmatpush1.bf16.msra.mxu0 0
    %5080 = vmatprep.subr.bf16.mxu0 0
    %5081 = vmatpush1.bf16.msra.mxu0 0
    %5082 = vmatprep.subr.bf16.mxu0 0
    %5083 = vmatpush1.bf16.msra.mxu0 0
    %5084 = vmatprep.subr.bf16.mxu0 0
    %5085 = vmatpush1.bf16.msra.mxu0 0
    %5086 = vmatprep.subr.bf16.mxu0 0
    %5087 = vmatpush1.bf16.msra.mxu0 0
    %5088 = vmatprep.subr.bf16.mxu0 0
    %5089 = vmatpush1.bf16.msra.mxu0 0
    %5090 = vmatprep.subr.bf16.mxu0 0
    %5091 = vmatpush1.bf16.msra.mxu0 0
    %5092 = vmatprep.mubr.bf16.mxu0 0
    %5093 = vmatmul.mubr.bf16.gmra.mrb[0].mxu0 %v4607
    %v5094 = vpop.f32.mrb[0].mxu0
    %v5095 = vadd.f32 0.0, %v5094
    %v5096 = vpop.f32.mrb[0].mxu0
    %v5097 = vpop.f32.mrb[0].mxu0
    %v5098 = vadd.f32 0.0, %v5097
    %v5099 = vpop.f32.mrb[0].mxu0
    %5100 = vdwg.mxu0
    %5101 = vmatprep.subr.bf16.mxu0 0
    %5102 = vmatpush1.bf16.msra.mxu0 %v2319
    %5103 = vmatprep.subr.bf16.mxu0 0
    %5104 = vmatpush1.bf16.msra.mxu0 %v2320
    %5105 = vmatprep.subr.bf16.mxu0 0
    %5106 = vmatpush1.bf16.msra.mxu0 %v2321
    %5107 = vmatprep.subr.bf16.mxu0 0
    %5108 = vmatpush1.bf16.msra.mxu0 %v2327
    %5109 = vmatprep.subr.bf16.mxu0 0
    %5110 = vmatpush1.bf16.msra.mxu0 0
    %5111 = vmatprep.subr.bf16.mxu0 0
    %5112 = vmatpush1.bf16.msra.mxu0 0
    %5113 = vmatprep.subr.bf16.mxu0 0
    %5114 = vmatpush1.bf16.msra.mxu0 0
    %5115 = vmatprep.subr.bf16.mxu0 0
    %5116 = vmatpush1.bf16.msra.mxu0 0
    %5117 = vmatprep.subr.bf16.mxu0 0
    %5118 = vmatpush1.bf16.msra.mxu0 0
    %5119 = vmatprep.subr.bf16.mxu0 0
    %5120 = vmatpush1.bf16.msra.mxu0 0
    %5121 = vmatprep.subr.bf16.mxu0 0
    %5122 = vmatpush1.bf16.msra.mxu0 0
    %5123 = vmatprep.subr.bf16.mxu0 0
    %5124 = vmatpush1.bf16.msra.mxu0 0
    %5125 = vmatprep.subr.bf16.mxu0 0
    %5126 = vmatpush1.bf16.msra.mxu0 0
    %5127 = vmatprep.subr.bf16.mxu0 0
    %5128 = vmatpush1.bf16.msra.mxu0 0
    %5129 = vmatprep.subr.bf16.mxu0 0
    %5130 = vmatpush1.bf16.msra.mxu0 0
    %5131 = vmatprep.subr.bf16.mxu0 0
    %5132 = vmatpush1.bf16.msra.mxu0 0
    %5133 = vmatprep.mubr.bf16.mxu0 0
    %5134 = vmatmul.mubr.bf16.gmra.mrb[0].mxu0 %v4607
    %v5135 = vpop.f32.mrb[0].mxu0
    %v5136 = vadd.f32 0.0, %v5135
    %v5137 = vpop.f32.mrb[0].mxu0
    %v5138 = vpop.f32.mrb[0].mxu0
    %v5139 = vadd.f32 0.0, %v5138
    %v5140 = vpop.f32.mrb[0].mxu0
    %5141 = vdwg.mxu0
    %5142 = vmatprep.subr.bf16.mxu0 0
    %5143 = vmatpush1.bf16.msra.mxu0 %v2391
    %5144 = vmatprep.subr.bf16.mxu0 0
    %5145 = vmatpush1.bf16.msra.mxu0 %v2392
    %5146 = vmatprep.subr.bf16.mxu0 0
    %5147 = vmatpush1.bf16.msra.mxu0 %v2393
    %5148 = vmatprep.subr.bf16.mxu0 0
    %5149 = vmatpush1.bf16.msra.mxu0 %v2399
    %5150 = vmatprep.subr.bf16.mxu0 0
    %5151 = vmatpush1.bf16.msra.mxu0 0
    %5152 = vmatprep.subr.bf16.mxu0 0
    %5153 = vmatpush1.bf16.msra.mxu0 0
    %5154 = vmatprep.subr.bf16.mxu0 0
    %5155 = vmatpush1.bf16.msra.mxu0 0
    %5156 = vmatprep.subr.bf16.mxu0 0
    %5157 = vmatpush1.bf16.msra.mxu0 0
    %5158 = vmatprep.subr.bf16.mxu0 0
    %5159 = vmatpush1.bf16.msra.mxu0 0
    %5160 = vmatprep.subr.bf16.mxu0 0
    %5161 = vmatpush1.bf16.msra.mxu0 0
    %5162 = vmatprep.subr.bf16.mxu0 0
    %5163 = vmatpush1.bf16.msra.mxu0 0
    %5164 = vmatprep.subr.bf16.mxu0 0
    %5165 = vmatpush1.bf16.msra.mxu0 0
    %5166 = vmatprep.subr.bf16.mxu0 0
    %5167 = vmatpush1.bf16.msra.mxu0 0
    %5168 = vmatprep.subr.bf16.mxu0 0
    %5169 = vmatpush1.bf16.msra.mxu0 0
    %5170 = vmatprep.subr.bf16.mxu0 0
    %5171 = vmatpush1.bf16.msra.mxu0 0
    %5172 = vmatprep.subr.bf16.mxu0 0
    %5173 = vmatpush1.bf16.msra.mxu0 0
    %5174 = vmatprep.mubr.bf16.mxu0 0
    %5175 = vmatmul.mubr.bf16.gmra.mrb[0].mxu0 %v4607
    %v5176 = vpop.f32.mrb[0].mxu0
    %v5177 = vadd.f32 0.0, %v5176
    %v5178 = vpop.f32.mrb[0].mxu0
    %v5179 = vpop.f32.mrb[0].mxu0
    %v5180 = vadd.f32 0.0, %v5179
    %v5181 = vpop.f32.mrb[0].mxu0
    %5182 = vdwg.mxu0
    %5183 = vmatprep.subr.bf16.mxu0 0
    %5184 = vmatpush1.bf16.msra.mxu0 %v2463
    %5185 = vmatprep.subr.bf16.mxu0 0
    %5186 = vmatpush1.bf16.msra.mxu0 %v2464
    %5187 = vmatprep.subr.bf16.mxu0 0
    %5188 = vmatpush1.bf16.msra.mxu0 %v2465
    %5189 = vmatprep.subr.bf16.mxu0 0
    %5190 = vmatpush1.bf16.msra.mxu0 %v2471
    %5191 = vmatprep.subr.bf16.mxu0 0
    %5192 = vmatpush1.bf16.msra.mxu0 0
    %5193 = vmatprep.subr.bf16.mxu0 0
    %5194 = vmatpush1.bf16.msra.mxu0 0
    %5195 = vmatprep.subr.bf16.mxu0 0
    %5196 = vmatpush1.bf16.msra.mxu0 0
    %5197 = vmatprep.subr.bf16.mxu0 0
    %5198 = vmatpush1.bf16.msra.mxu0 0
    %5199 = vmatprep.subr.bf16.mxu0 0
    %5200 = vmatpush1.bf16.msra.mxu0 0
    %5201 = vmatprep.subr.bf16.mxu0 0
    %5202 = vmatpush1.bf16.msra.mxu0 0
    %5203 = vmatprep.subr.bf16.mxu0 0
    %5204 = vmatpush1.bf16.msra.mxu0 0
    %5205 = vmatprep.subr.bf16.mxu0 0
    %5206 = vmatpush1.bf16.msra.mxu0 0
    %5207 = vmatprep.subr.bf16.mxu0 0
    %5208 = vmatpush1.bf16.msra.mxu0 0
    %5209 = vmatprep.subr.bf16.mxu0 0
    %5210 = vmatpush1.bf16.msra.mxu0 0
    %5211 = vmatprep.subr.bf16.mxu0 0
    %5212 = vmatpush1.bf16.msra.mxu0 0
    %5213 = vmatprep.subr.bf16.mxu0 0
    %5214 = vmatpush1.bf16.msra.mxu0 0
    %5215 = vmatprep.mubr.bf16.mxu0 0
    %5216 = vmatmul.mubr.bf16.gmra.mrb[0].mxu0 %v4607
    %v5217 = vpop.f32.mrb[0].mxu0
    %v5218 = vadd.f32 0.0, %v5217
    %v5219 = vpop.f32.mrb[0].mxu0
    %v5220 = vpop.f32.mrb[0].mxu0
    %v5221 = vadd.f32 0.0, %v5220
    %v5222 = vpop.f32.mrb[0].mxu0
    %5223 = vdwg.mxu0
    %5224 = vmatprep.subr.bf16.mxu0 0
    %5225 = vmatpush1.bf16.msra.mxu0 %v2535
    %5226 = vmatprep.subr.bf16.mxu0 0
    %5227 = vmatpush1.bf16.msra.mxu0 %v2536
    %5228 = vmatprep.subr.bf16.mxu0 0
    %5229 = vmatpush1.bf16.msra.mxu0 %v2537
    %5230 = vmatprep.subr.bf16.mxu0 0
    %5231 = vmatpush1.bf16.msra.mxu0 %v2543
    %5232 = vmatprep.subr.bf16.mxu0 0
    %5233 = vmatpush1.bf16.msra.mxu0 0
    %5234 = vmatprep.subr.bf16.mxu0 0
    %5235 = vmatpush1.bf16.msra.mxu0 0
    %5236 = vmatprep.subr.bf16.mxu0 0
    %5237 = vmatpush1.bf16.msra.mxu0 0
    %5238 = vmatprep.subr.bf16.mxu0 0
    %5239 = vmatpush1.bf16.msra.mxu0 0
    %5240 = vmatprep.subr.bf16.mxu0 0
    %5241 = vmatpush1.bf16.msra.mxu0 0
    %5242 = vmatprep.subr.bf16.mxu0 0
    %5243 = vmatpush1.bf16.msra.mxu0 0
    %5244 = vmatprep.subr.bf16.mxu0 0
    %5245 = vmatpush1.bf16.msra.mxu0 0
    %5246 = vmatprep.subr.bf16.mxu0 0
    %5247 = vmatpush1.bf16.msra.mxu0 0
    %5248 = vmatprep.subr.bf16.mxu0 0
    %5249 = vmatpush1.bf16.msra.mxu0 0
    %5250 = vmatprep.subr.bf16.mxu0 0
    %5251 = vmatpush1.bf16.msra.mxu0 0
    %5252 = vmatprep.subr.bf16.mxu0 0
    %5253 = vmatpush1.bf16.msra.mxu0 0
    %5254 = vmatprep.subr.bf16.mxu0 0
    %5255 = vmatpush1.bf16.msra.mxu0 0
    %5256 = vmatprep.mubr.bf16.mxu0 0
    %5257 = vmatmul.mubr.bf16.gmra.mrb[0].mxu0 %v4607
    %v5258 = vpop.f32.mrb[0].mxu0
    %v5259 = vadd.f32 0.0, %v5258
    %v5260 = vpop.f32.mrb[0].mxu0
    %v5261 = vpop.f32.mrb[0].mxu0
    %v5262 = vadd.f32 0.0, %v5261
    %v5263 = vpop.f32.mrb[0].mxu0
    %5264 = vdwg.mxu0
    %5265 = vmatprep.subr.bf16.mxu0 0
    %5266 = vmatpush1.bf16.msra.mxu0 %v2607
    %5267 = vmatprep.subr.bf16.mxu0 0
    %5268 = vmatpush1.bf16.msra.mxu0 %v2608
    %5269 = vmatprep.subr.bf16.mxu0 0
    %5270 = vmatpush1.bf16.msra.mxu0 %v2609
    %5271 = vmatprep.subr.bf16.mxu0 0
    %5272 = vmatpush1.bf16.msra.mxu0 %v2615
    %5273 = vmatprep.subr.bf16.mxu0 0
    %5274 = vmatpush1.bf16.msra.mxu0 0
    %5275 = vmatprep.subr.bf16.mxu0 0
    %5276 = vmatpush1.bf16.msra.mxu0 0
    %5277 = vmatprep.subr.bf16.mxu0 0
    %5278 = vmatpush1.bf16.msra.mxu0 0
    %5279 = vmatprep.subr.bf16.mxu0 0
    %5280 = vmatpush1.bf16.msra.mxu0 0
    %5281 = vmatprep.subr.bf16.mxu0 0
    %5282 = vmatpush1.bf16.msra.mxu0 0
    %5283 = vmatprep.subr.bf16.mxu0 0
    %5284 = vmatpush1.bf16.msra.mxu0 0
    %5285 = vmatprep.subr.bf16.mxu0 0
    %5286 = vmatpush1.bf16.msra.mxu0 0
    %5287 = vmatprep.subr.bf16.mxu0 0
    %5288 = vmatpush1.bf16.msra.mxu0 0
    %5289 = vmatprep.subr.bf16.mxu0 0
    %5290 = vmatpush1.bf16.msra.mxu0 0
    %5291 = vmatprep.subr.bf16.mxu0 0
    %5292 = vmatpush1.bf16.msra.mxu0 0
    %5293 = vmatprep.subr.bf16.mxu0 0
    %5294 = vmatpush1.bf16.msra.mxu0 0
    %5295 = vmatprep.subr.bf16.mxu0 0
    %5296 = vmatpush1.bf16.msra.mxu0 0
    %5297 = vmatprep.mubr.bf16.mxu0 0
    %5298 = vmatmul.mubr.bf16.gmra.mrb[0].mxu0 %v4607
    %v5299 = vpop.f32.mrb[0].mxu0
    %v5300 = vadd.f32 0.0, %v5299
    %v5301 = vpop.f32.mrb[0].mxu0
    %v5302 = vpop.f32.mrb[0].mxu0
    %v5303 = vadd.f32 0.0, %v5302
    %v5304 = vpop.f32.mrb[0].mxu0
    %5305 = vdwg.mxu0
    %5306 = vmatprep.subr.bf16.mxu0 0
    %5307 = vmatpush1.bf16.msra.mxu0 %v2679
    %5308 = vmatprep.subr.bf16.mxu0 0
    %5309 = vmatpush1.bf16.msra.mxu0 %v2680
    %5310 = vmatprep.subr.bf16.mxu0 0
    %5311 = vmatpush1.bf16.msra.mxu0 %v2681
    %5312 = vmatprep.subr.bf16.mxu0 0
    %5313 = vmatpush1.bf16.msra.mxu0 %v2687
    %5314 = vmatprep.subr.bf16.mxu0 0
    %5315 = vmatpush1.bf16.msra.mxu0 0
    %5316 = vmatprep.subr.bf16.mxu0 0
    %5317 = vmatpush1.bf16.msra.mxu0 0
    %5318 = vmatprep.subr.bf16.mxu0 0
    %5319 = vmatpush1.bf16.msra.mxu0 0
    %5320 = vmatprep.subr.bf16.mxu0 0
    %5321 = vmatpush1.bf16.msra.mxu0 0
    %5322 = vmatprep.subr.bf16.mxu0 0
    %5323 = vmatpush1.bf16.msra.mxu0 0
    %5324 = vmatprep.subr.bf16.mxu0 0
    %5325 = vmatpush1.bf16.msra.mxu0 0
    %5326 = vmatprep.subr.bf16.mxu0 0
    %5327 = vmatpush1.bf16.msra.mxu0 0
    %5328 = vmatprep.subr.bf16.mxu0 0
    %5329 = vmatpush1.bf16.msra.mxu0 0
    %5330 = vmatprep.subr.bf16.mxu0 0
    %5331 = vmatpush1.bf16.msra.mxu0 0
    %5332 = vmatprep.subr.bf16.mxu0 0
    %5333 = vmatpush1.bf16.msra.mxu0 0
    %5334 = vmatprep.subr.bf16.mxu0 0
    %5335 = vmatpush1.bf16.msra.mxu0 0
    %5336 = vmatprep.subr.bf16.mxu0 0
    %5337 = vmatpush1.bf16.msra.mxu0 0
    %5338 = vmatprep.mubr.bf16.mxu0 0
    %5339 = vmatmul.mubr.bf16.gmra.mrb[0].mxu0 %v4607
    %v5340 = vpop.f32.mrb[0].mxu0
    %v5341 = vadd.f32 0.0, %v5340
    %v5342 = vpop.f32.mrb[0].mxu0
    %v5343 = vpop.f32.mrb[0].mxu0
    %v5344 = vadd.f32 0.0, %v5343
    %v5345 = vpop.f32.mrb[0].mxu0
    %5346 = vdwg.mxu0
    %5347 = vmatprep.subr.bf16.mxu0 0
    %5348 = vmatpush1.bf16.msra.mxu0 %v2751
    %5349 = vmatprep.subr.bf16.mxu0 0
    %5350 = vmatpush1.bf16.msra.mxu0 %v2752
    %5351 = vmatprep.subr.bf16.mxu0 0
    %5352 = vmatpush1.bf16.msra.mxu0 %v2753
    %5353 = vmatprep.subr.bf16.mxu0 0
    %5354 = vmatpush1.bf16.msra.mxu0 %v2759
    %5355 = vmatprep.subr.bf16.mxu0 0
    %5356 = vmatpush1.bf16.msra.mxu0 0
    %5357 = vmatprep.subr.bf16.mxu0 0
    %5358 = vmatpush1.bf16.msra.mxu0 0
    %5359 = vmatprep.subr.bf16.mxu0 0
    %5360 = vmatpush1.bf16.msra.mxu0 0
    %5361 = vmatprep.subr.bf16.mxu0 0
    %5362 = vmatpush1.bf16.msra.mxu0 0
    %5363 = vmatprep.subr.bf16.mxu0 0
    %5364 = vmatpush1.bf16.msra.mxu0 0
    %5365 = vmatprep.subr.bf16.mxu0 0
    %5366 = vmatpush1.bf16.msra.mxu0 0
    %5367 = vmatprep.subr.bf16.mxu0 0
    %5368 = vmatpush1.bf16.msra.mxu0 0
    %5369 = vmatprep.subr.bf16.mxu0 0
    %5370 = vmatpush1.bf16.msra.mxu0 0
    %5371 = vmatprep.subr.bf16.mxu0 0
    %5372 = vmatpush1.bf16.msra.mxu0 0
    %5373 = vmatprep.subr.bf16.mxu0 0
    %5374 = vmatpush1.bf16.msra.mxu0 0
    %5375 = vmatprep.subr.bf16.mxu0 0
    %5376 = vmatpush1.bf16.msra.mxu0 0
    %5377 = vmatprep.subr.bf16.mxu0 0
    %5378 = vmatpush1.bf16.msra.mxu0 0
    %5379 = vmatprep.mubr.bf16.mxu0 0
    %5380 = vmatmul.mubr.bf16.gmra.mrb[0].mxu0 %v4607
    %v5381 = vpop.f32.mrb[0].mxu0
    %v5382 = vadd.f32 0.0, %v5381
    %v5383 = vpop.f32.mrb[0].mxu0
    %v5384 = vpop.f32.mrb[0].mxu0
    %v5385 = vadd.f32 0.0, %v5384
    %v5386 = vpop.f32.mrb[0].mxu0
    %5387 = vdwg.mxu0
    %5388 = vmatprep.subr.bf16.mxu0 0
    %5389 = vmatpush1.bf16.msra.mxu0 %v2823
    %5390 = vmatprep.subr.bf16.mxu0 0
    %5391 = vmatpush1.bf16.msra.mxu0 %v2824
    %5392 = vmatprep.subr.bf16.mxu0 0
    %5393 = vmatpush1.bf16.msra.mxu0 %v2825
    %5394 = vmatprep.subr.bf16.mxu0 0
    %5395 = vmatpush1.bf16.msra.mxu0 %v2831
    %5396 = vmatprep.subr.bf16.mxu0 0
    %5397 = vmatpush1.bf16.msra.mxu0 0
    %5398 = vmatprep.subr.bf16.mxu0 0
    %5399 = vmatpush1.bf16.msra.mxu0 0
    %5400 = vmatprep.subr.bf16.mxu0 0
    %5401 = vmatpush1.bf16.msra.mxu0 0
    %5402 = vmatprep.subr.bf16.mxu0 0
    %5403 = vmatpush1.bf16.msra.mxu0 0
    %5404 = vmatprep.subr.bf16.mxu0 0
    %5405 = vmatpush1.bf16.msra.mxu0 0
    %5406 = vmatprep.subr.bf16.mxu0 0
    %5407 = vmatpush1.bf16.msra.mxu0 0
    %5408 = vmatprep.subr.bf16.mxu0 0
    %5409 = vmatpush1.bf16.msra.mxu0 0
    %5410 = vmatprep.subr.bf16.mxu0 0
    %5411 = vmatpush1.bf16.msra.mxu0 0
    %5412 = vmatprep.subr.bf16.mxu0 0
    %5413 = vmatpush1.bf16.msra.mxu0 0
    %5414 = vmatprep.subr.bf16.mxu0 0
    %5415 = vmatpush1.bf16.msra.mxu0 0
    %5416 = vmatprep.subr.bf16.mxu0 0
    %5417 = vmatpush1.bf16.msra.mxu0 0
    %5418 = vmatprep.subr.bf16.mxu0 0
    %5419 = vmatpush1.bf16.msra.mxu0 0
    %5420 = vmatprep.mubr.bf16.mxu0 0
    %5421 = vmatmul.mubr.bf16.gmra.mrb[0].mxu0 %v4607
    %v5422 = vpop.f32.mrb[0].mxu0
    %v5423 = vadd.f32 0.0, %v5422
    %v5424 = vpop.f32.mrb[0].mxu0
    %v5425 = vpop.f32.mrb[0].mxu0
    %v5426 = vadd.f32 0.0, %v5425
    %v5427 = vpop.f32.mrb[0].mxu0
    %5428 = vdwg.mxu0
    %5429 = vmatprep.subr.bf16.mxu0 0
    %5430 = vmatpush1.bf16.msra.mxu0 %v2895
    %5431 = vmatprep.subr.bf16.mxu0 0
    %5432 = vmatpush1.bf16.msra.mxu0 %v2896
    %5433 = vmatprep.subr.bf16.mxu0 0
    %5434 = vmatpush1.bf16.msra.mxu0 %v2897
    %5435 = vmatprep.subr.bf16.mxu0 0
    %5436 = vmatpush1.bf16.msra.mxu0 %v2903
    %5437 = vmatprep.subr.bf16.mxu0 0
    %5438 = vmatpush1.bf16.msra.mxu0 0
    %5439 = vmatprep.subr.bf16.mxu0 0
    %5440 = vmatpush1.bf16.msra.mxu0 0
    %5441 = vmatprep.subr.bf16.mxu0 0
    %5442 = vmatpush1.bf16.msra.mxu0 0
    %5443 = vmatprep.subr.bf16.mxu0 0
    %5444 = vmatpush1.bf16.msra.mxu0 0
    %5445 = vmatprep.subr.bf16.mxu0 0
    %5446 = vmatpush1.bf16.msra.mxu0 0
    %5447 = vmatprep.subr.bf16.mxu0 0
    %5448 = vmatpush1.bf16.msra.mxu0 0
    %5449 = vmatprep.subr.bf16.mxu0 0
    %5450 = vmatpush1.bf16.msra.mxu0 0
    %5451 = vmatprep.subr.bf16.mxu0 0
    %5452 = vmatpush1.bf16.msra.mxu0 0
    %5453 = vmatprep.subr.bf16.mxu0 0
    %5454 = vmatpush1.bf16.msra.mxu0 0
    %5455 = vmatprep.subr.bf16.mxu0 0
    %5456 = vmatpush1.bf16.msra.mxu0 0
    %5457 = vmatprep.subr.bf16.mxu0 0
    %5458 = vmatpush1.bf16.msra.mxu0 0
    %5459 = vmatprep.subr.bf16.mxu0 0
    %5460 = vmatpush1.bf16.msra.mxu0 0
    %5461 = vmatprep.mubr.bf16.mxu0 0
    %5462 = vmatmul.mubr.bf16.gmra.mrb[0].mxu0 %v4607
    %v5463 = vpop.f32.mrb[0].mxu0
    %v5464 = vadd.f32 0.0, %v5463
    %v5465 = vpop.f32.mrb[0].mxu0
    %v5466 = vpop.f32.mrb[0].mxu0
    %v5467 = vadd.f32 0.0, %v5466
    %v5468 = vpop.f32.mrb[0].mxu0
    %5469 = vdwg.mxu0
    %5470 = vmatprep.subr.bf16.mxu0 0
    %5471 = vmatpush1.bf16.msra.mxu0 %v2967
    %5472 = vmatprep.subr.bf16.mxu0 0
    %5473 = vmatpush1.bf16.msra.mxu0 %v2968
    %5474 = vmatprep.subr.bf16.mxu0 0
    %5475 = vmatpush1.bf16.msra.mxu0 %v2969
    %5476 = vmatprep.subr.bf16.mxu0 0
    %5477 = vmatpush1.bf16.msra.mxu0 %v2975
    %5478 = vmatprep.subr.bf16.mxu0 0
    %5479 = vmatpush1.bf16.msra.mxu0 0
    %5480 = vmatprep.subr.bf16.mxu0 0
    %5481 = vmatpush1.bf16.msra.mxu0 0
    %5482 = vmatprep.subr.bf16.mxu0 0
    %5483 = vmatpush1.bf16.msra.mxu0 0
    %5484 = vmatprep.subr.bf16.mxu0 0
    %5485 = vmatpush1.bf16.msra.mxu0 0
    %5486 = vmatprep.subr.bf16.mxu0 0
    %5487 = vmatpush1.bf16.msra.mxu0 0
    %5488 = vmatprep.subr.bf16.mxu0 0
    %5489 = vmatpush1.bf16.msra.mxu0 0
    %5490 = vmatprep.subr.bf16.mxu0 0
    %5491 = vmatpush1.bf16.msra.mxu0 0
    %5492 = vmatprep.subr.bf16.mxu0 0
    %5493 = vmatpush1.bf16.msra.mxu0 0
    %5494 = vmatprep.subr.bf16.mxu0 0
    %5495 = vmatpush1.bf16.msra.mxu0 0
    %5496 = vmatprep.subr.bf16.mxu0 0
    %5497 = vmatpush1.bf16.msra.mxu0 0
    %5498 = vmatprep.subr.bf16.mxu0 0
    %5499 = vmatpush1.bf16.msra.mxu0 0
    %5500 = vmatprep.subr.bf16.mxu0 0
    %5501 = vmatpush1.bf16.msra.mxu0 0
    %5502 = vmatprep.mubr.bf16.mxu0 0
    %5503 = vmatmul.mubr.bf16.gmra.mrb[0].mxu0 %v4607
    %v5504 = vpop.f32.mrb[0].mxu0
    %v5505 = vadd.f32 0.0, %v5504
    %v5506 = vpop.f32.mrb[0].mxu0
    %v5507 = vpop.f32.mrb[0].mxu0
    %v5508 = vadd.f32 0.0, %v5507
    %v5509 = vpop.f32.mrb[0].mxu0
    %5510 = vdwg.mxu0
    %5511 = vmatprep.subr.bf16.mxu0 0
    %5512 = vmatpush1.bf16.msra.mxu0 %v3039
    %5513 = vmatprep.subr.bf16.mxu0 0
    %5514 = vmatpush1.bf16.msra.mxu0 %v3040
    %5515 = vmatprep.subr.bf16.mxu0 0
    %5516 = vmatpush1.bf16.msra.mxu0 %v3041
    %5517 = vmatprep.subr.bf16.mxu0 0
    %5518 = vmatpush1.bf16.msra.mxu0 %v3047
    %5519 = vmatprep.subr.bf16.mxu0 0
    %5520 = vmatpush1.bf16.msra.mxu0 0
    %5521 = vmatprep.subr.bf16.mxu0 0
    %5522 = vmatpush1.bf16.msra.mxu0 0
    %5523 = vmatprep.subr.bf16.mxu0 0
    %5524 = vmatpush1.bf16.msra.mxu0 0
    %5525 = vmatprep.subr.bf16.mxu0 0
    %5526 = vmatpush1.bf16.msra.mxu0 0
    %5527 = vmatprep.subr.bf16.mxu0 0
    %5528 = vmatpush1.bf16.msra.mxu0 0
    %5529 = vmatprep.subr.bf16.mxu0 0
    %5530 = vmatpush1.bf16.msra.mxu0 0
    %5531 = vmatprep.subr.bf16.mxu0 0
    %5532 = vmatpush1.bf16.msra.mxu0 0
    %5533 = vmatprep.subr.bf16.mxu0 0
    %5534 = vmatpush1.bf16.msra.mxu0 0
    %5535 = vmatprep.subr.bf16.mxu0 0
    %5536 = vmatpush1.bf16.msra.mxu0 0
    %5537 = vmatprep.subr.bf16.mxu0 0
    %5538 = vmatpush1.bf16.msra.mxu0 0
    %5539 = vmatprep.subr.bf16.mxu0 0
    %5540 = vmatpush1.bf16.msra.mxu0 0
    %5541 = vmatprep.subr.bf16.mxu0 0
    %5542 = vmatpush1.bf16.msra.mxu0 0
    %5543 = vmatprep.mubr.bf16.mxu0 0
    %5544 = vmatmul.mubr.bf16.gmra.mrb[0].mxu0 %v4607
    %v5545 = vpop.f32.mrb[0].mxu0
    %v5546 = vadd.f32 0.0, %v5545
    %v5547 = vpop.f32.mrb[0].mxu0
    %v5548 = vpop.f32.mrb[0].mxu0
    %v5549 = vadd.f32 0.0, %v5548
    %v5550 = vpop.f32.mrb[0].mxu0
    %5551 = vdwg.mxu0
    %5552 = vmatprep.subr.bf16.mxu0 0
    %5553 = vmatpush1.bf16.msra.mxu0 %v3111
    %5554 = vmatprep.subr.bf16.mxu0 0
    %5555 = vmatpush1.bf16.msra.mxu0 %v3112
    %5556 = vmatprep.subr.bf16.mxu0 0
    %5557 = vmatpush1.bf16.msra.mxu0 %v3113
    %5558 = vmatprep.subr.bf16.mxu0 0
    %5559 = vmatpush1.bf16.msra.mxu0 %v3119
    %5560 = vmatprep.subr.bf16.mxu0 0
    %5561 = vmatpush1.bf16.msra.mxu0 0
    %5562 = vmatprep.subr.bf16.mxu0 0
    %5563 = vmatpush1.bf16.msra.mxu0 0
    %5564 = vmatprep.subr.bf16.mxu0 0
    %5565 = vmatpush1.bf16.msra.mxu0 0
    %5566 = vmatprep.subr.bf16.mxu0 0
    %5567 = vmatpush1.bf16.msra.mxu0 0
    %5568 = vmatprep.subr.bf16.mxu0 0
    %5569 = vmatpush1.bf16.msra.mxu0 0
    %5570 = vmatprep.subr.bf16.mxu0 0
    %5571 = vmatpush1.bf16.msra.mxu0 0
    %5572 = vmatprep.subr.bf16.mxu0 0
    %5573 = vmatpush1.bf16.msra.mxu0 0
    %5574 = vmatprep.subr.bf16.mxu0 0
    %5575 = vmatpush1.bf16.msra.mxu0 0
    %5576 = vmatprep.subr.bf16.mxu0 0
    %5577 = vmatpush1.bf16.msra.mxu0 0
    %5578 = vmatprep.subr.bf16.mxu0 0
    %5579 = vmatpush1.bf16.msra.mxu0 0
    %5580 = vmatprep.subr.bf16.mxu0 0
    %5581 = vmatpush1.bf16.msra.mxu0 0
    %5582 = vmatprep.subr.bf16.mxu0 0
    %5583 = vmatpush1.bf16.msra.mxu0 0
    %5584 = vmatprep.mubr.bf16.mxu0 0
    %5585 = vmatmul.mubr.bf16.gmra.mrb[0].mxu0 %v4607
    %v5586 = vpop.f32.mrb[0].mxu0
    %v5587 = vadd.f32 0.0, %v5586
    %v5588 = vpop.f32.mrb[0].mxu0
    %v5589 = vpop.f32.mrb[0].mxu0
    %v5590 = vadd.f32 0.0, %v5589
    %v5591 = vpop.f32.mrb[0].mxu0
    %5592 = vdwg.mxu0
    %5593 = vmatprep.subr.bf16.mxu0 0
    %5594 = vmatpush1.bf16.msra.mxu0 %v3183
    %5595 = vmatprep.subr.bf16.mxu0 0
    %5596 = vmatpush1.bf16.msra.mxu0 %v3184
    %5597 = vmatprep.subr.bf16.mxu0 0
    %5598 = vmatpush1.bf16.msra.mxu0 %v3185
    %5599 = vmatprep.subr.bf16.mxu0 0
    %5600 = vmatpush1.bf16.msra.mxu0 %v3191
    %5601 = vmatprep.subr.bf16.mxu0 0
    %5602 = vmatpush1.bf16.msra.mxu0 0
    %5603 = vmatprep.subr.bf16.mxu0 0
    %5604 = vmatpush1.bf16.msra.mxu0 0
    %5605 = vmatprep.subr.bf16.mxu0 0
    %5606 = vmatpush1.bf16.msra.mxu0 0
    %5607 = vmatprep.subr.bf16.mxu0 0
    %5608 = vmatpush1.bf16.msra.mxu0 0
    %5609 = vmatprep.subr.bf16.mxu0 0
    %5610 = vmatpush1.bf16.msra.mxu0 0
    %5611 = vmatprep.subr.bf16.mxu0 0
    %5612 = vmatpush1.bf16.msra.mxu0 0
    %5613 = vmatprep.subr.bf16.mxu0 0
    %5614 = vmatpush1.bf16.msra.mxu0 0
    %5615 = vmatprep.subr.bf16.mxu0 0
    %5616 = vmatpush1.bf16.msra.mxu0 0
    %5617 = vmatprep.subr.bf16.mxu0 0
    %5618 = vmatpush1.bf16.msra.mxu0 0
    %5619 = vmatprep.subr.bf16.mxu0 0
    %5620 = vmatpush1.bf16.msra.mxu0 0
    %5621 = vmatprep.subr.bf16.mxu0 0
    %5622 = vmatpush1.bf16.msra.mxu0 0
    %5623 = vmatprep.subr.bf16.mxu0 0
    %5624 = vmatpush1.bf16.msra.mxu0 0
    %5625 = vmatprep.mubr.bf16.mxu0 0
    %5626 = vmatmul.mubr.bf16.gmra.mrb[0].mxu0 %v4607
    %v5627 = vpop.f32.mrb[0].mxu0
    %v5628 = vadd.f32 0.0, %v5627
    %v5629 = vpop.f32.mrb[0].mxu0
    %v5630 = vpop.f32.mrb[0].mxu0
    %v5631 = vadd.f32 0.0, %v5630
    %v5632 = vpop.f32.mrb[0].mxu0
    %5633 = vdwg.mxu0
    %5634 = vmatprep.subr.bf16.mxu0 0
    %5635 = vmatpush1.bf16.msra.mxu0 %v3255
    %5636 = vmatprep.subr.bf16.mxu0 0
    %5637 = vmatpush1.bf16.msra.mxu0 %v3256
    %5638 = vmatprep.subr.bf16.mxu0 0
    %5639 = vmatpush1.bf16.msra.mxu0 %v3257
    %5640 = vmatprep.subr.bf16.mxu0 0
    %5641 = vmatpush1.bf16.msra.mxu0 %v3263
    %5642 = vmatprep.subr.bf16.mxu0 0
    %5643 = vmatpush1.bf16.msra.mxu0 0
    %5644 = vmatprep.subr.bf16.mxu0 0
    %5645 = vmatpush1.bf16.msra.mxu0 0
    %5646 = vmatprep.subr.bf16.mxu0 0
    %5647 = vmatpush1.bf16.msra.mxu0 0
    %5648 = vmatprep.subr.bf16.mxu0 0
    %5649 = vmatpush1.bf16.msra.mxu0 0
    %5650 = vmatprep.subr.bf16.mxu0 0
    %5651 = vmatpush1.bf16.msra.mxu0 0
    %5652 = vmatprep.subr.bf16.mxu0 0
    %5653 = vmatpush1.bf16.msra.mxu0 0
    %5654 = vmatprep.subr.bf16.mxu0 0
    %5655 = vmatpush1.bf16.msra.mxu0 0
    %5656 = vmatprep.subr.bf16.mxu0 0
    %5657 = vmatpush1.bf16.msra.mxu0 0
    %5658 = vmatprep.subr.bf16.mxu0 0
    %5659 = vmatpush1.bf16.msra.mxu0 0
    %5660 = vmatprep.subr.bf16.mxu0 0
    %5661 = vmatpush1.bf16.msra.mxu0 0
    %5662 = vmatprep.subr.bf16.mxu0 0
    %5663 = vmatpush1.bf16.msra.mxu0 0
    %5664 = vmatprep.subr.bf16.mxu0 0
    %5665 = vmatpush1.bf16.msra.mxu0 0
    %5666 = vmatprep.mubr.bf16.mxu0 0
    %5667 = vmatmul.mubr.bf16.gmra.mrb[0].mxu0 %v4607
    %v5668 = vpop.f32.mrb[0].mxu0
    %v5669 = vadd.f32 0.0, %v5668
    %v5670 = vpop.f32.mrb[0].mxu0
    %v5671 = vpop.f32.mrb[0].mxu0
    %v5672 = vadd.f32 0.0, %v5671
    %v5673 = vpop.f32.mrb[0].mxu0
    %5674 = vdwg.mxu0
    %5675 = vmatprep.subr.bf16.mxu0 0
    %5676 = vmatpush1.bf16.msra.mxu0 %v3327
    %5677 = vmatprep.subr.bf16.mxu0 0
    %5678 = vmatpush1.bf16.msra.mxu0 %v3328
    %5679 = vmatprep.subr.bf16.mxu0 0
    %5680 = vmatpush1.bf16.msra.mxu0 %v3329
    %5681 = vmatprep.subr.bf16.mxu0 0
    %5682 = vmatpush1.bf16.msra.mxu0 %v3335
    %5683 = vmatprep.subr.bf16.mxu0 0
    %5684 = vmatpush1.bf16.msra.mxu0 0
    %5685 = vmatprep.subr.bf16.mxu0 0
    %5686 = vmatpush1.bf16.msra.mxu0 0
    %5687 = vmatprep.subr.bf16.mxu0 0
    %5688 = vmatpush1.bf16.msra.mxu0 0
    %5689 = vmatprep.subr.bf16.mxu0 0
    %5690 = vmatpush1.bf16.msra.mxu0 0
    %5691 = vmatprep.subr.bf16.mxu0 0
    %5692 = vmatpush1.bf16.msra.mxu0 0
    %5693 = vmatprep.subr.bf16.mxu0 0
    %5694 = vmatpush1.bf16.msra.mxu0 0
    %5695 = vmatprep.subr.bf16.mxu0 0
    %5696 = vmatpush1.bf16.msra.mxu0 0
    %5697 = vmatprep.subr.bf16.mxu0 0
    %5698 = vmatpush1.bf16.msra.mxu0 0
    %5699 = vmatprep.subr.bf16.mxu0 0
    %5700 = vmatpush1.bf16.msra.mxu0 0
    %5701 = vmatprep.subr.bf16.mxu0 0
    %5702 = vmatpush1.bf16.msra.mxu0 0
    %5703 = vmatprep.subr.bf16.mxu0 0
    %5704 = vmatpush1.bf16.msra.mxu0 0
    %5705 = vmatprep.subr.bf16.mxu0 0
    %5706 = vmatpush1.bf16.msra.mxu0 0
    %5707 = vmatprep.mubr.bf16.mxu0 0
    %5708 = vmatmul.mubr.bf16.gmra.mrb[0].mxu0 %v4607
    %v5709 = vpop.f32.mrb[0].mxu0
    %v5710 = vadd.f32 0.0, %v5709
    %v5711 = vpop.f32.mrb[0].mxu0
    %v5712 = vpop.f32.mrb[0].mxu0
    %v5713 = vadd.f32 0.0, %v5712
    %v5714 = vpop.f32.mrb[0].mxu0
    %5715 = vdwg.mxu0
    %v5716 = vpack.c.bf16 %v4647, %v4644
    %v5717 = vpack.c.bf16 %v4688, %v4685
    %v5718 = vpack.c.bf16 %v4729, %v4726
    %v5719 = vpack.c.bf16 %v4770, %v4767
    %v5720 = vpack.c.bf16 %v4811, %v4808
    %v5721 = vpack.c.bf16 %v4852, %v4849
    %v5722 = vpack.c.bf16 %v4893, %v4890
    %v5723 = vpack.c.bf16 %v4934, %v4931
    %v5724 = vpack.c.bf16 %v4975, %v4972
    %v5725 = vpack.c.bf16 %v5016, %v5013
    %v5726 = vpack.c.bf16 %v5057, %v5054
    %v5727 = vpack.c.bf16 %v5098, %v5095
    %v5728 = vpack.c.bf16 %v5139, %v5136
    %v5729 = vpack.c.bf16 %v5180, %v5177
    %v5730 = vpack.c.bf16 %v5221, %v5218
    %v5731 = vpack.c.bf16 %v5262, %v5259
    %v5732 = vpack.c.bf16 %v5303, %v5300
    %v5733 = vpack.c.bf16 %v5344, %v5341
    %v5734 = vpack.c.bf16 %v5385, %v5382
    %v5735 = vpack.c.bf16 %v5426, %v5423
    %v5736 = vpack.c.bf16 %v5467, %v5464
    %v5737 = vpack.c.bf16 %v5508, %v5505
    %v5738 = vpack.c.bf16 %v5549, %v5546
    %v5739 = vpack.c.bf16 %v5590, %v5587
    %v5740 = vpack.c.bf16 %v5631, %v5628
    %v5741 = vpack.c.bf16 %v5672, %v5669
    %v5742 = vpack.c.bf16 %v5713, %v5710
    %v5743 = vld [vmem:[%s5] sm:$0xff]
    %v5744 = vld [vmem:[%s5 + $0x8] sm:$0xff]
    %v5745 = vld [vmem:[%s5 + $0x10] sm:$0xff]
    %v5746 = vld [vmem:[%s5 + $0x18] sm:$0xff]
    %v5751 = vunpack.c.l.b16 %v5743
    %v5752 = vunpack.c.h.b16 %v5743
    %v5753 = vunpack.c.l.b16 %v5744
    %v5754 = vunpack.c.h.b16 %v5744
    %v5755 = vunpack.c.l.b16 %v5745
    %v5756 = vunpack.c.h.b16 %v5745
    %v5757 = vunpack.c.l.b16 %v5746
    %v5758 = vunpack.c.h.b16 %v5746
    %v5759 = vpack.c.b16 %v5755, %v5751
    %v5760 = vpack.c.b16 %v5756, %v5752
    %v5761 = vpack.c.b16 %v5757, %v5753
    %v5762 = vpack.c.b16 %v5758, %v5754
    %vm5766 = vcmask 392192
    %v5768 = vsel %vm5766, %v5762, 0
    %5770 = vmatprep.subr.bf16.mxu0 0
    %5771 = vmatpush1.bf16.msra.mxu0 %v5716
    %5772 = vmatprep.subr.bf16.mxu0 0
    %5773 = vmatpush1.bf16.msra.mxu0 %v5717
    %5774 = vmatprep.subr.bf16.mxu0 0
    %5775 = vmatpush1.bf16.msra.mxu0 %v5718
    %5776 = vmatprep.subr.bf16.mxu0 0
    %5777 = vmatpush1.bf16.msra.mxu0 %v5719
    %5778 = vmatprep.subr.bf16.mxu0 0
    %5779 = vmatpush1.bf16.msra.mxu0 %v5720
    %5780 = vmatprep.subr.bf16.mxu0 0
    %5781 = vmatpush1.bf16.msra.mxu0 %v5721
    %5782 = vmatprep.subr.bf16.mxu0 0
    %5783 = vmatpush1.bf16.msra.mxu0 %v5722
    %5784 = vmatprep.subr.bf16.mxu0 0
    %5785 = vmatpush1.bf16.msra.mxu0 %v5723
    %5786 = vmatprep.subr.bf16.mxu0 0
    %5787 = vmatpush1.bf16.msra.mxu0 %v5724
    %5788 = vmatprep.subr.bf16.mxu0 0
    %5789 = vmatpush1.bf16.msra.mxu0 %v5725
    %5790 = vmatprep.subr.bf16.mxu0 0
    %5791 = vmatpush1.bf16.msra.mxu0 %v5726
    %5792 = vmatprep.subr.bf16.mxu0 0
    %5793 = vmatpush1.bf16.msra.mxu0 %v5727
    %5794 = vmatprep.subr.bf16.mxu0 0
    %5795 = vmatpush1.bf16.msra.mxu0 %v5728
    %5796 = vmatprep.subr.bf16.mxu0 0
    %5797 = vmatpush1.bf16.msra.mxu0 %v5729
    %5798 = vmatprep.subr.bf16.mxu0 0
    %5799 = vmatpush1.bf16.msra.mxu0 %v5730
    %5800 = vmatprep.subr.bf16.mxu0 0
    %5801 = vmatpush1.bf16.msra.mxu0 %v5731
    %5802 = vmatprep.mubr.bf16.mxu0 %v5760
    %5803 = vmatmul.mubr.bf16.gmra.mrb[0].mxu0 %v5759
    %v5804 = vpop.f32.mrb[0].mxu0
    %v5805 = vadd.f32 0.0, %v5804
    %v5806 = vpop.f32.mrb[0].mxu0
    %v5807 = vpop.f32.mrb[0].mxu0
    %v5808 = vadd.f32 0.0, %v5807
    %v5809 = vpop.f32.mrb[0].mxu0
    %5810 = vdwg.mxu0
    %5811 = vmatprep.subr.bf16.mxu0 0
    %5812 = vmatpush1.bf16.msra.mxu0 %v5732
    %5813 = vmatprep.subr.bf16.mxu0 0
    %5814 = vmatpush1.bf16.msra.mxu0 %v5733
    %5815 = vmatprep.subr.bf16.mxu0 0
    %5816 = vmatpush1.bf16.msra.mxu0 %v5734
    %5817 = vmatprep.subr.bf16.mxu0 0
    %5818 = vmatpush1.bf16.msra.mxu0 %v5735
    %5819 = vmatprep.subr.bf16.mxu0 0
    %5820 = vmatpush1.bf16.msra.mxu0 %v5736
    %5821 = vmatprep.subr.bf16.mxu0 0
    %5822 = vmatpush1.bf16.msra.mxu0 %v5737
    %5823 = vmatprep.subr.bf16.mxu0 0
    %5824 = vmatpush1.bf16.msra.mxu0 %v5738
    %5825 = vmatprep.subr.bf16.mxu0 0
    %5826 = vmatpush1.bf16.msra.mxu0 %v5739
    %5827 = vmatprep.subr.bf16.mxu0 0
    %5828 = vmatpush1.bf16.msra.mxu0 %v5740
    %5829 = vmatprep.subr.bf16.mxu0 0
    %5830 = vmatpush1.bf16.msra.mxu0 %v5741
    %5831 = vmatprep.subr.bf16.mxu0 0
    %5832 = vmatpush1.bf16.msra.mxu0 %v5742
    %5833 = vmatprep.subr.bf16.mxu0 0
    %5834 = vmatpush1.bf16.msra.mxu0 0
    %5835 = vmatprep.subr.bf16.mxu0 0
    %5836 = vmatpush1.bf16.msra.mxu0 0
    %5837 = vmatprep.subr.bf16.mxu0 0
    %5838 = vmatpush1.bf16.msra.mxu0 0
    %5839 = vmatprep.subr.bf16.mxu0 0
    %5840 = vmatpush1.bf16.msra.mxu0 0
    %5841 = vmatprep.subr.bf16.mxu0 0
    %5842 = vmatpush1.bf16.msra.mxu0 0
    %5843 = vmatprep.mubr.bf16.mxu0 %v5768
    %5844 = vmatmul.mubr.bf16.gmra.mrb[0].mxu0 %v5761
    %v5845 = vpop.f32.mrb[0].mxu0
    %v5846 = vadd.f32 %v5805, %v5845
    %v5847 = vpop.f32.mrb[0].mxu0
    %v5848 = vpop.f32.mrb[0].mxu0
    %v5849 = vadd.f32 %v5808, %v5848
    %v5850 = vpop.f32.mrb[0].mxu0
    %5851 = vdwg.mxu0
    %v5852 = vmax.f32 %v5846, 0.0
    %v5853 = vmax.f32 %v5849, 0.0
    %vm5854 = vcmask 220160
    %v5855 = vsel %vm5854, %v5852, 0.0
    %5856 = vadd.xlane.f32.xlu0 %v5855
    %v5857 = vpop.xlane.xlu0 %5856
    %v5858 = vsel %vm5854, %v5853, 0.0
    %5859 = vadd.xlane.f32.xlu0 %v5858
    %v5860 = vpop.xlane.xlu0 %5859
    %v5861 = vmul.f32 %v5857, 0.037037037
    %v5862 = vmul.f32 %v5860, 0.037037037
    %v5863 = vld [vmem:[%s8] sm:$0xff]
    %v5864 = vld [vmem:[%s8 + $0x8] sm:$0xff]
    %v5865 = vmul.f32 %v5863, %v5861
    %v5866 = vmul.f32 %v5864, %v5862
    %v5867 = vadd.f32 %v5865, %v5866
    %v5868 = vrot.slane %v5867, 4
    %v5869 = vadd.f32 %v5867, %v5868
    %v5870 = vrot.slane %v5869, 2
    %v5871 = vadd.f32 %v5869, %v5870
    %v5872 = vrot.slane %v5871, 1
    %v5873 = vadd.f32 %v5871, %v5872
    %v5874 = vld [vmem:[%s9] sm:$0x1]
    %v5875 = vadd.f32 %v5873, %v5874
    %5878 = vrot.lane.b32.xlu0 %v5852, 101
    %v5879 = vpop.permute.xlu0 %5878
    %5880 = vrot.lane.b32.xlu0 %v5853, 101
    %v5881 = vpop.permute.xlu0 %5880
    %v5884 = vsel %vm5854, %v5879, 0.0
    %5885 = vadd.xlane.f32.xlu0 %v5884
    %v5886 = vpop.xlane.xlu0 %5885
    %v5887 = vsel %vm5854, %v5881, 0.0
    %5888 = vadd.xlane.f32.xlu0 %v5887
    %v5889 = vpop.xlane.xlu0 %5888
    %v5890 = vmul.f32 %v5886, 0.037037037
    %v5891 = vmul.f32 %v5889, 0.037037037
    %v5892 = vmul.f32 %v5863, %v5890
    %v5893 = vmul.f32 %v5864, %v5891
    %v5894 = vadd.f32 %v5892, %v5893
    %v5895 = vrot.slane %v5894, 4
    %v5896 = vadd.f32 %v5894, %v5895
    %v5897 = vrot.slane %v5896, 2
    %v5898 = vadd.f32 %v5896, %v5897
    %v5899 = vrot.slane %v5898, 1
    %v5900 = vadd.f32 %v5898, %v5899
    %v5901 = vadd.f32 %v5900, %v5874
    %v5903 = vrot.slane %v5901, 7
    %vm5905 = vcmask 1040384
    %v5906 = vsel %vm5905, %v5875, %v5903
    %5907 = vst [vmem:[#allocation2] sm:$0x3] %v5906
    // Predicated region
    $region42: #{vggnet_forward.1} parent=1 // pred_check
      _
    $region43: #{vggnet_forward.1} parent=1 // pred_check_branch
      %5909 = sbr.rel (0) target = $region45
    $region44: #{vggnet_forward.1} parent=1 // pred_region
      %s5911 = ssub.s32 32, 32
      %5912 = vsyncadd [#allocation3], %s5911
      %s5914 = sshll.u32 [#allocation2], 4
      %s5915 = int_to_ptr.vmem [resolvable:$true] %s5914
      %5917 = dma.vmem_to_hbm [thread:$0]  %s5915, 32, %s10, [#allocation3]
    $region45: #{vggnet_forward.1} parent=1 // pred_fallthru
      _
    // Predicated region
    $region46: #{vggnet_forward.1} parent=1 // pred_check
      _
    $region47: #{vggnet_forward.1} parent=1 // pred_check_branch
      %5919 = sbr.rel (0) target = $region49
    $region48: #{vggnet_forward.1} parent=1 // pred_region
      %5920 = dma.done [#allocation3], 32
    $region49: #{vggnet_forward.1} parent=1 // pred_fallthru
      _
    %5921 = vsyncpa [#allocation3], 1

</llo_original>
